<compile_context>
chip_gen: v7x
topology: tpu7x:2x2x1
jax: 0.10.0
libtpu: 0.0.40
codegen_flags: <defaults>
</compile_context>

<pallas_src>
import functools

import numpy as np
import jax
import jax.numpy as jnp
from jax import lax
from jax.experimental import pallas as pl
from jax.experimental.pallas import tpu as pltpu

EPS = 1e-5  # PyTorch GroupNorm default eps


# ---------------------------------------------------------------------------
# In-kernel helpers
# ---------------------------------------------------------------------------
def _gn_relu(xf, gamma, beta, gmask, inv_cnt):
    """GroupNorm + affine + ReLU on a (Bt, H*W, C) f32 tile.

    C stays on the lane dim.  Per-sample sums over the spatial axis, then one
    (2*Bt, C) x (C, C) block-diagonal mask matmul combines channels of a group.
    Single pass via E[x^2] - E[x]^2 (clamped); normalization applied as one
    scale/shift pass over the big tile.
    """
    Bt = xf.shape[0]
    s = jnp.sum(xf, axis=1)                       # (Bt, C)
    sq = jnp.sum(xf * xf, axis=1)                 # (Bt, C)
    stats = jnp.concatenate([s, sq], axis=0)      # (2*Bt, C)
    g = jnp.dot(stats, gmask, preferred_element_type=jnp.float32) * inv_cnt
    mean = g[:Bt]                                 # (Bt, C) per-group mean
    var = jnp.maximum(g[Bt:] - mean * mean, 0.0)  # (Bt, C) per-group var
    scale = lax.rsqrt(var + EPS) * gamma          # (Bt, C)
    shift = beta - mean * scale                   # (Bt, C)
    y = xf * scale[:, None, :] + shift[:, None, :]
    return jnp.maximum(y, 0.0)


def _fill_halo(pad_ref, y):
    """Write y (Bt, H, W, C) into the interior of the zero-bordered halo scratch.

    Only the 4 border strips are zeroed (the interior is fully overwritten), so
    there is no full-buffer zero sweep.  Borders are re-zeroed every grid step
    because each TensorCore owns its own scratch instance under "parallel".
    """
    Bt, H, W, C = y.shape
    zrow = jnp.zeros((Bt, 1, W + 2, C), y.dtype)
    zcol = jnp.zeros((Bt, H, 1, C), y.dtype)
    pad_ref[:, 0:1, :, :] = zrow                    # top halo row
    pad_ref[:, H + 1:H + 2, :, :] = zrow            # bottom halo row
    pad_ref[:, 1:H + 1, 0:1, :] = zcol              # left halo column
    pad_ref[:, 1:H + 1, W + 1:W + 2, :] = zcol      # right halo column
    pad_ref[:, 1:H + 1, 1:W + 1, :] = y             # interior


def _conv3x3(pad_ref, w_ref, H, W):
    """3x3 'same' conv from the zero-bordered halo scratch: 9 shifted matmuls.

    Each tap: (Bt*H*W, Cin) bf16 x (Cin, Cout) bf16 -> f32 MXU accumulation.
    """
    Bt = pad_ref.shape[0]
    Cin = pad_ref.shape[-1]
    Cout = w_ref.shape[-1]
    acc = jnp.zeros((Bt * H * W, Cout), jnp.float32)
    for t in range(9):
        dy, dx = divmod(t, 3)
        patch = pad_ref[:, dy:dy + H, dx:dx + W, :].reshape(Bt * H * W, Cin)
        acc = acc + jnp.dot(patch.astype(w_ref.dtype),
                            w_ref[t * Cin:(t + 1) * Cin, :],
                            preferred_element_type=jnp.float32)
    return acc


# ---------------------------------------------------------------------------
# Fused ResBlock kernel (one grid step = Bt batch samples)
# ---------------------------------------------------------------------------
def _resblock_kernel(x_ref, g1_ref, b1_ref, gm1_ref, w1_ref,
                     g2_ref, b2_ref, gm2_ref, w2_ref,
                     o_ref, pad_ref, *, groups1, groups2):
    Bt, H, W, Cin = x_ref.shape
    planes = w1_ref.shape[-1]
    HW = H * W

    x = x_ref[...].astype(jnp.float32).reshape(Bt, HW, Cin)

    # ---- GN1 + ReLU ------------------------------------------------------
    y1 = _gn_relu(x, g1_ref[...], b1_ref[...], gm1_ref[...],
                  1.0 / float(HW * (Cin // groups1)))

    # ---- conv1 (halo lives in a shared zero-bordered VMEM scratch) --------
    _fill_halo(pad_ref, y1.reshape(Bt, H, W, Cin))
    h = _conv3x3(pad_ref, w1_ref, H, W)                      # (Bt*HW, planes) f32

    # ---- GN2 + ReLU ------------------------------------------------------
    y2 = _gn_relu(h.reshape(Bt, HW, planes), g2_ref[...], b2_ref[...], gm2_ref[...],
                  1.0 / float(HW * (planes // groups2)))

    # ---- conv2 + identity shortcut (re-read raw x at the add site) --------
    _fill_halo(pad_ref, y2.reshape(Bt, H, W, planes))
    out = _conv3x3(pad_ref, w2_ref, H, W)
    out = out + x_ref[...].astype(jnp.float32).reshape(Bt * HW, Cin)

    o_ref[...] = out.reshape(Bt, H, W, planes).astype(o_ref.dtype)


# ---------------------------------------------------------------------------
# Host-side helpers + cached pallas_call plumbing
# ---------------------------------------------------------------------------
@functools.lru_cache(maxsize=None)
def _group_mask(C, groups):
    """(C, C) f32 mask: M[i, j] = 1 iff channels i, j belong to the same GN group."""
    cg = C // groups
    gid = np.arange(C) // cg
    return jnp.asarray((gid[:, None] == gid[None, :]).astype(np.float32))


def _vmem_cap_bytes():
    """Per-generation scoped-VMEM ceiling (v7x has 64 MiB/TC; v4/v5e/v6e 128 MiB)."""
    try:
        kind = jax.devices()[0].device_kind.lower()
    except Exception:
        kind = ""
    if ("v4" in kind) or ("v5" in kind) or ("v6" in kind):
        return 100 << 20
    return 56 << 20                      # v7x and unknown generations: conservative


def _per_sample_bytes(H, W, Cin, planes, itemsize):
    c = max(Cin, planes)
    return (2 * H * W * (Cin + planes) * itemsize    # double-buffered in/out blocks
            + 4 * (H + 2) * (W + 2) * c              # f32 halo scratch (shared)
            + 6 * 4 * H * W * c)                     # f32 working temporaries (rough)


def _pick_batch_tile(N, H, W, Cin, planes, itemsize, cap):
    budget = int(cap * 0.6)
    per = max(_per_sample_bytes(H, W, Cin, planes, itemsize), 1)
    bt = int(max(1, min(N, 32, budget // per)))
    # Prefer exact division and >= 2 grid steps so the batch axis can be split
    # across v7x's two TensorCores.
    while bt > 1 and (N % bt != 0 or N // bt < 2):
        bt -= 1
    return bt


def _vmem_limit_bytes(Bt, H, W, Cin, planes, itemsize, cap):
    weights = 2 * 9 * (Cin + planes) * planes + 4 * (Cin * Cin + planes * planes)
    est = (Bt * _per_sample_bytes(H, W, Cin, planes, itemsize)
           + 2 * weights + (4 << 20))
    return int(min(max(est, 32 << 20), cap))


@functools.lru_cache(maxsize=None)
def _get_resblock_call(N, Bt, H, W, Cin, planes, dtype_name, groups1, groups2,
                       vmem_limit):
    dtype = jnp.dtype(dtype_name)
    kernel = functools.partial(_resblock_kernel, groups1=groups1, groups2=groups2)
    return pl.pallas_call(
        kernel,
        out_shape=jax.ShapeDtypeStruct((N, H, W, planes), dtype),
        grid=(N // Bt,),
        in_specs=[
            pl.BlockSpec((Bt, H, W, Cin), lambda n: (n, 0, 0, 0)),       # x
            pl.BlockSpec((1, Cin), lambda n: (0, 0)),                    # gn1 gamma
            pl.BlockSpec((1, Cin), lambda n: (0, 0)),                    # gn1 beta
            pl.BlockSpec((Cin, Cin), lambda n: (0, 0)),                  # gn1 group mask
            pl.BlockSpec((9 * Cin, planes), lambda n: (0, 0)),           # conv1 w (bf16)
            pl.BlockSpec((1, planes), lambda n: (0, 0)),                 # gn2 gamma
            pl.BlockSpec((1, planes), lambda n: (0, 0)),                 # gn2 beta
            pl.BlockSpec((planes, planes), lambda n: (0, 0)),            # gn2 group mask
            pl.BlockSpec((9 * planes, planes), lambda n: (0, 0)),        # conv2 w (bf16)
        ],
        out_specs=pl.BlockSpec((Bt, H, W, planes), lambda n: (n, 0, 0, 0)),
        scratch_shapes=[
            # Single halo buffer, reused for conv1 and conv2 (Cin == planes).
            pltpu.VMEM((Bt, H + 2, W + 2, max(Cin, planes)), jnp.float32),
        ],
        compiler_params=pltpu.CompilerParams(
            dimension_semantics=("parallel",),
            vmem_limit_bytes=vmem_limit,
        ),
    )


def resblock_forward_nhwc(x, params):
    """Fused ResBlock forward. x: (N, H, W, Cin) NHWC (native layout)."""
    N, H, W, Cin = x.shape
    planes = params["conv1_w"].shape[-1]
    assert params["conv2_w"].shape[-1] == planes
    groups1, groups2 = min(32, Cin), min(32, planes)
    assert Cin % groups1 == 0 and planes % groups2 == 0
    # TODO(synk): downsample branch (stride != 1 or Cin != planes) not implemented;
    #             it is None for this ResBlock configuration (identity shortcut).
    assert Cin == planes, "identity shortcut requires Cin == planes"

    itemsize = jnp.dtype(x.dtype).itemsize
    cap = _vmem_cap_bytes()
    Bt = _pick_batch_tile(N, H, W, Cin, planes, itemsize, cap)
    vmem_limit = _vmem_limit_bytes(Bt, H, W, Cin, planes, itemsize, cap)
    call = _get_resblock_call(N, Bt, H, W, Cin, planes, jnp.dtype(x.dtype).name,
                              groups1, groups2, vmem_limit)

    w1 = params["conv1_w"].reshape(9 * Cin, planes).astype(jnp.bfloat16)
    w2 = params["conv2_w"].reshape(9 * planes, planes).astype(jnp.bfloat16)
    g1 = params["gn1_w"].reshape(1, Cin).astype(jnp.float32)
    b1 = params["gn1_b"].reshape(1, Cin).astype(jnp.float32)
    g2 = params["gn2_w"].reshape(1, planes).astype(jnp.float32)
    b2 = params["gn2_b"].reshape(1, planes).astype(jnp.float32)
    gm1 = _group_mask(Cin, groups1)
    gm2 = _group_mask(planes, groups2)

    # No host sync here: result is returned asynchronously so back-to-back
    # ResBlocks can pipeline.
    return call(x, g1, b1, gm1, w1, g2, b2, gm2, w2)


def resblock_forward(x_nchw, params):
    """PyTorch-layout wrapper (NCHW in/out).  In a full network keep activations NHWC
    and call resblock_forward_nhwc directly to avoid these boundary transposes."""
    x = jnp.transpose(x_nchw, (0, 2, 3, 1))               # NCHW -> NHWC
    out = resblock_forward_nhwc(x, params)
    return jnp.transpose(out, (0, 3, 1, 2))               # NHWC -> NCHW


# ---------------------------------------------------------------------------
# Pure-JAX reference (for correctness check)
# ---------------------------------------------------------------------------
def _groupnorm_ref(x, gamma, beta, groups):
    N, H, W, C = x.shape
    xg = x.reshape(N, H, W, groups, C // groups)
    mean = xg.mean(axis=(1, 2, 4), keepdims=True)
    var = ((xg - mean) ** 2).mean(axis=(1, 2, 4), keepdims=True)
    xn = ((xg - mean) / jnp.sqrt(var + EPS)).reshape(N, H, W, C)
    return xn * gamma + beta


def resblock_ref(x_nchw, params):
    x = jnp.transpose(x_nchw, (0, 2, 3, 1))
    cin = x.shape[-1]
    planes = params["conv1_w"].shape[-1]
    dn = ("NHWC", "HWIO", "NHWC")
    out = jax.nn.relu(_groupnorm_ref(x, params["gn1_w"], params["gn1_b"], min(32, cin)))
    out = lax.conv_general_dilated(out, params["conv1_w"], (1, 1), "SAME",
                                   dimension_numbers=dn,
                                   precision=lax.Precision.HIGHEST)
    out = jax.nn.relu(_groupnorm_ref(out, params["gn2_w"], params["gn2_b"], min(32, planes)))
    out = lax.conv_general_dilated(out, params["conv2_w"], (1, 1), "SAME",
                                   dimension_numbers=dn,
                                   precision=lax.Precision.HIGHEST)
    out = out + x
    return jnp.transpose(out, (0, 3, 1, 2))


# ---------------------------------------------------------------------------
if __name__ == "__main__":
    key = jax.random.PRNGKey(0)
    kx, k1, k2, k3, k4, k5, k6 = jax.random.split(key, 7)

    # Small shapes: batch=2, inplanes=planes=4, spatial=16 (groups = min(32, 4) = 4)
    N, C, H, W = 2, 4, 16, 16
    planes = C
    x = jax.random.normal(kx, (N, C, H, W), jnp.float32)   # NCHW, like PyTorch

    params = {
        "gn1_w": jax.random.uniform(k1, (C,), jnp.float32, 0.5, 1.5),
        "gn1_b": 0.1 * jax.random.normal(k2, (C,), jnp.float32),
        "conv1_w": 0.2 * jax.random.normal(k3, (3, 3, C, planes), jnp.float32),
        "gn2_w": jax.random.uniform(k4, (planes,), jnp.float32, 0.5, 1.5),
        "gn2_b": 0.1 * jax.random.normal(k5, (planes,), jnp.float32),
        "conv2_w": 0.2 * jax.random.normal(k6, (3, 3, planes, planes), jnp.float32),
    }

    out = jax.block_until_ready(resblock_forward(x, params))
    ref = jax.block_until_ready(resblock_ref(x, params))

    assert out.shape == x.shape and out.dtype == x.dtype
    # Tolerance covers bf16 MXU operands (f32 accumulation) vs. the full-f32 reference.
    np.testing.assert_allclose(np.asarray(out), np.asarray(ref), rtol=2e-2, atol=2e-2)
    print("KERNEL_OK")
</pallas_src>

<mosaic_0001>
module attributes {stable_mosaic.version = 11 : i64} {
  func.func @_resblock_kernel(%arg0: i32, %arg1: memref<1x16x16x4xf32, #tpu.memory_space<vmem>>, %arg2: memref<1x4xf32, #tpu.memory_space<vmem>>, %arg3: memref<1x4xf32, #tpu.memory_space<vmem>>, %arg4: memref<4x4xf32, #tpu.memory_space<vmem>>, %arg5: memref<36x4xbf16, #tpu.memory_space<vmem>>, %arg6: memref<1x4xf32, #tpu.memory_space<vmem>>, %arg7: memref<1x4xf32, #tpu.memory_space<vmem>>, %arg8: memref<4x4xf32, #tpu.memory_space<vmem>>, %arg9: memref<36x4xbf16, #tpu.memory_space<vmem>>, %arg10: memref<1x16x16x4xf32, #tpu.memory_space<vmem>>, %arg11: memref<1x18x18x4xf32, #tpu.memory_space<vmem>>) attributes {dimension_semantics = [#tpu.dimension_semantics<parallel>], iteration_bounds = array<i64: 2>, scalar_prefetch = 0 : i64, scratch_operands = 1 : i64, tpu.core_type = #tpu.core_type<tc>, window_params = [{transform_indices = @transform_0, window_bounds = array<i64: 1, 16, 16, 4>}, {pipeline_mode = #tpu.pipeline_mode<synchronous>, transform_indices = @transform_1, window_bounds = array<i64: 1, 4>}, {pipeline_mode = #tpu.pipeline_mode<synchronous>, transform_indices = @transform_2, window_bounds = array<i64: 1, 4>}, {pipeline_mode = #tpu.pipeline_mode<synchronous>, transform_indices = @transform_3, window_bounds = array<i64: 4, 4>}, {pipeline_mode = #tpu.pipeline_mode<synchronous>, transform_indices = @transform_4, window_bounds = array<i64: 36, 4>}, {pipeline_mode = #tpu.pipeline_mode<synchronous>, transform_indices = @transform_5, window_bounds = array<i64: 1, 4>}, {pipeline_mode = #tpu.pipeline_mode<synchronous>, transform_indices = @transform_6, window_bounds = array<i64: 1, 4>}, {pipeline_mode = #tpu.pipeline_mode<synchronous>, transform_indices = @transform_7, window_bounds = array<i64: 4, 4>}, {pipeline_mode = #tpu.pipeline_mode<synchronous>, transform_indices = @transform_8, window_bounds = array<i64: 36, 4>}, {transform_indices = @transform_9, window_bounds = array<i64: 1, 16, 16, 4>}]} {
    %c0 = arith.constant 0 : index
    %c0_0 = arith.constant 0 : index
    %c0_1 = arith.constant 0 : index
    %c0_2 = arith.constant 0 : index
    %0 = vector.load %arg1[%c0, %c0_0, %c0_1, %c0_2] : memref<1x16x16x4xf32, #tpu.memory_space<vmem>>, vector<1x16x16x4xf32>
    %1 = vector.shape_cast %0 : vector<1x16x16x4xf32> to vector<1x256x4xf32>
    %c0_3 = arith.constant 0 : index
    %c0_4 = arith.constant 0 : index
    %2 = vector.load %arg2[%c0_3, %c0_4] : memref<1x4xf32, #tpu.memory_space<vmem>>, vector<1x4xf32>
    %c0_5 = arith.constant 0 : index
    %c0_6 = arith.constant 0 : index
    %3 = vector.load %arg3[%c0_5, %c0_6] : memref<1x4xf32, #tpu.memory_space<vmem>>, vector<1x4xf32>
    %c0_7 = arith.constant 0 : index
    %c0_8 = arith.constant 0 : index
    %4 = vector.load %arg4[%c0_7, %c0_8] : memref<4x4xf32, #tpu.memory_space<vmem>>, vector<4x4xf32>
    %cst = arith.constant dense<0.000000e+00> : vector<1x4xf32>
    %5 = vector.multi_reduction <add>, %1, %cst [1] : vector<1x256x4xf32> to vector<1x4xf32>
    %6 = arith.mulf %1, %1 : vector<1x256x4xf32>
    %cst_9 = arith.constant dense<0.000000e+00> : vector<1x4xf32>
    %7 = vector.multi_reduction <add>, %6, %cst_9 [1] : vector<1x256x4xf32> to vector<1x4xf32>
    %8 = tpu.concatenate %5, %7 in 0 : vector<1x4xf32>, vector<1x4xf32> -> vector<2x4xf32>
    %cst_10 = arith.constant dense<0.000000e+00> : vector<2x4xf32>
    %9 = tpu.matmul %8, %4, %cst_10 {dimension_numbers = #tpu.dot_dimension_numbers<[1], [0], [0], [1], [0, 0, 1, 1], [], []>} : vector<2x4xf32>, vector<4x4xf32>, vector<2x4xf32> -> vector<2x4xf32>
    %cst_11 = arith.constant 3.906250e-03 : f32
    %10 = vector.broadcast %cst_11 : f32 to vector<2x4xf32>
    %11 = arith.mulf %9, %10 : vector<2x4xf32>
    %12 = vector.extract_strided_slice %11 {offsets = [0, 0], sizes = [1, 4], strides = [1, 1]} : vector<2x4xf32> to vector<1x4xf32>
    %13 = vector.extract_strided_slice %11 {offsets = [1, 0], sizes = [1, 4], strides = [1, 1]} : vector<2x4xf32> to vector<1x4xf32>
    %14 = arith.mulf %12, %12 : vector<1x4xf32>
    %15 = arith.subf %13, %14 : vector<1x4xf32>
    %cst_12 = arith.constant 0.000000e+00 : f32
    %16 = vector.broadcast %cst_12 : f32 to vector<1x4xf32>
    %17 = arith.maximumf %15, %16 : vector<1x4xf32>
    %cst_13 = arith.constant 9.99999974E-6 : f32
    %18 = vector.broadcast %cst_13 : f32 to vector<1x4xf32>
    %19 = arith.addf %17, %18 : vector<1x4xf32>
    %20 = math.rsqrt %19 : vector<1x4xf32>
    %21 = arith.mulf %20, %2 : vector<1x4xf32>
    %22 = arith.mulf %12, %21 : vector<1x4xf32>
    %23 = arith.subf %3, %22 : vector<1x4xf32>
    %24 = vector.shape_cast %21 : vector<1x4xf32> to vector<1x1x4xf32>
    %25 = vector.broadcast %24 : vector<1x1x4xf32> to vector<1x256x4xf32>
    %26 = arith.mulf %1, %25 : vector<1x256x4xf32>
    %27 = vector.shape_cast %23 : vector<1x4xf32> to vector<1x1x4xf32>
    %28 = vector.broadcast %27 : vector<1x1x4xf32> to vector<1x256x4xf32>
    %29 = arith.addf %26, %28 : vector<1x256x4xf32>
    %cst_14 = arith.constant 0.000000e+00 : f32
    %30 = vector.broadcast %cst_14 : f32 to vector<1x256x4xf32>
    %31 = arith.maximumf %29, %30 : vector<1x256x4xf32>
    %32 = vector.shape_cast %31 : vector<1x256x4xf32> to vector<1x16x16x4xf32>
    %cst_15 = arith.constant 0.000000e+00 : f32
    %33 = vector.broadcast %cst_15 : f32 to vector<1x1x18x4xf32>
    %cst_16 = arith.constant 0.000000e+00 : f32
    %34 = vector.broadcast %cst_16 : f32 to vector<1x16x1x4xf32>
    %c0_17 = arith.constant 0 : index
    %c0_18 = arith.constant 0 : index
    %c0_19 = arith.constant 0 : index
    %c0_20 = arith.constant 0 : index
    %35 = vector.load %arg11[%c0_17, %c0_18, %c0_19, %c0_20] : memref<1x18x18x4xf32, #tpu.memory_space<vmem>>, vector<1x1x18x4xf32>
    tpu.vector_store %arg11[%c0_17, %c0_18, %c0_19, %c0_20], %33 {strides = array<i32>} : memref<1x18x18x4xf32, #tpu.memory_space<vmem>>, vector<1x1x18x4xf32>,
    %c0_21 = arith.constant 0 : index
    %c17 = arith.constant 17 : index
    %c0_22 = arith.constant 0 : index
    %c0_23 = arith.constant 0 : index
    %36 = vector.load %arg11[%c0_21, %c17, %c0_22, %c0_23] : memref<1x18x18x4xf32, #tpu.memory_space<vmem>>, vector<1x1x18x4xf32>
    tpu.vector_store %arg11[%c0_21, %c17, %c0_22, %c0_23], %33 {strides = array<i32>} : memref<1x18x18x4xf32, #tpu.memory_space<vmem>>, vector<1x1x18x4xf32>,
    %c0_24 = arith.constant 0 : index
    %c1 = arith.constant 1 : index
    %c0_25 = arith.constant 0 : index
    %c0_26 = arith.constant 0 : index
    %37 = vector.load %arg11[%c0_24, %c1, %c0_25, %c0_26] : memref<1x18x18x4xf32, #tpu.memory_space<vmem>>, vector<1x16x1x4xf32>
    tpu.vector_store %arg11[%c0_24, %c1, %c0_25, %c0_26], %34 {strides = array<i32>} : memref<1x18x18x4xf32, #tpu.memory_space<vmem>>, vector<1x16x1x4xf32>,
    %c0_27 = arith.constant 0 : index
    %c1_28 = arith.constant 1 : index
    %c17_29 = arith.constant 17 : index
    %c0_30 = arith.constant 0 : index
    %38 = vector.load %arg11[%c0_27, %c1_28, %c17_29, %c0_30] : memref<1x18x18x4xf32, #tpu.memory_space<vmem>>, vector<1x16x1x4xf32>
    tpu.vector_store %arg11[%c0_27, %c1_28, %c17_29, %c0_30], %34 {strides = array<i32>} : memref<1x18x18x4xf32, #tpu.memory_space<vmem>>, vector<1x16x1x4xf32>,
    %c0_31 = arith.constant 0 : index
    %c1_32 = arith.constant 1 : index
    %c1_33 = arith.constant 1 : index
    %c0_34 = arith.constant 0 : index
    %39 = vector.load %arg11[%c0_31, %c1_32, %c1_33, %c0_34] : memref<1x18x18x4xf32, #tpu.memory_space<vmem>>, vector<1x16x16x4xf32>
    tpu.vector_store %arg11[%c0_31, %c1_32, %c1_33, %c0_34], %32 {strides = array<i32>} : memref<1x18x18x4xf32, #tpu.memory_space<vmem>>, vector<1x16x16x4xf32>,
    %cst_35 = arith.constant 0.000000e+00 : f32
    %40 = vector.broadcast %cst_35 : f32 to vector<256x4xf32>
    %c0_36 = arith.constant 0 : index
    %c0_37 = arith.constant 0 : index
    %c0_38 = arith.constant 0 : index
    %c0_39 = arith.constant 0 : index
    %41 = vector.load %arg11[%c0_36, %c0_37, %c0_38, %c0_39] : memref<1x18x18x4xf32, #tpu.memory_space<vmem>>, vector<1x16x16x4xf32>
    %42 = vector.shape_cast %41 : vector<1x16x16x4xf32> to vector<256x4xf32>
    %43 = arith.truncf %42 : vector<256x4xf32> to vector<256x4xbf16>
    %c0_40 = arith.constant 0 : index
    %c0_41 = arith.constant 0 : index
    %44 = vector.load %arg5[%c0_40, %c0_41] : memref<36x4xbf16, #tpu.memory_space<vmem>>, vector<4x4xbf16>
    %cst_42 = arith.constant dense<0.000000e+00> : vector<256x4xf32>
    %45 = tpu.matmul %43, %44, %cst_42 {dimension_numbers = #tpu.dot_dimension_numbers<[1], [0], [0], [1], [0, 0, 1, 1], [], []>} : vector<256x4xbf16>, vector<4x4xbf16>, vector<256x4xf32> -> vector<256x4xf32>
    %46 = arith.addf %40, %45 : vector<256x4xf32>
    %c0_43 = arith.constant 0 : index
    %c0_44 = arith.constant 0 : index
    %c1_45 = arith.constant 1 : index
    %c0_46 = arith.constant 0 : index
    %47 = vector.load %arg11[%c0_43, %c0_44, %c1_45, %c0_46] : memref<1x18x18x4xf32, #tpu.memory_space<vmem>>, vector<1x16x16x4xf32>
    %48 = vector.shape_cast %47 : vector<1x16x16x4xf32> to vector<256x4xf32>
    %49 = arith.truncf %48 : vector<256x4xf32> to vector<256x4xbf16>
    %c4 = arith.constant 4 : index
    %c0_47 = arith.constant 0 : index
    %50 = vector.load %arg5[%c4, %c0_47] : memref<36x4xbf16, #tpu.memory_space<vmem>>, vector<4x4xbf16>
    %cst_48 = arith.constant dense<0.000000e+00> : vector<256x4xf32>
    %51 = tpu.matmul %49, %50, %cst_48 {dimension_numbers = #tpu.dot_dimension_numbers<[1], [0], [0], [1], [0, 0, 1, 1], [], []>} : vector<256x4xbf16>, vector<4x4xbf16>, vector<256x4xf32> -> vector<256x4xf32>
    %52 = arith.addf %46, %51 : vector<256x4xf32>
    %c0_49 = arith.constant 0 : index
    %c0_50 = arith.constant 0 : index
    %c2 = arith.constant 2 : index
    %c0_51 = arith.constant 0 : index
    %53 = vector.load %arg11[%c0_49, %c0_50, %c2, %c0_51] : memref<1x18x18x4xf32, #tpu.memory_space<vmem>>, vector<1x16x16x4xf32>
    %54 = vector.shape_cast %53 : vector<1x16x16x4xf32> to vector<256x4xf32>
    %55 = arith.truncf %54 : vector<256x4xf32> to vector<256x4xbf16>
    %c8 = arith.constant 8 : index
    %c0_52 = arith.constant 0 : index
    %56 = vector.load %arg5[%c8, %c0_52] : memref<36x4xbf16, #tpu.memory_space<vmem>>, vector<4x4xbf16>
    %cst_53 = arith.constant dense<0.000000e+00> : vector<256x4xf32>
    %57 = tpu.matmul %55, %56, %cst_53 {dimension_numbers = #tpu.dot_dimension_numbers<[1], [0], [0], [1], [0, 0, 1, 1], [], []>} : vector<256x4xbf16>, vector<4x4xbf16>, vector<256x4xf32> -> vector<256x4xf32>
    %58 = arith.addf %52, %57 : vector<256x4xf32>
    %c0_54 = arith.constant 0 : index
    %c1_55 = arith.constant 1 : index
    %c0_56 = arith.constant 0 : index
    %c0_57 = arith.constant 0 : index
    %59 = vector.load %arg11[%c0_54, %c1_55, %c0_56, %c0_57] : memref<1x18x18x4xf32, #tpu.memory_space<vmem>>, vector<1x16x16x4xf32>
    %60 = vector.shape_cast %59 : vector<1x16x16x4xf32> to vector<256x4xf32>
    %61 = arith.truncf %60 : vector<256x4xf32> to vector<256x4xbf16>
    %c12 = arith.constant 12 : index
    %c0_58 = arith.constant 0 : index
    %62 = vector.load %arg5[%c12, %c0_58] : memref<36x4xbf16, #tpu.memory_space<vmem>>, vector<4x4xbf16>
    %cst_59 = arith.constant dense<0.000000e+00> : vector<256x4xf32>
    %63 = tpu.matmul %61, %62, %cst_59 {dimension_numbers = #tpu.dot_dimension_numbers<[1], [0], [0], [1], [0, 0, 1, 1], [], []>} : vector<256x4xbf16>, vector<4x4xbf16>, vector<256x4xf32> -> vector<256x4xf32>
    %64 = arith.addf %58, %63 : vector<256x4xf32>
    %c0_60 = arith.constant 0 : index
    %c1_61 = arith.constant 1 : index
    %c1_62 = arith.constant 1 : index
    %c0_63 = arith.constant 0 : index
    %65 = vector.load %arg11[%c0_60, %c1_61, %c1_62, %c0_63] : memref<1x18x18x4xf32, #tpu.memory_space<vmem>>, vector<1x16x16x4xf32>
    %66 = vector.shape_cast %65 : vector<1x16x16x4xf32> to vector<256x4xf32>
    %67 = arith.truncf %66 : vector<256x4xf32> to vector<256x4xbf16>
    %c16 = arith.constant 16 : index
    %c0_64 = arith.constant 0 : index
    %68 = vector.load %arg5[%c16, %c0_64] : memref<36x4xbf16, #tpu.memory_space<vmem>>, vector<4x4xbf16>
    %cst_65 = arith.constant dense<0.000000e+00> : vector<256x4xf32>
    %69 = tpu.matmul %67, %68, %cst_65 {dimension_numbers = #tpu.dot_dimension_numbers<[1], [0], [0], [1], [0, 0, 1, 1], [], []>} : vector<256x4xbf16>, vector<4x4xbf16>, vector<256x4xf32> -> vector<256x4xf32>
    %70 = arith.addf %64, %69 : vector<256x4xf32>
    %c0_66 = arith.constant 0 : index
    %c1_67 = arith.constant 1 : index
    %c2_68 = arith.constant 2 : index
    %c0_69 = arith.constant 0 : index
    %71 = vector.load %arg11[%c0_66, %c1_67, %c2_68, %c0_69] : memref<1x18x18x4xf32, #tpu.memory_space<vmem>>, vector<1x16x16x4xf32>
    %72 = vector.shape_cast %71 : vector<1x16x16x4xf32> to vector<256x4xf32>
    %73 = arith.truncf %72 : vector<256x4xf32> to vector<256x4xbf16>
    %c20 = arith.constant 20 : index
    %c0_70 = arith.constant 0 : index
    %74 = vector.load %arg5[%c20, %c0_70] : memref<36x4xbf16, #tpu.memory_space<vmem>>, vector<4x4xbf16>
    %cst_71 = arith.constant dense<0.000000e+00> : vector<256x4xf32>
    %75 = tpu.matmul %73, %74, %cst_71 {dimension_numbers = #tpu.dot_dimension_numbers<[1], [0], [0], [1], [0, 0, 1, 1], [], []>} : vector<256x4xbf16>, vector<4x4xbf16>, vector<256x4xf32> -> vector<256x4xf32>
    %76 = arith.addf %70, %75 : vector<256x4xf32>
    %c0_72 = arith.constant 0 : index
    %c2_73 = arith.constant 2 : index
    %c0_74 = arith.constant 0 : index
    %c0_75 = arith.constant 0 : index
    %77 = vector.load %arg11[%c0_72, %c2_73, %c0_74, %c0_75] : memref<1x18x18x4xf32, #tpu.memory_space<vmem>>, vector<1x16x16x4xf32>
    %78 = vector.shape_cast %77 : vector<1x16x16x4xf32> to vector<256x4xf32>
    %79 = arith.truncf %78 : vector<256x4xf32> to vector<256x4xbf16>
    %c24 = arith.constant 24 : index
    %c0_76 = arith.constant 0 : index
    %80 = vector.load %arg5[%c24, %c0_76] : memref<36x4xbf16, #tpu.memory_space<vmem>>, vector<4x4xbf16>
    %cst_77 = arith.constant dense<0.000000e+00> : vector<256x4xf32>
    %81 = tpu.matmul %79, %80, %cst_77 {dimension_numbers = #tpu.dot_dimension_numbers<[1], [0], [0], [1], [0, 0, 1, 1], [], []>} : vector<256x4xbf16>, vector<4x4xbf16>, vector<256x4xf32> -> vector<256x4xf32>
    %82 = arith.addf %76, %81 : vector<256x4xf32>
    %c0_78 = arith.constant 0 : index
    %c2_79 = arith.constant 2 : index
    %c1_80 = arith.constant 1 : index
    %c0_81 = arith.constant 0 : index
    %83 = vector.load %arg11[%c0_78, %c2_79, %c1_80, %c0_81] : memref<1x18x18x4xf32, #tpu.memory_space<vmem>>, vector<1x16x16x4xf32>
    %84 = vector.shape_cast %83 : vector<1x16x16x4xf32> to vector<256x4xf32>
    %85 = arith.truncf %84 : vector<256x4xf32> to vector<256x4xbf16>
    %c28 = arith.constant 28 : index
    %c0_82 = arith.constant 0 : index
    %86 = vector.load %arg5[%c28, %c0_82] : memref<36x4xbf16, #tpu.memory_space<vmem>>, vector<4x4xbf16>
    %cst_83 = arith.constant dense<0.000000e+00> : vector<256x4xf32>
    %87 = tpu.matmul %85, %86, %cst_83 {dimension_numbers = #tpu.dot_dimension_numbers<[1], [0], [0], [1], [0, 0, 1, 1], [], []>} : vector<256x4xbf16>, vector<4x4xbf16>, vector<256x4xf32> -> vector<256x4xf32>
    %88 = arith.addf %82, %87 : vector<256x4xf32>
    %c0_84 = arith.constant 0 : index
    %c2_85 = arith.constant 2 : index
    %c2_86 = arith.constant 2 : index
    %c0_87 = arith.constant 0 : index
    %89 = vector.load %arg11[%c0_84, %c2_85, %c2_86, %c0_87] : memref<1x18x18x4xf32, #tpu.memory_space<vmem>>, vector<1x16x16x4xf32>
    %90 = vector.shape_cast %89 : vector<1x16x16x4xf32> to vector<256x4xf32>
    %91 = arith.truncf %90 : vector<256x4xf32> to vector<256x4xbf16>
    %c32 = arith.constant 32 : index
    %c0_88 = arith.constant 0 : index
    %92 = vector.load %arg5[%c32, %c0_88] : memref<36x4xbf16, #tpu.memory_space<vmem>>, vector<4x4xbf16>
    %cst_89 = arith.constant dense<0.000000e+00> : vector<256x4xf32>
    %93 = tpu.matmul %91, %92, %cst_89 {dimension_numbers = #tpu.dot_dimension_numbers<[1], [0], [0], [1], [0, 0, 1, 1], [], []>} : vector<256x4xbf16>, vector<4x4xbf16>, vector<256x4xf32> -> vector<256x4xf32>
    %94 = arith.addf %88, %93 : vector<256x4xf32>
    %95 = vector.shape_cast %94 : vector<256x4xf32> to vector<1x256x4xf32>
    %c0_90 = arith.constant 0 : index
    %c0_91 = arith.constant 0 : index
    %96 = vector.load %arg6[%c0_90, %c0_91] : memref<1x4xf32, #tpu.memory_space<vmem>>, vector<1x4xf32>
    %c0_92 = arith.constant 0 : index
    %c0_93 = arith.constant 0 : index
    %97 = vector.load %arg7[%c0_92, %c0_93] : memref<1x4xf32, #tpu.memory_space<vmem>>, vector<1x4xf32>
    %c0_94 = arith.constant 0 : index
    %c0_95 = arith.constant 0 : index
    %98 = vector.load %arg8[%c0_94, %c0_95] : memref<4x4xf32, #tpu.memory_space<vmem>>, vector<4x4xf32>
    %cst_96 = arith.constant dense<0.000000e+00> : vector<1x4xf32>
    %99 = vector.multi_reduction <add>, %95, %cst_96 [1] : vector<1x256x4xf32> to vector<1x4xf32>
    %100 = arith.mulf %95, %95 : vector<1x256x4xf32>
    %cst_97 = arith.constant dense<0.000000e+00> : vector<1x4xf32>
    %101 = vector.multi_reduction <add>, %100, %cst_97 [1] : vector<1x256x4xf32> to vector<1x4xf32>
    %102 = tpu.concatenate %99, %101 in 0 : vector<1x4xf32>, vector<1x4xf32> -> vector<2x4xf32>
    %cst_98 = arith.constant dense<0.000000e+00> : vector<2x4xf32>
    %103 = tpu.matmul %102, %98, %cst_98 {dimension_numbers = #tpu.dot_dimension_numbers<[1], [0], [0], [1], [0, 0, 1, 1], [], []>} : vector<2x4xf32>, vector<4x4xf32>, vector<2x4xf32> -> vector<2x4xf32>
    %cst_99 = arith.constant 3.906250e-03 : f32
    %104 = vector.broadcast %cst_99 : f32 to vector<2x4xf32>
    %105 = arith.mulf %103, %104 : vector<2x4xf32>
    %106 = vector.extract_strided_slice %105 {offsets = [0, 0], sizes = [1, 4], strides = [1, 1]} : vector<2x4xf32> to vector<1x4xf32>
    %107 = vector.extract_strided_slice %105 {offsets = [1, 0], sizes = [1, 4], strides = [1, 1]} : vector<2x4xf32> to vector<1x4xf32>
    %108 = arith.mulf %106, %106 : vector<1x4xf32>
    %109 = arith.subf %107, %108 : vector<1x4xf32>
    %cst_100 = arith.constant 0.000000e+00 : f32
    %110 = vector.broadcast %cst_100 : f32 to vector<1x4xf32>
    %111 = arith.maximumf %109, %110 : vector<1x4xf32>
    %cst_101 = arith.constant 9.99999974E-6 : f32
    %112 = vector.broadcast %cst_101 : f32 to vector<1x4xf32>
    %113 = arith.addf %111, %112 : vector<1x4xf32>
    %114 = math.rsqrt %113 : vector<1x4xf32>
    %115 = arith.mulf %114, %96 : vector<1x4xf32>
    %116 = arith.mulf %106, %115 : vector<1x4xf32>
    %117 = arith.subf %97, %116 : vector<1x4xf32>
    %118 = vector.shape_cast %115 : vector<1x4xf32> to vector<1x1x4xf32>
    %119 = vector.broadcast %118 : vector<1x1x4xf32> to vector<1x256x4xf32>
    %120 = arith.mulf %95, %119 : vector<1x256x4xf32>
    %121 = vector.shape_cast %117 : vector<1x4xf32> to vector<1x1x4xf32>
    %122 = vector.broadcast %121 : vector<1x1x4xf32> to vector<1x256x4xf32>
    %123 = arith.addf %120, %122 : vector<1x256x4xf32>
    %cst_102 = arith.constant 0.000000e+00 : f32
    %124 = vector.broadcast %cst_102 : f32 to vector<1x256x4xf32>
    %125 = arith.maximumf %123, %124 : vector<1x256x4xf32>
    %126 = vector.shape_cast %125 : vector<1x256x4xf32> to vector<1x16x16x4xf32>
    %cst_103 = arith.constant 0.000000e+00 : f32
    %127 = vector.broadcast %cst_103 : f32 to vector<1x1x18x4xf32>
    %cst_104 = arith.constant 0.000000e+00 : f32
    %128 = vector.broadcast %cst_104 : f32 to vector<1x16x1x4xf32>
    %c0_105 = arith.constant 0 : index
    %c0_106 = arith.constant 0 : index
    %c0_107 = arith.constant 0 : index
    %c0_108 = arith.constant 0 : index
    %129 = vector.load %arg11[%c0_105, %c0_106, %c0_107, %c0_108] : memref<1x18x18x4xf32, #tpu.memory_space<vmem>>, vector<1x1x18x4xf32>
    tpu.vector_store %arg11[%c0_105, %c0_106, %c0_107, %c0_108], %127 {strides = array<i32>} : memref<1x18x18x4xf32, #tpu.memory_space<vmem>>, vector<1x1x18x4xf32>,
    %c0_109 = arith.constant 0 : index
    %c17_110 = arith.constant 17 : index
    %c0_111 = arith.constant 0 : index
    %c0_112 = arith.constant 0 : index
    %130 = vector.load %arg11[%c0_109, %c17_110, %c0_111, %c0_112] : memref<1x18x18x4xf32, #tpu.memory_space<vmem>>, vector<1x1x18x4xf32>
    tpu.vector_store %arg11[%c0_109, %c17_110, %c0_111, %c0_112], %127 {strides = array<i32>} : memref<1x18x18x4xf32, #tpu.memory_space<vmem>>, vector<1x1x18x4xf32>,
    %c0_113 = arith.constant 0 : index
    %c1_114 = arith.constant 1 : index
    %c0_115 = arith.constant 0 : index
    %c0_116 = arith.constant 0 : index
    %131 = vector.load %arg11[%c0_113, %c1_114, %c0_115, %c0_116] : memref<1x18x18x4xf32, #tpu.memory_space<vmem>>, vector<1x16x1x4xf32>
    tpu.vector_store %arg11[%c0_113, %c1_114, %c0_115, %c0_116], %128 {strides = array<i32>} : memref<1x18x18x4xf32, #tpu.memory_space<vmem>>, vector<1x16x1x4xf32>,
    %c0_117 = arith.constant 0 : index
    %c1_118 = arith.constant 1 : index
    %c17_119 = arith.constant 17 : index
    %c0_120 = arith.constant 0 : index
    %132 = vector.load %arg11[%c0_117, %c1_118, %c17_119, %c0_120] : memref<1x18x18x4xf32, #tpu.memory_space<vmem>>, vector<1x16x1x4xf32>
    tpu.vector_store %arg11[%c0_117, %c1_118, %c17_119, %c0_120], %128 {strides = array<i32>} : memref<1x18x18x4xf32, #tpu.memory_space<vmem>>, vector<1x16x1x4xf32>,
    %c0_121 = arith.constant 0 : index
    %c1_122 = arith.constant 1 : index
    %c1_123 = arith.constant 1 : index
    %c0_124 = arith.constant 0 : index
    %133 = vector.load %arg11[%c0_121, %c1_122, %c1_123, %c0_124] : memref<1x18x18x4xf32, #tpu.memory_space<vmem>>, vector<1x16x16x4xf32>
    tpu.vector_store %arg11[%c0_121, %c1_122, %c1_123, %c0_124], %126 {strides = array<i32>} : memref<1x18x18x4xf32, #tpu.memory_space<vmem>>, vector<1x16x16x4xf32>,
    %cst_125 = arith.constant 0.000000e+00 : f32
    %134 = vector.broadcast %cst_125 : f32 to vector<256x4xf32>
    %c0_126 = arith.constant 0 : index
    %c0_127 = arith.constant 0 : index
    %c0_128 = arith.constant 0 : index
    %c0_129 = arith.constant 0 : index
    %135 = vector.load %arg11[%c0_126, %c0_127, %c0_128, %c0_129] : memref<1x18x18x4xf32, #tpu.memory_space<vmem>>, vector<1x16x16x4xf32>
    %136 = vector.shape_cast %135 : vector<1x16x16x4xf32> to vector<256x4xf32>
    %137 = arith.truncf %136 : vector<256x4xf32> to vector<256x4xbf16>
    %c0_130 = arith.constant 0 : index
    %c0_131 = arith.constant 0 : index
    %138 = vector.load %arg9[%c0_130, %c0_131] : memref<36x4xbf16, #tpu.memory_space<vmem>>, vector<4x4xbf16>
    %cst_132 = arith.constant dense<0.000000e+00> : vector<256x4xf32>
    %139 = tpu.matmul %137, %138, %cst_132 {dimension_numbers = #tpu.dot_dimension_numbers<[1], [0], [0], [1], [0, 0, 1, 1], [], []>} : vector<256x4xbf16>, vector<4x4xbf16>, vector<256x4xf32> -> vector<256x4xf32>
    %140 = arith.addf %134, %139 : vector<256x4xf32>
    %c0_133 = arith.constant 0 : index
    %c0_134 = arith.constant 0 : index
    %c1_135 = arith.constant 1 : index
    %c0_136 = arith.constant 0 : index
    %141 = vector.load %arg11[%c0_133, %c0_134, %c1_135, %c0_136] : memref<1x18x18x4xf32, #tpu.memory_space<vmem>>, vector<1x16x16x4xf32>
    %142 = vector.shape_cast %141 : vector<1x16x16x4xf32> to vector<256x4xf32>
    %143 = arith.truncf %142 : vector<256x4xf32> to vector<256x4xbf16>
    %c4_137 = arith.constant 4 : index
    %c0_138 = arith.constant 0 : index
    %144 = vector.load %arg9[%c4_137, %c0_138] : memref<36x4xbf16, #tpu.memory_space<vmem>>, vector<4x4xbf16>
    %cst_139 = arith.constant dense<0.000000e+00> : vector<256x4xf32>
    %145 = tpu.matmul %143, %144, %cst_139 {dimension_numbers = #tpu.dot_dimension_numbers<[1], [0], [0], [1], [0, 0, 1, 1], [], []>} : vector<256x4xbf16>, vector<4x4xbf16>, vector<256x4xf32> -> vector<256x4xf32>
    %146 = arith.addf %140, %145 : vector<256x4xf32>
    %c0_140 = arith.constant 0 : index
    %c0_141 = arith.constant 0 : index
    %c2_142 = arith.constant 2 : index
    %c0_143 = arith.constant 0 : index
    %147 = vector.load %arg11[%c0_140, %c0_141, %c2_142, %c0_143] : memref<1x18x18x4xf32, #tpu.memory_space<vmem>>, vector<1x16x16x4xf32>
    %148 = vector.shape_cast %147 : vector<1x16x16x4xf32> to vector<256x4xf32>
    %149 = arith.truncf %148 : vector<256x4xf32> to vector<256x4xbf16>
    %c8_144 = arith.constant 8 : index
    %c0_145 = arith.constant 0 : index
    %150 = vector.load %arg9[%c8_144, %c0_145] : memref<36x4xbf16, #tpu.memory_space<vmem>>, vector<4x4xbf16>
    %cst_146 = arith.constant dense<0.000000e+00> : vector<256x4xf32>
    %151 = tpu.matmul %149, %150, %cst_146 {dimension_numbers = #tpu.dot_dimension_numbers<[1], [0], [0], [1], [0, 0, 1, 1], [], []>} : vector<256x4xbf16>, vector<4x4xbf16>, vector<256x4xf32> -> vector<256x4xf32>
    %152 = arith.addf %146, %151 : vector<256x4xf32>
    %c0_147 = arith.constant 0 : index
    %c1_148 = arith.constant 1 : index
    %c0_149 = arith.constant 0 : index
    %c0_150 = arith.constant 0 : index
    %153 = vector.load %arg11[%c0_147, %c1_148, %c0_149, %c0_150] : memref<1x18x18x4xf32, #tpu.memory_space<vmem>>, vector<1x16x16x4xf32>
    %154 = vector.shape_cast %153 : vector<1x16x16x4xf32> to vector<256x4xf32>
    %155 = arith.truncf %154 : vector<256x4xf32> to vector<256x4xbf16>
    %c12_151 = arith.constant 12 : index
    %c0_152 = arith.constant 0 : index
    %156 = vector.load %arg9[%c12_151, %c0_152] : memref<36x4xbf16, #tpu.memory_space<vmem>>, vector<4x4xbf16>
    %cst_153 = arith.constant dense<0.000000e+00> : vector<256x4xf32>
    %157 = tpu.matmul %155, %156, %cst_153 {dimension_numbers = #tpu.dot_dimension_numbers<[1], [0], [0], [1], [0, 0, 1, 1], [], []>} : vector<256x4xbf16>, vector<4x4xbf16>, vector<256x4xf32> -> vector<256x4xf32>
    %158 = arith.addf %152, %157 : vector<256x4xf32>
    %c0_154 = arith.constant 0 : index
    %c1_155 = arith.constant 1 : index
    %c1_156 = arith.constant 1 : index
    %c0_157 = arith.constant 0 : index
    %159 = vector.load %arg11[%c0_154, %c1_155, %c1_156, %c0_157] : memref<1x18x18x4xf32, #tpu.memory_space<vmem>>, vector<1x16x16x4xf32>
    %160 = vector.shape_cast %159 : vector<1x16x16x4xf32> to vector<256x4xf32>
    %161 = arith.truncf %160 : vector<256x4xf32> to vector<256x4xbf16>
    %c16_158 = arith.constant 16 : index
    %c0_159 = arith.constant 0 : index
    %162 = vector.load %arg9[%c16_158, %c0_159] : memref<36x4xbf16, #tpu.memory_space<vmem>>, vector<4x4xbf16>
    %cst_160 = arith.constant dense<0.000000e+00> : vector<256x4xf32>
    %163 = tpu.matmul %161, %162, %cst_160 {dimension_numbers = #tpu.dot_dimension_numbers<[1], [0], [0], [1], [0, 0, 1, 1], [], []>} : vector<256x4xbf16>, vector<4x4xbf16>, vector<256x4xf32> -> vector<256x4xf32>
    %164 = arith.addf %158, %163 : vector<256x4xf32>
    %c0_161 = arith.constant 0 : index
    %c1_162 = arith.constant 1 : index
    %c2_163 = arith.constant 2 : index
    %c0_164 = arith.constant 0 : index
    %165 = vector.load %arg11[%c0_161, %c1_162, %c2_163, %c0_164] : memref<1x18x18x4xf32, #tpu.memory_space<vmem>>, vector<1x16x16x4xf32>
    %166 = vector.shape_cast %165 : vector<1x16x16x4xf32> to vector<256x4xf32>
    %167 = arith.truncf %166 : vector<256x4xf32> to vector<256x4xbf16>
    %c20_165 = arith.constant 20 : index
    %c0_166 = arith.constant 0 : index
    %168 = vector.load %arg9[%c20_165, %c0_166] : memref<36x4xbf16, #tpu.memory_space<vmem>>, vector<4x4xbf16>
    %cst_167 = arith.constant dense<0.000000e+00> : vector<256x4xf32>
    %169 = tpu.matmul %167, %168, %cst_167 {dimension_numbers = #tpu.dot_dimension_numbers<[1], [0], [0], [1], [0, 0, 1, 1], [], []>} : vector<256x4xbf16>, vector<4x4xbf16>, vector<256x4xf32> -> vector<256x4xf32>
    %170 = arith.addf %164, %169 : vector<256x4xf32>
    %c0_168 = arith.constant 0 : index
    %c2_169 = arith.constant 2 : index
    %c0_170 = arith.constant 0 : index
    %c0_171 = arith.constant 0 : index
    %171 = vector.load %arg11[%c0_168, %c2_169, %c0_170, %c0_171] : memref<1x18x18x4xf32, #tpu.memory_space<vmem>>, vector<1x16x16x4xf32>
    %172 = vector.shape_cast %171 : vector<1x16x16x4xf32> to vector<256x4xf32>
    %173 = arith.truncf %172 : vector<256x4xf32> to vector<256x4xbf16>
    %c24_172 = arith.constant 24 : index
    %c0_173 = arith.constant 0 : index
    %174 = vector.load %arg9[%c24_172, %c0_173] : memref<36x4xbf16, #tpu.memory_space<vmem>>, vector<4x4xbf16>
    %cst_174 = arith.constant dense<0.000000e+00> : vector<256x4xf32>
    %175 = tpu.matmul %173, %174, %cst_174 {dimension_numbers = #tpu.dot_dimension_numbers<[1], [0], [0], [1], [0, 0, 1, 1], [], []>} : vector<256x4xbf16>, vector<4x4xbf16>, vector<256x4xf32> -> vector<256x4xf32>
    %176 = arith.addf %170, %175 : vector<256x4xf32>
    %c0_175 = arith.constant 0 : index
    %c2_176 = arith.constant 2 : index
    %c1_177 = arith.constant 1 : index
    %c0_178 = arith.constant 0 : index
    %177 = vector.load %arg11[%c0_175, %c2_176, %c1_177, %c0_178] : memref<1x18x18x4xf32, #tpu.memory_space<vmem>>, vector<1x16x16x4xf32>
    %178 = vector.shape_cast %177 : vector<1x16x16x4xf32> to vector<256x4xf32>
    %179 = arith.truncf %178 : vector<256x4xf32> to vector<256x4xbf16>
    %c28_179 = arith.constant 28 : index
    %c0_180 = arith.constant 0 : index
    %180 = vector.load %arg9[%c28_179, %c0_180] : memref<36x4xbf16, #tpu.memory_space<vmem>>, vector<4x4xbf16>
    %cst_181 = arith.constant dense<0.000000e+00> : vector<256x4xf32>
    %181 = tpu.matmul %179, %180, %cst_181 {dimension_numbers = #tpu.dot_dimension_numbers<[1], [0], [0], [1], [0, 0, 1, 1], [], []>} : vector<256x4xbf16>, vector<4x4xbf16>, vector<256x4xf32> -> vector<256x4xf32>
    %182 = arith.addf %176, %181 : vector<256x4xf32>
    %c0_182 = arith.constant 0 : index
    %c2_183 = arith.constant 2 : index
    %c2_184 = arith.constant 2 : index
    %c0_185 = arith.constant 0 : index
    %183 = vector.load %arg11[%c0_182, %c2_183, %c2_184, %c0_185] : memref<1x18x18x4xf32, #tpu.memory_space<vmem>>, vector<1x16x16x4xf32>
    %184 = vector.shape_cast %183 : vector<1x16x16x4xf32> to vector<256x4xf32>
    %185 = arith.truncf %184 : vector<256x4xf32> to vector<256x4xbf16>
    %c32_186 = arith.constant 32 : index
    %c0_187 = arith.constant 0 : index
    %186 = vector.load %arg9[%c32_186, %c0_187] : memref<36x4xbf16, #tpu.memory_space<vmem>>, vector<4x4xbf16>
    %cst_188 = arith.constant dense<0.000000e+00> : vector<256x4xf32>
    %187 = tpu.matmul %185, %186, %cst_188 {dimension_numbers = #tpu.dot_dimension_numbers<[1], [0], [0], [1], [0, 0, 1, 1], [], []>} : vector<256x4xbf16>, vector<4x4xbf16>, vector<256x4xf32> -> vector<256x4xf32>
    %188 = arith.addf %182, %187 : vector<256x4xf32>
    %c0_189 = arith.constant 0 : index
    %c0_190 = arith.constant 0 : index
    %c0_191 = arith.constant 0 : index
    %c0_192 = arith.constant 0 : index
    %189 = vector.load %arg1[%c0_189, %c0_190, %c0_191, %c0_192] : memref<1x16x16x4xf32, #tpu.memory_space<vmem>>, vector<1x16x16x4xf32>
    %190 = vector.shape_cast %189 : vector<1x16x16x4xf32> to vector<256x4xf32>
    %191 = arith.addf %188, %190 : vector<256x4xf32>
    %192 = vector.shape_cast %191 : vector<256x4xf32> to vector<1x16x16x4xf32>
    %c0_193 = arith.constant 0 : index
    %c0_194 = arith.constant 0 : index
    %c0_195 = arith.constant 0 : index
    %c0_196 = arith.constant 0 : index
    %193 = vector.load %arg10[%c0_193, %c0_194, %c0_195, %c0_196] : memref<1x16x16x4xf32, #tpu.memory_space<vmem>>, vector<1x16x16x4xf32>
    tpu.vector_store %arg10[%c0_193, %c0_194, %c0_195, %c0_196], %192 {strides = array<i32>} : memref<1x16x16x4xf32, #tpu.memory_space<vmem>>, vector<1x16x16x4xf32>,
    return
  }
  func.func @transform_0(%arg0: i32) -> (i32, i32, i32, i32) {
    %c0_i32 = arith.constant 0 : i32
    %c0_i32_0 = arith.constant 0 : i32
    %c0_i32_1 = arith.constant 0 : i32
    %c0_i32_2 = arith.constant 0 : i32
    return %arg0, %c0_i32, %c0_i32_0, %c0_i32_1 : i32, i32, i32, i32
  }
  func.func @transform_1(%arg0: i32) -> (i32, i32) {
    %c0_i32 = arith.constant 0 : i32
    %c0_i32_0 = arith.constant 0 : i32
    %c0_i32_1 = arith.constant 0 : i32
    return %c0_i32, %c0_i32_0 : i32, i32
  }
  func.func @transform_2(%arg0: i32) -> (i32, i32) {
    %c0_i32 = arith.constant 0 : i32
    %c0_i32_0 = arith.constant 0 : i32
    %c0_i32_1 = arith.constant 0 : i32
    return %c0_i32, %c0_i32_0 : i32, i32
  }
  func.func @transform_3(%arg0: i32) -> (i32, i32) {
    %c0_i32 = arith.constant 0 : i32
    %c0_i32_0 = arith.constant 0 : i32
    %c0_i32_1 = arith.constant 0 : i32
    return %c0_i32, %c0_i32_0 : i32, i32
  }
  func.func @transform_4(%arg0: i32) -> (i32, i32) {
    %c0_i32 = arith.constant 0 : i32
    %c0_i32_0 = arith.constant 0 : i32
    %c0_i32_1 = arith.constant 0 : i32
    return %c0_i32, %c0_i32_0 : i32, i32
  }
  func.func @transform_5(%arg0: i32) -> (i32, i32) {
    %c0_i32 = arith.constant 0 : i32
    %c0_i32_0 = arith.constant 0 : i32
    %c0_i32_1 = arith.constant 0 : i32
    return %c0_i32, %c0_i32_0 : i32, i32
  }
  func.func @transform_6(%arg0: i32) -> (i32, i32) {
    %c0_i32 = arith.constant 0 : i32
    %c0_i32_0 = arith.constant 0 : i32
    %c0_i32_1 = arith.constant 0 : i32
    return %c0_i32, %c0_i32_0 : i32, i32
  }
  func.func @transform_7(%arg0: i32) -> (i32, i32) {
    %c0_i32 = arith.constant 0 : i32
    %c0_i32_0 = arith.constant 0 : i32
    %c0_i32_1 = arith.constant 0 : i32
    return %c0_i32, %c0_i32_0 : i32, i32
  }
  func.func @transform_8(%arg0: i32) -> (i32, i32) {
    %c0_i32 = arith.constant 0 : i32
    %c0_i32_0 = arith.constant 0 : i32
    %c0_i32_1 = arith.constant 0 : i32
    return %c0_i32, %c0_i32_0 : i32, i32
  }
  func.func @transform_9(%arg0: i32) -> (i32, i32, i32, i32) {
    %c0_i32 = arith.constant 0 : i32
    %c0_i32_0 = arith.constant 0 : i32
    %c0_i32_1 = arith.constant 0 : i32
    %c0_i32_2 = arith.constant 0 : i32
    return %arg0, %c0_i32, %c0_i32_0, %c0_i32_1 : i32, i32, i32, i32
  }
}

</mosaic_0001>

<llo_original>
// kernel: tpu_custom_call.1
$region0: #{tpu_custom_call.1}
  #allocation0 [shape = 'u32[]', space=smem, size = 0x4, offset = 0x4, fixed_abs, tag = 'smem constant byte address 0x4 - core index']
  #allocation1 [shape = 'u32[144,128]{1,0:T(1,128)}', space=vmem, size = 0x12000, scoped, tag = 'internal scratch']
  #allocation2 [shape = 'f32[1,18,18,4]{3,2,1,0:T(8,128)}', space=vmem, size = 0x36000, scoped, tag = 'scratch operand']
  %s0 = inlined_call_operand.vmem [shape: f32[2,16,16,4], index: 0, kind: input, shape index: {}]
  %s1 = inlined_call_operand.vmem [shape: f32[1,4], index: 1, kind: input, shape index: {}]
  %s2 = inlined_call_operand.vmem [shape: f32[1,4], index: 2, kind: input, shape index: {}]
  %s3 = inlined_call_operand.vmem [shape: f32[4,4], index: 3, kind: input, shape index: {}]
  %s4 = inlined_call_operand.vmem [shape: bf16[36,4], index: 4, kind: input, shape index: {}]
  %s5 = inlined_call_operand.vmem [shape: f32[1,4], index: 5, kind: input, shape index: {}]
  %s6 = inlined_call_operand.vmem [shape: f32[1,4], index: 6, kind: input, shape index: {}]
  %s7 = inlined_call_operand.vmem [shape: f32[4,4], index: 7, kind: input, shape index: {}]
  %s8 = inlined_call_operand.vmem [shape: bf16[36,4], index: 8, kind: input, shape index: {}]
  %s9 = inlined_call_operand.vmem [shape: f32[2,16,16,4], index: 9, kind: output, shape index: {}]
  %s10 = sld [smem:[#allocation0]]
  $region69: #{tpu_custom_call.1} parent=0
    _
  %s12 = ssub.s32 1, %s10
  %s13 = scalar_select 0, %s12, %s10
  loop: start=0, step=1, limit=4
  $region2: #{tpu_custom_call.1} parent=0 // loop_pre_header
    _
  $region3: #{tpu_custom_call.1} parent=0 // loop_header
    %s15 = sphi 0, %s19
    %p16 = scmp.ge.s32.totalorder %s15, 4
    %s25 = sphi 0, %s27
    %s28 = sphi 0, %s25
    %s29 = sphi 0, %s28
    %s45 = sphi 0, %s29
    %s49 = sphi 0, %s49
    %s51 = sphi 0, %s49
    %s52 = sphi 0, %s51
    %s66 = sphi 0, %s52
    %s70 = sphi 0, %s70
    %s72 = sphi 0, %s70
    %s73 = sphi 0, %s72
    %s87 = sphi 0, %s73
    %s91 = sphi 0, %s91
    %s93 = sphi 0, %s91
    %s94 = sphi 0, %s93
    %s108 = sphi 0, %s94
    %s112 = sphi 0, %s112
    %s114 = sphi 0, %s112
    %s115 = sphi 0, %s114
    %s129 = sphi 0, %s115
    %s133 = sphi 0, %s133
    %s135 = sphi 0, %s133
    %s136 = sphi 0, %s135
    %s150 = sphi 0, %s136
    %s154 = sphi 0, %s154
    %s156 = sphi 0, %s154
    %s157 = sphi 0, %s156
    %s171 = sphi 0, %s157
    %s175 = sphi 0, %s175
    %s177 = sphi 0, %s175
    %s178 = sphi 0, %s177
    %s192 = sphi 0, %s178
    %s196 = sphi 0, %s196
    %s198 = sphi 0, %s196
    %s199 = sphi 0, %s198
    %s213 = sphi 0, %s199
    %s219 = sphi 0, %s221
    %s222 = sphi 0, %s219
    %s223 = sphi 0, %s222
    %s239 = sphi 0, %s223
  $region4: #{tpu_custom_call.1} parent=0 // loop_header_branch
    %18 = sbr.rel (%p16) target = $region8
  $region5: #{tpu_custom_call.1} parent=0 // loop_body
    %s20 = ssub.s32 %s15, 1
    %s21 = ssub.s32 %s15, 2
    %s22 = sadd.s32 %s15, 1
    %s23 = ssub.s32 %s15, %s22
    %p24 = scmp.eq.s32.totalorder %s23, 0
    %s26 = sadd.s32 %s25, 1
    %s27 = scalar_select %p24, %s25, %s26
    %p30 = pneg %p24
    %p31 = scmp.eq.s32.totalorder %s15, 1
    %p32 = por %p30, %p31
    %p33 = scmp.ne.s32.totalorder %s25, %s28
    %p34 = scmp.eq.s32.totalorder %s15, 0
    %p35 = por %p33, %p34
    %p36 = scmp.ne.s32.totalorder %s25, %s28
    %p37 = scmp.eq.s32.totalorder %s20, 1
    %p38 = por %p36, %p37
    %p39 = scmp.ne.s32.totalorder %s28, %s29
    %p40 = scmp.eq.s32.totalorder %s20, 0
    %p41 = por %p39, %p40
    %p42 = scmp.ne.s32.totalorder %s28, %s29
    %p43 = scmp.eq.s32.totalorder %s21, 1
    %p44 = por %p42, %p43
    %p46 = scmp.ne.s32.totalorder %s29, %s45
    %p47 = scmp.eq.s32.totalorder %s21, 0
    %p48 = por %p46, %p47
    %s50 = sadd.s32 %s49, 1
    %p53 = scmp.eq.s32.totalorder %s15, 1
    %p54 = scmp.ne.s32.totalorder %s49, %s51
    %p55 = scmp.eq.s32.totalorder %s15, 0
    %p56 = por %p54, %p55
    %p57 = scmp.ne.s32.totalorder %s49, %s51
    %p58 = scmp.eq.s32.totalorder %s20, 1
    %p59 = por %p57, %p58
    %p60 = scmp.ne.s32.totalorder %s51, %s52
    %p61 = scmp.eq.s32.totalorder %s20, 0
    %p62 = por %p60, %p61
    %p63 = scmp.ne.s32.totalorder %s51, %s52
    %p64 = scmp.eq.s32.totalorder %s21, 1
    %p65 = por %p63, %p64
    %p67 = scmp.ne.s32.totalorder %s52, %s66
    %p68 = scmp.eq.s32.totalorder %s21, 0
    %p69 = por %p67, %p68
    %s71 = sadd.s32 %s70, 1
    %p74 = scmp.eq.s32.totalorder %s15, 1
    %p75 = scmp.ne.s32.totalorder %s70, %s72
    %p76 = scmp.eq.s32.totalorder %s15, 0
    %p77 = por %p75, %p76
    %p78 = scmp.ne.s32.totalorder %s70, %s72
    %p79 = scmp.eq.s32.totalorder %s20, 1
    %p80 = por %p78, %p79
    %p81 = scmp.ne.s32.totalorder %s72, %s73
    %p82 = scmp.eq.s32.totalorder %s20, 0
    %p83 = por %p81, %p82
    %p84 = scmp.ne.s32.totalorder %s72, %s73
    %p85 = scmp.eq.s32.totalorder %s21, 1
    %p86 = por %p84, %p85
    %p88 = scmp.ne.s32.totalorder %s73, %s87
    %p89 = scmp.eq.s32.totalorder %s21, 0
    %p90 = por %p88, %p89
    %s92 = sadd.s32 %s91, 1
    %p95 = scmp.eq.s32.totalorder %s15, 1
    %p96 = scmp.ne.s32.totalorder %s91, %s93
    %p97 = scmp.eq.s32.totalorder %s15, 0
    %p98 = por %p96, %p97
    %p99 = scmp.ne.s32.totalorder %s91, %s93
    %p100 = scmp.eq.s32.totalorder %s20, 1
    %p101 = por %p99, %p100
    %p102 = scmp.ne.s32.totalorder %s93, %s94
    %p103 = scmp.eq.s32.totalorder %s20, 0
    %p104 = por %p102, %p103
    %p105 = scmp.ne.s32.totalorder %s93, %s94
    %p106 = scmp.eq.s32.totalorder %s21, 1
    %p107 = por %p105, %p106
    %p109 = scmp.ne.s32.totalorder %s94, %s108
    %p110 = scmp.eq.s32.totalorder %s21, 0
    %p111 = por %p109, %p110
    %s113 = sadd.s32 %s112, 1
    %p116 = scmp.eq.s32.totalorder %s15, 1
    %p117 = scmp.ne.s32.totalorder %s112, %s114
    %p118 = scmp.eq.s32.totalorder %s15, 0
    %p119 = por %p117, %p118
    %p120 = scmp.ne.s32.totalorder %s112, %s114
    %p121 = scmp.eq.s32.totalorder %s20, 1
    %p122 = por %p120, %p121
    %p123 = scmp.ne.s32.totalorder %s114, %s115
    %p124 = scmp.eq.s32.totalorder %s20, 0
    %p125 = por %p123, %p124
    %p126 = scmp.ne.s32.totalorder %s114, %s115
    %p127 = scmp.eq.s32.totalorder %s21, 1
    %p128 = por %p126, %p127
    %p130 = scmp.ne.s32.totalorder %s115, %s129
    %p131 = scmp.eq.s32.totalorder %s21, 0
    %p132 = por %p130, %p131
    %s134 = sadd.s32 %s133, 1
    %p137 = scmp.eq.s32.totalorder %s15, 1
    %p138 = scmp.ne.s32.totalorder %s133, %s135
    %p139 = scmp.eq.s32.totalorder %s15, 0
    %p140 = por %p138, %p139
    %p141 = scmp.ne.s32.totalorder %s133, %s135
    %p142 = scmp.eq.s32.totalorder %s20, 1
    %p143 = por %p141, %p142
    %p144 = scmp.ne.s32.totalorder %s135, %s136
    %p145 = scmp.eq.s32.totalorder %s20, 0
    %p146 = por %p144, %p145
    %p147 = scmp.ne.s32.totalorder %s135, %s136
    %p148 = scmp.eq.s32.totalorder %s21, 1
    %p149 = por %p147, %p148
    %p151 = scmp.ne.s32.totalorder %s136, %s150
    %p152 = scmp.eq.s32.totalorder %s21, 0
    %p153 = por %p151, %p152
    %s155 = sadd.s32 %s154, 1
    %p158 = scmp.eq.s32.totalorder %s15, 1
    %p159 = scmp.ne.s32.totalorder %s154, %s156
    %p160 = scmp.eq.s32.totalorder %s15, 0
    %p161 = por %p159, %p160
    %p162 = scmp.ne.s32.totalorder %s154, %s156
    %p163 = scmp.eq.s32.totalorder %s20, 1
    %p164 = por %p162, %p163
    %p165 = scmp.ne.s32.totalorder %s156, %s157
    %p166 = scmp.eq.s32.totalorder %s20, 0
    %p167 = por %p165, %p166
    %p168 = scmp.ne.s32.totalorder %s156, %s157
    %p169 = scmp.eq.s32.totalorder %s21, 1
    %p170 = por %p168, %p169
    %p172 = scmp.ne.s32.totalorder %s157, %s171
    %p173 = scmp.eq.s32.totalorder %s21, 0
    %p174 = por %p172, %p173
    %s176 = sadd.s32 %s175, 1
    %p179 = scmp.eq.s32.totalorder %s15, 1
    %p180 = scmp.ne.s32.totalorder %s175, %s177
    %p181 = scmp.eq.s32.totalorder %s15, 0
    %p182 = por %p180, %p181
    %p183 = scmp.ne.s32.totalorder %s175, %s177
    %p184 = scmp.eq.s32.totalorder %s20, 1
    %p185 = por %p183, %p184
    %p186 = scmp.ne.s32.totalorder %s177, %s178
    %p187 = scmp.eq.s32.totalorder %s20, 0
    %p188 = por %p186, %p187
    %p189 = scmp.ne.s32.totalorder %s177, %s178
    %p190 = scmp.eq.s32.totalorder %s21, 1
    %p191 = por %p189, %p190
    %p193 = scmp.ne.s32.totalorder %s178, %s192
    %p194 = scmp.eq.s32.totalorder %s21, 0
    %p195 = por %p193, %p194
    %s197 = sadd.s32 %s196, 1
    %p200 = scmp.eq.s32.totalorder %s15, 1
    %p201 = scmp.ne.s32.totalorder %s196, %s198
    %p202 = scmp.eq.s32.totalorder %s15, 0
    %p203 = por %p201, %p202
    %p204 = scmp.ne.s32.totalorder %s196, %s198
    %p205 = scmp.eq.s32.totalorder %s20, 1
    %p206 = por %p204, %p205
    %p207 = scmp.ne.s32.totalorder %s198, %s199
    %p208 = scmp.eq.s32.totalorder %s20, 0
    %p209 = por %p207, %p208
    %p210 = scmp.ne.s32.totalorder %s198, %s199
    %p211 = scmp.eq.s32.totalorder %s21, 1
    %p212 = por %p210, %p211
    %p214 = scmp.ne.s32.totalorder %s199, %s213
    %p215 = scmp.eq.s32.totalorder %s21, 0
    %p216 = por %p214, %p215
    %s217 = ssub.s32 %s15, %s22
    %p218 = scmp.eq.s32.totalorder %s217, 0
    %s220 = sadd.s32 %s219, 1
    %s221 = scalar_select %p218, %s219, %s220
    %p224 = pneg %p218
    %p225 = scmp.eq.s32.totalorder %s15, 1
    %p226 = por %p224, %p225
    %p227 = scmp.ne.s32.totalorder %s219, %s222
    %p228 = scmp.eq.s32.totalorder %s15, 0
    %p229 = por %p227, %p228
    %p230 = scmp.ne.s32.totalorder %s219, %s222
    %p231 = scmp.eq.s32.totalorder %s20, 1
    %p232 = por %p230, %p231
    %p233 = scmp.ne.s32.totalorder %s222, %s223
    %p234 = scmp.eq.s32.totalorder %s20, 0
    %p235 = por %p233, %p234
    %p236 = scmp.ne.s32.totalorder %s222, %s223
    %p237 = scmp.eq.s32.totalorder %s21, 1
    %p238 = por %p236, %p237
    %p240 = scmp.ne.s32.totalorder %s223, %s239
    %p241 = scmp.eq.s32.totalorder %s21, 0
    %p242 = por %p240, %p241
    %p243 = scmp.le.s32.totalorder 1, %s15
    %p244 = scmp.lt.s32.totalorder %s15, 3
    %p245 = pnand %p243, %p244
    %p246 = pneg %p245
    // Predicated region
    $region9: #{tpu_custom_call.1} parent=5 // pred_check
      _
    $region10: #{tpu_custom_call.1} parent=5 // pred_check_branch
      %248 = sbr.rel (%p245) target = $region12
    $region11: #{tpu_custom_call.1} parent=5 // pred_region
      %s249 = ssub.s32 %s15, 1
      // Predicated region
      $region13: #{tpu_custom_call.1} parent=11 // pred_check
        %p250 = pneg %p62
      $region14: #{tpu_custom_call.1} parent=11 // pred_check_branch
        %252 = sbr.rel (%p250) target = $region16
      $region15: #{tpu_custom_call.1} parent=11 // pred_region
        _
      $region16: #{tpu_custom_call.1} parent=11 // pred_fallthru
        _
      // Predicated region
      $region17: #{tpu_custom_call.1} parent=11 // pred_check
        %p253 = pneg %p83
      $region18: #{tpu_custom_call.1} parent=11 // pred_check_branch
        %255 = sbr.rel (%p253) target = $region20
      $region19: #{tpu_custom_call.1} parent=11 // pred_region
        _
      $region20: #{tpu_custom_call.1} parent=11 // pred_fallthru
        _
      // Predicated region
      $region21: #{tpu_custom_call.1} parent=11 // pred_check
        %p256 = pneg %p104
      $region22: #{tpu_custom_call.1} parent=11 // pred_check_branch
        %258 = sbr.rel (%p256) target = $region24
      $region23: #{tpu_custom_call.1} parent=11 // pred_region
        _
      $region24: #{tpu_custom_call.1} parent=11 // pred_fallthru
        _
      // Predicated region
      $region25: #{tpu_custom_call.1} parent=11 // pred_check
        %p259 = pneg %p125
      $region26: #{tpu_custom_call.1} parent=11 // pred_check_branch
        %261 = sbr.rel (%p259) target = $region28
      $region27: #{tpu_custom_call.1} parent=11 // pred_region
        _
      $region28: #{tpu_custom_call.1} parent=11 // pred_fallthru
        _
      // Predicated region
      $region29: #{tpu_custom_call.1} parent=11 // pred_check
        %p262 = pneg %p146
      $region30: #{tpu_custom_call.1} parent=11 // pred_check_branch
        %264 = sbr.rel (%p262) target = $region32
      $region31: #{tpu_custom_call.1} parent=11 // pred_region
        _
      $region32: #{tpu_custom_call.1} parent=11 // pred_fallthru
        _
      // Predicated region
      $region33: #{tpu_custom_call.1} parent=11 // pred_check
        %p265 = pneg %p167
      $region34: #{tpu_custom_call.1} parent=11 // pred_check_branch
        %267 = sbr.rel (%p265) target = $region36
      $region35: #{tpu_custom_call.1} parent=11 // pred_region
        _
      $region36: #{tpu_custom_call.1} parent=11 // pred_fallthru
        _
      // Predicated region
      $region37: #{tpu_custom_call.1} parent=11 // pred_check
        %p268 = pneg %p188
      $region38: #{tpu_custom_call.1} parent=11 // pred_check_branch
        %270 = sbr.rel (%p268) target = $region40
      $region39: #{tpu_custom_call.1} parent=11 // pred_region
        _
      $region40: #{tpu_custom_call.1} parent=11 // pred_fallthru
        _
      // Predicated region
      $region41: #{tpu_custom_call.1} parent=11 // pred_check
        %p271 = pneg %p209
      $region42: #{tpu_custom_call.1} parent=11 // pred_check_branch
        %273 = sbr.rel (%p271) target = $region44
      $region43: #{tpu_custom_call.1} parent=11 // pred_region
        _
      $region44: #{tpu_custom_call.1} parent=11 // pred_fallthru
        _
    $region12: #{tpu_custom_call.1} parent=5 // pred_fallthru
      _
    %p274 = scmp.lt.s32.totalorder %s15, 2
    // Predicated region
    $region45: #{tpu_custom_call.1} parent=5 // pred_check
      %p275 = pneg %p274
    $region46: #{tpu_custom_call.1} parent=5 // pred_check_branch
      %277 = sbr.rel (%p275) target = $region48
    $region47: #{tpu_custom_call.1} parent=5 // pred_region
      // Predicated region
      $region49: #{tpu_custom_call.1} parent=47 // pred_check
        %p278 = pneg %p35
      $region50: #{tpu_custom_call.1} parent=47 // pred_check_branch
        %280 = sbr.rel (%p278) target = $region52
      $region51: #{tpu_custom_call.1} parent=47 // pred_region
        %p281 = scmp.lt.s32.totalorder %s15, 1
        %s282 = scalar_select %p281, %s15, 1
        %s283 = smul.addr %s282, 32
        %s284 = smul.addr %s283, 8
        %s285 = scalar_lea.vmem %s0, %s284
      $region52: #{tpu_custom_call.1} parent=47 // pred_fallthru
        _
    $region48: #{tpu_custom_call.1} parent=5 // pred_fallthru
      _
    %p286 = scmp.le.s32.totalorder 1, %s15
    %p287 = scmp.lt.s32.totalorder %s15, 3
    %p288 = pnand %p286, %p287
    %p289 = pneg %p288
    // Predicated region
    $region53: #{tpu_custom_call.1} parent=5 // pred_check
      _
    $region54: #{tpu_custom_call.1} parent=5 // pred_check_branch
      %291 = sbr.rel (%p288) target = $region56
    $region55: #{tpu_custom_call.1} parent=5 // pred_region
      %s292 = ssub.s32 %s15, 1
      %p293 = scmp.lt.s32.totalorder %s20, 1
      %s294 = scalar_select %p293, %s20, 1
      %s295 = smul.addr %s294, 32
      %s296 = smul.addr %s295, 8
      %s297 = scalar_lea.vmem %s0, %s296
      %p298 = pneg %p41
      %p299 = pneg %p38
      %p300 = pneg %p62
      %p301 = pneg %p59
      %p302 = pneg %p83
      %p303 = pneg %p80
      %p304 = pneg %p104
      %p305 = pneg %p101
      %p306 = pneg %p125
      %p307 = pneg %p122
      %p308 = pneg %p146
      %p309 = pneg %p143
      %p310 = pneg %p167
      %p311 = pneg %p164
      %p312 = pneg %p188
      %p313 = pneg %p185
      %p314 = pneg %p209
      %p315 = pneg %p206
      %p316 = pneg %p235
      %p317 = pneg %p232
      %p318 = scmp.lt.s32.totalorder %s20, 1
      %s319 = scalar_select %p318, %s20, 1
      %s320 = smul.addr %s319, 32
      %s321 = smul.addr %s320, 8
      %s322 = scalar_lea.vmem %s9, %s321
      %p323 = scmp.lt.s32.totalorder %s20, 1
      %s324 = scalar_select %p323, %s20, 1
      %s325 = smul.addr %s324, 32
      %s326 = smul.addr %s325, 8
      %s327 = scalar_lea.vmem %s0, %s326
      %p328 = scmp.lt.s32.totalorder %s20, 1
      %s329 = scalar_select %p328, %s20, 1
      %s330 = smul.addr %s329, 32
      %s331 = smul.addr %s330, 8
      %s332 = scalar_lea.vmem %s9, %s331
      %v334 = vld [vmem:[%s327] sm:$0xff]
      %v335 = vld [vmem:[%s327 + $0x8] sm:$0xff]
      %v336 = vld [vmem:[%s327 + $0x10] sm:$0xff]
      %v337 = vld [vmem:[%s327 + $0x18] sm:$0xff]
      %v338 = vld [vmem:[%s327 + $0x20] sm:$0xff]
      %v339 = vld [vmem:[%s327 + $0x28] sm:$0xff]
      %v340 = vld [vmem:[%s327 + $0x30] sm:$0xff]
      %v341 = vld [vmem:[%s327 + $0x38] sm:$0xff]
      %v342 = vld [vmem:[%s327 + $0x40] sm:$0xff]
      %v343 = vld [vmem:[%s327 + $0x48] sm:$0xff]
      %v344 = vld [vmem:[%s327 + $0x50] sm:$0xff]
      %v345 = vld [vmem:[%s327 + $0x58] sm:$0xff]
      %v346 = vld [vmem:[%s327 + $0x60] sm:$0xff]
      %v347 = vld [vmem:[%s327 + $0x68] sm:$0xff]
      %v348 = vld [vmem:[%s327 + $0x70] sm:$0xff]
      %v349 = vld [vmem:[%s327 + $0x78] sm:$0xff]
      %v350 = vld [vmem:[%s327 + $0x80] sm:$0xff]
      %v351 = vld [vmem:[%s327 + $0x88] sm:$0xff]
      %v352 = vld [vmem:[%s327 + $0x90] sm:$0xff]
      %v353 = vld [vmem:[%s327 + $0x98] sm:$0xff]
      %v354 = vld [vmem:[%s327 + $0xa0] sm:$0xff]
      %v355 = vld [vmem:[%s327 + $0xa8] sm:$0xff]
      %v356 = vld [vmem:[%s327 + $0xb0] sm:$0xff]
      %v357 = vld [vmem:[%s327 + $0xb8] sm:$0xff]
      %v358 = vld [vmem:[%s327 + $0xc0] sm:$0xff]
      %v359 = vld [vmem:[%s327 + $0xc8] sm:$0xff]
      %v360 = vld [vmem:[%s327 + $0xd0] sm:$0xff]
      %v361 = vld [vmem:[%s327 + $0xd8] sm:$0xff]
      %v362 = vld [vmem:[%s327 + $0xe0] sm:$0xff]
      %v363 = vld [vmem:[%s327 + $0xe8] sm:$0xff]
      %v364 = vld [vmem:[%s327 + $0xf0] sm:$0xff]
      %v365 = vld [vmem:[%s327 + $0xf8] sm:$0xff]
      %v366 = vld [vmem:[%s1] sm:$0x1]
      %v367 = vld [vmem:[%s2] sm:$0x1]
      %v368 = vld [vmem:[%s3] sm:$0xf]
      %vm369 = vcmask 31744
      %v370 = vsel %vm369, %v334, 0.0
      %v371 = vsel %vm369, %v335, 0.0
      %v372 = vadd.f32 %v370, %v371
      %v373 = vsel %vm369, %v336, 0.0
      %v374 = vadd.f32 %v372, %v373
      %v375 = vsel %vm369, %v337, 0.0
      %v376 = vadd.f32 %v374, %v375
      %v377 = vsel %vm369, %v338, 0.0
      %v378 = vadd.f32 %v376, %v377
      %v379 = vsel %vm369, %v339, 0.0
      %v380 = vadd.f32 %v378, %v379
      %v381 = vsel %vm369, %v340, 0.0
      %v382 = vadd.f32 %v380, %v381
      %v383 = vsel %vm369, %v341, 0.0
      %v384 = vadd.f32 %v382, %v383
      %v385 = vsel %vm369, %v342, 0.0
      %v386 = vadd.f32 %v384, %v385
      %v387 = vsel %vm369, %v343, 0.0
      %v388 = vadd.f32 %v386, %v387
      %v389 = vsel %vm369, %v344, 0.0
      %v390 = vadd.f32 %v388, %v389
      %v391 = vsel %vm369, %v345, 0.0
      %v392 = vadd.f32 %v390, %v391
      %v393 = vsel %vm369, %v346, 0.0
      %v394 = vadd.f32 %v392, %v393
      %v395 = vsel %vm369, %v347, 0.0
      %v396 = vadd.f32 %v394, %v395
      %v397 = vsel %vm369, %v348, 0.0
      %v398 = vadd.f32 %v396, %v397
      %v399 = vsel %vm369, %v349, 0.0
      %v400 = vadd.f32 %v398, %v399
      %v401 = vsel %vm369, %v350, 0.0
      %v402 = vadd.f32 %v400, %v401
      %v403 = vsel %vm369, %v351, 0.0
      %v404 = vadd.f32 %v402, %v403
      %v405 = vsel %vm369, %v352, 0.0
      %v406 = vadd.f32 %v404, %v405
      %v407 = vsel %vm369, %v353, 0.0
      %v408 = vadd.f32 %v406, %v407
      %v409 = vsel %vm369, %v354, 0.0
      %v410 = vadd.f32 %v408, %v409
      %v411 = vsel %vm369, %v355, 0.0
      %v412 = vadd.f32 %v410, %v411
      %v413 = vsel %vm369, %v356, 0.0
      %v414 = vadd.f32 %v412, %v413
      %v415 = vsel %vm369, %v357, 0.0
      %v416 = vadd.f32 %v414, %v415
      %v417 = vsel %vm369, %v358, 0.0
      %v418 = vadd.f32 %v416, %v417
      %v419 = vsel %vm369, %v359, 0.0
      %v420 = vadd.f32 %v418, %v419
      %v421 = vsel %vm369, %v360, 0.0
      %v422 = vadd.f32 %v420, %v421
      %v423 = vsel %vm369, %v361, 0.0
      %v424 = vadd.f32 %v422, %v423
      %v425 = vsel %vm369, %v362, 0.0
      %v426 = vadd.f32 %v424, %v425
      %v427 = vsel %vm369, %v363, 0.0
      %v428 = vadd.f32 %v426, %v427
      %v429 = vsel %vm369, %v364, 0.0
      %v430 = vadd.f32 %v428, %v429
      %v431 = vsel %vm369, %v365, 0.0
      %v432 = vadd.f32 %v430, %v431
      %v433 = vrot.slane %v432, 4
      %v434 = vadd.f32 %v432, %v433
      %v435 = vrot.slane %v434, 2
      %v436 = vadd.f32 %v434, %v435
      %v437 = vrot.slane %v436, 1
      %v438 = vadd.f32 %v436, %v437
      %v439 = vmul.f32 %v334, %v334
      %v440 = vmul.f32 %v335, %v335
      %v441 = vmul.f32 %v336, %v336
      %v442 = vmul.f32 %v337, %v337
      %v443 = vmul.f32 %v338, %v338
      %v444 = vmul.f32 %v339, %v339
      %v445 = vmul.f32 %v340, %v340
      %v446 = vmul.f32 %v341, %v341
      %v447 = vmul.f32 %v342, %v342
      %v448 = vmul.f32 %v343, %v343
      %v449 = vmul.f32 %v344, %v344
      %v450 = vmul.f32 %v345, %v345
      %v451 = vmul.f32 %v346, %v346
      %v452 = vmul.f32 %v347, %v347
      %v453 = vmul.f32 %v348, %v348
      %v454 = vmul.f32 %v349, %v349
      %v455 = vmul.f32 %v350, %v350
      %v456 = vmul.f32 %v351, %v351
      %v457 = vmul.f32 %v352, %v352
      %v458 = vmul.f32 %v353, %v353
      %v459 = vmul.f32 %v354, %v354
      %v460 = vmul.f32 %v355, %v355
      %v461 = vmul.f32 %v356, %v356
      %v462 = vmul.f32 %v357, %v357
      %v463 = vmul.f32 %v358, %v358
      %v464 = vmul.f32 %v359, %v359
      %v465 = vmul.f32 %v360, %v360
      %v466 = vmul.f32 %v361, %v361
      %v467 = vmul.f32 %v362, %v362
      %v468 = vmul.f32 %v363, %v363
      %v469 = vmul.f32 %v364, %v364
      %v470 = vmul.f32 %v365, %v365
      %v471 = vsel %vm369, %v439, 0.0
      %v472 = vsel %vm369, %v440, 0.0
      %v473 = vadd.f32 %v471, %v472
      %v474 = vsel %vm369, %v441, 0.0
      %v475 = vadd.f32 %v473, %v474
      %v476 = vsel %vm369, %v442, 0.0
      %v477 = vadd.f32 %v475, %v476
      %v478 = vsel %vm369, %v443, 0.0
      %v479 = vadd.f32 %v477, %v478
      %v480 = vsel %vm369, %v444, 0.0
      %v481 = vadd.f32 %v479, %v480
      %v482 = vsel %vm369, %v445, 0.0
      %v483 = vadd.f32 %v481, %v482
      %v484 = vsel %vm369, %v446, 0.0
      %v485 = vadd.f32 %v483, %v484
      %v486 = vsel %vm369, %v447, 0.0
      %v487 = vadd.f32 %v485, %v486
      %v488 = vsel %vm369, %v448, 0.0
      %v489 = vadd.f32 %v487, %v488
      %v490 = vsel %vm369, %v449, 0.0
      %v491 = vadd.f32 %v489, %v490
      %v492 = vsel %vm369, %v450, 0.0
      %v493 = vadd.f32 %v491, %v492
      %v494 = vsel %vm369, %v451, 0.0
      %v495 = vadd.f32 %v493, %v494
      %v496 = vsel %vm369, %v452, 0.0
      %v497 = vadd.f32 %v495, %v496
      %v498 = vsel %vm369, %v453, 0.0
      %v499 = vadd.f32 %v497, %v498
      %v500 = vsel %vm369, %v454, 0.0
      %v501 = vadd.f32 %v499, %v500
      %v502 = vsel %vm369, %v455, 0.0
      %v503 = vadd.f32 %v501, %v502
      %v504 = vsel %vm369, %v456, 0.0
      %v505 = vadd.f32 %v503, %v504
      %v506 = vsel %vm369, %v457, 0.0
      %v507 = vadd.f32 %v505, %v506
      %v508 = vsel %vm369, %v458, 0.0
      %v509 = vadd.f32 %v507, %v508
      %v510 = vsel %vm369, %v459, 0.0
      %v511 = vadd.f32 %v509, %v510
      %v512 = vsel %vm369, %v460, 0.0
      %v513 = vadd.f32 %v511, %v512
      %v514 = vsel %vm369, %v461, 0.0
      %v515 = vadd.f32 %v513, %v514
      %v516 = vsel %vm369, %v462, 0.0
      %v517 = vadd.f32 %v515, %v516
      %v518 = vsel %vm369, %v463, 0.0
      %v519 = vadd.f32 %v517, %v518
      %v520 = vsel %vm369, %v464, 0.0
      %v521 = vadd.f32 %v519, %v520
      %v522 = vsel %vm369, %v465, 0.0
      %v523 = vadd.f32 %v521, %v522
      %v524 = vsel %vm369, %v466, 0.0
      %v525 = vadd.f32 %v523, %v524
      %v526 = vsel %vm369, %v467, 0.0
      %v527 = vadd.f32 %v525, %v526
      %v528 = vsel %vm369, %v468, 0.0
      %v529 = vadd.f32 %v527, %v528
      %v530 = vsel %vm369, %v469, 0.0
      %v531 = vadd.f32 %v529, %v530
      %v532 = vsel %vm369, %v470, 0.0
      %v533 = vadd.f32 %v531, %v532
      %v534 = vrot.slane %v533, 4
      %v535 = vadd.f32 %v533, %v534
      %v536 = vrot.slane %v535, 2
      %v537 = vadd.f32 %v535, %v536
      %v538 = vrot.slane %v537, 1
      %v539 = vadd.f32 %v537, %v538
      %vm540 = vcmask 1040384
      %v541 = vsel %vm540, %v438, %v539
      %v543 = vsel %vm369, %v541, 0
      %vm545 = vcmask 1043456
      %v547 = vsel %vm545, %v368, 0
      %549 = vmatprep.subr.mxu0 0.0
      %550 = vmatpush1.msra.mxu0 %v547
      %551 = vmatprep.subr.mxu0 0.0
      %552 = vmatpush1.msra.mxu0 0.0
      %553 = vmatprep.subr.mxu0 0.0
      %554 = vmatpush1.msra.mxu0 0.0
      %555 = vmatprep.subr.mxu0 0.0
      %556 = vmatpush1.msra.mxu0 0.0
      %557 = vmatprep.subr.mxu0 0.0
      %558 = vmatpush1.msra.mxu0 0.0
      %559 = vmatprep.subr.mxu0 0.0
      %560 = vmatpush1.msra.mxu0 0.0
      %561 = vmatprep.subr.mxu0 0.0
      %562 = vmatpush1.msra.mxu0 0.0
      %563 = vmatprep.subr.mxu0 0.0
      %564 = vmatpush1.msra.mxu0 0.0
      %565 = vmatprep.subr.mxu0 0.0
      %566 = vmatpush1.msra.mxu0 0.0
      %567 = vmatprep.subr.mxu0 0.0
      %568 = vmatpush1.msra.mxu0 0.0
      %569 = vmatprep.subr.mxu0 0.0
      %570 = vmatpush1.msra.mxu0 0.0
      %571 = vmatprep.subr.mxu0 0.0
      %572 = vmatpush1.msra.mxu0 0.0
      %573 = vmatprep.subr.mxu0 0.0
      %574 = vmatpush1.msra.mxu0 0.0
      %575 = vmatprep.subr.mxu0 0.0
      %576 = vmatpush1.msra.mxu0 0.0
      %577 = vmatprep.subr.mxu0 0.0
      %578 = vmatpush1.msra.mxu0 0.0
      %579 = vmatprep.subr.mxu0 0.0
      %580 = vmatpush1.msra.mxu0 0.0
      %581 = vmatprep.subr.mxu0 0.0
      %582 = vmatpush1.msra.mxu0 0.0
      %583 = vmatprep.subr.mxu0 0.0
      %584 = vmatpush1.msra.mxu0 0.0
      %585 = vmatprep.subr.mxu0 0.0
      %586 = vmatpush1.msra.mxu0 0.0
      %587 = vmatprep.subr.mxu0 0.0
      %588 = vmatpush1.msra.mxu0 0.0
      %589 = vmatprep.subr.mxu0 0.0
      %590 = vmatpush1.msra.mxu0 0.0
      %591 = vmatprep.subr.mxu0 0.0
      %592 = vmatpush1.msra.mxu0 0.0
      %593 = vmatprep.subr.mxu0 0.0
      %594 = vmatpush1.msra.mxu0 0.0
      %595 = vmatprep.subr.mxu0 0.0
      %596 = vmatpush1.msra.mxu0 0.0
      %597 = vmatprep.subr.mxu0 0.0
      %598 = vmatpush1.msra.mxu0 0.0
      %599 = vmatprep.subr.mxu0 0.0
      %600 = vmatpush1.msra.mxu0 0.0
      %601 = vmatprep.subr.mxu0 0.0
      %602 = vmatpush1.msra.mxu0 0.0
      %603 = vmatprep.subr.mxu0 0.0
      %604 = vmatpush1.msra.mxu0 0.0
      %605 = vmatprep.subr.mxu0 0.0
      %606 = vmatpush1.msra.mxu0 0.0
      %607 = vmatprep.subr.mxu0 0.0
      %608 = vmatpush1.msra.mxu0 0.0
      %609 = vmatprep.subr.mxu0 0.0
      %610 = vmatpush1.msra.mxu0 0.0
      %611 = vmatprep.subr.mxu0 0.0
      %612 = vmatpush1.msra.mxu0 0.0
      %613 = vmatprep.mubr.f32.mxu0 0.0
      %614 = vmatmul.mubr.f32.gmra.mrb[0].mxu0 %v543
      %v615 = vpop.f32.mrb[0].mxu0
      %v616 = vadd.f32 0.0, %v615
      %v617 = vpop.f32.mrb[0].mxu0
      %618 = vdwg.mxu0
      %v619 = vmul.f32 %v616, 0.00390625
      %v620 = vmul.f32 %v619, %v619
      %v622 = vrot.slane %v620, 7
      %v624 = vsub.f32 %v619, %v622
      %v625 = vmax.f32 %v624, 0.0
      %v626 = vadd.f32 %v625, 1e-05
      %v627 = vrsqrt.pop %v626
      %v629 = vlaneseq
      %v630 = vshrl.u32 %v629, 7
      %v631 = vsub.s32 0, %v630
      %v632 = vrot.slane %v366, %v631
      %v634 = vmul.f32 %v627, %v632
      %v636 = vrot.slane %v634, 1
      %v638 = vmul.f32 %v619, %v636
      %v639 = vsub.f32 %v367, %v638
      %v640 = vlaneseq
      %v641 = vshrl.u32 %v640, 7
      %v642 = vsub.s32 1, %v641
      %v643 = vrot.slane %v634, %v642
      %v644 = vmul.f32 %v334, %v643
      %v645 = vmul.f32 %v335, %v643
      %v646 = vmul.f32 %v336, %v643
      %v647 = vmul.f32 %v337, %v643
      %v648 = vmul.f32 %v338, %v643
      %v649 = vmul.f32 %v339, %v643
      %v650 = vmul.f32 %v340, %v643
      %v651 = vmul.f32 %v341, %v643
      %v652 = vmul.f32 %v342, %v643
      %v653 = vmul.f32 %v343, %v643
      %v654 = vmul.f32 %v344, %v643
      %v655 = vmul.f32 %v345, %v643
      %v656 = vmul.f32 %v346, %v643
      %v657 = vmul.f32 %v347, %v643
      %v658 = vmul.f32 %v348, %v643
      %v659 = vmul.f32 %v349, %v643
      %v660 = vmul.f32 %v350, %v643
      %v661 = vmul.f32 %v351, %v643
      %v662 = vmul.f32 %v352, %v643
      %v663 = vmul.f32 %v353, %v643
      %v664 = vmul.f32 %v354, %v643
      %v665 = vmul.f32 %v355, %v643
      %v666 = vmul.f32 %v356, %v643
      %v667 = vmul.f32 %v357, %v643
      %v668 = vmul.f32 %v358, %v643
      %v669 = vmul.f32 %v359, %v643
      %v670 = vmul.f32 %v360, %v643
      %v671 = vmul.f32 %v361, %v643
      %v672 = vmul.f32 %v362, %v643
      %v673 = vmul.f32 %v363, %v643
      %v674 = vmul.f32 %v364, %v643
      %v675 = vmul.f32 %v365, %v643
      %v677 = vlaneseq
      %v678 = vshrl.u32 %v677, 7
      %v679 = vsub.s32 0, %v678
      %v680 = vrot.slane %v639, %v679
      %v682 = vadd.f32 %v644, %v680
      %v683 = vadd.f32 %v645, %v680
      %v684 = vadd.f32 %v646, %v680
      %v685 = vadd.f32 %v647, %v680
      %v686 = vadd.f32 %v648, %v680
      %v687 = vadd.f32 %v649, %v680
      %v688 = vadd.f32 %v650, %v680
      %v689 = vadd.f32 %v651, %v680
      %v690 = vadd.f32 %v652, %v680
      %v691 = vadd.f32 %v653, %v680
      %v692 = vadd.f32 %v654, %v680
      %v693 = vadd.f32 %v655, %v680
      %v694 = vadd.f32 %v656, %v680
      %v695 = vadd.f32 %v657, %v680
      %v696 = vadd.f32 %v658, %v680
      %v697 = vadd.f32 %v659, %v680
      %v698 = vadd.f32 %v660, %v680
      %v699 = vadd.f32 %v661, %v680
      %v700 = vadd.f32 %v662, %v680
      %v701 = vadd.f32 %v663, %v680
      %v702 = vadd.f32 %v664, %v680
      %v703 = vadd.f32 %v665, %v680
      %v704 = vadd.f32 %v666, %v680
      %v705 = vadd.f32 %v667, %v680
      %v706 = vadd.f32 %v668, %v680
      %v707 = vadd.f32 %v669, %v680
      %v708 = vadd.f32 %v670, %v680
      %v709 = vadd.f32 %v671, %v680
      %v710 = vadd.f32 %v672, %v680
      %v711 = vadd.f32 %v673, %v680
      %v712 = vadd.f32 %v674, %v680
      %v713 = vadd.f32 %v675, %v680
      %v714 = vmax.f32 %v682, 0.0
      %v715 = vmax.f32 %v683, 0.0
      %v716 = vmax.f32 %v684, 0.0
      %v717 = vmax.f32 %v685, 0.0
      %v718 = vmax.f32 %v686, 0.0
      %v719 = vmax.f32 %v687, 0.0
      %v720 = vmax.f32 %v688, 0.0
      %v721 = vmax.f32 %v689, 0.0
      %v722 = vmax.f32 %v690, 0.0
      %v723 = vmax.f32 %v691, 0.0
      %v724 = vmax.f32 %v692, 0.0
      %v725 = vmax.f32 %v693, 0.0
      %v726 = vmax.f32 %v694, 0.0
      %v727 = vmax.f32 %v695, 0.0
      %v728 = vmax.f32 %v696, 0.0
      %v729 = vmax.f32 %v697, 0.0
      %v730 = vmax.f32 %v698, 0.0
      %v731 = vmax.f32 %v699, 0.0
      %v732 = vmax.f32 %v700, 0.0
      %v733 = vmax.f32 %v701, 0.0
      %v734 = vmax.f32 %v702, 0.0
      %v735 = vmax.f32 %v703, 0.0
      %v736 = vmax.f32 %v704, 0.0
      %v737 = vmax.f32 %v705, 0.0
      %v738 = vmax.f32 %v706, 0.0
      %v739 = vmax.f32 %v707, 0.0
      %v740 = vmax.f32 %v708, 0.0
      %v741 = vmax.f32 %v709, 0.0
      %v742 = vmax.f32 %v710, 0.0
      %v743 = vmax.f32 %v711, 0.0
      %v744 = vmax.f32 %v712, 0.0
      %v745 = vmax.f32 %v713, 0.0
      %746 = vst.msk [vmem:[#allocation2] sm:$0xff] %vm369, 0.0
      %747 = vst.msk [vmem:[#allocation2 + $0x8] sm:$0xff] %vm369, 0.0
      %vm748 = vcmask 25600
      %749 = vst.msk [vmem:[#allocation2 + $0x10] sm:$0x3] %vm748, 0.0
      %s750 = scalar_lea.vmem [#allocation2], 408
      %751 = vst.msk [vmem:[%s750] sm:$0xff] %vm369, 0.0
      %752 = vst.msk [vmem:[%s750 + $0x8] sm:$0xff] %vm369, 0.0
      %753 = vst.msk [vmem:[%s750 + $0x10] sm:$0x3] %vm748, 0.0
      %s754 = scalar_lea.vmem [#allocation2], 24
      %vm755 = vcmask 24576
      %756 = vst.msk [vmem:[%s754] sm:$0x1] %vm755, 0.0
      %757 = vst.msk [vmem:[%s754 + $0x18] sm:$0x1] %vm755, 0.0
      %758 = vst.msk [vmem:[%s754 + $0x30] sm:$0x1] %vm755, 0.0
      %759 = vst.msk [vmem:[%s754 + $0x48] sm:$0x1] %vm755, 0.0
      %760 = vst.msk [vmem:[%s754 + $0x60] sm:$0x1] %vm755, 0.0
      %761 = vst.msk [vmem:[%s754 + $0x78] sm:$0x1] %vm755, 0.0
      %762 = vst.msk [vmem:[%s754 + $0x90] sm:$0x1] %vm755, 0.0
      %763 = vst.msk [vmem:[%s754 + $0xa8] sm:$0x1] %vm755, 0.0
      %764 = vst.msk [vmem:[%s754 + $0xc0] sm:$0x1] %vm755, 0.0
      %765 = vst.msk [vmem:[%s754 + $0xd8] sm:$0x1] %vm755, 0.0
      %766 = vst.msk [vmem:[%s754 + $0xf0] sm:$0x1] %vm755, 0.0
      %767 = vst.msk [vmem:[%s754 + $0x108] sm:$0x1] %vm755, 0.0
      %768 = vst.msk [vmem:[%s754 + $0x120] sm:$0x1] %vm755, 0.0
      %769 = vst.msk [vmem:[%s754 + $0x138] sm:$0x1] %vm755, 0.0
      %770 = vst.msk [vmem:[%s754 + $0x150] sm:$0x1] %vm755, 0.0
      %771 = vst.msk [vmem:[%s754 + $0x168] sm:$0x1] %vm755, 0.0
      %772 = vst.msk [vmem:[%s754 + $0x11] sm:$0x1] %vm755, 0.0
      %773 = vst.msk [vmem:[%s754 + $0x29] sm:$0x1] %vm755, 0.0
      %774 = vst.msk [vmem:[%s754 + $0x41] sm:$0x1] %vm755, 0.0
      %775 = vst.msk [vmem:[%s754 + $0x59] sm:$0x1] %vm755, 0.0
      %776 = vst.msk [vmem:[%s754 + $0x71] sm:$0x1] %vm755, 0.0
      %777 = vst.msk [vmem:[%s754 + $0x89] sm:$0x1] %vm755, 0.0
      %778 = vst.msk [vmem:[%s754 + $0xa1] sm:$0x1] %vm755, 0.0
      %779 = vst.msk [vmem:[%s754 + $0xb9] sm:$0x1] %vm755, 0.0
      %780 = vst.msk [vmem:[%s754 + $0xd1] sm:$0x1] %vm755, 0.0
      %781 = vst.msk [vmem:[%s754 + $0xe9] sm:$0x1] %vm755, 0.0
      %782 = vst.msk [vmem:[%s754 + $0x101] sm:$0x1] %vm755, 0.0
      %783 = vst.msk [vmem:[%s754 + $0x119] sm:$0x1] %vm755, 0.0
      %784 = vst.msk [vmem:[%s754 + $0x131] sm:$0x1] %vm755, 0.0
      %785 = vst.msk [vmem:[%s754 + $0x149] sm:$0x1] %vm755, 0.0
      %786 = vst.msk [vmem:[%s754 + $0x161] sm:$0x1] %vm755, 0.0
      %787 = vst.msk [vmem:[%s754 + $0x179] sm:$0x1] %vm755, 0.0
      %788 = vst.msk [vmem:[%s754 + $0x1] sm:$0xff] %vm369, %v714
      %789 = vst.msk [vmem:[%s754 + $0x9] sm:$0xff] %vm369, %v715
      %790 = vst.msk [vmem:[%s754 + $0x19] sm:$0xff] %vm369, %v716
      %791 = vst.msk [vmem:[%s754 + $0x21] sm:$0xff] %vm369, %v717
      %792 = vst.msk [vmem:[%s754 + $0x31] sm:$0xff] %vm369, %v718
      %793 = vst.msk [vmem:[%s754 + $0x39] sm:$0xff] %vm369, %v719
      %794 = vst.msk [vmem:[%s754 + $0x49] sm:$0xff] %vm369, %v720
      %795 = vst.msk [vmem:[%s754 + $0x51] sm:$0xff] %vm369, %v721
      %796 = vst.msk [vmem:[%s754 + $0x61] sm:$0xff] %vm369, %v722
      %797 = vst.msk [vmem:[%s754 + $0x69] sm:$0xff] %vm369, %v723
      %798 = vst.msk [vmem:[%s754 + $0x79] sm:$0xff] %vm369, %v724
      %799 = vst.msk [vmem:[%s754 + $0x81] sm:$0xff] %vm369, %v725
      %800 = vst.msk [vmem:[%s754 + $0x91] sm:$0xff] %vm369, %v726
      %801 = vst.msk [vmem:[%s754 + $0x99] sm:$0xff] %vm369, %v727
      %802 = vst.msk [vmem:[%s754 + $0xa9] sm:$0xff] %vm369, %v728
      %803 = vst.msk [vmem:[%s754 + $0xb1] sm:$0xff] %vm369, %v729
      %804 = vst.msk [vmem:[%s754 + $0xc1] sm:$0xff] %vm369, %v730
      %805 = vst.msk [vmem:[%s754 + $0xc9] sm:$0xff] %vm369, %v731
      %806 = vst.msk [vmem:[%s754 + $0xd9] sm:$0xff] %vm369, %v732
      %807 = vst.msk [vmem:[%s754 + $0xe1] sm:$0xff] %vm369, %v733
      %808 = vst.msk [vmem:[%s754 + $0xf1] sm:$0xff] %vm369, %v734
      %809 = vst.msk [vmem:[%s754 + $0xf9] sm:$0xff] %vm369, %v735
      %810 = vst.msk [vmem:[%s754 + $0x109] sm:$0xff] %vm369, %v736
      %811 = vst.msk [vmem:[%s754 + $0x111] sm:$0xff] %vm369, %v737
      %812 = vst.msk [vmem:[%s754 + $0x121] sm:$0xff] %vm369, %v738
      %813 = vst.msk [vmem:[%s754 + $0x129] sm:$0xff] %vm369, %v739
      %814 = vst.msk [vmem:[%s754 + $0x139] sm:$0xff] %vm369, %v740
      %815 = vst.msk [vmem:[%s754 + $0x141] sm:$0xff] %vm369, %v741
      %816 = vst.msk [vmem:[%s754 + $0x151] sm:$0xff] %vm369, %v742
      %817 = vst.msk [vmem:[%s754 + $0x159] sm:$0xff] %vm369, %v743
      %818 = vst.msk [vmem:[%s754 + $0x169] sm:$0xff] %vm369, %v744
      %819 = vst.msk [vmem:[%s754 + $0x171] sm:$0xff] %vm369, %v745
      %v820 = vld [vmem:[#allocation2] sm:$0xff]
      %v821 = vld [vmem:[#allocation2 + $0x8] sm:$0xff]
      %v822 = vld [vmem:[#allocation2 + $0x18] sm:$0xff]
      %v823 = vld [vmem:[#allocation2 + $0x20] sm:$0xff]
      %v824 = vld [vmem:[#allocation2 + $0x30] sm:$0xff]
      %v825 = vld [vmem:[#allocation2 + $0x38] sm:$0xff]
      %v826 = vld [vmem:[#allocation2 + $0x48] sm:$0xff]
      %v827 = vld [vmem:[#allocation2 + $0x50] sm:$0xff]
      %v828 = vld [vmem:[#allocation2 + $0x60] sm:$0xff]
      %v829 = vld [vmem:[#allocation2 + $0x68] sm:$0xff]
      %v830 = vld [vmem:[#allocation2 + $0x78] sm:$0xff]
      %v831 = vld [vmem:[#allocation2 + $0x80] sm:$0xff]
      %v832 = vld [vmem:[#allocation2 + $0x90] sm:$0xff]
      %v833 = vld [vmem:[#allocation2 + $0x98] sm:$0xff]
      %v834 = vld [vmem:[#allocation2 + $0xa8] sm:$0xff]
      %v835 = vld [vmem:[#allocation2 + $0xb0] sm:$0xff]
      %v836 = vld [vmem:[#allocation2 + $0xc0] sm:$0xff]
      %v837 = vld [vmem:[#allocation2 + $0xc8] sm:$0xff]
      %v838 = vld [vmem:[#allocation2 + $0xd8] sm:$0xff]
      %v839 = vld [vmem:[#allocation2 + $0xe0] sm:$0xff]
      %v840 = vld [vmem:[#allocation2 + $0xf0] sm:$0xff]
      %v841 = vld [vmem:[#allocation2 + $0xf8] sm:$0xff]
      %v842 = vld [vmem:[#allocation2 + $0x108] sm:$0xff]
      %v843 = vld [vmem:[#allocation2 + $0x110] sm:$0xff]
      %v844 = vld [vmem:[#allocation2 + $0x120] sm:$0xff]
      %v845 = vld [vmem:[#allocation2 + $0x128] sm:$0xff]
      %v846 = vld [vmem:[#allocation2 + $0x138] sm:$0xff]
      %v847 = vld [vmem:[#allocation2 + $0x140] sm:$0xff]
      %v848 = vld [vmem:[#allocation2 + $0x150] sm:$0xff]
      %v849 = vld [vmem:[#allocation2 + $0x158] sm:$0xff]
      %v850 = vld [vmem:[#allocation2 + $0x168] sm:$0xff]
      %v851 = vld [vmem:[#allocation2 + $0x170] sm:$0xff]
      %v852 = vpack.c.bf16 %v821, %v820
      %v853 = vpack.c.bf16 %v823, %v822
      %v854 = vpack.c.bf16 %v825, %v824
      %v855 = vpack.c.bf16 %v827, %v826
      %v856 = vpack.c.bf16 %v829, %v828
      %v857 = vpack.c.bf16 %v831, %v830
      %v858 = vpack.c.bf16 %v833, %v832
      %v859 = vpack.c.bf16 %v835, %v834
      %v860 = vpack.c.bf16 %v837, %v836
      %v861 = vpack.c.bf16 %v839, %v838
      %v862 = vpack.c.bf16 %v841, %v840
      %v863 = vpack.c.bf16 %v843, %v842
      %v864 = vpack.c.bf16 %v845, %v844
      %v865 = vpack.c.bf16 %v847, %v846
      %v866 = vpack.c.bf16 %v849, %v848
      %v867 = vpack.c.bf16 %v851, %v850
      %v868 = vld [vmem:[%s4] sm:$0x3]
      %v869 = vld [vmem:[#allocation2 + $0x1] sm:$0xff]
      %v870 = vld [vmem:[#allocation2 + $0x9] sm:$0xff]
      %v871 = vld [vmem:[#allocation2 + $0x19] sm:$0xff]
      %v872 = vld [vmem:[#allocation2 + $0x21] sm:$0xff]
      %v873 = vld [vmem:[#allocation2 + $0x31] sm:$0xff]
      %v874 = vld [vmem:[#allocation2 + $0x39] sm:$0xff]
      %v875 = vld [vmem:[#allocation2 + $0x49] sm:$0xff]
      %v876 = vld [vmem:[#allocation2 + $0x51] sm:$0xff]
      %v877 = vld [vmem:[#allocation2 + $0x61] sm:$0xff]
      %v878 = vld [vmem:[#allocation2 + $0x69] sm:$0xff]
      %v879 = vld [vmem:[#allocation2 + $0x79] sm:$0xff]
      %v880 = vld [vmem:[#allocation2 + $0x81] sm:$0xff]
      %v881 = vld [vmem:[#allocation2 + $0x91] sm:$0xff]
      %v882 = vld [vmem:[#allocation2 + $0x99] sm:$0xff]
      %v883 = vld [vmem:[#allocation2 + $0xa9] sm:$0xff]
      %v884 = vld [vmem:[#allocation2 + $0xb1] sm:$0xff]
      %v885 = vld [vmem:[#allocation2 + $0xc1] sm:$0xff]
      %v886 = vld [vmem:[#allocation2 + $0xc9] sm:$0xff]
      %v887 = vld [vmem:[#allocation2 + $0xd9] sm:$0xff]
      %v888 = vld [vmem:[#allocation2 + $0xe1] sm:$0xff]
      %v889 = vld [vmem:[#allocation2 + $0xf1] sm:$0xff]
      %v890 = vld [vmem:[#allocation2 + $0xf9] sm:$0xff]
      %v891 = vld [vmem:[#allocation2 + $0x109] sm:$0xff]
      %v892 = vld [vmem:[#allocation2 + $0x111] sm:$0xff]
      %v893 = vld [vmem:[#allocation2 + $0x121] sm:$0xff]
      %v894 = vld [vmem:[#allocation2 + $0x129] sm:$0xff]
      %v895 = vld [vmem:[#allocation2 + $0x139] sm:$0xff]
      %v896 = vld [vmem:[#allocation2 + $0x141] sm:$0xff]
      %v897 = vld [vmem:[#allocation2 + $0x151] sm:$0xff]
      %v898 = vld [vmem:[#allocation2 + $0x159] sm:$0xff]
      %v899 = vld [vmem:[#allocation2 + $0x169] sm:$0xff]
      %v900 = vld [vmem:[#allocation2 + $0x171] sm:$0xff]
      %v901 = vpack.c.bf16 %v870, %v869
      %v902 = vpack.c.bf16 %v872, %v871
      %v903 = vpack.c.bf16 %v874, %v873
      %v904 = vpack.c.bf16 %v876, %v875
      %v905 = vpack.c.bf16 %v878, %v877
      %v906 = vpack.c.bf16 %v880, %v879
      %v907 = vpack.c.bf16 %v882, %v881
      %v908 = vpack.c.bf16 %v884, %v883
      %v909 = vpack.c.bf16 %v886, %v885
      %v910 = vpack.c.bf16 %v888, %v887
      %v911 = vpack.c.bf16 %v890, %v889
      %v912 = vpack.c.bf16 %v892, %v891
      %v913 = vpack.c.bf16 %v894, %v893
      %v914 = vpack.c.bf16 %v896, %v895
      %v915 = vpack.c.bf16 %v898, %v897
      %v916 = vpack.c.bf16 %v900, %v899
      %v917 = vld [vmem:[%s4] sm:$0xc]
      %v919 = vunpack.c.l.b16 %v917
      %v920 = vpack.c.b16 %v919, %v919
      %v921 = vrot.slane %v920, 2
      %v923 = vsel %vm369, %v901, 0
      %v926 = vsel %vm369, %v902, 0
      %v929 = vsel %vm369, %v903, 0
      %v932 = vsel %vm369, %v904, 0
      %v935 = vsel %vm369, %v905, 0
      %v938 = vsel %vm369, %v906, 0
      %v941 = vsel %vm369, %v907, 0
      %v944 = vsel %vm369, %v908, 0
      %v947 = vsel %vm369, %v909, 0
      %v950 = vsel %vm369, %v910, 0
      %v953 = vsel %vm369, %v911, 0
      %v956 = vsel %vm369, %v912, 0
      %v959 = vsel %vm369, %v913, 0
      %v962 = vsel %vm369, %v914, 0
      %v965 = vsel %vm369, %v915, 0
      %v968 = vsel %vm369, %v916, 0
      %vm970 = vcmask 1041408
      %v972 = vsel %vm970, %v921, 0
      %974 = vmatprep.subr.bf16.mxu0 0
      %975 = vmatpush1.bf16.msra.mxu0 %v972
      %976 = vmatprep.subr.bf16.mxu0 0
      %977 = vmatpush1.bf16.msra.mxu0 0
      %978 = vmatprep.subr.bf16.mxu0 0
      %979 = vmatpush1.bf16.msra.mxu0 0
      %980 = vmatprep.subr.bf16.mxu0 0
      %981 = vmatpush1.bf16.msra.mxu0 0
      %982 = vmatprep.subr.bf16.mxu0 0
      %983 = vmatpush1.bf16.msra.mxu0 0
      %984 = vmatprep.subr.bf16.mxu0 0
      %985 = vmatpush1.bf16.msra.mxu0 0
      %986 = vmatprep.subr.bf16.mxu0 0
      %987 = vmatpush1.bf16.msra.mxu0 0
      %988 = vmatprep.subr.bf16.mxu0 0
      %989 = vmatpush1.bf16.msra.mxu0 0
      %990 = vmatprep.subr.bf16.mxu0 0
      %991 = vmatpush1.bf16.msra.mxu0 0
      %992 = vmatprep.subr.bf16.mxu0 0
      %993 = vmatpush1.bf16.msra.mxu0 0
      %994 = vmatprep.subr.bf16.mxu0 0
      %995 = vmatpush1.bf16.msra.mxu0 0
      %996 = vmatprep.subr.bf16.mxu0 0
      %997 = vmatpush1.bf16.msra.mxu0 0
      %998 = vmatprep.subr.bf16.mxu0 0
      %999 = vmatpush1.bf16.msra.mxu0 0
      %1000 = vmatprep.subr.bf16.mxu0 0
      %1001 = vmatpush1.bf16.msra.mxu0 0
      %1002 = vmatprep.subr.bf16.mxu0 0
      %1003 = vmatpush1.bf16.msra.mxu0 0
      %1004 = vmatprep.subr.bf16.mxu0 0
      %1005 = vmatpush1.bf16.msra.mxu0 0
      %1006 = vmatprep.mubr.bf16.mxu0 0
      %1007 = vmatmul.mubr.bf16.gmra.mrb[0].mxu0 %v923
      %v1008 = vpop.f32.mrb[0].mxu0
      %v1009 = vadd.f32 0.0, %v1008
      %v1010 = vpop.f32.mrb[0].mxu0
      %v1011 = vpop.f32.mrb[0].mxu0
      %v1012 = vadd.f32 0.0, %v1011
      %v1013 = vpop.f32.mrb[0].mxu0
      %1014 = vmatprep.mubr.bf16.mxu0 0
      %1015 = vmatmul.mubr.bf16.gmra.mrb[0].mxu0 %v926
      %v1016 = vpop.f32.mrb[0].mxu0
      %v1017 = vadd.f32 0.0, %v1016
      %v1018 = vpop.f32.mrb[0].mxu0
      %v1019 = vpop.f32.mrb[0].mxu0
      %v1020 = vadd.f32 0.0, %v1019
      %v1021 = vpop.f32.mrb[0].mxu0
      %1022 = vmatprep.mubr.bf16.mxu0 0
      %1023 = vmatmul.mubr.bf16.gmra.mrb[0].mxu0 %v929
      %v1024 = vpop.f32.mrb[0].mxu0
      %v1025 = vadd.f32 0.0, %v1024
      %v1026 = vpop.f32.mrb[0].mxu0
      %v1027 = vpop.f32.mrb[0].mxu0
      %v1028 = vadd.f32 0.0, %v1027
      %v1029 = vpop.f32.mrb[0].mxu0
      %1030 = vmatprep.mubr.bf16.mxu0 0
      %1031 = vmatmul.mubr.bf16.gmra.mrb[0].mxu0 %v932
      %v1032 = vpop.f32.mrb[0].mxu0
      %v1033 = vadd.f32 0.0, %v1032
      %v1034 = vpop.f32.mrb[0].mxu0
      %v1035 = vpop.f32.mrb[0].mxu0
      %v1036 = vadd.f32 0.0, %v1035
      %v1037 = vpop.f32.mrb[0].mxu0
      %1038 = vmatprep.mubr.bf16.mxu0 0
      %1039 = vmatmul.mubr.bf16.gmra.mrb[0].mxu0 %v935
      %v1040 = vpop.f32.mrb[0].mxu0
      %v1041 = vadd.f32 0.0, %v1040
      %v1042 = vpop.f32.mrb[0].mxu0
      %v1043 = vpop.f32.mrb[0].mxu0
      %v1044 = vadd.f32 0.0, %v1043
      %v1045 = vpop.f32.mrb[0].mxu0
      %1046 = vmatprep.mubr.bf16.mxu0 0
      %1047 = vmatmul.mubr.bf16.gmra.mrb[0].mxu0 %v938
      %v1048 = vpop.f32.mrb[0].mxu0
      %v1049 = vadd.f32 0.0, %v1048
      %v1050 = vpop.f32.mrb[0].mxu0
      %v1051 = vpop.f32.mrb[0].mxu0
      %v1052 = vadd.f32 0.0, %v1051
      %v1053 = vpop.f32.mrb[0].mxu0
      %1054 = vmatprep.mubr.bf16.mxu0 0
      %1055 = vmatmul.mubr.bf16.gmra.mrb[0].mxu0 %v941
      %v1056 = vpop.f32.mrb[0].mxu0
      %v1057 = vadd.f32 0.0, %v1056
      %v1058 = vpop.f32.mrb[0].mxu0
      %v1059 = vpop.f32.mrb[0].mxu0
      %v1060 = vadd.f32 0.0, %v1059
      %v1061 = vpop.f32.mrb[0].mxu0
      %1062 = vmatprep.mubr.bf16.mxu0 0
      %1063 = vmatmul.mubr.bf16.gmra.mrb[0].mxu0 %v944
      %v1064 = vpop.f32.mrb[0].mxu0
      %v1065 = vadd.f32 0.0, %v1064
      %v1066 = vpop.f32.mrb[0].mxu0
      %v1067 = vpop.f32.mrb[0].mxu0
      %v1068 = vadd.f32 0.0, %v1067
      %v1069 = vpop.f32.mrb[0].mxu0
      %1070 = vmatprep.mubr.bf16.mxu0 0
      %1071 = vmatmul.mubr.bf16.gmra.mrb[0].mxu0 %v947
      %v1072 = vpop.f32.mrb[0].mxu0
      %v1073 = vadd.f32 0.0, %v1072
      %v1074 = vpop.f32.mrb[0].mxu0
      %v1075 = vpop.f32.mrb[0].mxu0
      %v1076 = vadd.f32 0.0, %v1075
      %v1077 = vpop.f32.mrb[0].mxu0
      %1078 = vmatprep.mubr.bf16.mxu0 0
      %1079 = vmatmul.mubr.bf16.gmra.mrb[0].mxu0 %v950
      %v1080 = vpop.f32.mrb[0].mxu0
      %v1081 = vadd.f32 0.0, %v1080
      %v1082 = vpop.f32.mrb[0].mxu0
      %v1083 = vpop.f32.mrb[0].mxu0
      %v1084 = vadd.f32 0.0, %v1083
      %v1085 = vpop.f32.mrb[0].mxu0
      %1086 = vmatprep.mubr.bf16.mxu0 0
      %1087 = vmatmul.mubr.bf16.gmra.mrb[0].mxu0 %v953
      %v1088 = vpop.f32.mrb[0].mxu0
      %v1089 = vadd.f32 0.0, %v1088
      %v1090 = vpop.f32.mrb[0].mxu0
      %v1091 = vpop.f32.mrb[0].mxu0
      %v1092 = vadd.f32 0.0, %v1091
      %v1093 = vpop.f32.mrb[0].mxu0
      %1094 = vmatprep.mubr.bf16.mxu0 0
      %1095 = vmatmul.mubr.bf16.gmra.mrb[0].mxu0 %v956
      %v1096 = vpop.f32.mrb[0].mxu0
      %v1097 = vadd.f32 0.0, %v1096
      %v1098 = vpop.f32.mrb[0].mxu0
      %v1099 = vpop.f32.mrb[0].mxu0
      %v1100 = vadd.f32 0.0, %v1099
      %v1101 = vpop.f32.mrb[0].mxu0
      %1102 = vmatprep.mubr.bf16.mxu0 0
      %1103 = vmatmul.mubr.bf16.gmra.mrb[0].mxu0 %v959
      %v1104 = vpop.f32.mrb[0].mxu0
      %v1105 = vadd.f32 0.0, %v1104
      %v1106 = vpop.f32.mrb[0].mxu0
      %v1107 = vpop.f32.mrb[0].mxu0
      %v1108 = vadd.f32 0.0, %v1107
      %v1109 = vpop.f32.mrb[0].mxu0
      %1110 = vmatprep.mubr.bf16.mxu0 0
      %1111 = vmatmul.mubr.bf16.gmra.mrb[0].mxu0 %v962
      %v1112 = vpop.f32.mrb[0].mxu0
      %v1113 = vadd.f32 0.0, %v1112
      %v1114 = vpop.f32.mrb[0].mxu0
      %v1115 = vpop.f32.mrb[0].mxu0
      %v1116 = vadd.f32 0.0, %v1115
      %v1117 = vpop.f32.mrb[0].mxu0
      %1118 = vmatprep.mubr.bf16.mxu0 0
      %1119 = vmatmul.mubr.bf16.gmra.mrb[0].mxu0 %v965
      %v1120 = vpop.f32.mrb[0].mxu0
      %v1121 = vadd.f32 0.0, %v1120
      %v1122 = vpop.f32.mrb[0].mxu0
      %v1123 = vpop.f32.mrb[0].mxu0
      %v1124 = vadd.f32 0.0, %v1123
      %v1125 = vpop.f32.mrb[0].mxu0
      %1126 = vmatprep.mubr.bf16.mxu0 0
      %1127 = vmatmul.mubr.bf16.gmra.mrb[0].mxu0 %v968
      %v1128 = vpop.f32.mrb[0].mxu0
      %v1129 = vadd.f32 0.0, %v1128
      %v1130 = vpop.f32.mrb[0].mxu0
      %v1131 = vpop.f32.mrb[0].mxu0
      %v1132 = vadd.f32 0.0, %v1131
      %v1133 = vpop.f32.mrb[0].mxu0
      %1134 = vdwg.mxu0
      %v1136 = vsel %vm369, %v852, 0
      %v1139 = vsel %vm369, %v853, 0
      %v1142 = vsel %vm369, %v854, 0
      %v1145 = vsel %vm369, %v855, 0
      %v1148 = vsel %vm369, %v856, 0
      %v1151 = vsel %vm369, %v857, 0
      %v1154 = vsel %vm369, %v858, 0
      %v1157 = vsel %vm369, %v859, 0
      %v1160 = vsel %vm369, %v860, 0
      %v1163 = vsel %vm369, %v861, 0
      %v1166 = vsel %vm369, %v862, 0
      %v1169 = vsel %vm369, %v863, 0
      %v1172 = vsel %vm369, %v864, 0
      %v1175 = vsel %vm369, %v865, 0
      %v1178 = vsel %vm369, %v866, 0
      %v1181 = vsel %vm369, %v867, 0
      %v1184 = vsel %vm970, %v868, 0
      %1186 = vmatprep.subr.bf16.mxu0 0
      %1187 = vmatpush1.bf16.msra.mxu0 %v1184
      %1188 = vmatprep.subr.bf16.mxu0 0
      %1189 = vmatpush1.bf16.msra.mxu0 0
      %1190 = vmatprep.subr.bf16.mxu0 0
      %1191 = vmatpush1.bf16.msra.mxu0 0
      %1192 = vmatprep.subr.bf16.mxu0 0
      %1193 = vmatpush1.bf16.msra.mxu0 0
      %1194 = vmatprep.subr.bf16.mxu0 0
      %1195 = vmatpush1.bf16.msra.mxu0 0
      %1196 = vmatprep.subr.bf16.mxu0 0
      %1197 = vmatpush1.bf16.msra.mxu0 0
      %1198 = vmatprep.subr.bf16.mxu0 0
      %1199 = vmatpush1.bf16.msra.mxu0 0
      %1200 = vmatprep.subr.bf16.mxu0 0
      %1201 = vmatpush1.bf16.msra.mxu0 0
      %1202 = vmatprep.subr.bf16.mxu0 0
      %1203 = vmatpush1.bf16.msra.mxu0 0
      %1204 = vmatprep.subr.bf16.mxu0 0
      %1205 = vmatpush1.bf16.msra.mxu0 0
      %1206 = vmatprep.subr.bf16.mxu0 0
      %1207 = vmatpush1.bf16.msra.mxu0 0
      %1208 = vmatprep.subr.bf16.mxu0 0
      %1209 = vmatpush1.bf16.msra.mxu0 0
      %1210 = vmatprep.subr.bf16.mxu0 0
      %1211 = vmatpush1.bf16.msra.mxu0 0
      %1212 = vmatprep.subr.bf16.mxu0 0
      %1213 = vmatpush1.bf16.msra.mxu0 0
      %1214 = vmatprep.subr.bf16.mxu0 0
      %1215 = vmatpush1.bf16.msra.mxu0 0
      %1216 = vmatprep.subr.bf16.mxu0 0
      %1217 = vmatpush1.bf16.msra.mxu0 0
      %1218 = vmatprep.mubr.bf16.mxu0 0
      %1219 = vmatmul.mubr.bf16.gmra.mrb[0].mxu0 %v1136
      %v1220 = vpop.f32.mrb[0].mxu0
      %v1221 = vadd.f32 %v1009, %v1220
      %v1222 = vpop.f32.mrb[0].mxu0
      %v1223 = vpop.f32.mrb[0].mxu0
      %v1224 = vadd.f32 %v1012, %v1223
      %v1225 = vpop.f32.mrb[0].mxu0
      %1226 = vmatprep.mubr.bf16.mxu0 0
      %1227 = vmatmul.mubr.bf16.gmra.mrb[0].mxu0 %v1139
      %v1228 = vpop.f32.mrb[0].mxu0
      %v1229 = vadd.f32 %v1017, %v1228
      %v1230 = vpop.f32.mrb[0].mxu0
      %v1231 = vpop.f32.mrb[0].mxu0
      %v1232 = vadd.f32 %v1020, %v1231
      %v1233 = vpop.f32.mrb[0].mxu0
      %1234 = vmatprep.mubr.bf16.mxu0 0
      %1235 = vmatmul.mubr.bf16.gmra.mrb[0].mxu0 %v1142
      %v1236 = vpop.f32.mrb[0].mxu0
      %v1237 = vadd.f32 %v1025, %v1236
      %v1238 = vpop.f32.mrb[0].mxu0
      %v1239 = vpop.f32.mrb[0].mxu0
      %v1240 = vadd.f32 %v1028, %v1239
      %v1241 = vpop.f32.mrb[0].mxu0
      %1242 = vmatprep.mubr.bf16.mxu0 0
      %1243 = vmatmul.mubr.bf16.gmra.mrb[0].mxu0 %v1145
      %v1244 = vpop.f32.mrb[0].mxu0
      %v1245 = vadd.f32 %v1033, %v1244
      %v1246 = vpop.f32.mrb[0].mxu0
      %v1247 = vpop.f32.mrb[0].mxu0
      %v1248 = vadd.f32 %v1036, %v1247
      %v1249 = vpop.f32.mrb[0].mxu0
      %1250 = vmatprep.mubr.bf16.mxu0 0
      %1251 = vmatmul.mubr.bf16.gmra.mrb[0].mxu0 %v1148
      %v1252 = vpop.f32.mrb[0].mxu0
      %v1253 = vadd.f32 %v1041, %v1252
      %v1254 = vpop.f32.mrb[0].mxu0
      %v1255 = vpop.f32.mrb[0].mxu0
      %v1256 = vadd.f32 %v1044, %v1255
      %v1257 = vpop.f32.mrb[0].mxu0
      %1258 = vmatprep.mubr.bf16.mxu0 0
      %1259 = vmatmul.mubr.bf16.gmra.mrb[0].mxu0 %v1151
      %v1260 = vpop.f32.mrb[0].mxu0
      %v1261 = vadd.f32 %v1049, %v1260
      %v1262 = vpop.f32.mrb[0].mxu0
      %v1263 = vpop.f32.mrb[0].mxu0
      %v1264 = vadd.f32 %v1052, %v1263
      %v1265 = vpop.f32.mrb[0].mxu0
      %1266 = vmatprep.mubr.bf16.mxu0 0
      %1267 = vmatmul.mubr.bf16.gmra.mrb[0].mxu0 %v1154
      %v1268 = vpop.f32.mrb[0].mxu0
      %v1269 = vadd.f32 %v1057, %v1268
      %v1270 = vpop.f32.mrb[0].mxu0
      %v1271 = vpop.f32.mrb[0].mxu0
      %v1272 = vadd.f32 %v1060, %v1271
      %v1273 = vpop.f32.mrb[0].mxu0
      %1274 = vmatprep.mubr.bf16.mxu0 0
      %1275 = vmatmul.mubr.bf16.gmra.mrb[0].mxu0 %v1157
      %v1276 = vpop.f32.mrb[0].mxu0
      %v1277 = vadd.f32 %v1065, %v1276
      %v1278 = vpop.f32.mrb[0].mxu0
      %v1279 = vpop.f32.mrb[0].mxu0
      %v1280 = vadd.f32 %v1068, %v1279
      %v1281 = vpop.f32.mrb[0].mxu0
      %1282 = vmatprep.mubr.bf16.mxu0 0
      %1283 = vmatmul.mubr.bf16.gmra.mrb[0].mxu0 %v1160
      %v1284 = vpop.f32.mrb[0].mxu0
      %v1285 = vadd.f32 %v1073, %v1284
      %v1286 = vpop.f32.mrb[0].mxu0
      %v1287 = vpop.f32.mrb[0].mxu0
      %v1288 = vadd.f32 %v1076, %v1287
      %v1289 = vpop.f32.mrb[0].mxu0
      %1290 = vmatprep.mubr.bf16.mxu0 0
      %1291 = vmatmul.mubr.bf16.gmra.mrb[0].mxu0 %v1163
      %v1292 = vpop.f32.mrb[0].mxu0
      %v1293 = vadd.f32 %v1081, %v1292
      %v1294 = vpop.f32.mrb[0].mxu0
      %v1295 = vpop.f32.mrb[0].mxu0
      %v1296 = vadd.f32 %v1084, %v1295
      %v1297 = vpop.f32.mrb[0].mxu0
      %1298 = vmatprep.mubr.bf16.mxu0 0
      %1299 = vmatmul.mubr.bf16.gmra.mrb[0].mxu0 %v1166
      %v1300 = vpop.f32.mrb[0].mxu0
      %v1301 = vadd.f32 %v1089, %v1300
      %v1302 = vpop.f32.mrb[0].mxu0
      %v1303 = vpop.f32.mrb[0].mxu0
      %v1304 = vadd.f32 %v1092, %v1303
      %v1305 = vpop.f32.mrb[0].mxu0
      %1306 = vmatprep.mubr.bf16.mxu0 0
      %1307 = vmatmul.mubr.bf16.gmra.mrb[0].mxu0 %v1169
      %v1308 = vpop.f32.mrb[0].mxu0
      %v1309 = vadd.f32 %v1097, %v1308
      %v1310 = vpop.f32.mrb[0].mxu0
      %v1311 = vpop.f32.mrb[0].mxu0
      %v1312 = vadd.f32 %v1100, %v1311
      %v1313 = vpop.f32.mrb[0].mxu0
      %1314 = vmatprep.mubr.bf16.mxu0 0
      %1315 = vmatmul.mubr.bf16.gmra.mrb[0].mxu0 %v1172
      %v1316 = vpop.f32.mrb[0].mxu0
      %v1317 = vadd.f32 %v1105, %v1316
      %v1318 = vpop.f32.mrb[0].mxu0
      %v1319 = vpop.f32.mrb[0].mxu0
      %v1320 = vadd.f32 %v1108, %v1319
      %v1321 = vpop.f32.mrb[0].mxu0
      %1322 = vmatprep.mubr.bf16.mxu0 0
      %1323 = vmatmul.mubr.bf16.gmra.mrb[0].mxu0 %v1175
      %v1324 = vpop.f32.mrb[0].mxu0
      %v1325 = vadd.f32 %v1113, %v1324
      %v1326 = vpop.f32.mrb[0].mxu0
      %v1327 = vpop.f32.mrb[0].mxu0
      %v1328 = vadd.f32 %v1116, %v1327
      %v1329 = vpop.f32.mrb[0].mxu0
      %1330 = vmatprep.mubr.bf16.mxu0 0
      %1331 = vmatmul.mubr.bf16.gmra.mrb[0].mxu0 %v1178
      %v1332 = vpop.f32.mrb[0].mxu0
      %v1333 = vadd.f32 %v1121, %v1332
      %v1334 = vpop.f32.mrb[0].mxu0
      %v1335 = vpop.f32.mrb[0].mxu0
      %v1336 = vadd.f32 %v1124, %v1335
      %v1337 = vpop.f32.mrb[0].mxu0
      %1338 = vmatprep.mubr.bf16.mxu0 0
      %1339 = vmatmul.mubr.bf16.gmra.mrb[0].mxu0 %v1181
      %v1340 = vpop.f32.mrb[0].mxu0
      %v1341 = vadd.f32 %v1129, %v1340
      %v1342 = vpop.f32.mrb[0].mxu0
      %v1343 = vpop.f32.mrb[0].mxu0
      %v1344 = vadd.f32 %v1132, %v1343
      %v1345 = vpop.f32.mrb[0].mxu0
      %1346 = vdwg.mxu0
      %v1347 = vld [vmem:[#allocation2 + $0x2] sm:$0xff]
      %v1348 = vld [vmem:[#allocation2 + $0xa] sm:$0xff]
      %v1349 = vld [vmem:[#allocation2 + $0x1a] sm:$0xff]
      %v1350 = vld [vmem:[#allocation2 + $0x22] sm:$0xff]
      %v1351 = vld [vmem:[#allocation2 + $0x32] sm:$0xff]
      %v1352 = vld [vmem:[#allocation2 + $0x3a] sm:$0xff]
      %v1353 = vld [vmem:[#allocation2 + $0x4a] sm:$0xff]
      %v1354 = vld [vmem:[#allocation2 + $0x52] sm:$0xff]
      %v1355 = vld [vmem:[#allocation2 + $0x62] sm:$0xff]
      %v1356 = vld [vmem:[#allocation2 + $0x6a] sm:$0xff]
      %v1357 = vld [vmem:[#allocation2 + $0x7a] sm:$0xff]
      %v1358 = vld [vmem:[#allocation2 + $0x82] sm:$0xff]
      %v1359 = vld [vmem:[#allocation2 + $0x92] sm:$0xff]
      %v1360 = vld [vmem:[#allocation2 + $0x9a] sm:$0xff]
      %v1361 = vld [vmem:[#allocation2 + $0xaa] sm:$0xff]
      %v1362 = vld [vmem:[#allocation2 + $0xb2] sm:$0xff]
      %v1363 = vld [vmem:[#allocation2 + $0xc2] sm:$0xff]
      %v1364 = vld [vmem:[#allocation2 + $0xca] sm:$0xff]
      %v1365 = vld [vmem:[#allocation2 + $0xda] sm:$0xff]
      %v1366 = vld [vmem:[#allocation2 + $0xe2] sm:$0xff]
      %v1367 = vld [vmem:[#allocation2 + $0xf2] sm:$0xff]
      %v1368 = vld [vmem:[#allocation2 + $0xfa] sm:$0xff]
      %v1369 = vld [vmem:[#allocation2 + $0x10a] sm:$0xff]
      %v1370 = vld [vmem:[#allocation2 + $0x112] sm:$0xff]
      %v1371 = vld [vmem:[#allocation2 + $0x122] sm:$0xff]
      %v1372 = vld [vmem:[#allocation2 + $0x12a] sm:$0xff]
      %v1373 = vld [vmem:[#allocation2 + $0x13a] sm:$0xff]
      %v1374 = vld [vmem:[#allocation2 + $0x142] sm:$0xff]
      %v1375 = vld [vmem:[#allocation2 + $0x152] sm:$0xff]
      %v1376 = vld [vmem:[#allocation2 + $0x15a] sm:$0xff]
      %v1377 = vld [vmem:[#allocation2 + $0x16a] sm:$0xff]
      %v1378 = vld [vmem:[#allocation2 + $0x172] sm:$0xff]
      %v1379 = vpack.c.bf16 %v1348, %v1347
      %v1380 = vpack.c.bf16 %v1350, %v1349
      %v1381 = vpack.c.bf16 %v1352, %v1351
      %v1382 = vpack.c.bf16 %v1354, %v1353
      %v1383 = vpack.c.bf16 %v1356, %v1355
      %v1384 = vpack.c.bf16 %v1358, %v1357
      %v1385 = vpack.c.bf16 %v1360, %v1359
      %v1386 = vpack.c.bf16 %v1362, %v1361
      %v1387 = vpack.c.bf16 %v1364, %v1363
      %v1388 = vpack.c.bf16 %v1366, %v1365
      %v1389 = vpack.c.bf16 %v1368, %v1367
      %v1390 = vpack.c.bf16 %v1370, %v1369
      %v1391 = vpack.c.bf16 %v1372, %v1371
      %v1392 = vpack.c.bf16 %v1374, %v1373
      %v1393 = vpack.c.bf16 %v1376, %v1375
      %v1394 = vpack.c.bf16 %v1378, %v1377
      %v1395 = vld [vmem:[%s4 + $0x4] sm:$0x3]
      %v1397 = vsel %vm369, %v1379, 0
      %v1400 = vsel %vm369, %v1380, 0
      %v1403 = vsel %vm369, %v1381, 0
      %v1406 = vsel %vm369, %v1382, 0
      %v1409 = vsel %vm369, %v1383, 0
      %v1412 = vsel %vm369, %v1384, 0
      %v1415 = vsel %vm369, %v1385, 0
      %v1418 = vsel %vm369, %v1386, 0
      %v1421 = vsel %vm369, %v1387, 0
      %v1424 = vsel %vm369, %v1388, 0
      %v1427 = vsel %vm369, %v1389, 0
      %v1430 = vsel %vm369, %v1390, 0
      %v1433 = vsel %vm369, %v1391, 0
      %v1436 = vsel %vm369, %v1392, 0
      %v1439 = vsel %vm369, %v1393, 0
      %v1442 = vsel %vm369, %v1394, 0
      %v1445 = vsel %vm970, %v1395, 0
      %1447 = vmatprep.subr.bf16.mxu0 0
      %1448 = vmatpush1.bf16.msra.mxu0 %v1445
      %1449 = vmatprep.subr.bf16.mxu0 0
      %1450 = vmatpush1.bf16.msra.mxu0 0
      %1451 = vmatprep.subr.bf16.mxu0 0
      %1452 = vmatpush1.bf16.msra.mxu0 0
      %1453 = vmatprep.subr.bf16.mxu0 0
      %1454 = vmatpush1.bf16.msra.mxu0 0
      %1455 = vmatprep.subr.bf16.mxu0 0
      %1456 = vmatpush1.bf16.msra.mxu0 0
      %1457 = vmatprep.subr.bf16.mxu0 0
      %1458 = vmatpush1.bf16.msra.mxu0 0
      %1459 = vmatprep.subr.bf16.mxu0 0
      %1460 = vmatpush1.bf16.msra.mxu0 0
      %1461 = vmatprep.subr.bf16.mxu0 0
      %1462 = vmatpush1.bf16.msra.mxu0 0
      %1463 = vmatprep.subr.bf16.mxu0 0
      %1464 = vmatpush1.bf16.msra.mxu0 0
      %1465 = vmatprep.subr.bf16.mxu0 0
      %1466 = vmatpush1.bf16.msra.mxu0 0
      %1467 = vmatprep.subr.bf16.mxu0 0
      %1468 = vmatpush1.bf16.msra.mxu0 0
      %1469 = vmatprep.subr.bf16.mxu0 0
      %1470 = vmatpush1.bf16.msra.mxu0 0
      %1471 = vmatprep.subr.bf16.mxu0 0
      %1472 = vmatpush1.bf16.msra.mxu0 0
      %1473 = vmatprep.subr.bf16.mxu0 0
      %1474 = vmatpush1.bf16.msra.mxu0 0
      %1475 = vmatprep.subr.bf16.mxu0 0
      %1476 = vmatpush1.bf16.msra.mxu0 0
      %1477 = vmatprep.subr.bf16.mxu0 0
      %1478 = vmatpush1.bf16.msra.mxu0 0
      %1479 = vmatprep.mubr.bf16.mxu0 0
      %1480 = vmatmul.mubr.bf16.gmra.mrb[0].mxu0 %v1397
      %v1481 = vpop.f32.mrb[0].mxu0
      %v1482 = vadd.f32 0.0, %v1481
      %v1483 = vpop.f32.mrb[0].mxu0
      %v1484 = vpop.f32.mrb[0].mxu0
      %v1485 = vadd.f32 0.0, %v1484
      %v1486 = vpop.f32.mrb[0].mxu0
      %1487 = vmatprep.mubr.bf16.mxu0 0
      %1488 = vmatmul.mubr.bf16.gmra.mrb[0].mxu0 %v1400
      %v1489 = vpop.f32.mrb[0].mxu0
      %v1490 = vadd.f32 0.0, %v1489
      %v1491 = vpop.f32.mrb[0].mxu0
      %v1492 = vpop.f32.mrb[0].mxu0
      %v1493 = vadd.f32 0.0, %v1492
      %v1494 = vpop.f32.mrb[0].mxu0
      %1495 = vmatprep.mubr.bf16.mxu0 0
      %1496 = vmatmul.mubr.bf16.gmra.mrb[0].mxu0 %v1403
      %v1497 = vpop.f32.mrb[0].mxu0
      %v1498 = vadd.f32 0.0, %v1497
      %v1499 = vpop.f32.mrb[0].mxu0
      %v1500 = vpop.f32.mrb[0].mxu0
      %v1501 = vadd.f32 0.0, %v1500
      %v1502 = vpop.f32.mrb[0].mxu0
      %1503 = vmatprep.mubr.bf16.mxu0 0
      %1504 = vmatmul.mubr.bf16.gmra.mrb[0].mxu0 %v1406
      %v1505 = vpop.f32.mrb[0].mxu0
      %v1506 = vadd.f32 0.0, %v1505
      %v1507 = vpop.f32.mrb[0].mxu0
      %v1508 = vpop.f32.mrb[0].mxu0
      %v1509 = vadd.f32 0.0, %v1508
      %v1510 = vpop.f32.mrb[0].mxu0
      %1511 = vmatprep.mubr.bf16.mxu0 0
      %1512 = vmatmul.mubr.bf16.gmra.mrb[0].mxu0 %v1409
      %v1513 = vpop.f32.mrb[0].mxu0
      %v1514 = vadd.f32 0.0, %v1513
      %v1515 = vpop.f32.mrb[0].mxu0
      %v1516 = vpop.f32.mrb[0].mxu0
      %v1517 = vadd.f32 0.0, %v1516
      %v1518 = vpop.f32.mrb[0].mxu0
      %1519 = vmatprep.mubr.bf16.mxu0 0
      %1520 = vmatmul.mubr.bf16.gmra.mrb[0].mxu0 %v1412
      %v1521 = vpop.f32.mrb[0].mxu0
      %v1522 = vadd.f32 0.0, %v1521
      %v1523 = vpop.f32.mrb[0].mxu0
      %v1524 = vpop.f32.mrb[0].mxu0
      %v1525 = vadd.f32 0.0, %v1524
      %v1526 = vpop.f32.mrb[0].mxu0
      %1527 = vmatprep.mubr.bf16.mxu0 0
      %1528 = vmatmul.mubr.bf16.gmra.mrb[0].mxu0 %v1415
      %v1529 = vpop.f32.mrb[0].mxu0
      %v1530 = vadd.f32 0.0, %v1529
      %v1531 = vpop.f32.mrb[0].mxu0
      %v1532 = vpop.f32.mrb[0].mxu0
      %v1533 = vadd.f32 0.0, %v1532
      %v1534 = vpop.f32.mrb[0].mxu0
      %1535 = vmatprep.mubr.bf16.mxu0 0
      %1536 = vmatmul.mubr.bf16.gmra.mrb[0].mxu0 %v1418
      %v1537 = vpop.f32.mrb[0].mxu0
      %v1538 = vadd.f32 0.0, %v1537
      %v1539 = vpop.f32.mrb[0].mxu0
      %v1540 = vpop.f32.mrb[0].mxu0
      %v1541 = vadd.f32 0.0, %v1540
      %v1542 = vpop.f32.mrb[0].mxu0
      %1543 = vmatprep.mubr.bf16.mxu0 0
      %1544 = vmatmul.mubr.bf16.gmra.mrb[0].mxu0 %v1421
      %v1545 = vpop.f32.mrb[0].mxu0
      %v1546 = vadd.f32 0.0, %v1545
      %v1547 = vpop.f32.mrb[0].mxu0
      %v1548 = vpop.f32.mrb[0].mxu0
      %v1549 = vadd.f32 0.0, %v1548
      %v1550 = vpop.f32.mrb[0].mxu0
      %1551 = vmatprep.mubr.bf16.mxu0 0
      %1552 = vmatmul.mubr.bf16.gmra.mrb[0].mxu0 %v1424
      %v1553 = vpop.f32.mrb[0].mxu0
      %v1554 = vadd.f32 0.0, %v1553
      %v1555 = vpop.f32.mrb[0].mxu0
      %v1556 = vpop.f32.mrb[0].mxu0
      %v1557 = vadd.f32 0.0, %v1556
      %v1558 = vpop.f32.mrb[0].mxu0
      %1559 = vmatprep.mubr.bf16.mxu0 0
      %1560 = vmatmul.mubr.bf16.gmra.mrb[0].mxu0 %v1427
      %v1561 = vpop.f32.mrb[0].mxu0
      %v1562 = vadd.f32 0.0, %v1561
      %v1563 = vpop.f32.mrb[0].mxu0
      %v1564 = vpop.f32.mrb[0].mxu0
      %v1565 = vadd.f32 0.0, %v1564
      %v1566 = vpop.f32.mrb[0].mxu0
      %1567 = vmatprep.mubr.bf16.mxu0 0
      %1568 = vmatmul.mubr.bf16.gmra.mrb[0].mxu0 %v1430
      %v1569 = vpop.f32.mrb[0].mxu0
      %v1570 = vadd.f32 0.0, %v1569
      %v1571 = vpop.f32.mrb[0].mxu0
      %v1572 = vpop.f32.mrb[0].mxu0
      %v1573 = vadd.f32 0.0, %v1572
      %v1574 = vpop.f32.mrb[0].mxu0
      %1575 = vmatprep.mubr.bf16.mxu0 0
      %1576 = vmatmul.mubr.bf16.gmra.mrb[0].mxu0 %v1433
      %v1577 = vpop.f32.mrb[0].mxu0
      %v1578 = vadd.f32 0.0, %v1577
      %v1579 = vpop.f32.mrb[0].mxu0
      %v1580 = vpop.f32.mrb[0].mxu0
      %v1581 = vadd.f32 0.0, %v1580
      %v1582 = vpop.f32.mrb[0].mxu0
      %1583 = vmatprep.mubr.bf16.mxu0 0
      %1584 = vmatmul.mubr.bf16.gmra.mrb[0].mxu0 %v1436
      %v1585 = vpop.f32.mrb[0].mxu0
      %v1586 = vadd.f32 0.0, %v1585
      %v1587 = vpop.f32.mrb[0].mxu0
      %v1588 = vpop.f32.mrb[0].mxu0
      %v1589 = vadd.f32 0.0, %v1588
      %v1590 = vpop.f32.mrb[0].mxu0
      %1591 = vmatprep.mubr.bf16.mxu0 0
      %1592 = vmatmul.mubr.bf16.gmra.mrb[0].mxu0 %v1439
      %v1593 = vpop.f32.mrb[0].mxu0
      %v1594 = vadd.f32 0.0, %v1593
      %v1595 = vpop.f32.mrb[0].mxu0
      %v1596 = vpop.f32.mrb[0].mxu0
      %v1597 = vadd.f32 0.0, %v1596
      %v1598 = vpop.f32.mrb[0].mxu0
      %1599 = vmatprep.mubr.bf16.mxu0 0
      %1600 = vmatmul.mubr.bf16.gmra.mrb[0].mxu0 %v1442
      %v1601 = vpop.f32.mrb[0].mxu0
      %v1602 = vadd.f32 0.0, %v1601
      %v1603 = vpop.f32.mrb[0].mxu0
      %v1604 = vpop.f32.mrb[0].mxu0
      %v1605 = vadd.f32 0.0, %v1604
      %v1606 = vpop.f32.mrb[0].mxu0
      %1607 = vdwg.mxu0
      %v1608 = vadd.f32 %v1221, %v1482
      %v1609 = vadd.f32 %v1224, %v1485
      %v1610 = vadd.f32 %v1229, %v1490
      %v1611 = vadd.f32 %v1232, %v1493
      %v1612 = vadd.f32 %v1237, %v1498
      %v1613 = vadd.f32 %v1240, %v1501
      %v1614 = vadd.f32 %v1245, %v1506
      %v1615 = vadd.f32 %v1248, %v1509
      %v1616 = vadd.f32 %v1253, %v1514
      %v1617 = vadd.f32 %v1256, %v1517
      %v1618 = vadd.f32 %v1261, %v1522
      %v1619 = vadd.f32 %v1264, %v1525
      %v1620 = vadd.f32 %v1269, %v1530
      %v1621 = vadd.f32 %v1272, %v1533
      %v1622 = vadd.f32 %v1277, %v1538
      %v1623 = vadd.f32 %v1280, %v1541
      %v1624 = vadd.f32 %v1285, %v1546
      %v1625 = vadd.f32 %v1288, %v1549
      %v1626 = vadd.f32 %v1293, %v1554
      %v1627 = vadd.f32 %v1296, %v1557
      %v1628 = vadd.f32 %v1301, %v1562
      %v1629 = vadd.f32 %v1304, %v1565
      %v1630 = vadd.f32 %v1309, %v1570
      %v1631 = vadd.f32 %v1312, %v1573
      %v1632 = vadd.f32 %v1317, %v1578
      %v1633 = vadd.f32 %v1320, %v1581
      %v1634 = vadd.f32 %v1325, %v1586
      %v1635 = vadd.f32 %v1328, %v1589
      %v1636 = vadd.f32 %v1333, %v1594
      %v1637 = vadd.f32 %v1336, %v1597
      %v1638 = vadd.f32 %v1341, %v1602
      %v1639 = vadd.f32 %v1344, %v1605
      %v1640 = vld [vmem:[%s754] sm:$0xff]
      %v1641 = vld [vmem:[%s754 + $0x8] sm:$0xff]
      %v1642 = vld [vmem:[%s754 + $0x18] sm:$0xff]
      %v1643 = vld [vmem:[%s754 + $0x20] sm:$0xff]
      %v1644 = vld [vmem:[%s754 + $0x30] sm:$0xff]
      %v1645 = vld [vmem:[%s754 + $0x38] sm:$0xff]
      %v1646 = vld [vmem:[%s754 + $0x48] sm:$0xff]
      %v1647 = vld [vmem:[%s754 + $0x50] sm:$0xff]
      %v1648 = vld [vmem:[%s754 + $0x60] sm:$0xff]
      %v1649 = vld [vmem:[%s754 + $0x68] sm:$0xff]
      %v1650 = vld [vmem:[%s754 + $0x78] sm:$0xff]
      %v1651 = vld [vmem:[%s754 + $0x80] sm:$0xff]
      %v1652 = vld [vmem:[%s754 + $0x90] sm:$0xff]
      %v1653 = vld [vmem:[%s754 + $0x98] sm:$0xff]
      %v1654 = vld [vmem:[%s754 + $0xa8] sm:$0xff]
      %v1655 = vld [vmem:[%s754 + $0xb0] sm:$0xff]
      %v1656 = vld [vmem:[%s754 + $0xc0] sm:$0xff]
      %v1657 = vld [vmem:[%s754 + $0xc8] sm:$0xff]
      %v1658 = vld [vmem:[%s754 + $0xd8] sm:$0xff]
      %v1659 = vld [vmem:[%s754 + $0xe0] sm:$0xff]
      %v1660 = vld [vmem:[%s754 + $0xf0] sm:$0xff]
      %v1661 = vld [vmem:[%s754 + $0xf8] sm:$0xff]
      %v1662 = vld [vmem:[%s754 + $0x108] sm:$0xff]
      %v1663 = vld [vmem:[%s754 + $0x110] sm:$0xff]
      %v1664 = vld [vmem:[%s754 + $0x120] sm:$0xff]
      %v1665 = vld [vmem:[%s754 + $0x128] sm:$0xff]
      %v1666 = vld [vmem:[%s754 + $0x138] sm:$0xff]
      %v1667 = vld [vmem:[%s754 + $0x140] sm:$0xff]
      %v1668 = vld [vmem:[%s754 + $0x150] sm:$0xff]
      %v1669 = vld [vmem:[%s754 + $0x158] sm:$0xff]
      %v1670 = vld [vmem:[%s754 + $0x168] sm:$0xff]
      %v1671 = vld [vmem:[%s754 + $0x170] sm:$0xff]
      %v1672 = vpack.c.bf16 %v1641, %v1640
      %v1673 = vpack.c.bf16 %v1643, %v1642
      %v1674 = vpack.c.bf16 %v1645, %v1644
      %v1675 = vpack.c.bf16 %v1647, %v1646
      %v1676 = vpack.c.bf16 %v1649, %v1648
      %v1677 = vpack.c.bf16 %v1651, %v1650
      %v1678 = vpack.c.bf16 %v1653, %v1652
      %v1679 = vpack.c.bf16 %v1655, %v1654
      %v1680 = vpack.c.bf16 %v1657, %v1656
      %v1681 = vpack.c.bf16 %v1659, %v1658
      %v1682 = vpack.c.bf16 %v1661, %v1660
      %v1683 = vpack.c.bf16 %v1663, %v1662
      %v1684 = vpack.c.bf16 %v1665, %v1664
      %v1685 = vpack.c.bf16 %v1667, %v1666
      %v1686 = vpack.c.bf16 %v1669, %v1668
      %v1687 = vpack.c.bf16 %v1671, %v1670
      %v1688 = vld [vmem:[%s4 + $0x4] sm:$0xc]
      %v1690 = vunpack.c.l.b16 %v1688
      %v1691 = vpack.c.b16 %v1690, %v1690
      %v1692 = vrot.slane %v1691, 2
      %v1694 = vsel %vm369, %v1672, 0
      %v1697 = vsel %vm369, %v1673, 0
      %v1700 = vsel %vm369, %v1674, 0
      %v1703 = vsel %vm369, %v1675, 0
      %v1706 = vsel %vm369, %v1676, 0
      %v1709 = vsel %vm369, %v1677, 0
      %v1712 = vsel %vm369, %v1678, 0
      %v1715 = vsel %vm369, %v1679, 0
      %v1718 = vsel %vm369, %v1680, 0
      %v1721 = vsel %vm369, %v1681, 0
      %v1724 = vsel %vm369, %v1682, 0
      %v1727 = vsel %vm369, %v1683, 0
      %v1730 = vsel %vm369, %v1684, 0
      %v1733 = vsel %vm369, %v1685, 0
      %v1736 = vsel %vm369, %v1686, 0
      %v1739 = vsel %vm369, %v1687, 0
      %v1742 = vsel %vm970, %v1692, 0
      %1744 = vmatprep.subr.bf16.mxu0 0
      %1745 = vmatpush1.bf16.msra.mxu0 %v1742
      %1746 = vmatprep.subr.bf16.mxu0 0
      %1747 = vmatpush1.bf16.msra.mxu0 0
      %1748 = vmatprep.subr.bf16.mxu0 0
      %1749 = vmatpush1.bf16.msra.mxu0 0
      %1750 = vmatprep.subr.bf16.mxu0 0
      %1751 = vmatpush1.bf16.msra.mxu0 0
      %1752 = vmatprep.subr.bf16.mxu0 0
      %1753 = vmatpush1.bf16.msra.mxu0 0
      %1754 = vmatprep.subr.bf16.mxu0 0
      %1755 = vmatpush1.bf16.msra.mxu0 0
      %1756 = vmatprep.subr.bf16.mxu0 0
      %1757 = vmatpush1.bf16.msra.mxu0 0
      %1758 = vmatprep.subr.bf16.mxu0 0
      %1759 = vmatpush1.bf16.msra.mxu0 0
      %1760 = vmatprep.subr.bf16.mxu0 0
      %1761 = vmatpush1.bf16.msra.mxu0 0
      %1762 = vmatprep.subr.bf16.mxu0 0
      %1763 = vmatpush1.bf16.msra.mxu0 0
      %1764 = vmatprep.subr.bf16.mxu0 0
      %1765 = vmatpush1.bf16.msra.mxu0 0
      %1766 = vmatprep.subr.bf16.mxu0 0
      %1767 = vmatpush1.bf16.msra.mxu0 0
      %1768 = vmatprep.subr.bf16.mxu0 0
      %1769 = vmatpush1.bf16.msra.mxu0 0
      %1770 = vmatprep.subr.bf16.mxu0 0
      %1771 = vmatpush1.bf16.msra.mxu0 0
      %1772 = vmatprep.subr.bf16.mxu0 0
      %1773 = vmatpush1.bf16.msra.mxu0 0
      %1774 = vmatprep.subr.bf16.mxu0 0
      %1775 = vmatpush1.bf16.msra.mxu0 0
      %1776 = vmatprep.mubr.bf16.mxu0 0
      %1777 = vmatmul.mubr.bf16.gmra.mrb[0].mxu0 %v1694
      %v1778 = vpop.f32.mrb[0].mxu0
      %v1779 = vadd.f32 0.0, %v1778
      %v1780 = vpop.f32.mrb[0].mxu0
      %v1781 = vpop.f32.mrb[0].mxu0
      %v1782 = vadd.f32 0.0, %v1781
      %v1783 = vpop.f32.mrb[0].mxu0
      %1784 = vmatprep.mubr.bf16.mxu0 0
      %1785 = vmatmul.mubr.bf16.gmra.mrb[0].mxu0 %v1697
      %v1786 = vpop.f32.mrb[0].mxu0
      %v1787 = vadd.f32 0.0, %v1786
      %v1788 = vpop.f32.mrb[0].mxu0
      %v1789 = vpop.f32.mrb[0].mxu0
      %v1790 = vadd.f32 0.0, %v1789
      %v1791 = vpop.f32.mrb[0].mxu0
      %1792 = vmatprep.mubr.bf16.mxu0 0
      %1793 = vmatmul.mubr.bf16.gmra.mrb[0].mxu0 %v1700
      %v1794 = vpop.f32.mrb[0].mxu0
      %v1795 = vadd.f32 0.0, %v1794
      %v1796 = vpop.f32.mrb[0].mxu0
      %v1797 = vpop.f32.mrb[0].mxu0
      %v1798 = vadd.f32 0.0, %v1797
      %v1799 = vpop.f32.mrb[0].mxu0
      %1800 = vmatprep.mubr.bf16.mxu0 0
      %1801 = vmatmul.mubr.bf16.gmra.mrb[0].mxu0 %v1703
      %v1802 = vpop.f32.mrb[0].mxu0
      %v1803 = vadd.f32 0.0, %v1802
      %v1804 = vpop.f32.mrb[0].mxu0
      %v1805 = vpop.f32.mrb[0].mxu0
      %v1806 = vadd.f32 0.0, %v1805
      %v1807 = vpop.f32.mrb[0].mxu0
      %1808 = vmatprep.mubr.bf16.mxu0 0
      %1809 = vmatmul.mubr.bf16.gmra.mrb[0].mxu0 %v1706
      %v1810 = vpop.f32.mrb[0].mxu0
      %v1811 = vadd.f32 0.0, %v1810
      %v1812 = vpop.f32.mrb[0].mxu0
      %v1813 = vpop.f32.mrb[0].mxu0
      %v1814 = vadd.f32 0.0, %v1813
      %v1815 = vpop.f32.mrb[0].mxu0
      %1816 = vmatprep.mubr.bf16.mxu0 0
      %1817 = vmatmul.mubr.bf16.gmra.mrb[0].mxu0 %v1709
      %v1818 = vpop.f32.mrb[0].mxu0
      %v1819 = vadd.f32 0.0, %v1818
      %v1820 = vpop.f32.mrb[0].mxu0
      %v1821 = vpop.f32.mrb[0].mxu0
      %v1822 = vadd.f32 0.0, %v1821
      %v1823 = vpop.f32.mrb[0].mxu0
      %1824 = vmatprep.mubr.bf16.mxu0 0
      %1825 = vmatmul.mubr.bf16.gmra.mrb[0].mxu0 %v1712
      %v1826 = vpop.f32.mrb[0].mxu0
      %v1827 = vadd.f32 0.0, %v1826
      %v1828 = vpop.f32.mrb[0].mxu0
      %v1829 = vpop.f32.mrb[0].mxu0
      %v1830 = vadd.f32 0.0, %v1829
      %v1831 = vpop.f32.mrb[0].mxu0
      %1832 = vmatprep.mubr.bf16.mxu0 0
      %1833 = vmatmul.mubr.bf16.gmra.mrb[0].mxu0 %v1715
      %v1834 = vpop.f32.mrb[0].mxu0
      %v1835 = vadd.f32 0.0, %v1834
      %v1836 = vpop.f32.mrb[0].mxu0
      %v1837 = vpop.f32.mrb[0].mxu0
      %v1838 = vadd.f32 0.0, %v1837
      %v1839 = vpop.f32.mrb[0].mxu0
      %1840 = vmatprep.mubr.bf16.mxu0 0
      %1841 = vmatmul.mubr.bf16.gmra.mrb[0].mxu0 %v1718
      %v1842 = vpop.f32.mrb[0].mxu0
      %v1843 = vadd.f32 0.0, %v1842
      %v1844 = vpop.f32.mrb[0].mxu0
      %v1845 = vpop.f32.mrb[0].mxu0
      %v1846 = vadd.f32 0.0, %v1845
      %v1847 = vpop.f32.mrb[0].mxu0
      %1848 = vmatprep.mubr.bf16.mxu0 0
      %1849 = vmatmul.mubr.bf16.gmra.mrb[0].mxu0 %v1721
      %v1850 = vpop.f32.mrb[0].mxu0
      %v1851 = vadd.f32 0.0, %v1850
      %v1852 = vpop.f32.mrb[0].mxu0
      %v1853 = vpop.f32.mrb[0].mxu0
      %v1854 = vadd.f32 0.0, %v1853
      %v1855 = vpop.f32.mrb[0].mxu0
      %1856 = vmatprep.mubr.bf16.mxu0 0
      %1857 = vmatmul.mubr.bf16.gmra.mrb[0].mxu0 %v1724
      %v1858 = vpop.f32.mrb[0].mxu0
      %v1859 = vadd.f32 0.0, %v1858
      %v1860 = vpop.f32.mrb[0].mxu0
      %v1861 = vpop.f32.mrb[0].mxu0
      %v1862 = vadd.f32 0.0, %v1861
      %v1863 = vpop.f32.mrb[0].mxu0
      %1864 = vmatprep.mubr.bf16.mxu0 0
      %1865 = vmatmul.mubr.bf16.gmra.mrb[0].mxu0 %v1727
      %v1866 = vpop.f32.mrb[0].mxu0
      %v1867 = vadd.f32 0.0, %v1866
      %v1868 = vpop.f32.mrb[0].mxu0
      %v1869 = vpop.f32.mrb[0].mxu0
      %v1870 = vadd.f32 0.0, %v1869
      %v1871 = vpop.f32.mrb[0].mxu0
      %1872 = vmatprep.mubr.bf16.mxu0 0
      %1873 = vmatmul.mubr.bf16.gmra.mrb[0].mxu0 %v1730
      %v1874 = vpop.f32.mrb[0].mxu0
      %v1875 = vadd.f32 0.0, %v1874
      %v1876 = vpop.f32.mrb[0].mxu0
      %v1877 = vpop.f32.mrb[0].mxu0
      %v1878 = vadd.f32 0.0, %v1877
      %v1879 = vpop.f32.mrb[0].mxu0
      %1880 = vmatprep.mubr.bf16.mxu0 0
      %1881 = vmatmul.mubr.bf16.gmra.mrb[0].mxu0 %v1733
      %v1882 = vpop.f32.mrb[0].mxu0
      %v1883 = vadd.f32 0.0, %v1882
      %v1884 = vpop.f32.mrb[0].mxu0
      %v1885 = vpop.f32.mrb[0].mxu0
      %v1886 = vadd.f32 0.0, %v1885
      %v1887 = vpop.f32.mrb[0].mxu0
      %1888 = vmatprep.mubr.bf16.mxu0 0
      %1889 = vmatmul.mubr.bf16.gmra.mrb[0].mxu0 %v1736
      %v1890 = vpop.f32.mrb[0].mxu0
      %v1891 = vadd.f32 0.0, %v1890
      %v1892 = vpop.f32.mrb[0].mxu0
      %v1893 = vpop.f32.mrb[0].mxu0
      %v1894 = vadd.f32 0.0, %v1893
      %v1895 = vpop.f32.mrb[0].mxu0
      %1896 = vmatprep.mubr.bf16.mxu0 0
      %1897 = vmatmul.mubr.bf16.gmra.mrb[0].mxu0 %v1739
      %v1898 = vpop.f32.mrb[0].mxu0
      %v1899 = vadd.f32 0.0, %v1898
      %v1900 = vpop.f32.mrb[0].mxu0
      %v1901 = vpop.f32.mrb[0].mxu0
      %v1902 = vadd.f32 0.0, %v1901
      %v1903 = vpop.f32.mrb[0].mxu0
      %1904 = vdwg.mxu0
      %v1905 = vadd.f32 %v1608, %v1779
      %v1906 = vadd.f32 %v1609, %v1782
      %v1907 = vadd.f32 %v1610, %v1787
      %v1908 = vadd.f32 %v1611, %v1790
      %v1909 = vadd.f32 %v1612, %v1795
      %v1910 = vadd.f32 %v1613, %v1798
      %v1911 = vadd.f32 %v1614, %v1803
      %v1912 = vadd.f32 %v1615, %v1806
      %v1913 = vadd.f32 %v1616, %v1811
      %v1914 = vadd.f32 %v1617, %v1814
      %v1915 = vadd.f32 %v1618, %v1819
      %v1916 = vadd.f32 %v1619, %v1822
      %v1917 = vadd.f32 %v1620, %v1827
      %v1918 = vadd.f32 %v1621, %v1830
      %v1919 = vadd.f32 %v1622, %v1835
      %v1920 = vadd.f32 %v1623, %v1838
      %v1921 = vadd.f32 %v1624, %v1843
      %v1922 = vadd.f32 %v1625, %v1846
      %v1923 = vadd.f32 %v1626, %v1851
      %v1924 = vadd.f32 %v1627, %v1854
      %v1925 = vadd.f32 %v1628, %v1859
      %v1926 = vadd.f32 %v1629, %v1862
      %v1927 = vadd.f32 %v1630, %v1867
      %v1928 = vadd.f32 %v1631, %v1870
      %v1929 = vadd.f32 %v1632, %v1875
      %v1930 = vadd.f32 %v1633, %v1878
      %v1931 = vadd.f32 %v1634, %v1883
      %v1932 = vadd.f32 %v1635, %v1886
      %v1933 = vadd.f32 %v1636, %v1891
      %v1934 = vadd.f32 %v1637, %v1894
      %v1935 = vadd.f32 %v1638, %v1899
      %v1936 = vadd.f32 %v1639, %v1902
      %v1937 = vld [vmem:[%s754 + $0x1] sm:$0xff]
      %v1938 = vld [vmem:[%s754 + $0x9] sm:$0xff]
      %v1939 = vld [vmem:[%s754 + $0x19] sm:$0xff]
      %v1940 = vld [vmem:[%s754 + $0x21] sm:$0xff]
      %v1941 = vld [vmem:[%s754 + $0x31] sm:$0xff]
      %v1942 = vld [vmem:[%s754 + $0x39] sm:$0xff]
      %v1943 = vld [vmem:[%s754 + $0x49] sm:$0xff]
      %v1944 = vld [vmem:[%s754 + $0x51] sm:$0xff]
      %v1945 = vld [vmem:[%s754 + $0x61] sm:$0xff]
      %v1946 = vld [vmem:[%s754 + $0x69] sm:$0xff]
      %v1947 = vld [vmem:[%s754 + $0x79] sm:$0xff]
      %v1948 = vld [vmem:[%s754 + $0x81] sm:$0xff]
      %v1949 = vld [vmem:[%s754 + $0x91] sm:$0xff]
      %v1950 = vld [vmem:[%s754 + $0x99] sm:$0xff]
      %v1951 = vld [vmem:[%s754 + $0xa9] sm:$0xff]
      %v1952 = vld [vmem:[%s754 + $0xb1] sm:$0xff]
      %v1953 = vld [vmem:[%s754 + $0xc1] sm:$0xff]
      %v1954 = vld [vmem:[%s754 + $0xc9] sm:$0xff]
      %v1955 = vld [vmem:[%s754 + $0xd9] sm:$0xff]
      %v1956 = vld [vmem:[%s754 + $0xe1] sm:$0xff]
      %v1957 = vld [vmem:[%s754 + $0xf1] sm:$0xff]
      %v1958 = vld [vmem:[%s754 + $0xf9] sm:$0xff]
      %v1959 = vld [vmem:[%s754 + $0x109] sm:$0xff]
      %v1960 = vld [vmem:[%s754 + $0x111] sm:$0xff]
      %v1961 = vld [vmem:[%s754 + $0x121] sm:$0xff]
      %v1962 = vld [vmem:[%s754 + $0x129] sm:$0xff]
      %v1963 = vld [vmem:[%s754 + $0x139] sm:$0xff]
      %v1964 = vld [vmem:[%s754 + $0x141] sm:$0xff]
      %v1965 = vld [vmem:[%s754 + $0x151] sm:$0xff]
      %v1966 = vld [vmem:[%s754 + $0x159] sm:$0xff]
      %v1967 = vld [vmem:[%s754 + $0x169] sm:$0xff]
      %v1968 = vld [vmem:[%s754 + $0x171] sm:$0xff]
      %v1969 = vpack.c.bf16 %v1938, %v1937
      %v1970 = vpack.c.bf16 %v1940, %v1939
      %v1971 = vpack.c.bf16 %v1942, %v1941
      %v1972 = vpack.c.bf16 %v1944, %v1943
      %v1973 = vpack.c.bf16 %v1946, %v1945
      %v1974 = vpack.c.bf16 %v1948, %v1947
      %v1975 = vpack.c.bf16 %v1950, %v1949
      %v1976 = vpack.c.bf16 %v1952, %v1951
      %v1977 = vpack.c.bf16 %v1954, %v1953
      %v1978 = vpack.c.bf16 %v1956, %v1955
      %v1979 = vpack.c.bf16 %v1958, %v1957
      %v1980 = vpack.c.bf16 %v1960, %v1959
      %v1981 = vpack.c.bf16 %v1962, %v1961
      %v1982 = vpack.c.bf16 %v1964, %v1963
      %v1983 = vpack.c.bf16 %v1966, %v1965
      %v1984 = vpack.c.bf16 %v1968, %v1967
      %v1985 = vld [vmem:[%s4 + $0x8] sm:$0x3]
      %v1987 = vsel %vm369, %v1969, 0
      %v1990 = vsel %vm369, %v1970, 0
      %v1993 = vsel %vm369, %v1971, 0
      %v1996 = vsel %vm369, %v1972, 0
      %v1999 = vsel %vm369, %v1973, 0
      %v2002 = vsel %vm369, %v1974, 0
      %v2005 = vsel %vm369, %v1975, 0
      %v2008 = vsel %vm369, %v1976, 0
      %v2011 = vsel %vm369, %v1977, 0
      %v2014 = vsel %vm369, %v1978, 0
      %v2017 = vsel %vm369, %v1979, 0
      %v2020 = vsel %vm369, %v1980, 0
      %v2023 = vsel %vm369, %v1981, 0
      %v2026 = vsel %vm369, %v1982, 0
      %v2029 = vsel %vm369, %v1983, 0
      %v2032 = vsel %vm369, %v1984, 0
      %v2035 = vsel %vm970, %v1985, 0
      %2037 = vmatprep.subr.bf16.mxu0 0
      %2038 = vmatpush1.bf16.msra.mxu0 %v2035
      %2039 = vmatprep.subr.bf16.mxu0 0
      %2040 = vmatpush1.bf16.msra.mxu0 0
      %2041 = vmatprep.subr.bf16.mxu0 0
      %2042 = vmatpush1.bf16.msra.mxu0 0
      %2043 = vmatprep.subr.bf16.mxu0 0
      %2044 = vmatpush1.bf16.msra.mxu0 0
      %2045 = vmatprep.subr.bf16.mxu0 0
      %2046 = vmatpush1.bf16.msra.mxu0 0
      %2047 = vmatprep.subr.bf16.mxu0 0
      %2048 = vmatpush1.bf16.msra.mxu0 0
      %2049 = vmatprep.subr.bf16.mxu0 0
      %2050 = vmatpush1.bf16.msra.mxu0 0
      %2051 = vmatprep.subr.bf16.mxu0 0
      %2052 = vmatpush1.bf16.msra.mxu0 0
      %2053 = vmatprep.subr.bf16.mxu0 0
      %2054 = vmatpush1.bf16.msra.mxu0 0
      %2055 = vmatprep.subr.bf16.mxu0 0
      %2056 = vmatpush1.bf16.msra.mxu0 0
      %2057 = vmatprep.subr.bf16.mxu0 0
      %2058 = vmatpush1.bf16.msra.mxu0 0
      %2059 = vmatprep.subr.bf16.mxu0 0
      %2060 = vmatpush1.bf16.msra.mxu0 0
      %2061 = vmatprep.subr.bf16.mxu0 0
      %2062 = vmatpush1.bf16.msra.mxu0 0
      %2063 = vmatprep.subr.bf16.mxu0 0
      %2064 = vmatpush1.bf16.msra.mxu0 0
      %2065 = vmatprep.subr.bf16.mxu0 0
      %2066 = vmatpush1.bf16.msra.mxu0 0
      %2067 = vmatprep.subr.bf16.mxu0 0
      %2068 = vmatpush1.bf16.msra.mxu0 0
      %2069 = vmatprep.mubr.bf16.mxu0 0
      %2070 = vmatmul.mubr.bf16.gmra.mrb[0].mxu0 %v1987
      %v2071 = vpop.f32.mrb[0].mxu0
      %v2072 = vadd.f32 0.0, %v2071
      %v2073 = vpop.f32.mrb[0].mxu0
      %v2074 = vpop.f32.mrb[0].mxu0
      %v2075 = vadd.f32 0.0, %v2074
      %v2076 = vpop.f32.mrb[0].mxu0
      %2077 = vmatprep.mubr.bf16.mxu0 0
      %2078 = vmatmul.mubr.bf16.gmra.mrb[0].mxu0 %v1990
      %v2079 = vpop.f32.mrb[0].mxu0
      %v2080 = vadd.f32 0.0, %v2079
      %v2081 = vpop.f32.mrb[0].mxu0
      %v2082 = vpop.f32.mrb[0].mxu0
      %v2083 = vadd.f32 0.0, %v2082
      %v2084 = vpop.f32.mrb[0].mxu0
      %2085 = vmatprep.mubr.bf16.mxu0 0
      %2086 = vmatmul.mubr.bf16.gmra.mrb[0].mxu0 %v1993
      %v2087 = vpop.f32.mrb[0].mxu0
      %v2088 = vadd.f32 0.0, %v2087
      %v2089 = vpop.f32.mrb[0].mxu0
      %v2090 = vpop.f32.mrb[0].mxu0
      %v2091 = vadd.f32 0.0, %v2090
      %v2092 = vpop.f32.mrb[0].mxu0
      %2093 = vmatprep.mubr.bf16.mxu0 0
      %2094 = vmatmul.mubr.bf16.gmra.mrb[0].mxu0 %v1996
      %v2095 = vpop.f32.mrb[0].mxu0
      %v2096 = vadd.f32 0.0, %v2095
      %v2097 = vpop.f32.mrb[0].mxu0
      %v2098 = vpop.f32.mrb[0].mxu0
      %v2099 = vadd.f32 0.0, %v2098
      %v2100 = vpop.f32.mrb[0].mxu0
      %2101 = vmatprep.mubr.bf16.mxu0 0
      %2102 = vmatmul.mubr.bf16.gmra.mrb[0].mxu0 %v1999
      %v2103 = vpop.f32.mrb[0].mxu0
      %v2104 = vadd.f32 0.0, %v2103
      %v2105 = vpop.f32.mrb[0].mxu0
      %v2106 = vpop.f32.mrb[0].mxu0
      %v2107 = vadd.f32 0.0, %v2106
      %v2108 = vpop.f32.mrb[0].mxu0
      %2109 = vmatprep.mubr.bf16.mxu0 0
      %2110 = vmatmul.mubr.bf16.gmra.mrb[0].mxu0 %v2002
      %v2111 = vpop.f32.mrb[0].mxu0
      %v2112 = vadd.f32 0.0, %v2111
      %v2113 = vpop.f32.mrb[0].mxu0
      %v2114 = vpop.f32.mrb[0].mxu0
      %v2115 = vadd.f32 0.0, %v2114
      %v2116 = vpop.f32.mrb[0].mxu0
      %2117 = vmatprep.mubr.bf16.mxu0 0
      %2118 = vmatmul.mubr.bf16.gmra.mrb[0].mxu0 %v2005
      %v2119 = vpop.f32.mrb[0].mxu0
      %v2120 = vadd.f32 0.0, %v2119
      %v2121 = vpop.f32.mrb[0].mxu0
      %v2122 = vpop.f32.mrb[0].mxu0
      %v2123 = vadd.f32 0.0, %v2122
      %v2124 = vpop.f32.mrb[0].mxu0
      %2125 = vmatprep.mubr.bf16.mxu0 0
      %2126 = vmatmul.mubr.bf16.gmra.mrb[0].mxu0 %v2008
      %v2127 = vpop.f32.mrb[0].mxu0
      %v2128 = vadd.f32 0.0, %v2127
      %v2129 = vpop.f32.mrb[0].mxu0
      %v2130 = vpop.f32.mrb[0].mxu0
      %v2131 = vadd.f32 0.0, %v2130
      %v2132 = vpop.f32.mrb[0].mxu0
      %2133 = vmatprep.mubr.bf16.mxu0 0
      %2134 = vmatmul.mubr.bf16.gmra.mrb[0].mxu0 %v2011
      %v2135 = vpop.f32.mrb[0].mxu0
      %v2136 = vadd.f32 0.0, %v2135
      %v2137 = vpop.f32.mrb[0].mxu0
      %v2138 = vpop.f32.mrb[0].mxu0
      %v2139 = vadd.f32 0.0, %v2138
      %v2140 = vpop.f32.mrb[0].mxu0
      %2141 = vmatprep.mubr.bf16.mxu0 0
      %2142 = vmatmul.mubr.bf16.gmra.mrb[0].mxu0 %v2014
      %v2143 = vpop.f32.mrb[0].mxu0
      %v2144 = vadd.f32 0.0, %v2143
      %v2145 = vpop.f32.mrb[0].mxu0
      %v2146 = vpop.f32.mrb[0].mxu0
      %v2147 = vadd.f32 0.0, %v2146
      %v2148 = vpop.f32.mrb[0].mxu0
      %2149 = vmatprep.mubr.bf16.mxu0 0
      %2150 = vmatmul.mubr.bf16.gmra.mrb[0].mxu0 %v2017
      %v2151 = vpop.f32.mrb[0].mxu0
      %v2152 = vadd.f32 0.0, %v2151
      %v2153 = vpop.f32.mrb[0].mxu0
      %v2154 = vpop.f32.mrb[0].mxu0
      %v2155 = vadd.f32 0.0, %v2154
      %v2156 = vpop.f32.mrb[0].mxu0
      %2157 = vmatprep.mubr.bf16.mxu0 0
      %2158 = vmatmul.mubr.bf16.gmra.mrb[0].mxu0 %v2020
      %v2159 = vpop.f32.mrb[0].mxu0
      %v2160 = vadd.f32 0.0, %v2159
      %v2161 = vpop.f32.mrb[0].mxu0
      %v2162 = vpop.f32.mrb[0].mxu0
      %v2163 = vadd.f32 0.0, %v2162
      %v2164 = vpop.f32.mrb[0].mxu0
      %2165 = vmatprep.mubr.bf16.mxu0 0
      %2166 = vmatmul.mubr.bf16.gmra.mrb[0].mxu0 %v2023
      %v2167 = vpop.f32.mrb[0].mxu0
      %v2168 = vadd.f32 0.0, %v2167
      %v2169 = vpop.f32.mrb[0].mxu0
      %v2170 = vpop.f32.mrb[0].mxu0
      %v2171 = vadd.f32 0.0, %v2170
      %v2172 = vpop.f32.mrb[0].mxu0
      %2173 = vmatprep.mubr.bf16.mxu0 0
      %2174 = vmatmul.mubr.bf16.gmra.mrb[0].mxu0 %v2026
      %v2175 = vpop.f32.mrb[0].mxu0
      %v2176 = vadd.f32 0.0, %v2175
      %v2177 = vpop.f32.mrb[0].mxu0
      %v2178 = vpop.f32.mrb[0].mxu0
      %v2179 = vadd.f32 0.0, %v2178
      %v2180 = vpop.f32.mrb[0].mxu0
      %2181 = vmatprep.mubr.bf16.mxu0 0
      %2182 = vmatmul.mubr.bf16.gmra.mrb[0].mxu0 %v2029
      %v2183 = vpop.f32.mrb[0].mxu0
      %v2184 = vadd.f32 0.0, %v2183
      %v2185 = vpop.f32.mrb[0].mxu0
      %v2186 = vpop.f32.mrb[0].mxu0
      %v2187 = vadd.f32 0.0, %v2186
      %v2188 = vpop.f32.mrb[0].mxu0
      %2189 = vmatprep.mubr.bf16.mxu0 0
      %2190 = vmatmul.mubr.bf16.gmra.mrb[0].mxu0 %v2032
      %v2191 = vpop.f32.mrb[0].mxu0
      %v2192 = vadd.f32 0.0, %v2191
      %v2193 = vpop.f32.mrb[0].mxu0
      %v2194 = vpop.f32.mrb[0].mxu0
      %v2195 = vadd.f32 0.0, %v2194
      %v2196 = vpop.f32.mrb[0].mxu0
      %2197 = vdwg.mxu0
      %v2198 = vadd.f32 %v1905, %v2072
      %v2199 = vadd.f32 %v1906, %v2075
      %v2200 = vadd.f32 %v1907, %v2080
      %v2201 = vadd.f32 %v1908, %v2083
      %v2202 = vadd.f32 %v1909, %v2088
      %v2203 = vadd.f32 %v1910, %v2091
      %v2204 = vadd.f32 %v1911, %v2096
      %v2205 = vadd.f32 %v1912, %v2099
      %v2206 = vadd.f32 %v1913, %v2104
      %v2207 = vadd.f32 %v1914, %v2107
      %v2208 = vadd.f32 %v1915, %v2112
      %v2209 = vadd.f32 %v1916, %v2115
      %v2210 = vadd.f32 %v1917, %v2120
      %v2211 = vadd.f32 %v1918, %v2123
      %v2212 = vadd.f32 %v1919, %v2128
      %v2213 = vadd.f32 %v1920, %v2131
      %v2214 = vadd.f32 %v1921, %v2136
      %v2215 = vadd.f32 %v1922, %v2139
      %v2216 = vadd.f32 %v1923, %v2144
      %v2217 = vadd.f32 %v1924, %v2147
      %v2218 = vadd.f32 %v1925, %v2152
      %v2219 = vadd.f32 %v1926, %v2155
      %v2220 = vadd.f32 %v1927, %v2160
      %v2221 = vadd.f32 %v1928, %v2163
      %v2222 = vadd.f32 %v1929, %v2168
      %v2223 = vadd.f32 %v1930, %v2171
      %v2224 = vadd.f32 %v1931, %v2176
      %v2225 = vadd.f32 %v1932, %v2179
      %v2226 = vadd.f32 %v1933, %v2184
      %v2227 = vadd.f32 %v1934, %v2187
      %v2228 = vadd.f32 %v1935, %v2192
      %v2229 = vadd.f32 %v1936, %v2195
      %v2230 = vld [vmem:[%s754 + $0x2] sm:$0xff]
      %v2231 = vld [vmem:[%s754 + $0xa] sm:$0xff]
      %v2232 = vld [vmem:[%s754 + $0x1a] sm:$0xff]
      %v2233 = vld [vmem:[%s754 + $0x22] sm:$0xff]
      %v2234 = vld [vmem:[%s754 + $0x32] sm:$0xff]
      %v2235 = vld [vmem:[%s754 + $0x3a] sm:$0xff]
      %v2236 = vld [vmem:[%s754 + $0x4a] sm:$0xff]
      %v2237 = vld [vmem:[%s754 + $0x52] sm:$0xff]
      %v2238 = vld [vmem:[%s754 + $0x62] sm:$0xff]
      %v2239 = vld [vmem:[%s754 + $0x6a] sm:$0xff]
      %v2240 = vld [vmem:[%s754 + $0x7a] sm:$0xff]
      %v2241 = vld [vmem:[%s754 + $0x82] sm:$0xff]
      %v2242 = vld [vmem:[%s754 + $0x92] sm:$0xff]
      %v2243 = vld [vmem:[%s754 + $0x9a] sm:$0xff]
      %v2244 = vld [vmem:[%s754 + $0xaa] sm:$0xff]
      %v2245 = vld [vmem:[%s754 + $0xb2] sm:$0xff]
      %v2246 = vld [vmem:[%s754 + $0xc2] sm:$0xff]
      %v2247 = vld [vmem:[%s754 + $0xca] sm:$0xff]
      %v2248 = vld [vmem:[%s754 + $0xda] sm:$0xff]
      %v2249 = vld [vmem:[%s754 + $0xe2] sm:$0xff]
      %v2250 = vld [vmem:[%s754 + $0xf2] sm:$0xff]
      %v2251 = vld [vmem:[%s754 + $0xfa] sm:$0xff]
      %v2252 = vld [vmem:[%s754 + $0x10a] sm:$0xff]
      %v2253 = vld [vmem:[%s754 + $0x112] sm:$0xff]
      %v2254 = vld [vmem:[%s754 + $0x122] sm:$0xff]
      %v2255 = vld [vmem:[%s754 + $0x12a] sm:$0xff]
      %v2256 = vld [vmem:[%s754 + $0x13a] sm:$0xff]
      %v2257 = vld [vmem:[%s754 + $0x142] sm:$0xff]
      %v2258 = vld [vmem:[%s754 + $0x152] sm:$0xff]
      %v2259 = vld [vmem:[%s754 + $0x15a] sm:$0xff]
      %v2260 = vld [vmem:[%s754 + $0x16a] sm:$0xff]
      %v2261 = vld [vmem:[%s754 + $0x172] sm:$0xff]
      %v2262 = vpack.c.bf16 %v2231, %v2230
      %v2263 = vpack.c.bf16 %v2233, %v2232
      %v2264 = vpack.c.bf16 %v2235, %v2234
      %v2265 = vpack.c.bf16 %v2237, %v2236
      %v2266 = vpack.c.bf16 %v2239, %v2238
      %v2267 = vpack.c.bf16 %v2241, %v2240
      %v2268 = vpack.c.bf16 %v2243, %v2242
      %v2269 = vpack.c.bf16 %v2245, %v2244
      %v2270 = vpack.c.bf16 %v2247, %v2246
      %v2271 = vpack.c.bf16 %v2249, %v2248
      %v2272 = vpack.c.bf16 %v2251, %v2250
      %v2273 = vpack.c.bf16 %v2253, %v2252
      %v2274 = vpack.c.bf16 %v2255, %v2254
      %v2275 = vpack.c.bf16 %v2257, %v2256
      %v2276 = vpack.c.bf16 %v2259, %v2258
      %v2277 = vpack.c.bf16 %v2261, %v2260
      %v2278 = vld [vmem:[%s4 + $0x8] sm:$0xc]
      %v2280 = vunpack.c.l.b16 %v2278
      %v2281 = vpack.c.b16 %v2280, %v2280
      %v2282 = vrot.slane %v2281, 2
      %v2284 = vsel %vm369, %v2262, 0
      %v2287 = vsel %vm369, %v2263, 0
      %v2290 = vsel %vm369, %v2264, 0
      %v2293 = vsel %vm369, %v2265, 0
      %v2296 = vsel %vm369, %v2266, 0
      %v2299 = vsel %vm369, %v2267, 0
      %v2302 = vsel %vm369, %v2268, 0
      %v2305 = vsel %vm369, %v2269, 0
      %v2308 = vsel %vm369, %v2270, 0
      %v2311 = vsel %vm369, %v2271, 0
      %v2314 = vsel %vm369, %v2272, 0
      %v2317 = vsel %vm369, %v2273, 0
      %v2320 = vsel %vm369, %v2274, 0
      %v2323 = vsel %vm369, %v2275, 0
      %v2326 = vsel %vm369, %v2276, 0
      %v2329 = vsel %vm369, %v2277, 0
      %v2332 = vsel %vm970, %v2282, 0
      %2334 = vmatprep.subr.bf16.mxu0 0
      %2335 = vmatpush1.bf16.msra.mxu0 %v2332
      %2336 = vmatprep.subr.bf16.mxu0 0
      %2337 = vmatpush1.bf16.msra.mxu0 0
      %2338 = vmatprep.subr.bf16.mxu0 0
      %2339 = vmatpush1.bf16.msra.mxu0 0
      %2340 = vmatprep.subr.bf16.mxu0 0
      %2341 = vmatpush1.bf16.msra.mxu0 0
      %2342 = vmatprep.subr.bf16.mxu0 0
      %2343 = vmatpush1.bf16.msra.mxu0 0
      %2344 = vmatprep.subr.bf16.mxu0 0
      %2345 = vmatpush1.bf16.msra.mxu0 0
      %2346 = vmatprep.subr.bf16.mxu0 0
      %2347 = vmatpush1.bf16.msra.mxu0 0
      %2348 = vmatprep.subr.bf16.mxu0 0
      %2349 = vmatpush1.bf16.msra.mxu0 0
      %2350 = vmatprep.subr.bf16.mxu0 0
      %2351 = vmatpush1.bf16.msra.mxu0 0
      %2352 = vmatprep.subr.bf16.mxu0 0
      %2353 = vmatpush1.bf16.msra.mxu0 0
      %2354 = vmatprep.subr.bf16.mxu0 0
      %2355 = vmatpush1.bf16.msra.mxu0 0
      %2356 = vmatprep.subr.bf16.mxu0 0
      %2357 = vmatpush1.bf16.msra.mxu0 0
      %2358 = vmatprep.subr.bf16.mxu0 0
      %2359 = vmatpush1.bf16.msra.mxu0 0
      %2360 = vmatprep.subr.bf16.mxu0 0
      %2361 = vmatpush1.bf16.msra.mxu0 0
      %2362 = vmatprep.subr.bf16.mxu0 0
      %2363 = vmatpush1.bf16.msra.mxu0 0
      %2364 = vmatprep.subr.bf16.mxu0 0
      %2365 = vmatpush1.bf16.msra.mxu0 0
      %2366 = vmatprep.mubr.bf16.mxu0 0
      %2367 = vmatmul.mubr.bf16.gmra.mrb[0].mxu0 %v2284
      %v2368 = vpop.f32.mrb[0].mxu0
      %v2369 = vadd.f32 0.0, %v2368
      %v2370 = vpop.f32.mrb[0].mxu0
      %v2371 = vpop.f32.mrb[0].mxu0
      %v2372 = vadd.f32 0.0, %v2371
      %v2373 = vpop.f32.mrb[0].mxu0
      %2374 = vmatprep.mubr.bf16.mxu0 0
      %2375 = vmatmul.mubr.bf16.gmra.mrb[0].mxu0 %v2287
      %v2376 = vpop.f32.mrb[0].mxu0
      %v2377 = vadd.f32 0.0, %v2376
      %v2378 = vpop.f32.mrb[0].mxu0
      %v2379 = vpop.f32.mrb[0].mxu0
      %v2380 = vadd.f32 0.0, %v2379
      %v2381 = vpop.f32.mrb[0].mxu0
      %2382 = vmatprep.mubr.bf16.mxu0 0
      %2383 = vmatmul.mubr.bf16.gmra.mrb[0].mxu0 %v2290
      %v2384 = vpop.f32.mrb[0].mxu0
      %v2385 = vadd.f32 0.0, %v2384
      %v2386 = vpop.f32.mrb[0].mxu0
      %v2387 = vpop.f32.mrb[0].mxu0
      %v2388 = vadd.f32 0.0, %v2387
      %v2389 = vpop.f32.mrb[0].mxu0
      %2390 = vmatprep.mubr.bf16.mxu0 0
      %2391 = vmatmul.mubr.bf16.gmra.mrb[0].mxu0 %v2293
      %v2392 = vpop.f32.mrb[0].mxu0
      %v2393 = vadd.f32 0.0, %v2392
      %v2394 = vpop.f32.mrb[0].mxu0
      %v2395 = vpop.f32.mrb[0].mxu0
      %v2396 = vadd.f32 0.0, %v2395
      %v2397 = vpop.f32.mrb[0].mxu0
      %2398 = vmatprep.mubr.bf16.mxu0 0
      %2399 = vmatmul.mubr.bf16.gmra.mrb[0].mxu0 %v2296
      %v2400 = vpop.f32.mrb[0].mxu0
      %v2401 = vadd.f32 0.0, %v2400
      %v2402 = vpop.f32.mrb[0].mxu0
      %v2403 = vpop.f32.mrb[0].mxu0
      %v2404 = vadd.f32 0.0, %v2403
      %v2405 = vpop.f32.mrb[0].mxu0
      %2406 = vmatprep.mubr.bf16.mxu0 0
      %2407 = vmatmul.mubr.bf16.gmra.mrb[0].mxu0 %v2299
      %v2408 = vpop.f32.mrb[0].mxu0
      %v2409 = vadd.f32 0.0, %v2408
      %v2410 = vpop.f32.mrb[0].mxu0
      %v2411 = vpop.f32.mrb[0].mxu0
      %v2412 = vadd.f32 0.0, %v2411
      %v2413 = vpop.f32.mrb[0].mxu0
      %2414 = vmatprep.mubr.bf16.mxu0 0
      %2415 = vmatmul.mubr.bf16.gmra.mrb[0].mxu0 %v2302
      %v2416 = vpop.f32.mrb[0].mxu0
      %v2417 = vadd.f32 0.0, %v2416
      %v2418 = vpop.f32.mrb[0].mxu0
      %v2419 = vpop.f32.mrb[0].mxu0
      %v2420 = vadd.f32 0.0, %v2419
      %v2421 = vpop.f32.mrb[0].mxu0
      %2422 = vmatprep.mubr.bf16.mxu0 0
      %2423 = vmatmul.mubr.bf16.gmra.mrb[0].mxu0 %v2305
      %v2424 = vpop.f32.mrb[0].mxu0
      %v2425 = vadd.f32 0.0, %v2424
      %v2426 = vpop.f32.mrb[0].mxu0
      %v2427 = vpop.f32.mrb[0].mxu0
      %v2428 = vadd.f32 0.0, %v2427
      %v2429 = vpop.f32.mrb[0].mxu0
      %2430 = vmatprep.mubr.bf16.mxu0 0
      %2431 = vmatmul.mubr.bf16.gmra.mrb[0].mxu0 %v2308
      %v2432 = vpop.f32.mrb[0].mxu0
      %v2433 = vadd.f32 0.0, %v2432
      %v2434 = vpop.f32.mrb[0].mxu0
      %v2435 = vpop.f32.mrb[0].mxu0
      %v2436 = vadd.f32 0.0, %v2435
      %v2437 = vpop.f32.mrb[0].mxu0
      %2438 = vmatprep.mubr.bf16.mxu0 0
      %2439 = vmatmul.mubr.bf16.gmra.mrb[0].mxu0 %v2311
      %v2440 = vpop.f32.mrb[0].mxu0
      %v2441 = vadd.f32 0.0, %v2440
      %v2442 = vpop.f32.mrb[0].mxu0
      %v2443 = vpop.f32.mrb[0].mxu0
      %v2444 = vadd.f32 0.0, %v2443
      %v2445 = vpop.f32.mrb[0].mxu0
      %2446 = vmatprep.mubr.bf16.mxu0 0
      %2447 = vmatmul.mubr.bf16.gmra.mrb[0].mxu0 %v2314
      %v2448 = vpop.f32.mrb[0].mxu0
      %v2449 = vadd.f32 0.0, %v2448
      %v2450 = vpop.f32.mrb[0].mxu0
      %v2451 = vpop.f32.mrb[0].mxu0
      %v2452 = vadd.f32 0.0, %v2451
      %v2453 = vpop.f32.mrb[0].mxu0
      %2454 = vmatprep.mubr.bf16.mxu0 0
      %2455 = vmatmul.mubr.bf16.gmra.mrb[0].mxu0 %v2317
      %v2456 = vpop.f32.mrb[0].mxu0
      %v2457 = vadd.f32 0.0, %v2456
      %v2458 = vpop.f32.mrb[0].mxu0
      %v2459 = vpop.f32.mrb[0].mxu0
      %v2460 = vadd.f32 0.0, %v2459
      %v2461 = vpop.f32.mrb[0].mxu0
      %2462 = vmatprep.mubr.bf16.mxu0 0
      %2463 = vmatmul.mubr.bf16.gmra.mrb[0].mxu0 %v2320
      %v2464 = vpop.f32.mrb[0].mxu0
      %v2465 = vadd.f32 0.0, %v2464
      %v2466 = vpop.f32.mrb[0].mxu0
      %v2467 = vpop.f32.mrb[0].mxu0
      %v2468 = vadd.f32 0.0, %v2467
      %v2469 = vpop.f32.mrb[0].mxu0
      %2470 = vmatprep.mubr.bf16.mxu0 0
      %2471 = vmatmul.mubr.bf16.gmra.mrb[0].mxu0 %v2323
      %v2472 = vpop.f32.mrb[0].mxu0
      %v2473 = vadd.f32 0.0, %v2472
      %v2474 = vpop.f32.mrb[0].mxu0
      %v2475 = vpop.f32.mrb[0].mxu0
      %v2476 = vadd.f32 0.0, %v2475
      %v2477 = vpop.f32.mrb[0].mxu0
      %2478 = vmatprep.mubr.bf16.mxu0 0
      %2479 = vmatmul.mubr.bf16.gmra.mrb[0].mxu0 %v2326
      %v2480 = vpop.f32.mrb[0].mxu0
      %v2481 = vadd.f32 0.0, %v2480
      %v2482 = vpop.f32.mrb[0].mxu0
      %v2483 = vpop.f32.mrb[0].mxu0
      %v2484 = vadd.f32 0.0, %v2483
      %v2485 = vpop.f32.mrb[0].mxu0
      %2486 = vmatprep.mubr.bf16.mxu0 0
      %2487 = vmatmul.mubr.bf16.gmra.mrb[0].mxu0 %v2329
      %v2488 = vpop.f32.mrb[0].mxu0
      %v2489 = vadd.f32 0.0, %v2488
      %v2490 = vpop.f32.mrb[0].mxu0
      %v2491 = vpop.f32.mrb[0].mxu0
      %v2492 = vadd.f32 0.0, %v2491
      %v2493 = vpop.f32.mrb[0].mxu0
      %2494 = vdwg.mxu0
      %v2495 = vadd.f32 %v2198, %v2369
      %v2496 = vadd.f32 %v2199, %v2372
      %v2497 = vadd.f32 %v2200, %v2377
      %v2498 = vadd.f32 %v2201, %v2380
      %v2499 = vadd.f32 %v2202, %v2385
      %v2500 = vadd.f32 %v2203, %v2388
      %v2501 = vadd.f32 %v2204, %v2393
      %v2502 = vadd.f32 %v2205, %v2396
      %v2503 = vadd.f32 %v2206, %v2401
      %v2504 = vadd.f32 %v2207, %v2404
      %v2505 = vadd.f32 %v2208, %v2409
      %v2506 = vadd.f32 %v2209, %v2412
      %v2507 = vadd.f32 %v2210, %v2417
      %v2508 = vadd.f32 %v2211, %v2420
      %v2509 = vadd.f32 %v2212, %v2425
      %v2510 = vadd.f32 %v2213, %v2428
      %v2511 = vadd.f32 %v2214, %v2433
      %v2512 = vadd.f32 %v2215, %v2436
      %v2513 = vadd.f32 %v2216, %v2441
      %v2514 = vadd.f32 %v2217, %v2444
      %v2515 = vadd.f32 %v2218, %v2449
      %v2516 = vadd.f32 %v2219, %v2452
      %v2517 = vadd.f32 %v2220, %v2457
      %v2518 = vadd.f32 %v2221, %v2460
      %v2519 = vadd.f32 %v2222, %v2465
      %v2520 = vadd.f32 %v2223, %v2468
      %v2521 = vadd.f32 %v2224, %v2473
      %v2522 = vadd.f32 %v2225, %v2476
      %v2523 = vadd.f32 %v2226, %v2481
      %v2524 = vadd.f32 %v2227, %v2484
      %v2525 = vadd.f32 %v2228, %v2489
      %v2526 = vadd.f32 %v2229, %v2492
      %s2527 = scalar_lea.vmem [#allocation2], 48
      %v2528 = vld [vmem:[%s2527] sm:$0xff]
      %v2529 = vld [vmem:[%s2527 + $0x8] sm:$0xff]
      %v2530 = vld [vmem:[%s2527 + $0x18] sm:$0xff]
      %v2531 = vld [vmem:[%s2527 + $0x20] sm:$0xff]
      %v2532 = vld [vmem:[%s2527 + $0x30] sm:$0xff]
      %v2533 = vld [vmem:[%s2527 + $0x38] sm:$0xff]
      %v2534 = vld [vmem:[%s2527 + $0x48] sm:$0xff]
      %v2535 = vld [vmem:[%s2527 + $0x50] sm:$0xff]
      %v2536 = vld [vmem:[%s2527 + $0x60] sm:$0xff]
      %v2537 = vld [vmem:[%s2527 + $0x68] sm:$0xff]
      %v2538 = vld [vmem:[%s2527 + $0x78] sm:$0xff]
      %v2539 = vld [vmem:[%s2527 + $0x80] sm:$0xff]
      %v2540 = vld [vmem:[%s2527 + $0x90] sm:$0xff]
      %v2541 = vld [vmem:[%s2527 + $0x98] sm:$0xff]
      %v2542 = vld [vmem:[%s2527 + $0xa8] sm:$0xff]
      %v2543 = vld [vmem:[%s2527 + $0xb0] sm:$0xff]
      %v2544 = vld [vmem:[%s2527 + $0xc0] sm:$0xff]
      %v2545 = vld [vmem:[%s2527 + $0xc8] sm:$0xff]
      %v2546 = vld [vmem:[%s2527 + $0xd8] sm:$0xff]
      %v2547 = vld [vmem:[%s2527 + $0xe0] sm:$0xff]
      %v2548 = vld [vmem:[%s2527 + $0xf0] sm:$0xff]
      %v2549 = vld [vmem:[%s2527 + $0xf8] sm:$0xff]
      %v2550 = vld [vmem:[%s2527 + $0x108] sm:$0xff]
      %v2551 = vld [vmem:[%s2527 + $0x110] sm:$0xff]
      %v2552 = vld [vmem:[%s2527 + $0x120] sm:$0xff]
      %v2553 = vld [vmem:[%s2527 + $0x128] sm:$0xff]
      %v2554 = vld [vmem:[%s2527 + $0x138] sm:$0xff]
      %v2555 = vld [vmem:[%s2527 + $0x140] sm:$0xff]
      %v2556 = vld [vmem:[%s2527 + $0x150] sm:$0xff]
      %v2557 = vld [vmem:[%s2527 + $0x158] sm:$0xff]
      %v2558 = vld [vmem:[%s2527 + $0x168] sm:$0xff]
      %v2559 = vld [vmem:[%s2527 + $0x170] sm:$0xff]
      %v2560 = vpack.c.bf16 %v2529, %v2528
      %v2561 = vpack.c.bf16 %v2531, %v2530
      %v2562 = vpack.c.bf16 %v2533, %v2532
      %v2563 = vpack.c.bf16 %v2535, %v2534
      %v2564 = vpack.c.bf16 %v2537, %v2536
      %v2565 = vpack.c.bf16 %v2539, %v2538
      %v2566 = vpack.c.bf16 %v2541, %v2540
      %v2567 = vpack.c.bf16 %v2543, %v2542
      %v2568 = vpack.c.bf16 %v2545, %v2544
      %v2569 = vpack.c.bf16 %v2547, %v2546
      %v2570 = vpack.c.bf16 %v2549, %v2548
      %v2571 = vpack.c.bf16 %v2551, %v2550
      %v2572 = vpack.c.bf16 %v2553, %v2552
      %v2573 = vpack.c.bf16 %v2555, %v2554
      %v2574 = vpack.c.bf16 %v2557, %v2556
      %v2575 = vpack.c.bf16 %v2559, %v2558
      %v2576 = vld [vmem:[%s4 + $0xc] sm:$0x3]
      %v2578 = vsel %vm369, %v2560, 0
      %v2581 = vsel %vm369, %v2561, 0
      %v2584 = vsel %vm369, %v2562, 0
      %v2587 = vsel %vm369, %v2563, 0
      %v2590 = vsel %vm369, %v2564, 0
      %v2593 = vsel %vm369, %v2565, 0
      %v2596 = vsel %vm369, %v2566, 0
      %v2599 = vsel %vm369, %v2567, 0
      %v2602 = vsel %vm369, %v2568, 0
      %v2605 = vsel %vm369, %v2569, 0
      %v2608 = vsel %vm369, %v2570, 0
      %v2611 = vsel %vm369, %v2571, 0
      %v2614 = vsel %vm369, %v2572, 0
      %v2617 = vsel %vm369, %v2573, 0
      %v2620 = vsel %vm369, %v2574, 0
      %v2623 = vsel %vm369, %v2575, 0
      %v2626 = vsel %vm970, %v2576, 0
      %2628 = vmatprep.subr.bf16.mxu0 0
      %2629 = vmatpush1.bf16.msra.mxu0 %v2626
      %2630 = vmatprep.subr.bf16.mxu0 0
      %2631 = vmatpush1.bf16.msra.mxu0 0
      %2632 = vmatprep.subr.bf16.mxu0 0
      %2633 = vmatpush1.bf16.msra.mxu0 0
      %2634 = vmatprep.subr.bf16.mxu0 0
      %2635 = vmatpush1.bf16.msra.mxu0 0
      %2636 = vmatprep.subr.bf16.mxu0 0
      %2637 = vmatpush1.bf16.msra.mxu0 0
      %2638 = vmatprep.subr.bf16.mxu0 0
      %2639 = vmatpush1.bf16.msra.mxu0 0
      %2640 = vmatprep.subr.bf16.mxu0 0
      %2641 = vmatpush1.bf16.msra.mxu0 0
      %2642 = vmatprep.subr.bf16.mxu0 0
      %2643 = vmatpush1.bf16.msra.mxu0 0
      %2644 = vmatprep.subr.bf16.mxu0 0
      %2645 = vmatpush1.bf16.msra.mxu0 0
      %2646 = vmatprep.subr.bf16.mxu0 0
      %2647 = vmatpush1.bf16.msra.mxu0 0
      %2648 = vmatprep.subr.bf16.mxu0 0
      %2649 = vmatpush1.bf16.msra.mxu0 0
      %2650 = vmatprep.subr.bf16.mxu0 0
      %2651 = vmatpush1.bf16.msra.mxu0 0
      %2652 = vmatprep.subr.bf16.mxu0 0
      %2653 = vmatpush1.bf16.msra.mxu0 0
      %2654 = vmatprep.subr.bf16.mxu0 0
      %2655 = vmatpush1.bf16.msra.mxu0 0
      %2656 = vmatprep.subr.bf16.mxu0 0
      %2657 = vmatpush1.bf16.msra.mxu0 0
      %2658 = vmatprep.subr.bf16.mxu0 0
      %2659 = vmatpush1.bf16.msra.mxu0 0
      %2660 = vmatprep.mubr.bf16.mxu0 0
      %2661 = vmatmul.mubr.bf16.gmra.mrb[0].mxu0 %v2578
      %v2662 = vpop.f32.mrb[0].mxu0
      %v2663 = vadd.f32 0.0, %v2662
      %v2664 = vpop.f32.mrb[0].mxu0
      %v2665 = vpop.f32.mrb[0].mxu0
      %v2666 = vadd.f32 0.0, %v2665
      %v2667 = vpop.f32.mrb[0].mxu0
      %2668 = vmatprep.mubr.bf16.mxu0 0
      %2669 = vmatmul.mubr.bf16.gmra.mrb[0].mxu0 %v2581
      %v2670 = vpop.f32.mrb[0].mxu0
      %v2671 = vadd.f32 0.0, %v2670
      %v2672 = vpop.f32.mrb[0].mxu0
      %v2673 = vpop.f32.mrb[0].mxu0
      %v2674 = vadd.f32 0.0, %v2673
      %v2675 = vpop.f32.mrb[0].mxu0
      %2676 = vmatprep.mubr.bf16.mxu0 0
      %2677 = vmatmul.mubr.bf16.gmra.mrb[0].mxu0 %v2584
      %v2678 = vpop.f32.mrb[0].mxu0
      %v2679 = vadd.f32 0.0, %v2678
      %v2680 = vpop.f32.mrb[0].mxu0
      %v2681 = vpop.f32.mrb[0].mxu0
      %v2682 = vadd.f32 0.0, %v2681
      %v2683 = vpop.f32.mrb[0].mxu0
      %2684 = vmatprep.mubr.bf16.mxu0 0
      %2685 = vmatmul.mubr.bf16.gmra.mrb[0].mxu0 %v2587
      %v2686 = vpop.f32.mrb[0].mxu0
      %v2687 = vadd.f32 0.0, %v2686
      %v2688 = vpop.f32.mrb[0].mxu0
      %v2689 = vpop.f32.mrb[0].mxu0
      %v2690 = vadd.f32 0.0, %v2689
      %v2691 = vpop.f32.mrb[0].mxu0
      %2692 = vmatprep.mubr.bf16.mxu0 0
      %2693 = vmatmul.mubr.bf16.gmra.mrb[0].mxu0 %v2590
      %v2694 = vpop.f32.mrb[0].mxu0
      %v2695 = vadd.f32 0.0, %v2694
      %v2696 = vpop.f32.mrb[0].mxu0
      %v2697 = vpop.f32.mrb[0].mxu0
      %v2698 = vadd.f32 0.0, %v2697
      %v2699 = vpop.f32.mrb[0].mxu0
      %2700 = vmatprep.mubr.bf16.mxu0 0
      %2701 = vmatmul.mubr.bf16.gmra.mrb[0].mxu0 %v2593
      %v2702 = vpop.f32.mrb[0].mxu0
      %v2703 = vadd.f32 0.0, %v2702
      %v2704 = vpop.f32.mrb[0].mxu0
      %v2705 = vpop.f32.mrb[0].mxu0
      %v2706 = vadd.f32 0.0, %v2705
      %v2707 = vpop.f32.mrb[0].mxu0
      %2708 = vmatprep.mubr.bf16.mxu0 0
      %2709 = vmatmul.mubr.bf16.gmra.mrb[0].mxu0 %v2596
      %v2710 = vpop.f32.mrb[0].mxu0
      %v2711 = vadd.f32 0.0, %v2710
      %v2712 = vpop.f32.mrb[0].mxu0
      %v2713 = vpop.f32.mrb[0].mxu0
      %v2714 = vadd.f32 0.0, %v2713
      %v2715 = vpop.f32.mrb[0].mxu0
      %2716 = vmatprep.mubr.bf16.mxu0 0
      %2717 = vmatmul.mubr.bf16.gmra.mrb[0].mxu0 %v2599
      %v2718 = vpop.f32.mrb[0].mxu0
      %v2719 = vadd.f32 0.0, %v2718
      %v2720 = vpop.f32.mrb[0].mxu0
      %v2721 = vpop.f32.mrb[0].mxu0
      %v2722 = vadd.f32 0.0, %v2721
      %v2723 = vpop.f32.mrb[0].mxu0
      %2724 = vmatprep.mubr.bf16.mxu0 0
      %2725 = vmatmul.mubr.bf16.gmra.mrb[0].mxu0 %v2602
      %v2726 = vpop.f32.mrb[0].mxu0
      %v2727 = vadd.f32 0.0, %v2726
      %v2728 = vpop.f32.mrb[0].mxu0
      %v2729 = vpop.f32.mrb[0].mxu0
      %v2730 = vadd.f32 0.0, %v2729
      %v2731 = vpop.f32.mrb[0].mxu0
      %2732 = vmatprep.mubr.bf16.mxu0 0
      %2733 = vmatmul.mubr.bf16.gmra.mrb[0].mxu0 %v2605
      %v2734 = vpop.f32.mrb[0].mxu0
      %v2735 = vadd.f32 0.0, %v2734
      %v2736 = vpop.f32.mrb[0].mxu0
      %v2737 = vpop.f32.mrb[0].mxu0
      %v2738 = vadd.f32 0.0, %v2737
      %v2739 = vpop.f32.mrb[0].mxu0
      %2740 = vmatprep.mubr.bf16.mxu0 0
      %2741 = vmatmul.mubr.bf16.gmra.mrb[0].mxu0 %v2608
      %v2742 = vpop.f32.mrb[0].mxu0
      %v2743 = vadd.f32 0.0, %v2742
      %v2744 = vpop.f32.mrb[0].mxu0
      %v2745 = vpop.f32.mrb[0].mxu0
      %v2746 = vadd.f32 0.0, %v2745
      %v2747 = vpop.f32.mrb[0].mxu0
      %2748 = vmatprep.mubr.bf16.mxu0 0
      %2749 = vmatmul.mubr.bf16.gmra.mrb[0].mxu0 %v2611
      %v2750 = vpop.f32.mrb[0].mxu0
      %v2751 = vadd.f32 0.0, %v2750
      %v2752 = vpop.f32.mrb[0].mxu0
      %v2753 = vpop.f32.mrb[0].mxu0
      %v2754 = vadd.f32 0.0, %v2753
      %v2755 = vpop.f32.mrb[0].mxu0
      %2756 = vmatprep.mubr.bf16.mxu0 0
      %2757 = vmatmul.mubr.bf16.gmra.mrb[0].mxu0 %v2614
      %v2758 = vpop.f32.mrb[0].mxu0
      %v2759 = vadd.f32 0.0, %v2758
      %v2760 = vpop.f32.mrb[0].mxu0
      %v2761 = vpop.f32.mrb[0].mxu0
      %v2762 = vadd.f32 0.0, %v2761
      %v2763 = vpop.f32.mrb[0].mxu0
      %2764 = vmatprep.mubr.bf16.mxu0 0
      %2765 = vmatmul.mubr.bf16.gmra.mrb[0].mxu0 %v2617
      %v2766 = vpop.f32.mrb[0].mxu0
      %v2767 = vadd.f32 0.0, %v2766
      %v2768 = vpop.f32.mrb[0].mxu0
      %v2769 = vpop.f32.mrb[0].mxu0
      %v2770 = vadd.f32 0.0, %v2769
      %v2771 = vpop.f32.mrb[0].mxu0
      %2772 = vmatprep.mubr.bf16.mxu0 0
      %2773 = vmatmul.mubr.bf16.gmra.mrb[0].mxu0 %v2620
      %v2774 = vpop.f32.mrb[0].mxu0
      %v2775 = vadd.f32 0.0, %v2774
      %v2776 = vpop.f32.mrb[0].mxu0
      %v2777 = vpop.f32.mrb[0].mxu0
      %v2778 = vadd.f32 0.0, %v2777
      %v2779 = vpop.f32.mrb[0].mxu0
      %2780 = vmatprep.mubr.bf16.mxu0 0
      %2781 = vmatmul.mubr.bf16.gmra.mrb[0].mxu0 %v2623
      %v2782 = vpop.f32.mrb[0].mxu0
      %v2783 = vadd.f32 0.0, %v2782
      %v2784 = vpop.f32.mrb[0].mxu0
      %v2785 = vpop.f32.mrb[0].mxu0
      %v2786 = vadd.f32 0.0, %v2785
      %v2787 = vpop.f32.mrb[0].mxu0
      %2788 = vdwg.mxu0
      %v2789 = vadd.f32 %v2495, %v2663
      %v2790 = vadd.f32 %v2496, %v2666
      %v2791 = vadd.f32 %v2497, %v2671
      %v2792 = vadd.f32 %v2498, %v2674
      %v2793 = vadd.f32 %v2499, %v2679
      %v2794 = vadd.f32 %v2500, %v2682
      %v2795 = vadd.f32 %v2501, %v2687
      %v2796 = vadd.f32 %v2502, %v2690
      %v2797 = vadd.f32 %v2503, %v2695
      %v2798 = vadd.f32 %v2504, %v2698
      %v2799 = vadd.f32 %v2505, %v2703
      %v2800 = vadd.f32 %v2506, %v2706
      %v2801 = vadd.f32 %v2507, %v2711
      %v2802 = vadd.f32 %v2508, %v2714
      %v2803 = vadd.f32 %v2509, %v2719
      %v2804 = vadd.f32 %v2510, %v2722
      %v2805 = vadd.f32 %v2511, %v2727
      %v2806 = vadd.f32 %v2512, %v2730
      %v2807 = vadd.f32 %v2513, %v2735
      %v2808 = vadd.f32 %v2514, %v2738
      %v2809 = vadd.f32 %v2515, %v2743
      %v2810 = vadd.f32 %v2516, %v2746
      %v2811 = vadd.f32 %v2517, %v2751
      %v2812 = vadd.f32 %v2518, %v2754
      %v2813 = vadd.f32 %v2519, %v2759
      %v2814 = vadd.f32 %v2520, %v2762
      %v2815 = vadd.f32 %v2521, %v2767
      %v2816 = vadd.f32 %v2522, %v2770
      %v2817 = vadd.f32 %v2523, %v2775
      %v2818 = vadd.f32 %v2524, %v2778
      %v2819 = vadd.f32 %v2525, %v2783
      %v2820 = vadd.f32 %v2526, %v2786
      %v2821 = vld [vmem:[%s2527 + $0x1] sm:$0xff]
      %v2822 = vld [vmem:[%s2527 + $0x9] sm:$0xff]
      %v2823 = vld [vmem:[%s2527 + $0x19] sm:$0xff]
      %v2824 = vld [vmem:[%s2527 + $0x21] sm:$0xff]
      %v2825 = vld [vmem:[%s2527 + $0x31] sm:$0xff]
      %v2826 = vld [vmem:[%s2527 + $0x39] sm:$0xff]
      %v2827 = vld [vmem:[%s2527 + $0x49] sm:$0xff]
      %v2828 = vld [vmem:[%s2527 + $0x51] sm:$0xff]
      %v2829 = vld [vmem:[%s2527 + $0x61] sm:$0xff]
      %v2830 = vld [vmem:[%s2527 + $0x69] sm:$0xff]
      %v2831 = vld [vmem:[%s2527 + $0x79] sm:$0xff]
      %v2832 = vld [vmem:[%s2527 + $0x81] sm:$0xff]
      %v2833 = vld [vmem:[%s2527 + $0x91] sm:$0xff]
      %v2834 = vld [vmem:[%s2527 + $0x99] sm:$0xff]
      %v2835 = vld [vmem:[%s2527 + $0xa9] sm:$0xff]
      %v2836 = vld [vmem:[%s2527 + $0xb1] sm:$0xff]
      %v2837 = vld [vmem:[%s2527 + $0xc1] sm:$0xff]
      %v2838 = vld [vmem:[%s2527 + $0xc9] sm:$0xff]
      %v2839 = vld [vmem:[%s2527 + $0xd9] sm:$0xff]
      %v2840 = vld [vmem:[%s2527 + $0xe1] sm:$0xff]
      %v2841 = vld [vmem:[%s2527 + $0xf1] sm:$0xff]
      %v2842 = vld [vmem:[%s2527 + $0xf9] sm:$0xff]
      %v2843 = vld [vmem:[%s2527 + $0x109] sm:$0xff]
      %v2844 = vld [vmem:[%s2527 + $0x111] sm:$0xff]
      %v2845 = vld [vmem:[%s2527 + $0x121] sm:$0xff]
      %v2846 = vld [vmem:[%s2527 + $0x129] sm:$0xff]
      %v2847 = vld [vmem:[%s2527 + $0x139] sm:$0xff]
      %v2848 = vld [vmem:[%s2527 + $0x141] sm:$0xff]
      %v2849 = vld [vmem:[%s2527 + $0x151] sm:$0xff]
      %v2850 = vld [vmem:[%s2527 + $0x159] sm:$0xff]
      %v2851 = vld [vmem:[%s2527 + $0x169] sm:$0xff]
      %v2852 = vld [vmem:[%s2527 + $0x171] sm:$0xff]
      %v2853 = vpack.c.bf16 %v2822, %v2821
      %v2854 = vpack.c.bf16 %v2824, %v2823
      %v2855 = vpack.c.bf16 %v2826, %v2825
      %v2856 = vpack.c.bf16 %v2828, %v2827
      %v2857 = vpack.c.bf16 %v2830, %v2829
      %v2858 = vpack.c.bf16 %v2832, %v2831
      %v2859 = vpack.c.bf16 %v2834, %v2833
      %v2860 = vpack.c.bf16 %v2836, %v2835
      %v2861 = vpack.c.bf16 %v2838, %v2837
      %v2862 = vpack.c.bf16 %v2840, %v2839
      %v2863 = vpack.c.bf16 %v2842, %v2841
      %v2864 = vpack.c.bf16 %v2844, %v2843
      %v2865 = vpack.c.bf16 %v2846, %v2845
      %v2866 = vpack.c.bf16 %v2848, %v2847
      %v2867 = vpack.c.bf16 %v2850, %v2849
      %v2868 = vpack.c.bf16 %v2852, %v2851
      %v2869 = vld [vmem:[%s4 + $0xc] sm:$0xc]
      %v2871 = vunpack.c.l.b16 %v2869
      %v2872 = vpack.c.b16 %v2871, %v2871
      %v2873 = vrot.slane %v2872, 2
      %v2875 = vsel %vm369, %v2853, 0
      %v2878 = vsel %vm369, %v2854, 0
      %v2881 = vsel %vm369, %v2855, 0
      %v2884 = vsel %vm369, %v2856, 0
      %v2887 = vsel %vm369, %v2857, 0
      %v2890 = vsel %vm369, %v2858, 0
      %v2893 = vsel %vm369, %v2859, 0
      %v2896 = vsel %vm369, %v2860, 0
      %v2899 = vsel %vm369, %v2861, 0
      %v2902 = vsel %vm369, %v2862, 0
      %v2905 = vsel %vm369, %v2863, 0
      %v2908 = vsel %vm369, %v2864, 0
      %v2911 = vsel %vm369, %v2865, 0
      %v2914 = vsel %vm369, %v2866, 0
      %v2917 = vsel %vm369, %v2867, 0
      %v2920 = vsel %vm369, %v2868, 0
      %v2923 = vsel %vm970, %v2873, 0
      %2925 = vmatprep.subr.bf16.mxu0 0
      %2926 = vmatpush1.bf16.msra.mxu0 %v2923
      %2927 = vmatprep.subr.bf16.mxu0 0
      %2928 = vmatpush1.bf16.msra.mxu0 0
      %2929 = vmatprep.subr.bf16.mxu0 0
      %2930 = vmatpush1.bf16.msra.mxu0 0
      %2931 = vmatprep.subr.bf16.mxu0 0
      %2932 = vmatpush1.bf16.msra.mxu0 0
      %2933 = vmatprep.subr.bf16.mxu0 0
      %2934 = vmatpush1.bf16.msra.mxu0 0
      %2935 = vmatprep.subr.bf16.mxu0 0
      %2936 = vmatpush1.bf16.msra.mxu0 0
      %2937 = vmatprep.subr.bf16.mxu0 0
      %2938 = vmatpush1.bf16.msra.mxu0 0
      %2939 = vmatprep.subr.bf16.mxu0 0
      %2940 = vmatpush1.bf16.msra.mxu0 0
      %2941 = vmatprep.subr.bf16.mxu0 0
      %2942 = vmatpush1.bf16.msra.mxu0 0
      %2943 = vmatprep.subr.bf16.mxu0 0
      %2944 = vmatpush1.bf16.msra.mxu0 0
      %2945 = vmatprep.subr.bf16.mxu0 0
      %2946 = vmatpush1.bf16.msra.mxu0 0
      %2947 = vmatprep.subr.bf16.mxu0 0
      %2948 = vmatpush1.bf16.msra.mxu0 0
      %2949 = vmatprep.subr.bf16.mxu0 0
      %2950 = vmatpush1.bf16.msra.mxu0 0
      %2951 = vmatprep.subr.bf16.mxu0 0
      %2952 = vmatpush1.bf16.msra.mxu0 0
      %2953 = vmatprep.subr.bf16.mxu0 0
      %2954 = vmatpush1.bf16.msra.mxu0 0
      %2955 = vmatprep.subr.bf16.mxu0 0
      %2956 = vmatpush1.bf16.msra.mxu0 0
      %2957 = vmatprep.mubr.bf16.mxu0 0
      %2958 = vmatmul.mubr.bf16.gmra.mrb[0].mxu0 %v2875
      %v2959 = vpop.f32.mrb[0].mxu0
      %v2960 = vadd.f32 0.0, %v2959
      %v2961 = vpop.f32.mrb[0].mxu0
      %v2962 = vpop.f32.mrb[0].mxu0
      %v2963 = vadd.f32 0.0, %v2962
      %v2964 = vpop.f32.mrb[0].mxu0
      %2965 = vmatprep.mubr.bf16.mxu0 0
      %2966 = vmatmul.mubr.bf16.gmra.mrb[0].mxu0 %v2878
      %v2967 = vpop.f32.mrb[0].mxu0
      %v2968 = vadd.f32 0.0, %v2967
      %v2969 = vpop.f32.mrb[0].mxu0
      %v2970 = vpop.f32.mrb[0].mxu0
      %v2971 = vadd.f32 0.0, %v2970
      %v2972 = vpop.f32.mrb[0].mxu0
      %2973 = vmatprep.mubr.bf16.mxu0 0
      %2974 = vmatmul.mubr.bf16.gmra.mrb[0].mxu0 %v2881
      %v2975 = vpop.f32.mrb[0].mxu0
      %v2976 = vadd.f32 0.0, %v2975
      %v2977 = vpop.f32.mrb[0].mxu0
      %v2978 = vpop.f32.mrb[0].mxu0
      %v2979 = vadd.f32 0.0, %v2978
      %v2980 = vpop.f32.mrb[0].mxu0
      %2981 = vmatprep.mubr.bf16.mxu0 0
      %2982 = vmatmul.mubr.bf16.gmra.mrb[0].mxu0 %v2884
      %v2983 = vpop.f32.mrb[0].mxu0
      %v2984 = vadd.f32 0.0, %v2983
      %v2985 = vpop.f32.mrb[0].mxu0
      %v2986 = vpop.f32.mrb[0].mxu0
      %v2987 = vadd.f32 0.0, %v2986
      %v2988 = vpop.f32.mrb[0].mxu0
      %2989 = vmatprep.mubr.bf16.mxu0 0
      %2990 = vmatmul.mubr.bf16.gmra.mrb[0].mxu0 %v2887
      %v2991 = vpop.f32.mrb[0].mxu0
      %v2992 = vadd.f32 0.0, %v2991
      %v2993 = vpop.f32.mrb[0].mxu0
      %v2994 = vpop.f32.mrb[0].mxu0
      %v2995 = vadd.f32 0.0, %v2994
      %v2996 = vpop.f32.mrb[0].mxu0
      %2997 = vmatprep.mubr.bf16.mxu0 0
      %2998 = vmatmul.mubr.bf16.gmra.mrb[0].mxu0 %v2890
      %v2999 = vpop.f32.mrb[0].mxu0
      %v3000 = vadd.f32 0.0, %v2999
      %v3001 = vpop.f32.mrb[0].mxu0
      %v3002 = vpop.f32.mrb[0].mxu0
      %v3003 = vadd.f32 0.0, %v3002
      %v3004 = vpop.f32.mrb[0].mxu0
      %3005 = vmatprep.mubr.bf16.mxu0 0
      %3006 = vmatmul.mubr.bf16.gmra.mrb[0].mxu0 %v2893
      %v3007 = vpop.f32.mrb[0].mxu0
      %v3008 = vadd.f32 0.0, %v3007
      %v3009 = vpop.f32.mrb[0].mxu0
      %v3010 = vpop.f32.mrb[0].mxu0
      %v3011 = vadd.f32 0.0, %v3010
      %v3012 = vpop.f32.mrb[0].mxu0
      %3013 = vmatprep.mubr.bf16.mxu0 0
      %3014 = vmatmul.mubr.bf16.gmra.mrb[0].mxu0 %v2896
      %v3015 = vpop.f32.mrb[0].mxu0
      %v3016 = vadd.f32 0.0, %v3015
      %v3017 = vpop.f32.mrb[0].mxu0
      %v3018 = vpop.f32.mrb[0].mxu0
      %v3019 = vadd.f32 0.0, %v3018
      %v3020 = vpop.f32.mrb[0].mxu0
      %3021 = vmatprep.mubr.bf16.mxu0 0
      %3022 = vmatmul.mubr.bf16.gmra.mrb[0].mxu0 %v2899
      %v3023 = vpop.f32.mrb[0].mxu0
      %v3024 = vadd.f32 0.0, %v3023
      %v3025 = vpop.f32.mrb[0].mxu0
      %v3026 = vpop.f32.mrb[0].mxu0
      %v3027 = vadd.f32 0.0, %v3026
      %v3028 = vpop.f32.mrb[0].mxu0
      %3029 = vmatprep.mubr.bf16.mxu0 0
      %3030 = vmatmul.mubr.bf16.gmra.mrb[0].mxu0 %v2902
      %v3031 = vpop.f32.mrb[0].mxu0
      %v3032 = vadd.f32 0.0, %v3031
      %v3033 = vpop.f32.mrb[0].mxu0
      %v3034 = vpop.f32.mrb[0].mxu0
      %v3035 = vadd.f32 0.0, %v3034
      %v3036 = vpop.f32.mrb[0].mxu0
      %3037 = vmatprep.mubr.bf16.mxu0 0
      %3038 = vmatmul.mubr.bf16.gmra.mrb[0].mxu0 %v2905
      %v3039 = vpop.f32.mrb[0].mxu0
      %v3040 = vadd.f32 0.0, %v3039
      %v3041 = vpop.f32.mrb[0].mxu0
      %v3042 = vpop.f32.mrb[0].mxu0
      %v3043 = vadd.f32 0.0, %v3042
      %v3044 = vpop.f32.mrb[0].mxu0
      %3045 = vmatprep.mubr.bf16.mxu0 0
      %3046 = vmatmul.mubr.bf16.gmra.mrb[0].mxu0 %v2908
      %v3047 = vpop.f32.mrb[0].mxu0
      %v3048 = vadd.f32 0.0, %v3047
      %v3049 = vpop.f32.mrb[0].mxu0
      %v3050 = vpop.f32.mrb[0].mxu0
      %v3051 = vadd.f32 0.0, %v3050
      %v3052 = vpop.f32.mrb[0].mxu0
      %3053 = vmatprep.mubr.bf16.mxu0 0
      %3054 = vmatmul.mubr.bf16.gmra.mrb[0].mxu0 %v2911
      %v3055 = vpop.f32.mrb[0].mxu0
      %v3056 = vadd.f32 0.0, %v3055
      %v3057 = vpop.f32.mrb[0].mxu0
      %v3058 = vpop.f32.mrb[0].mxu0
      %v3059 = vadd.f32 0.0, %v3058
      %v3060 = vpop.f32.mrb[0].mxu0
      %3061 = vmatprep.mubr.bf16.mxu0 0
      %3062 = vmatmul.mubr.bf16.gmra.mrb[0].mxu0 %v2914
      %v3063 = vpop.f32.mrb[0].mxu0
      %v3064 = vadd.f32 0.0, %v3063
      %v3065 = vpop.f32.mrb[0].mxu0
      %v3066 = vpop.f32.mrb[0].mxu0
      %v3067 = vadd.f32 0.0, %v3066
      %v3068 = vpop.f32.mrb[0].mxu0
      %3069 = vmatprep.mubr.bf16.mxu0 0
      %3070 = vmatmul.mubr.bf16.gmra.mrb[0].mxu0 %v2917
      %v3071 = vpop.f32.mrb[0].mxu0
      %v3072 = vadd.f32 0.0, %v3071
      %v3073 = vpop.f32.mrb[0].mxu0
      %v3074 = vpop.f32.mrb[0].mxu0
      %v3075 = vadd.f32 0.0, %v3074
      %v3076 = vpop.f32.mrb[0].mxu0
      %3077 = vmatprep.mubr.bf16.mxu0 0
      %3078 = vmatmul.mubr.bf16.gmra.mrb[0].mxu0 %v2920
      %v3079 = vpop.f32.mrb[0].mxu0
      %v3080 = vadd.f32 0.0, %v3079
      %v3081 = vpop.f32.mrb[0].mxu0
      %v3082 = vpop.f32.mrb[0].mxu0
      %v3083 = vadd.f32 0.0, %v3082
      %v3084 = vpop.f32.mrb[0].mxu0
      %3085 = vdwg.mxu0
      %v3086 = vadd.f32 %v2789, %v2960
      %v3087 = vadd.f32 %v2790, %v2963
      %v3088 = vadd.f32 %v2791, %v2968
      %v3089 = vadd.f32 %v2792, %v2971
      %v3090 = vadd.f32 %v2793, %v2976
      %v3091 = vadd.f32 %v2794, %v2979
      %v3092 = vadd.f32 %v2795, %v2984
      %v3093 = vadd.f32 %v2796, %v2987
      %v3094 = vadd.f32 %v2797, %v2992
      %v3095 = vadd.f32 %v2798, %v2995
      %v3096 = vadd.f32 %v2799, %v3000
      %v3097 = vadd.f32 %v2800, %v3003
      %v3098 = vadd.f32 %v2801, %v3008
      %v3099 = vadd.f32 %v2802, %v3011
      %v3100 = vadd.f32 %v2803, %v3016
      %v3101 = vadd.f32 %v2804, %v3019
      %v3102 = vadd.f32 %v2805, %v3024
      %v3103 = vadd.f32 %v2806, %v3027
      %v3104 = vadd.f32 %v2807, %v3032
      %v3105 = vadd.f32 %v2808, %v3035
      %v3106 = vadd.f32 %v2809, %v3040
      %v3107 = vadd.f32 %v2810, %v3043
      %v3108 = vadd.f32 %v2811, %v3048
      %v3109 = vadd.f32 %v2812, %v3051
      %v3110 = vadd.f32 %v2813, %v3056
      %v3111 = vadd.f32 %v2814, %v3059
      %v3112 = vadd.f32 %v2815, %v3064
      %v3113 = vadd.f32 %v2816, %v3067
      %v3114 = vadd.f32 %v2817, %v3072
      %v3115 = vadd.f32 %v2818, %v3075
      %v3116 = vadd.f32 %v2819, %v3080
      %v3117 = vadd.f32 %v2820, %v3083
      %v3118 = vld [vmem:[%s2527 + $0x2] sm:$0xff]
      %v3119 = vld [vmem:[%s2527 + $0xa] sm:$0xff]
      %v3120 = vld [vmem:[%s2527 + $0x1a] sm:$0xff]
      %v3121 = vld [vmem:[%s2527 + $0x22] sm:$0xff]
      %v3122 = vld [vmem:[%s2527 + $0x32] sm:$0xff]
      %v3123 = vld [vmem:[%s2527 + $0x3a] sm:$0xff]
      %v3124 = vld [vmem:[%s2527 + $0x4a] sm:$0xff]
      %v3125 = vld [vmem:[%s2527 + $0x52] sm:$0xff]
      %v3126 = vld [vmem:[%s2527 + $0x62] sm:$0xff]
      %v3127 = vld [vmem:[%s2527 + $0x6a] sm:$0xff]
      %v3128 = vld [vmem:[%s2527 + $0x7a] sm:$0xff]
      %v3129 = vld [vmem:[%s2527 + $0x82] sm:$0xff]
      %v3130 = vld [vmem:[%s2527 + $0x92] sm:$0xff]
      %v3131 = vld [vmem:[%s2527 + $0x9a] sm:$0xff]
      %v3132 = vld [vmem:[%s2527 + $0xaa] sm:$0xff]
      %v3133 = vld [vmem:[%s2527 + $0xb2] sm:$0xff]
      %v3134 = vld [vmem:[%s2527 + $0xc2] sm:$0xff]
      %v3135 = vld [vmem:[%s2527 + $0xca] sm:$0xff]
      %v3136 = vld [vmem:[%s2527 + $0xda] sm:$0xff]
      %v3137 = vld [vmem:[%s2527 + $0xe2] sm:$0xff]
      %v3138 = vld [vmem:[%s2527 + $0xf2] sm:$0xff]
      %v3139 = vld [vmem:[%s2527 + $0xfa] sm:$0xff]
      %v3140 = vld [vmem:[%s2527 + $0x10a] sm:$0xff]
      %v3141 = vld [vmem:[%s2527 + $0x112] sm:$0xff]
      %v3142 = vld [vmem:[%s2527 + $0x122] sm:$0xff]
      %v3143 = vld [vmem:[%s2527 + $0x12a] sm:$0xff]
      %v3144 = vld [vmem:[%s2527 + $0x13a] sm:$0xff]
      %v3145 = vld [vmem:[%s2527 + $0x142] sm:$0xff]
      %v3146 = vld [vmem:[%s2527 + $0x152] sm:$0xff]
      %v3147 = vld [vmem:[%s2527 + $0x15a] sm:$0xff]
      %v3148 = vld [vmem:[%s2527 + $0x16a] sm:$0xff]
      %v3149 = vld [vmem:[%s2527 + $0x172] sm:$0xff]
      %v3150 = vpack.c.bf16 %v3119, %v3118
      %v3151 = vpack.c.bf16 %v3121, %v3120
      %v3152 = vpack.c.bf16 %v3123, %v3122
      %v3153 = vpack.c.bf16 %v3125, %v3124
      %v3154 = vpack.c.bf16 %v3127, %v3126
      %v3155 = vpack.c.bf16 %v3129, %v3128
      %v3156 = vpack.c.bf16 %v3131, %v3130
      %v3157 = vpack.c.bf16 %v3133, %v3132
      %v3158 = vpack.c.bf16 %v3135, %v3134
      %v3159 = vpack.c.bf16 %v3137, %v3136
      %v3160 = vpack.c.bf16 %v3139, %v3138
      %v3161 = vpack.c.bf16 %v3141, %v3140
      %v3162 = vpack.c.bf16 %v3143, %v3142
      %v3163 = vpack.c.bf16 %v3145, %v3144
      %v3164 = vpack.c.bf16 %v3147, %v3146
      %v3165 = vpack.c.bf16 %v3149, %v3148
      %v3166 = vld [vmem:[%s4 + $0x10] sm:$0x3]
      %v3168 = vsel %vm369, %v3150, 0
      %v3171 = vsel %vm369, %v3151, 0
      %v3174 = vsel %vm369, %v3152, 0
      %v3177 = vsel %vm369, %v3153, 0
      %v3180 = vsel %vm369, %v3154, 0
      %v3183 = vsel %vm369, %v3155, 0
      %v3186 = vsel %vm369, %v3156, 0
      %v3189 = vsel %vm369, %v3157, 0
      %v3192 = vsel %vm369, %v3158, 0
      %v3195 = vsel %vm369, %v3159, 0
      %v3198 = vsel %vm369, %v3160, 0
      %v3201 = vsel %vm369, %v3161, 0
      %v3204 = vsel %vm369, %v3162, 0
      %v3207 = vsel %vm369, %v3163, 0
      %v3210 = vsel %vm369, %v3164, 0
      %v3213 = vsel %vm369, %v3165, 0
      %v3216 = vsel %vm970, %v3166, 0
      %3218 = vmatprep.subr.bf16.mxu0 0
      %3219 = vmatpush1.bf16.msra.mxu0 %v3216
      %3220 = vmatprep.subr.bf16.mxu0 0
      %3221 = vmatpush1.bf16.msra.mxu0 0
      %3222 = vmatprep.subr.bf16.mxu0 0
      %3223 = vmatpush1.bf16.msra.mxu0 0
      %3224 = vmatprep.subr.bf16.mxu0 0
      %3225 = vmatpush1.bf16.msra.mxu0 0
      %3226 = vmatprep.subr.bf16.mxu0 0
      %3227 = vmatpush1.bf16.msra.mxu0 0
      %3228 = vmatprep.subr.bf16.mxu0 0
      %3229 = vmatpush1.bf16.msra.mxu0 0
      %3230 = vmatprep.subr.bf16.mxu0 0
      %3231 = vmatpush1.bf16.msra.mxu0 0
      %3232 = vmatprep.subr.bf16.mxu0 0
      %3233 = vmatpush1.bf16.msra.mxu0 0
      %3234 = vmatprep.subr.bf16.mxu0 0
      %3235 = vmatpush1.bf16.msra.mxu0 0
      %3236 = vmatprep.subr.bf16.mxu0 0
      %3237 = vmatpush1.bf16.msra.mxu0 0
      %3238 = vmatprep.subr.bf16.mxu0 0
      %3239 = vmatpush1.bf16.msra.mxu0 0
      %3240 = vmatprep.subr.bf16.mxu0 0
      %3241 = vmatpush1.bf16.msra.mxu0 0
      %3242 = vmatprep.subr.bf16.mxu0 0
      %3243 = vmatpush1.bf16.msra.mxu0 0
      %3244 = vmatprep.subr.bf16.mxu0 0
      %3245 = vmatpush1.bf16.msra.mxu0 0
      %3246 = vmatprep.subr.bf16.mxu0 0
      %3247 = vmatpush1.bf16.msra.mxu0 0
      %3248 = vmatprep.subr.bf16.mxu0 0
      %3249 = vmatpush1.bf16.msra.mxu0 0
      %3250 = vmatprep.mubr.bf16.mxu0 0
      %3251 = vmatmul.mubr.bf16.gmra.mrb[0].mxu0 %v3168
      %v3252 = vpop.f32.mrb[0].mxu0
      %v3253 = vadd.f32 0.0, %v3252
      %v3254 = vpop.f32.mrb[0].mxu0
      %v3255 = vpop.f32.mrb[0].mxu0
      %v3256 = vadd.f32 0.0, %v3255
      %v3257 = vpop.f32.mrb[0].mxu0
      %3258 = vmatprep.mubr.bf16.mxu0 0
      %3259 = vmatmul.mubr.bf16.gmra.mrb[0].mxu0 %v3171
      %v3260 = vpop.f32.mrb[0].mxu0
      %v3261 = vadd.f32 0.0, %v3260
      %v3262 = vpop.f32.mrb[0].mxu0
      %v3263 = vpop.f32.mrb[0].mxu0
      %v3264 = vadd.f32 0.0, %v3263
      %v3265 = vpop.f32.mrb[0].mxu0
      %3266 = vmatprep.mubr.bf16.mxu0 0
      %3267 = vmatmul.mubr.bf16.gmra.mrb[0].mxu0 %v3174
      %v3268 = vpop.f32.mrb[0].mxu0
      %v3269 = vadd.f32 0.0, %v3268
      %v3270 = vpop.f32.mrb[0].mxu0
      %v3271 = vpop.f32.mrb[0].mxu0
      %v3272 = vadd.f32 0.0, %v3271
      %v3273 = vpop.f32.mrb[0].mxu0
      %3274 = vmatprep.mubr.bf16.mxu0 0
      %3275 = vmatmul.mubr.bf16.gmra.mrb[0].mxu0 %v3177
      %v3276 = vpop.f32.mrb[0].mxu0
      %v3277 = vadd.f32 0.0, %v3276
      %v3278 = vpop.f32.mrb[0].mxu0
      %v3279 = vpop.f32.mrb[0].mxu0
      %v3280 = vadd.f32 0.0, %v3279
      %v3281 = vpop.f32.mrb[0].mxu0
      %3282 = vmatprep.mubr.bf16.mxu0 0
      %3283 = vmatmul.mubr.bf16.gmra.mrb[0].mxu0 %v3180
      %v3284 = vpop.f32.mrb[0].mxu0
      %v3285 = vadd.f32 0.0, %v3284
      %v3286 = vpop.f32.mrb[0].mxu0
      %v3287 = vpop.f32.mrb[0].mxu0
      %v3288 = vadd.f32 0.0, %v3287
      %v3289 = vpop.f32.mrb[0].mxu0
      %3290 = vmatprep.mubr.bf16.mxu0 0
      %3291 = vmatmul.mubr.bf16.gmra.mrb[0].mxu0 %v3183
      %v3292 = vpop.f32.mrb[0].mxu0
      %v3293 = vadd.f32 0.0, %v3292
      %v3294 = vpop.f32.mrb[0].mxu0
      %v3295 = vpop.f32.mrb[0].mxu0
      %v3296 = vadd.f32 0.0, %v3295
      %v3297 = vpop.f32.mrb[0].mxu0
      %3298 = vmatprep.mubr.bf16.mxu0 0
      %3299 = vmatmul.mubr.bf16.gmra.mrb[0].mxu0 %v3186
      %v3300 = vpop.f32.mrb[0].mxu0
      %v3301 = vadd.f32 0.0, %v3300
      %v3302 = vpop.f32.mrb[0].mxu0
      %v3303 = vpop.f32.mrb[0].mxu0
      %v3304 = vadd.f32 0.0, %v3303
      %v3305 = vpop.f32.mrb[0].mxu0
      %3306 = vmatprep.mubr.bf16.mxu0 0
      %3307 = vmatmul.mubr.bf16.gmra.mrb[0].mxu0 %v3189
      %v3308 = vpop.f32.mrb[0].mxu0
      %v3309 = vadd.f32 0.0, %v3308
      %v3310 = vpop.f32.mrb[0].mxu0
      %v3311 = vpop.f32.mrb[0].mxu0
      %v3312 = vadd.f32 0.0, %v3311
      %v3313 = vpop.f32.mrb[0].mxu0
      %3314 = vmatprep.mubr.bf16.mxu0 0
      %3315 = vmatmul.mubr.bf16.gmra.mrb[0].mxu0 %v3192
      %v3316 = vpop.f32.mrb[0].mxu0
      %v3317 = vadd.f32 0.0, %v3316
      %v3318 = vpop.f32.mrb[0].mxu0
      %v3319 = vpop.f32.mrb[0].mxu0
      %v3320 = vadd.f32 0.0, %v3319
      %v3321 = vpop.f32.mrb[0].mxu0
      %3322 = vmatprep.mubr.bf16.mxu0 0
      %3323 = vmatmul.mubr.bf16.gmra.mrb[0].mxu0 %v3195
      %v3324 = vpop.f32.mrb[0].mxu0
      %v3325 = vadd.f32 0.0, %v3324
      %v3326 = vpop.f32.mrb[0].mxu0
      %v3327 = vpop.f32.mrb[0].mxu0
      %v3328 = vadd.f32 0.0, %v3327
      %v3329 = vpop.f32.mrb[0].mxu0
      %3330 = vmatprep.mubr.bf16.mxu0 0
      %3331 = vmatmul.mubr.bf16.gmra.mrb[0].mxu0 %v3198
      %v3332 = vpop.f32.mrb[0].mxu0
      %v3333 = vadd.f32 0.0, %v3332
      %v3334 = vpop.f32.mrb[0].mxu0
      %v3335 = vpop.f32.mrb[0].mxu0
      %v3336 = vadd.f32 0.0, %v3335
      %v3337 = vpop.f32.mrb[0].mxu0
      %3338 = vmatprep.mubr.bf16.mxu0 0
      %3339 = vmatmul.mubr.bf16.gmra.mrb[0].mxu0 %v3201
      %v3340 = vpop.f32.mrb[0].mxu0
      %v3341 = vadd.f32 0.0, %v3340
      %v3342 = vpop.f32.mrb[0].mxu0
      %v3343 = vpop.f32.mrb[0].mxu0
      %v3344 = vadd.f32 0.0, %v3343
      %v3345 = vpop.f32.mrb[0].mxu0
      %3346 = vmatprep.mubr.bf16.mxu0 0
      %3347 = vmatmul.mubr.bf16.gmra.mrb[0].mxu0 %v3204
      %v3348 = vpop.f32.mrb[0].mxu0
      %v3349 = vadd.f32 0.0, %v3348
      %v3350 = vpop.f32.mrb[0].mxu0
      %v3351 = vpop.f32.mrb[0].mxu0
      %v3352 = vadd.f32 0.0, %v3351
      %v3353 = vpop.f32.mrb[0].mxu0
      %3354 = vmatprep.mubr.bf16.mxu0 0
      %3355 = vmatmul.mubr.bf16.gmra.mrb[0].mxu0 %v3207
      %v3356 = vpop.f32.mrb[0].mxu0
      %v3357 = vadd.f32 0.0, %v3356
      %v3358 = vpop.f32.mrb[0].mxu0
      %v3359 = vpop.f32.mrb[0].mxu0
      %v3360 = vadd.f32 0.0, %v3359
      %v3361 = vpop.f32.mrb[0].mxu0
      %3362 = vmatprep.mubr.bf16.mxu0 0
      %3363 = vmatmul.mubr.bf16.gmra.mrb[0].mxu0 %v3210
      %v3364 = vpop.f32.mrb[0].mxu0
      %v3365 = vadd.f32 0.0, %v3364
      %v3366 = vpop.f32.mrb[0].mxu0
      %v3367 = vpop.f32.mrb[0].mxu0
      %v3368 = vadd.f32 0.0, %v3367
      %v3369 = vpop.f32.mrb[0].mxu0
      %3370 = vmatprep.mubr.bf16.mxu0 0
      %3371 = vmatmul.mubr.bf16.gmra.mrb[0].mxu0 %v3213
      %v3372 = vpop.f32.mrb[0].mxu0
      %v3373 = vadd.f32 0.0, %v3372
      %v3374 = vpop.f32.mrb[0].mxu0
      %v3375 = vpop.f32.mrb[0].mxu0
      %v3376 = vadd.f32 0.0, %v3375
      %v3377 = vpop.f32.mrb[0].mxu0
      %3378 = vdwg.mxu0
      %v3379 = vadd.f32 %v3086, %v3253
      %v3380 = vadd.f32 %v3087, %v3256
      %v3381 = vadd.f32 %v3088, %v3261
      %v3382 = vadd.f32 %v3089, %v3264
      %v3383 = vadd.f32 %v3090, %v3269
      %v3384 = vadd.f32 %v3091, %v3272
      %v3385 = vadd.f32 %v3092, %v3277
      %v3386 = vadd.f32 %v3093, %v3280
      %v3387 = vadd.f32 %v3094, %v3285
      %v3388 = vadd.f32 %v3095, %v3288
      %v3389 = vadd.f32 %v3096, %v3293
      %v3390 = vadd.f32 %v3097, %v3296
      %v3391 = vadd.f32 %v3098, %v3301
      %v3392 = vadd.f32 %v3099, %v3304
      %v3393 = vadd.f32 %v3100, %v3309
      %v3394 = vadd.f32 %v3101, %v3312
      %v3395 = vadd.f32 %v3102, %v3317
      %v3396 = vadd.f32 %v3103, %v3320
      %v3397 = vadd.f32 %v3104, %v3325
      %v3398 = vadd.f32 %v3105, %v3328
      %v3399 = vadd.f32 %v3106, %v3333
      %v3400 = vadd.f32 %v3107, %v3336
      %v3401 = vadd.f32 %v3108, %v3341
      %v3402 = vadd.f32 %v3109, %v3344
      %v3403 = vadd.f32 %v3110, %v3349
      %v3404 = vadd.f32 %v3111, %v3352
      %v3405 = vadd.f32 %v3112, %v3357
      %v3406 = vadd.f32 %v3113, %v3360
      %v3407 = vadd.f32 %v3114, %v3365
      %v3408 = vadd.f32 %v3115, %v3368
      %v3409 = vadd.f32 %v3116, %v3373
      %v3410 = vadd.f32 %v3117, %v3376
      %v3411 = vld [vmem:[%s5] sm:$0x1]
      %v3412 = vld [vmem:[%s6] sm:$0x1]
      %v3413 = vld [vmem:[%s7] sm:$0xf]
      %v3414 = vsel %vm369, %v3379, 0.0
      %v3415 = vsel %vm369, %v3380, 0.0
      %v3416 = vadd.f32 %v3414, %v3415
      %v3417 = vsel %vm369, %v3381, 0.0
      %v3418 = vadd.f32 %v3416, %v3417
      %v3419 = vsel %vm369, %v3382, 0.0
      %v3420 = vadd.f32 %v3418, %v3419
      %v3421 = vsel %vm369, %v3383, 0.0
      %v3422 = vadd.f32 %v3420, %v3421
      %v3423 = vsel %vm369, %v3384, 0.0
      %v3424 = vadd.f32 %v3422, %v3423
      %v3425 = vsel %vm369, %v3385, 0.0
      %v3426 = vadd.f32 %v3424, %v3425
      %v3427 = vsel %vm369, %v3386, 0.0
      %v3428 = vadd.f32 %v3426, %v3427
      %v3429 = vsel %vm369, %v3387, 0.0
      %v3430 = vadd.f32 %v3428, %v3429
      %v3431 = vsel %vm369, %v3388, 0.0
      %v3432 = vadd.f32 %v3430, %v3431
      %v3433 = vsel %vm369, %v3389, 0.0
      %v3434 = vadd.f32 %v3432, %v3433
      %v3435 = vsel %vm369, %v3390, 0.0
      %v3436 = vadd.f32 %v3434, %v3435
      %v3437 = vsel %vm369, %v3391, 0.0
      %v3438 = vadd.f32 %v3436, %v3437
      %v3439 = vsel %vm369, %v3392, 0.0
      %v3440 = vadd.f32 %v3438, %v3439
      %v3441 = vsel %vm369, %v3393, 0.0
      %v3442 = vadd.f32 %v3440, %v3441
      %v3443 = vsel %vm369, %v3394, 0.0
      %v3444 = vadd.f32 %v3442, %v3443
      %v3445 = vsel %vm369, %v3395, 0.0
      %v3446 = vadd.f32 %v3444, %v3445
      %v3447 = vsel %vm369, %v3396, 0.0
      %v3448 = vadd.f32 %v3446, %v3447
      %v3449 = vsel %vm369, %v3397, 0.0
      %v3450 = vadd.f32 %v3448, %v3449
      %v3451 = vsel %vm369, %v3398, 0.0
      %v3452 = vadd.f32 %v3450, %v3451
      %v3453 = vsel %vm369, %v3399, 0.0
      %v3454 = vadd.f32 %v3452, %v3453
      %v3455 = vsel %vm369, %v3400, 0.0
      %v3456 = vadd.f32 %v3454, %v3455
      %v3457 = vsel %vm369, %v3401, 0.0
      %v3458 = vadd.f32 %v3456, %v3457
      %v3459 = vsel %vm369, %v3402, 0.0
      %v3460 = vadd.f32 %v3458, %v3459
      %v3461 = vsel %vm369, %v3403, 0.0
      %v3462 = vadd.f32 %v3460, %v3461
      %v3463 = vsel %vm369, %v3404, 0.0
      %v3464 = vadd.f32 %v3462, %v3463
      %v3465 = vsel %vm369, %v3405, 0.0
      %v3466 = vadd.f32 %v3464, %v3465
      %v3467 = vsel %vm369, %v3406, 0.0
      %v3468 = vadd.f32 %v3466, %v3467
      %v3469 = vsel %vm369, %v3407, 0.0
      %v3470 = vadd.f32 %v3468, %v3469
      %v3471 = vsel %vm369, %v3408, 0.0
      %v3472 = vadd.f32 %v3470, %v3471
      %v3473 = vsel %vm369, %v3409, 0.0
      %v3474 = vadd.f32 %v3472, %v3473
      %v3475 = vsel %vm369, %v3410, 0.0
      %v3476 = vadd.f32 %v3474, %v3475
      %v3477 = vrot.slane %v3476, 4
      %v3478 = vadd.f32 %v3476, %v3477
      %v3479 = vrot.slane %v3478, 2
      %v3480 = vadd.f32 %v3478, %v3479
      %v3481 = vrot.slane %v3480, 1
      %v3482 = vadd.f32 %v3480, %v3481
      %v3483 = vmul.f32 %v3379, %v3379
      %v3484 = vmul.f32 %v3380, %v3380
      %v3485 = vmul.f32 %v3381, %v3381
      %v3486 = vmul.f32 %v3382, %v3382
      %v3487 = vmul.f32 %v3383, %v3383
      %v3488 = vmul.f32 %v3384, %v3384
      %v3489 = vmul.f32 %v3385, %v3385
      %v3490 = vmul.f32 %v3386, %v3386
      %v3491 = vmul.f32 %v3387, %v3387
      %v3492 = vmul.f32 %v3388, %v3388
      %v3493 = vmul.f32 %v3389, %v3389
      %v3494 = vmul.f32 %v3390, %v3390
      %v3495 = vmul.f32 %v3391, %v3391
      %v3496 = vmul.f32 %v3392, %v3392
      %v3497 = vmul.f32 %v3393, %v3393
      %v3498 = vmul.f32 %v3394, %v3394
      %v3499 = vmul.f32 %v3395, %v3395
      %v3500 = vmul.f32 %v3396, %v3396
      %v3501 = vmul.f32 %v3397, %v3397
      %v3502 = vmul.f32 %v3398, %v3398
      %v3503 = vmul.f32 %v3399, %v3399
      %v3504 = vmul.f32 %v3400, %v3400
      %v3505 = vmul.f32 %v3401, %v3401
      %v3506 = vmul.f32 %v3402, %v3402
      %v3507 = vmul.f32 %v3403, %v3403
      %v3508 = vmul.f32 %v3404, %v3404
      %v3509 = vmul.f32 %v3405, %v3405
      %v3510 = vmul.f32 %v3406, %v3406
      %v3511 = vmul.f32 %v3407, %v3407
      %v3512 = vmul.f32 %v3408, %v3408
      %v3513 = vmul.f32 %v3409, %v3409
      %v3514 = vmul.f32 %v3410, %v3410
      %v3515 = vsel %vm369, %v3483, 0.0
      %v3516 = vsel %vm369, %v3484, 0.0
      %v3517 = vadd.f32 %v3515, %v3516
      %v3518 = vsel %vm369, %v3485, 0.0
      %v3519 = vadd.f32 %v3517, %v3518
      %v3520 = vsel %vm369, %v3486, 0.0
      %v3521 = vadd.f32 %v3519, %v3520
      %v3522 = vsel %vm369, %v3487, 0.0
      %v3523 = vadd.f32 %v3521, %v3522
      %v3524 = vsel %vm369, %v3488, 0.0
      %v3525 = vadd.f32 %v3523, %v3524
      %v3526 = vsel %vm369, %v3489, 0.0
      %v3527 = vadd.f32 %v3525, %v3526
      %v3528 = vsel %vm369, %v3490, 0.0
      %v3529 = vadd.f32 %v3527, %v3528
      %v3530 = vsel %vm369, %v3491, 0.0
      %v3531 = vadd.f32 %v3529, %v3530
      %v3532 = vsel %vm369, %v3492, 0.0
      %v3533 = vadd.f32 %v3531, %v3532
      %v3534 = vsel %vm369, %v3493, 0.0
      %v3535 = vadd.f32 %v3533, %v3534
      %v3536 = vsel %vm369, %v3494, 0.0
      %v3537 = vadd.f32 %v3535, %v3536
      %v3538 = vsel %vm369, %v3495, 0.0
      %v3539 = vadd.f32 %v3537, %v3538
      %v3540 = vsel %vm369, %v3496, 0.0
      %v3541 = vadd.f32 %v3539, %v3540
      %v3542 = vsel %vm369, %v3497, 0.0
      %v3543 = vadd.f32 %v3541, %v3542
      %v3544 = vsel %vm369, %v3498, 0.0
      %v3545 = vadd.f32 %v3543, %v3544
      %v3546 = vsel %vm369, %v3499, 0.0
      %v3547 = vadd.f32 %v3545, %v3546
      %v3548 = vsel %vm369, %v3500, 0.0
      %v3549 = vadd.f32 %v3547, %v3548
      %v3550 = vsel %vm369, %v3501, 0.0
      %v3551 = vadd.f32 %v3549, %v3550
      %v3552 = vsel %vm369, %v3502, 0.0
      %v3553 = vadd.f32 %v3551, %v3552
      %v3554 = vsel %vm369, %v3503, 0.0
      %v3555 = vadd.f32 %v3553, %v3554
      %v3556 = vsel %vm369, %v3504, 0.0
      %v3557 = vadd.f32 %v3555, %v3556
      %v3558 = vsel %vm369, %v3505, 0.0
      %v3559 = vadd.f32 %v3557, %v3558
      %v3560 = vsel %vm369, %v3506, 0.0
      %v3561 = vadd.f32 %v3559, %v3560
      %v3562 = vsel %vm369, %v3507, 0.0
      %v3563 = vadd.f32 %v3561, %v3562
      %v3564 = vsel %vm369, %v3508, 0.0
      %v3565 = vadd.f32 %v3563, %v3564
      %v3566 = vsel %vm369, %v3509, 0.0
      %v3567 = vadd.f32 %v3565, %v3566
      %v3568 = vsel %vm369, %v3510, 0.0
      %v3569 = vadd.f32 %v3567, %v3568
      %v3570 = vsel %vm369, %v3511, 0.0
      %v3571 = vadd.f32 %v3569, %v3570
      %v3572 = vsel %vm369, %v3512, 0.0
      %v3573 = vadd.f32 %v3571, %v3572
      %v3574 = vsel %vm369, %v3513, 0.0
      %v3575 = vadd.f32 %v3573, %v3574
      %v3576 = vsel %vm369, %v3514, 0.0
      %v3577 = vadd.f32 %v3575, %v3576
      %v3578 = vrot.slane %v3577, 4
      %v3579 = vadd.f32 %v3577, %v3578
      %v3580 = vrot.slane %v3579, 2
      %v3581 = vadd.f32 %v3579, %v3580
      %v3582 = vrot.slane %v3581, 1
      %v3583 = vadd.f32 %v3581, %v3582
      %v3584 = vsel %vm540, %v3482, %v3583
      %v3586 = vsel %vm369, %v3584, 0
      %v3589 = vsel %vm545, %v3413, 0
      %3591 = vmatprep.subr.mxu0 0.0
      %3592 = vmatpush1.msra.mxu0 %v3589
      %3593 = vmatprep.subr.mxu0 0.0
      %3594 = vmatpush1.msra.mxu0 0.0
      %3595 = vmatprep.subr.mxu0 0.0
      %3596 = vmatpush1.msra.mxu0 0.0
      %3597 = vmatprep.subr.mxu0 0.0
      %3598 = vmatpush1.msra.mxu0 0.0
      %3599 = vmatprep.subr.mxu0 0.0
      %3600 = vmatpush1.msra.mxu0 0.0
      %3601 = vmatprep.subr.mxu0 0.0
      %3602 = vmatpush1.msra.mxu0 0.0
      %3603 = vmatprep.subr.mxu0 0.0
      %3604 = vmatpush1.msra.mxu0 0.0
      %3605 = vmatprep.subr.mxu0 0.0
      %3606 = vmatpush1.msra.mxu0 0.0
      %3607 = vmatprep.subr.mxu0 0.0
      %3608 = vmatpush1.msra.mxu0 0.0
      %3609 = vmatprep.subr.mxu0 0.0
      %3610 = vmatpush1.msra.mxu0 0.0
      %3611 = vmatprep.subr.mxu0 0.0
      %3612 = vmatpush1.msra.mxu0 0.0
      %3613 = vmatprep.subr.mxu0 0.0
      %3614 = vmatpush1.msra.mxu0 0.0
      %3615 = vmatprep.subr.mxu0 0.0
      %3616 = vmatpush1.msra.mxu0 0.0
      %3617 = vmatprep.subr.mxu0 0.0
      %3618 = vmatpush1.msra.mxu0 0.0
      %3619 = vmatprep.subr.mxu0 0.0
      %3620 = vmatpush1.msra.mxu0 0.0
      %3621 = vmatprep.subr.mxu0 0.0
      %3622 = vmatpush1.msra.mxu0 0.0
      %3623 = vmatprep.subr.mxu0 0.0
      %3624 = vmatpush1.msra.mxu0 0.0
      %3625 = vmatprep.subr.mxu0 0.0
      %3626 = vmatpush1.msra.mxu0 0.0
      %3627 = vmatprep.subr.mxu0 0.0
      %3628 = vmatpush1.msra.mxu0 0.0
      %3629 = vmatprep.subr.mxu0 0.0
      %3630 = vmatpush1.msra.mxu0 0.0
      %3631 = vmatprep.subr.mxu0 0.0
      %3632 = vmatpush1.msra.mxu0 0.0
      %3633 = vmatprep.subr.mxu0 0.0
      %3634 = vmatpush1.msra.mxu0 0.0
      %3635 = vmatprep.subr.mxu0 0.0
      %3636 = vmatpush1.msra.mxu0 0.0
      %3637 = vmatprep.subr.mxu0 0.0
      %3638 = vmatpush1.msra.mxu0 0.0
      %3639 = vmatprep.subr.mxu0 0.0
      %3640 = vmatpush1.msra.mxu0 0.0
      %3641 = vmatprep.subr.mxu0 0.0
      %3642 = vmatpush1.msra.mxu0 0.0
      %3643 = vmatprep.subr.mxu0 0.0
      %3644 = vmatpush1.msra.mxu0 0.0
      %3645 = vmatprep.subr.mxu0 0.0
      %3646 = vmatpush1.msra.mxu0 0.0
      %3647 = vmatprep.subr.mxu0 0.0
      %3648 = vmatpush1.msra.mxu0 0.0
      %3649 = vmatprep.subr.mxu0 0.0
      %3650 = vmatpush1.msra.mxu0 0.0
      %3651 = vmatprep.subr.mxu0 0.0
      %3652 = vmatpush1.msra.mxu0 0.0
      %3653 = vmatprep.subr.mxu0 0.0
      %3654 = vmatpush1.msra.mxu0 0.0
      %3655 = vmatprep.mubr.f32.mxu0 0.0
      %3656 = vmatmul.mubr.f32.gmra.mrb[0].mxu0 %v3586
      %v3657 = vpop.f32.mrb[0].mxu0
      %v3658 = vadd.f32 0.0, %v3657
      %v3659 = vpop.f32.mrb[0].mxu0
      %3660 = vdwg.mxu0
      %v3661 = vmul.f32 %v3658, 0.00390625
      %v3662 = vmul.f32 %v3661, %v3661
      %v3664 = vrot.slane %v3662, 7
      %v3666 = vsub.f32 %v3661, %v3664
      %v3667 = vmax.f32 %v3666, 0.0
      %v3668 = vadd.f32 %v3667, 1e-05
      %v3669 = vrsqrt.pop %v3668
      %v3671 = vlaneseq
      %v3672 = vshrl.u32 %v3671, 7
      %v3673 = vsub.s32 0, %v3672
      %v3674 = vrot.slane %v3411, %v3673
      %v3676 = vmul.f32 %v3669, %v3674
      %v3678 = vrot.slane %v3676, 1
      %v3680 = vmul.f32 %v3661, %v3678
      %v3681 = vsub.f32 %v3412, %v3680
      %v3682 = vlaneseq
      %v3683 = vshrl.u32 %v3682, 7
      %v3684 = vsub.s32 1, %v3683
      %v3685 = vrot.slane %v3676, %v3684
      %v3686 = vmul.f32 %v3379, %v3685
      %v3687 = vmul.f32 %v3380, %v3685
      %v3688 = vmul.f32 %v3381, %v3685
      %v3689 = vmul.f32 %v3382, %v3685
      %v3690 = vmul.f32 %v3383, %v3685
      %v3691 = vmul.f32 %v3384, %v3685
      %v3692 = vmul.f32 %v3385, %v3685
      %v3693 = vmul.f32 %v3386, %v3685
      %v3694 = vmul.f32 %v3387, %v3685
      %v3695 = vmul.f32 %v3388, %v3685
      %v3696 = vmul.f32 %v3389, %v3685
      %v3697 = vmul.f32 %v3390, %v3685
      %v3698 = vmul.f32 %v3391, %v3685
      %v3699 = vmul.f32 %v3392, %v3685
      %v3700 = vmul.f32 %v3393, %v3685
      %v3701 = vmul.f32 %v3394, %v3685
      %v3702 = vmul.f32 %v3395, %v3685
      %v3703 = vmul.f32 %v3396, %v3685
      %v3704 = vmul.f32 %v3397, %v3685
      %v3705 = vmul.f32 %v3398, %v3685
      %v3706 = vmul.f32 %v3399, %v3685
      %v3707 = vmul.f32 %v3400, %v3685
      %v3708 = vmul.f32 %v3401, %v3685
      %v3709 = vmul.f32 %v3402, %v3685
      %v3710 = vmul.f32 %v3403, %v3685
      %v3711 = vmul.f32 %v3404, %v3685
      %v3712 = vmul.f32 %v3405, %v3685
      %v3713 = vmul.f32 %v3406, %v3685
      %v3714 = vmul.f32 %v3407, %v3685
      %v3715 = vmul.f32 %v3408, %v3685
      %v3716 = vmul.f32 %v3409, %v3685
      %v3717 = vmul.f32 %v3410, %v3685
      %v3719 = vlaneseq
      %v3720 = vshrl.u32 %v3719, 7
      %v3721 = vsub.s32 0, %v3720
      %v3722 = vrot.slane %v3681, %v3721
      %v3724 = vadd.f32 %v3686, %v3722
      %v3725 = vadd.f32 %v3687, %v3722
      %v3726 = vadd.f32 %v3688, %v3722
      %v3727 = vadd.f32 %v3689, %v3722
      %v3728 = vadd.f32 %v3690, %v3722
      %v3729 = vadd.f32 %v3691, %v3722
      %v3730 = vadd.f32 %v3692, %v3722
      %v3731 = vadd.f32 %v3693, %v3722
      %v3732 = vadd.f32 %v3694, %v3722
      %v3733 = vadd.f32 %v3695, %v3722
      %v3734 = vadd.f32 %v3696, %v3722
      %v3735 = vadd.f32 %v3697, %v3722
      %v3736 = vadd.f32 %v3698, %v3722
      %v3737 = vadd.f32 %v3699, %v3722
      %v3738 = vadd.f32 %v3700, %v3722
      %v3739 = vadd.f32 %v3701, %v3722
      %v3740 = vadd.f32 %v3702, %v3722
      %v3741 = vadd.f32 %v3703, %v3722
      %v3742 = vadd.f32 %v3704, %v3722
      %v3743 = vadd.f32 %v3705, %v3722
      %v3744 = vadd.f32 %v3706, %v3722
      %v3745 = vadd.f32 %v3707, %v3722
      %v3746 = vadd.f32 %v3708, %v3722
      %v3747 = vadd.f32 %v3709, %v3722
      %v3748 = vadd.f32 %v3710, %v3722
      %v3749 = vadd.f32 %v3711, %v3722
      %v3750 = vadd.f32 %v3712, %v3722
      %v3751 = vadd.f32 %v3713, %v3722
      %v3752 = vadd.f32 %v3714, %v3722
      %v3753 = vadd.f32 %v3715, %v3722
      %v3754 = vadd.f32 %v3716, %v3722
      %v3755 = vadd.f32 %v3717, %v3722
      %v3756 = vmax.f32 %v3724, 0.0
      %v3757 = vmax.f32 %v3725, 0.0
      %v3758 = vmax.f32 %v3726, 0.0
      %v3759 = vmax.f32 %v3727, 0.0
      %v3760 = vmax.f32 %v3728, 0.0
      %v3761 = vmax.f32 %v3729, 0.0
      %v3762 = vmax.f32 %v3730, 0.0
      %v3763 = vmax.f32 %v3731, 0.0
      %v3764 = vmax.f32 %v3732, 0.0
      %v3765 = vmax.f32 %v3733, 0.0
      %v3766 = vmax.f32 %v3734, 0.0
      %v3767 = vmax.f32 %v3735, 0.0
      %v3768 = vmax.f32 %v3736, 0.0
      %v3769 = vmax.f32 %v3737, 0.0
      %v3770 = vmax.f32 %v3738, 0.0
      %v3771 = vmax.f32 %v3739, 0.0
      %v3772 = vmax.f32 %v3740, 0.0
      %v3773 = vmax.f32 %v3741, 0.0
      %v3774 = vmax.f32 %v3742, 0.0
      %v3775 = vmax.f32 %v3743, 0.0
      %v3776 = vmax.f32 %v3744, 0.0
      %v3777 = vmax.f32 %v3745, 0.0
      %v3778 = vmax.f32 %v3746, 0.0
      %v3779 = vmax.f32 %v3747, 0.0
      %v3780 = vmax.f32 %v3748, 0.0
      %v3781 = vmax.f32 %v3749, 0.0
      %v3782 = vmax.f32 %v3750, 0.0
      %v3783 = vmax.f32 %v3751, 0.0
      %v3784 = vmax.f32 %v3752, 0.0
      %v3785 = vmax.f32 %v3753, 0.0
      %v3786 = vmax.f32 %v3754, 0.0
      %v3787 = vmax.f32 %v3755, 0.0
      %3788 = vst.msk [vmem:[#allocation2] sm:$0xff] %vm369, 0.0
      %3789 = vst.msk [vmem:[#allocation2 + $0x8] sm:$0xff] %vm369, 0.0
      %3790 = vst.msk [vmem:[#allocation2 + $0x10] sm:$0x3] %vm748, 0.0
      %3791 = vst.msk [vmem:[%s750] sm:$0xff] %vm369, 0.0
      %3792 = vst.msk [vmem:[%s750 + $0x8] sm:$0xff] %vm369, 0.0
      %3793 = vst.msk [vmem:[%s750 + $0x10] sm:$0x3] %vm748, 0.0
      %3794 = vst.msk [vmem:[%s754] sm:$0x1] %vm755, 0.0
      %3795 = vst.msk [vmem:[%s754 + $0x18] sm:$0x1] %vm755, 0.0
      %3796 = vst.msk [vmem:[%s754 + $0x30] sm:$0x1] %vm755, 0.0
      %3797 = vst.msk [vmem:[%s754 + $0x48] sm:$0x1] %vm755, 0.0
      %3798 = vst.msk [vmem:[%s754 + $0x60] sm:$0x1] %vm755, 0.0
      %3799 = vst.msk [vmem:[%s754 + $0x78] sm:$0x1] %vm755, 0.0
      %3800 = vst.msk [vmem:[%s754 + $0x90] sm:$0x1] %vm755, 0.0
      %3801 = vst.msk [vmem:[%s754 + $0xa8] sm:$0x1] %vm755, 0.0
      %3802 = vst.msk [vmem:[%s754 + $0xc0] sm:$0x1] %vm755, 0.0
      %3803 = vst.msk [vmem:[%s754 + $0xd8] sm:$0x1] %vm755, 0.0
      %3804 = vst.msk [vmem:[%s754 + $0xf0] sm:$0x1] %vm755, 0.0
      %3805 = vst.msk [vmem:[%s754 + $0x108] sm:$0x1] %vm755, 0.0
      %3806 = vst.msk [vmem:[%s754 + $0x120] sm:$0x1] %vm755, 0.0
      %3807 = vst.msk [vmem:[%s754 + $0x138] sm:$0x1] %vm755, 0.0
      %3808 = vst.msk [vmem:[%s754 + $0x150] sm:$0x1] %vm755, 0.0
      %3809 = vst.msk [vmem:[%s754 + $0x168] sm:$0x1] %vm755, 0.0
      %3810 = vst.msk [vmem:[%s754 + $0x11] sm:$0x1] %vm755, 0.0
      %3811 = vst.msk [vmem:[%s754 + $0x29] sm:$0x1] %vm755, 0.0
      %3812 = vst.msk [vmem:[%s754 + $0x41] sm:$0x1] %vm755, 0.0
      %3813 = vst.msk [vmem:[%s754 + $0x59] sm:$0x1] %vm755, 0.0
      %3814 = vst.msk [vmem:[%s754 + $0x71] sm:$0x1] %vm755, 0.0
      %3815 = vst.msk [vmem:[%s754 + $0x89] sm:$0x1] %vm755, 0.0
      %3816 = vst.msk [vmem:[%s754 + $0xa1] sm:$0x1] %vm755, 0.0
      %3817 = vst.msk [vmem:[%s754 + $0xb9] sm:$0x1] %vm755, 0.0
      %3818 = vst.msk [vmem:[%s754 + $0xd1] sm:$0x1] %vm755, 0.0
      %3819 = vst.msk [vmem:[%s754 + $0xe9] sm:$0x1] %vm755, 0.0
      %3820 = vst.msk [vmem:[%s754 + $0x101] sm:$0x1] %vm755, 0.0
      %3821 = vst.msk [vmem:[%s754 + $0x119] sm:$0x1] %vm755, 0.0
      %3822 = vst.msk [vmem:[%s754 + $0x131] sm:$0x1] %vm755, 0.0
      %3823 = vst.msk [vmem:[%s754 + $0x149] sm:$0x1] %vm755, 0.0
      %3824 = vst.msk [vmem:[%s754 + $0x161] sm:$0x1] %vm755, 0.0
      %3825 = vst.msk [vmem:[%s754 + $0x179] sm:$0x1] %vm755, 0.0
      %3826 = vst.msk [vmem:[%s754 + $0x1] sm:$0xff] %vm369, %v3756
      %3827 = vst.msk [vmem:[%s754 + $0x9] sm:$0xff] %vm369, %v3757
      %3828 = vst.msk [vmem:[%s754 + $0x19] sm:$0xff] %vm369, %v3758
      %3829 = vst.msk [vmem:[%s754 + $0x21] sm:$0xff] %vm369, %v3759
      %3830 = vst.msk [vmem:[%s754 + $0x31] sm:$0xff] %vm369, %v3760
      %3831 = vst.msk [vmem:[%s754 + $0x39] sm:$0xff] %vm369, %v3761
      %3832 = vst.msk [vmem:[%s754 + $0x49] sm:$0xff] %vm369, %v3762
      %3833 = vst.msk [vmem:[%s754 + $0x51] sm:$0xff] %vm369, %v3763
      %3834 = vst.msk [vmem:[%s754 + $0x61] sm:$0xff] %vm369, %v3764
      %3835 = vst.msk [vmem:[%s754 + $0x69] sm:$0xff] %vm369, %v3765
      %3836 = vst.msk [vmem:[%s754 + $0x79] sm:$0xff] %vm369, %v3766
      %3837 = vst.msk [vmem:[%s754 + $0x81] sm:$0xff] %vm369, %v3767
      %3838 = vst.msk [vmem:[%s754 + $0x91] sm:$0xff] %vm369, %v3768
      %3839 = vst.msk [vmem:[%s754 + $0x99] sm:$0xff] %vm369, %v3769
      %3840 = vst.msk [vmem:[%s754 + $0xa9] sm:$0xff] %vm369, %v3770
      %3841 = vst.msk [vmem:[%s754 + $0xb1] sm:$0xff] %vm369, %v3771
      %3842 = vst.msk [vmem:[%s754 + $0xc1] sm:$0xff] %vm369, %v3772
      %3843 = vst.msk [vmem:[%s754 + $0xc9] sm:$0xff] %vm369, %v3773
      %3844 = vst.msk [vmem:[%s754 + $0xd9] sm:$0xff] %vm369, %v3774
      %3845 = vst.msk [vmem:[%s754 + $0xe1] sm:$0xff] %vm369, %v3775
      %3846 = vst.msk [vmem:[%s754 + $0xf1] sm:$0xff] %vm369, %v3776
      %3847 = vst.msk [vmem:[%s754 + $0xf9] sm:$0xff] %vm369, %v3777
      %3848 = vst.msk [vmem:[%s754 + $0x109] sm:$0xff] %vm369, %v3778
      %3849 = vst.msk [vmem:[%s754 + $0x111] sm:$0xff] %vm369, %v3779
      %3850 = vst.msk [vmem:[%s754 + $0x121] sm:$0xff] %vm369, %v3780
      %3851 = vst.msk [vmem:[%s754 + $0x129] sm:$0xff] %vm369, %v3781
      %3852 = vst.msk [vmem:[%s754 + $0x139] sm:$0xff] %vm369, %v3782
      %3853 = vst.msk [vmem:[%s754 + $0x141] sm:$0xff] %vm369, %v3783
      %3854 = vst.msk [vmem:[%s754 + $0x151] sm:$0xff] %vm369, %v3784
      %3855 = vst.msk [vmem:[%s754 + $0x159] sm:$0xff] %vm369, %v3785
      %3856 = vst.msk [vmem:[%s754 + $0x169] sm:$0xff] %vm369, %v3786
      %3857 = vst.msk [vmem:[%s754 + $0x171] sm:$0xff] %vm369, %v3787
      %v3858 = vld [vmem:[#allocation2] sm:$0xff]
      %v3859 = vld [vmem:[#allocation2 + $0x8] sm:$0xff]
      %v3860 = vld [vmem:[#allocation2 + $0x18] sm:$0xff]
      %v3861 = vld [vmem:[#allocation2 + $0x20] sm:$0xff]
      %v3862 = vld [vmem:[#allocation2 + $0x30] sm:$0xff]
      %v3863 = vld [vmem:[#allocation2 + $0x38] sm:$0xff]
      %v3864 = vld [vmem:[#allocation2 + $0x48] sm:$0xff]
      %v3865 = vld [vmem:[#allocation2 + $0x50] sm:$0xff]
      %v3866 = vld [vmem:[#allocation2 + $0x60] sm:$0xff]
      %v3867 = vld [vmem:[#allocation2 + $0x68] sm:$0xff]
      %v3868 = vld [vmem:[#allocation2 + $0x78] sm:$0xff]
      %v3869 = vld [vmem:[#allocation2 + $0x80] sm:$0xff]
      %v3870 = vld [vmem:[#allocation2 + $0x90] sm:$0xff]
      %v3871 = vld [vmem:[#allocation2 + $0x98] sm:$0xff]
      %v3872 = vld [vmem:[#allocation2 + $0xa8] sm:$0xff]
      %v3873 = vld [vmem:[#allocation2 + $0xb0] sm:$0xff]
      %v3874 = vld [vmem:[#allocation2 + $0xc0] sm:$0xff]
      %v3875 = vld [vmem:[#allocation2 + $0xc8] sm:$0xff]
      %v3876 = vld [vmem:[#allocation2 + $0xd8] sm:$0xff]
      %v3877 = vld [vmem:[#allocation2 + $0xe0] sm:$0xff]
      %v3878 = vld [vmem:[#allocation2 + $0xf0] sm:$0xff]
      %v3879 = vld [vmem:[#allocation2 + $0xf8] sm:$0xff]
      %v3880 = vld [vmem:[#allocation2 + $0x108] sm:$0xff]
      %v3881 = vld [vmem:[#allocation2 + $0x110] sm:$0xff]
      %v3882 = vld [vmem:[#allocation2 + $0x120] sm:$0xff]
      %v3883 = vld [vmem:[#allocation2 + $0x128] sm:$0xff]
      %v3884 = vld [vmem:[#allocation2 + $0x138] sm:$0xff]
      %v3885 = vld [vmem:[#allocation2 + $0x140] sm:$0xff]
      %v3886 = vld [vmem:[#allocation2 + $0x150] sm:$0xff]
      %v3887 = vld [vmem:[#allocation2 + $0x158] sm:$0xff]
      %v3888 = vld [vmem:[#allocation2 + $0x168] sm:$0xff]
      %v3889 = vld [vmem:[#allocation2 + $0x170] sm:$0xff]
      %v3890 = vpack.c.bf16 %v3859, %v3858
      %v3891 = vpack.c.bf16 %v3861, %v3860
      %v3892 = vpack.c.bf16 %v3863, %v3862
      %v3893 = vpack.c.bf16 %v3865, %v3864
      %v3894 = vpack.c.bf16 %v3867, %v3866
      %v3895 = vpack.c.bf16 %v3869, %v3868
      %v3896 = vpack.c.bf16 %v3871, %v3870
      %v3897 = vpack.c.bf16 %v3873, %v3872
      %v3898 = vpack.c.bf16 %v3875, %v3874
      %v3899 = vpack.c.bf16 %v3877, %v3876
      %v3900 = vpack.c.bf16 %v3879, %v3878
      %v3901 = vpack.c.bf16 %v3881, %v3880
      %v3902 = vpack.c.bf16 %v3883, %v3882
      %v3903 = vpack.c.bf16 %v3885, %v3884
      %v3904 = vpack.c.bf16 %v3887, %v3886
      %v3905 = vpack.c.bf16 %v3889, %v3888
      %v3906 = vld [vmem:[%s8] sm:$0x3]
      %v3907 = vld [vmem:[#allocation2 + $0x1] sm:$0xff]
      %v3908 = vld [vmem:[#allocation2 + $0x9] sm:$0xff]
      %v3909 = vld [vmem:[#allocation2 + $0x19] sm:$0xff]
      %v3910 = vld [vmem:[#allocation2 + $0x21] sm:$0xff]
      %v3911 = vld [vmem:[#allocation2 + $0x31] sm:$0xff]
      %v3912 = vld [vmem:[#allocation2 + $0x39] sm:$0xff]
      %v3913 = vld [vmem:[#allocation2 + $0x49] sm:$0xff]
      %v3914 = vld [vmem:[#allocation2 + $0x51] sm:$0xff]
      %v3915 = vld [vmem:[#allocation2 + $0x61] sm:$0xff]
      %v3916 = vld [vmem:[#allocation2 + $0x69] sm:$0xff]
      %v3917 = vld [vmem:[#allocation2 + $0x79] sm:$0xff]
      %v3918 = vld [vmem:[#allocation2 + $0x81] sm:$0xff]
      %v3919 = vld [vmem:[#allocation2 + $0x91] sm:$0xff]
      %v3920 = vld [vmem:[#allocation2 + $0x99] sm:$0xff]
      %v3921 = vld [vmem:[#allocation2 + $0xa9] sm:$0xff]
      %v3922 = vld [vmem:[#allocation2 + $0xb1] sm:$0xff]
      %v3923 = vld [vmem:[#allocation2 + $0xc1] sm:$0xff]
      %v3924 = vld [vmem:[#allocation2 + $0xc9] sm:$0xff]
      %v3925 = vld [vmem:[#allocation2 + $0xd9] sm:$0xff]
      %v3926 = vld [vmem:[#allocation2 + $0xe1] sm:$0xff]
      %v3927 = vld [vmem:[#allocation2 + $0xf1] sm:$0xff]
      %v3928 = vld [vmem:[#allocation2 + $0xf9] sm:$0xff]
      %v3929 = vld [vmem:[#allocation2 + $0x109] sm:$0xff]
      %v3930 = vld [vmem:[#allocation2 + $0x111] sm:$0xff]
      %v3931 = vld [vmem:[#allocation2 + $0x121] sm:$0xff]
      %v3932 = vld [vmem:[#allocation2 + $0x129] sm:$0xff]
      %v3933 = vld [vmem:[#allocation2 + $0x139] sm:$0xff]
      %v3934 = vld [vmem:[#allocation2 + $0x141] sm:$0xff]
      %v3935 = vld [vmem:[#allocation2 + $0x151] sm:$0xff]
      %v3936 = vld [vmem:[#allocation2 + $0x159] sm:$0xff]
      %v3937 = vld [vmem:[#allocation2 + $0x169] sm:$0xff]
      %v3938 = vld [vmem:[#allocation2 + $0x171] sm:$0xff]
      %v3939 = vpack.c.bf16 %v3908, %v3907
      %v3940 = vpack.c.bf16 %v3910, %v3909
      %v3941 = vpack.c.bf16 %v3912, %v3911
      %v3942 = vpack.c.bf16 %v3914, %v3913
      %v3943 = vpack.c.bf16 %v3916, %v3915
      %v3944 = vpack.c.bf16 %v3918, %v3917
      %v3945 = vpack.c.bf16 %v3920, %v3919
      %v3946 = vpack.c.bf16 %v3922, %v3921
      %v3947 = vpack.c.bf16 %v3924, %v3923
      %v3948 = vpack.c.bf16 %v3926, %v3925
      %v3949 = vpack.c.bf16 %v3928, %v3927
      %v3950 = vpack.c.bf16 %v3930, %v3929
      %v3951 = vpack.c.bf16 %v3932, %v3931
      %v3952 = vpack.c.bf16 %v3934, %v3933
      %v3953 = vpack.c.bf16 %v3936, %v3935
      %v3954 = vpack.c.bf16 %v3938, %v3937
      %v3955 = vld [vmem:[%s8] sm:$0xc]
      %v3957 = vunpack.c.l.b16 %v3955
      %v3958 = vpack.c.b16 %v3957, %v3957
      %v3959 = vrot.slane %v3958, 2
      %v3961 = vsel %vm369, %v3939, 0
      %v3964 = vsel %vm369, %v3940, 0
      %v3967 = vsel %vm369, %v3941, 0
      %v3970 = vsel %vm369, %v3942, 0
      %v3973 = vsel %vm369, %v3943, 0
      %v3976 = vsel %vm369, %v3944, 0
      %v3979 = vsel %vm369, %v3945, 0
      %v3982 = vsel %vm369, %v3946, 0
      %v3985 = vsel %vm369, %v3947, 0
      %v3988 = vsel %vm369, %v3948, 0
      %v3991 = vsel %vm369, %v3949, 0
      %v3994 = vsel %vm369, %v3950, 0
      %v3997 = vsel %vm369, %v3951, 0
      %v4000 = vsel %vm369, %v3952, 0
      %v4003 = vsel %vm369, %v3953, 0
      %v4006 = vsel %vm369, %v3954, 0
      %v4009 = vsel %vm970, %v3959, 0
      %4011 = vmatprep.subr.bf16.mxu0 0
      %4012 = vmatpush1.bf16.msra.mxu0 %v4009
      %4013 = vmatprep.subr.bf16.mxu0 0
      %4014 = vmatpush1.bf16.msra.mxu0 0
      %4015 = vmatprep.subr.bf16.mxu0 0
      %4016 = vmatpush1.bf16.msra.mxu0 0
      %4017 = vmatprep.subr.bf16.mxu0 0
      %4018 = vmatpush1.bf16.msra.mxu0 0
      %4019 = vmatprep.subr.bf16.mxu0 0
      %4020 = vmatpush1.bf16.msra.mxu0 0
      %4021 = vmatprep.subr.bf16.mxu0 0
      %4022 = vmatpush1.bf16.msra.mxu0 0
      %4023 = vmatprep.subr.bf16.mxu0 0
      %4024 = vmatpush1.bf16.msra.mxu0 0
      %4025 = vmatprep.subr.bf16.mxu0 0
      %4026 = vmatpush1.bf16.msra.mxu0 0
      %4027 = vmatprep.subr.bf16.mxu0 0
      %4028 = vmatpush1.bf16.msra.mxu0 0
      %4029 = vmatprep.subr.bf16.mxu0 0
      %4030 = vmatpush1.bf16.msra.mxu0 0
      %4031 = vmatprep.subr.bf16.mxu0 0
      %4032 = vmatpush1.bf16.msra.mxu0 0
      %4033 = vmatprep.subr.bf16.mxu0 0
      %4034 = vmatpush1.bf16.msra.mxu0 0
      %4035 = vmatprep.subr.bf16.mxu0 0
      %4036 = vmatpush1.bf16.msra.mxu0 0
      %4037 = vmatprep.subr.bf16.mxu0 0
      %4038 = vmatpush1.bf16.msra.mxu0 0
      %4039 = vmatprep.subr.bf16.mxu0 0
      %4040 = vmatpush1.bf16.msra.mxu0 0
      %4041 = vmatprep.subr.bf16.mxu0 0
      %4042 = vmatpush1.bf16.msra.mxu0 0
      %4043 = vmatprep.mubr.bf16.mxu0 0
      %4044 = vmatmul.mubr.bf16.gmra.mrb[0].mxu0 %v3961
      %v4045 = vpop.f32.mrb[0].mxu0
      %v4046 = vadd.f32 0.0, %v4045
      %v4047 = vpop.f32.mrb[0].mxu0
      %v4048 = vpop.f32.mrb[0].mxu0
      %v4049 = vadd.f32 0.0, %v4048
      %v4050 = vpop.f32.mrb[0].mxu0
      %4051 = vmatprep.mubr.bf16.mxu0 0
      %4052 = vmatmul.mubr.bf16.gmra.mrb[0].mxu0 %v3964
      %v4053 = vpop.f32.mrb[0].mxu0
      %v4054 = vadd.f32 0.0, %v4053
      %v4055 = vpop.f32.mrb[0].mxu0
      %v4056 = vpop.f32.mrb[0].mxu0
      %v4057 = vadd.f32 0.0, %v4056
      %v4058 = vpop.f32.mrb[0].mxu0
      %4059 = vmatprep.mubr.bf16.mxu0 0
      %4060 = vmatmul.mubr.bf16.gmra.mrb[0].mxu0 %v3967
      %v4061 = vpop.f32.mrb[0].mxu0
      %v4062 = vadd.f32 0.0, %v4061
      %v4063 = vpop.f32.mrb[0].mxu0
      %v4064 = vpop.f32.mrb[0].mxu0
      %v4065 = vadd.f32 0.0, %v4064
      %v4066 = vpop.f32.mrb[0].mxu0
      %4067 = vmatprep.mubr.bf16.mxu0 0
      %4068 = vmatmul.mubr.bf16.gmra.mrb[0].mxu0 %v3970
      %v4069 = vpop.f32.mrb[0].mxu0
      %v4070 = vadd.f32 0.0, %v4069
      %v4071 = vpop.f32.mrb[0].mxu0
      %v4072 = vpop.f32.mrb[0].mxu0
      %v4073 = vadd.f32 0.0, %v4072
      %v4074 = vpop.f32.mrb[0].mxu0
      %4075 = vmatprep.mubr.bf16.mxu0 0
      %4076 = vmatmul.mubr.bf16.gmra.mrb[0].mxu0 %v3973
      %v4077 = vpop.f32.mrb[0].mxu0
      %v4078 = vadd.f32 0.0, %v4077
      %v4079 = vpop.f32.mrb[0].mxu0
      %v4080 = vpop.f32.mrb[0].mxu0
      %v4081 = vadd.f32 0.0, %v4080
      %v4082 = vpop.f32.mrb[0].mxu0
      %4083 = vmatprep.mubr.bf16.mxu0 0
      %4084 = vmatmul.mubr.bf16.gmra.mrb[0].mxu0 %v3976
      %v4085 = vpop.f32.mrb[0].mxu0
      %v4086 = vadd.f32 0.0, %v4085
      %v4087 = vpop.f32.mrb[0].mxu0
      %v4088 = vpop.f32.mrb[0].mxu0
      %v4089 = vadd.f32 0.0, %v4088
      %v4090 = vpop.f32.mrb[0].mxu0
      %4091 = vmatprep.mubr.bf16.mxu0 0
      %4092 = vmatmul.mubr.bf16.gmra.mrb[0].mxu0 %v3979
      %v4093 = vpop.f32.mrb[0].mxu0
      %v4094 = vadd.f32 0.0, %v4093
      %v4095 = vpop.f32.mrb[0].mxu0
      %v4096 = vpop.f32.mrb[0].mxu0
      %v4097 = vadd.f32 0.0, %v4096
      %v4098 = vpop.f32.mrb[0].mxu0
      %4099 = vmatprep.mubr.bf16.mxu0 0
      %4100 = vmatmul.mubr.bf16.gmra.mrb[0].mxu0 %v3982
      %v4101 = vpop.f32.mrb[0].mxu0
      %v4102 = vadd.f32 0.0, %v4101
      %v4103 = vpop.f32.mrb[0].mxu0
      %v4104 = vpop.f32.mrb[0].mxu0
      %v4105 = vadd.f32 0.0, %v4104
      %v4106 = vpop.f32.mrb[0].mxu0
      %4107 = vmatprep.mubr.bf16.mxu0 0
      %4108 = vmatmul.mubr.bf16.gmra.mrb[0].mxu0 %v3985
      %v4109 = vpop.f32.mrb[0].mxu0
      %v4110 = vadd.f32 0.0, %v4109
      %v4111 = vpop.f32.mrb[0].mxu0
      %v4112 = vpop.f32.mrb[0].mxu0
      %v4113 = vadd.f32 0.0, %v4112
      %v4114 = vpop.f32.mrb[0].mxu0
      %4115 = vmatprep.mubr.bf16.mxu0 0
      %4116 = vmatmul.mubr.bf16.gmra.mrb[0].mxu0 %v3988
      %v4117 = vpop.f32.mrb[0].mxu0
      %v4118 = vadd.f32 0.0, %v4117
      %v4119 = vpop.f32.mrb[0].mxu0
      %v4120 = vpop.f32.mrb[0].mxu0
      %v4121 = vadd.f32 0.0, %v4120
      %v4122 = vpop.f32.mrb[0].mxu0
      %4123 = vmatprep.mubr.bf16.mxu0 0
      %4124 = vmatmul.mubr.bf16.gmra.mrb[0].mxu0 %v3991
      %v4125 = vpop.f32.mrb[0].mxu0
      %v4126 = vadd.f32 0.0, %v4125
      %v4127 = vpop.f32.mrb[0].mxu0
      %v4128 = vpop.f32.mrb[0].mxu0
      %v4129 = vadd.f32 0.0, %v4128
      %v4130 = vpop.f32.mrb[0].mxu0
      %4131 = vmatprep.mubr.bf16.mxu0 0
      %4132 = vmatmul.mubr.bf16.gmra.mrb[0].mxu0 %v3994
      %v4133 = vpop.f32.mrb[0].mxu0
      %v4134 = vadd.f32 0.0, %v4133
      %v4135 = vpop.f32.mrb[0].mxu0
      %v4136 = vpop.f32.mrb[0].mxu0
      %v4137 = vadd.f32 0.0, %v4136
      %v4138 = vpop.f32.mrb[0].mxu0
      %4139 = vmatprep.mubr.bf16.mxu0 0
      %4140 = vmatmul.mubr.bf16.gmra.mrb[0].mxu0 %v3997
      %v4141 = vpop.f32.mrb[0].mxu0
      %v4142 = vadd.f32 0.0, %v4141
      %v4143 = vpop.f32.mrb[0].mxu0
      %v4144 = vpop.f32.mrb[0].mxu0
      %v4145 = vadd.f32 0.0, %v4144
      %v4146 = vpop.f32.mrb[0].mxu0
      %4147 = vmatprep.mubr.bf16.mxu0 0
      %4148 = vmatmul.mubr.bf16.gmra.mrb[0].mxu0 %v4000
      %v4149 = vpop.f32.mrb[0].mxu0
      %v4150 = vadd.f32 0.0, %v4149
      %v4151 = vpop.f32.mrb[0].mxu0
      %v4152 = vpop.f32.mrb[0].mxu0
      %v4153 = vadd.f32 0.0, %v4152
      %v4154 = vpop.f32.mrb[0].mxu0
      %4155 = vmatprep.mubr.bf16.mxu0 0
      %4156 = vmatmul.mubr.bf16.gmra.mrb[0].mxu0 %v4003
      %v4157 = vpop.f32.mrb[0].mxu0
      %v4158 = vadd.f32 0.0, %v4157
      %v4159 = vpop.f32.mrb[0].mxu0
      %v4160 = vpop.f32.mrb[0].mxu0
      %v4161 = vadd.f32 0.0, %v4160
      %v4162 = vpop.f32.mrb[0].mxu0
      %4163 = vmatprep.mubr.bf16.mxu0 0
      %4164 = vmatmul.mubr.bf16.gmra.mrb[0].mxu0 %v4006
      %v4165 = vpop.f32.mrb[0].mxu0
      %v4166 = vadd.f32 0.0, %v4165
      %v4167 = vpop.f32.mrb[0].mxu0
      %v4168 = vpop.f32.mrb[0].mxu0
      %v4169 = vadd.f32 0.0, %v4168
      %v4170 = vpop.f32.mrb[0].mxu0
      %4171 = vdwg.mxu0
      %v4173 = vsel %vm369, %v3890, 0
      %v4176 = vsel %vm369, %v3891, 0
      %v4179 = vsel %vm369, %v3892, 0
      %v4182 = vsel %vm369, %v3893, 0
      %v4185 = vsel %vm369, %v3894, 0
      %v4188 = vsel %vm369, %v3895, 0
      %v4191 = vsel %vm369, %v3896, 0
      %v4194 = vsel %vm369, %v3897, 0
      %v4197 = vsel %vm369, %v3898, 0
      %v4200 = vsel %vm369, %v3899, 0
      %v4203 = vsel %vm369, %v3900, 0
      %v4206 = vsel %vm369, %v3901, 0
      %v4209 = vsel %vm369, %v3902, 0
      %v4212 = vsel %vm369, %v3903, 0
      %v4215 = vsel %vm369, %v3904, 0
      %v4218 = vsel %vm369, %v3905, 0
      %v4221 = vsel %vm970, %v3906, 0
      %4223 = vmatprep.subr.bf16.mxu0 0
      %4224 = vmatpush1.bf16.msra.mxu0 %v4221
      %4225 = vmatprep.subr.bf16.mxu0 0
      %4226 = vmatpush1.bf16.msra.mxu0 0
      %4227 = vmatprep.subr.bf16.mxu0 0
      %4228 = vmatpush1.bf16.msra.mxu0 0
      %4229 = vmatprep.subr.bf16.mxu0 0
      %4230 = vmatpush1.bf16.msra.mxu0 0
      %4231 = vmatprep.subr.bf16.mxu0 0
      %4232 = vmatpush1.bf16.msra.mxu0 0
      %4233 = vmatprep.subr.bf16.mxu0 0
      %4234 = vmatpush1.bf16.msra.mxu0 0
      %4235 = vmatprep.subr.bf16.mxu0 0
      %4236 = vmatpush1.bf16.msra.mxu0 0
      %4237 = vmatprep.subr.bf16.mxu0 0
      %4238 = vmatpush1.bf16.msra.mxu0 0
      %4239 = vmatprep.subr.bf16.mxu0 0
      %4240 = vmatpush1.bf16.msra.mxu0 0
      %4241 = vmatprep.subr.bf16.mxu0 0
      %4242 = vmatpush1.bf16.msra.mxu0 0
      %4243 = vmatprep.subr.bf16.mxu0 0
      %4244 = vmatpush1.bf16.msra.mxu0 0
      %4245 = vmatprep.subr.bf16.mxu0 0
      %4246 = vmatpush1.bf16.msra.mxu0 0
      %4247 = vmatprep.subr.bf16.mxu0 0
      %4248 = vmatpush1.bf16.msra.mxu0 0
      %4249 = vmatprep.subr.bf16.mxu0 0
      %4250 = vmatpush1.bf16.msra.mxu0 0
      %4251 = vmatprep.subr.bf16.mxu0 0
      %4252 = vmatpush1.bf16.msra.mxu0 0
      %4253 = vmatprep.subr.bf16.mxu0 0
      %4254 = vmatpush1.bf16.msra.mxu0 0
      %4255 = vmatprep.mubr.bf16.mxu0 0
      %4256 = vmatmul.mubr.bf16.gmra.mrb[0].mxu0 %v4173
      %v4257 = vpop.f32.mrb[0].mxu0
      %v4258 = vadd.f32 %v4046, %v4257
      %v4259 = vpop.f32.mrb[0].mxu0
      %v4260 = vpop.f32.mrb[0].mxu0
      %v4261 = vadd.f32 %v4049, %v4260
      %v4262 = vpop.f32.mrb[0].mxu0
      %4263 = vmatprep.mubr.bf16.mxu0 0
      %4264 = vmatmul.mubr.bf16.gmra.mrb[0].mxu0 %v4176
      %v4265 = vpop.f32.mrb[0].mxu0
      %v4266 = vadd.f32 %v4054, %v4265
      %v4267 = vpop.f32.mrb[0].mxu0
      %v4268 = vpop.f32.mrb[0].mxu0
      %v4269 = vadd.f32 %v4057, %v4268
      %v4270 = vpop.f32.mrb[0].mxu0
      %4271 = vmatprep.mubr.bf16.mxu0 0
      %4272 = vmatmul.mubr.bf16.gmra.mrb[0].mxu0 %v4179
      %v4273 = vpop.f32.mrb[0].mxu0
      %v4274 = vadd.f32 %v4062, %v4273
      %v4275 = vpop.f32.mrb[0].mxu0
      %v4276 = vpop.f32.mrb[0].mxu0
      %v4277 = vadd.f32 %v4065, %v4276
      %v4278 = vpop.f32.mrb[0].mxu0
      %4279 = vmatprep.mubr.bf16.mxu0 0
      %4280 = vmatmul.mubr.bf16.gmra.mrb[0].mxu0 %v4182
      %v4281 = vpop.f32.mrb[0].mxu0
      %v4282 = vadd.f32 %v4070, %v4281
      %v4283 = vpop.f32.mrb[0].mxu0
      %v4284 = vpop.f32.mrb[0].mxu0
      %v4285 = vadd.f32 %v4073, %v4284
      %v4286 = vpop.f32.mrb[0].mxu0
      %4287 = vmatprep.mubr.bf16.mxu0 0
      %4288 = vmatmul.mubr.bf16.gmra.mrb[0].mxu0 %v4185
      %v4289 = vpop.f32.mrb[0].mxu0
      %v4290 = vadd.f32 %v4078, %v4289
      %v4291 = vpop.f32.mrb[0].mxu0
      %v4292 = vpop.f32.mrb[0].mxu0
      %v4293 = vadd.f32 %v4081, %v4292
      %v4294 = vpop.f32.mrb[0].mxu0
      %4295 = vmatprep.mubr.bf16.mxu0 0
      %4296 = vmatmul.mubr.bf16.gmra.mrb[0].mxu0 %v4188
      %v4297 = vpop.f32.mrb[0].mxu0
      %v4298 = vadd.f32 %v4086, %v4297
      %v4299 = vpop.f32.mrb[0].mxu0
      %v4300 = vpop.f32.mrb[0].mxu0
      %v4301 = vadd.f32 %v4089, %v4300
      %v4302 = vpop.f32.mrb[0].mxu0
      %4303 = vmatprep.mubr.bf16.mxu0 0
      %4304 = vmatmul.mubr.bf16.gmra.mrb[0].mxu0 %v4191
      %v4305 = vpop.f32.mrb[0].mxu0
      %v4306 = vadd.f32 %v4094, %v4305
      %v4307 = vpop.f32.mrb[0].mxu0
      %v4308 = vpop.f32.mrb[0].mxu0
      %v4309 = vadd.f32 %v4097, %v4308
      %v4310 = vpop.f32.mrb[0].mxu0
      %4311 = vmatprep.mubr.bf16.mxu0 0
      %4312 = vmatmul.mubr.bf16.gmra.mrb[0].mxu0 %v4194
      %v4313 = vpop.f32.mrb[0].mxu0
      %v4314 = vadd.f32 %v4102, %v4313
      %v4315 = vpop.f32.mrb[0].mxu0
      %v4316 = vpop.f32.mrb[0].mxu0
      %v4317 = vadd.f32 %v4105, %v4316
      %v4318 = vpop.f32.mrb[0].mxu0
      %4319 = vmatprep.mubr.bf16.mxu0 0
      %4320 = vmatmul.mubr.bf16.gmra.mrb[0].mxu0 %v4197
      %v4321 = vpop.f32.mrb[0].mxu0
      %v4322 = vadd.f32 %v4110, %v4321
      %v4323 = vpop.f32.mrb[0].mxu0
      %v4324 = vpop.f32.mrb[0].mxu0
      %v4325 = vadd.f32 %v4113, %v4324
      %v4326 = vpop.f32.mrb[0].mxu0
      %4327 = vmatprep.mubr.bf16.mxu0 0
      %4328 = vmatmul.mubr.bf16.gmra.mrb[0].mxu0 %v4200
      %v4329 = vpop.f32.mrb[0].mxu0
      %v4330 = vadd.f32 %v4118, %v4329
      %v4331 = vpop.f32.mrb[0].mxu0
      %v4332 = vpop.f32.mrb[0].mxu0
      %v4333 = vadd.f32 %v4121, %v4332
      %v4334 = vpop.f32.mrb[0].mxu0
      %4335 = vmatprep.mubr.bf16.mxu0 0
      %4336 = vmatmul.mubr.bf16.gmra.mrb[0].mxu0 %v4203
      %v4337 = vpop.f32.mrb[0].mxu0
      %v4338 = vadd.f32 %v4126, %v4337
      %v4339 = vpop.f32.mrb[0].mxu0
      %v4340 = vpop.f32.mrb[0].mxu0
      %v4341 = vadd.f32 %v4129, %v4340
      %v4342 = vpop.f32.mrb[0].mxu0
      %4343 = vmatprep.mubr.bf16.mxu0 0
      %4344 = vmatmul.mubr.bf16.gmra.mrb[0].mxu0 %v4206
      %v4345 = vpop.f32.mrb[0].mxu0
      %v4346 = vadd.f32 %v4134, %v4345
      %v4347 = vpop.f32.mrb[0].mxu0
      %v4348 = vpop.f32.mrb[0].mxu0
      %v4349 = vadd.f32 %v4137, %v4348
      %v4350 = vpop.f32.mrb[0].mxu0
      %4351 = vmatprep.mubr.bf16.mxu0 0
      %4352 = vmatmul.mubr.bf16.gmra.mrb[0].mxu0 %v4209
      %v4353 = vpop.f32.mrb[0].mxu0
      %v4354 = vadd.f32 %v4142, %v4353
      %v4355 = vpop.f32.mrb[0].mxu0
      %v4356 = vpop.f32.mrb[0].mxu0
      %v4357 = vadd.f32 %v4145, %v4356
      %v4358 = vpop.f32.mrb[0].mxu0
      %4359 = vmatprep.mubr.bf16.mxu0 0
      %4360 = vmatmul.mubr.bf16.gmra.mrb[0].mxu0 %v4212
      %v4361 = vpop.f32.mrb[0].mxu0
      %v4362 = vadd.f32 %v4150, %v4361
      %v4363 = vpop.f32.mrb[0].mxu0
      %v4364 = vpop.f32.mrb[0].mxu0
      %v4365 = vadd.f32 %v4153, %v4364
      %v4366 = vpop.f32.mrb[0].mxu0
      %4367 = vmatprep.mubr.bf16.mxu0 0
      %4368 = vmatmul.mubr.bf16.gmra.mrb[0].mxu0 %v4215
      %v4369 = vpop.f32.mrb[0].mxu0
      %v4370 = vadd.f32 %v4158, %v4369
      %v4371 = vpop.f32.mrb[0].mxu0
      %v4372 = vpop.f32.mrb[0].mxu0
      %v4373 = vadd.f32 %v4161, %v4372
      %v4374 = vpop.f32.mrb[0].mxu0
      %4375 = vmatprep.mubr.bf16.mxu0 0
      %4376 = vmatmul.mubr.bf16.gmra.mrb[0].mxu0 %v4218
      %v4377 = vpop.f32.mrb[0].mxu0
      %v4378 = vadd.f32 %v4166, %v4377
      %v4379 = vpop.f32.mrb[0].mxu0
      %v4380 = vpop.f32.mrb[0].mxu0
      %v4381 = vadd.f32 %v4169, %v4380
      %v4382 = vpop.f32.mrb[0].mxu0
      %4383 = vdwg.mxu0
      %v4384 = vld [vmem:[#allocation2 + $0x2] sm:$0xff]
      %v4385 = vld [vmem:[#allocation2 + $0xa] sm:$0xff]
      %v4386 = vld [vmem:[#allocation2 + $0x1a] sm:$0xff]
      %v4387 = vld [vmem:[#allocation2 + $0x22] sm:$0xff]
      %v4388 = vld [vmem:[#allocation2 + $0x32] sm:$0xff]
      %v4389 = vld [vmem:[#allocation2 + $0x3a] sm:$0xff]
      %v4390 = vld [vmem:[#allocation2 + $0x4a] sm:$0xff]
      %v4391 = vld [vmem:[#allocation2 + $0x52] sm:$0xff]
      %v4392 = vld [vmem:[#allocation2 + $0x62] sm:$0xff]
      %v4393 = vld [vmem:[#allocation2 + $0x6a] sm:$0xff]
      %v4394 = vld [vmem:[#allocation2 + $0x7a] sm:$0xff]
      %v4395 = vld [vmem:[#allocation2 + $0x82] sm:$0xff]
      %v4396 = vld [vmem:[#allocation2 + $0x92] sm:$0xff]
      %v4397 = vld [vmem:[#allocation2 + $0x9a] sm:$0xff]
      %v4398 = vld [vmem:[#allocation2 + $0xaa] sm:$0xff]
      %v4399 = vld [vmem:[#allocation2 + $0xb2] sm:$0xff]
      %v4400 = vld [vmem:[#allocation2 + $0xc2] sm:$0xff]
      %v4401 = vld [vmem:[#allocation2 + $0xca] sm:$0xff]
      %v4402 = vld [vmem:[#allocation2 + $0xda] sm:$0xff]
      %v4403 = vld [vmem:[#allocation2 + $0xe2] sm:$0xff]
      %v4404 = vld [vmem:[#allocation2 + $0xf2] sm:$0xff]
      %v4405 = vld [vmem:[#allocation2 + $0xfa] sm:$0xff]
      %v4406 = vld [vmem:[#allocation2 + $0x10a] sm:$0xff]
      %v4407 = vld [vmem:[#allocation2 + $0x112] sm:$0xff]
      %v4408 = vld [vmem:[#allocation2 + $0x122] sm:$0xff]
      %v4409 = vld [vmem:[#allocation2 + $0x12a] sm:$0xff]
      %v4410 = vld [vmem:[#allocation2 + $0x13a] sm:$0xff]
      %v4411 = vld [vmem:[#allocation2 + $0x142] sm:$0xff]
      %v4412 = vld [vmem:[#allocation2 + $0x152] sm:$0xff]
      %v4413 = vld [vmem:[#allocation2 + $0x15a] sm:$0xff]
      %v4414 = vld [vmem:[#allocation2 + $0x16a] sm:$0xff]
      %v4415 = vld [vmem:[#allocation2 + $0x172] sm:$0xff]
      %v4416 = vpack.c.bf16 %v4385, %v4384
      %v4417 = vpack.c.bf16 %v4387, %v4386
      %v4418 = vpack.c.bf16 %v4389, %v4388
      %v4419 = vpack.c.bf16 %v4391, %v4390
      %v4420 = vpack.c.bf16 %v4393, %v4392
      %v4421 = vpack.c.bf16 %v4395, %v4394
      %v4422 = vpack.c.bf16 %v4397, %v4396
      %v4423 = vpack.c.bf16 %v4399, %v4398
      %v4424 = vpack.c.bf16 %v4401, %v4400
      %v4425 = vpack.c.bf16 %v4403, %v4402
      %v4426 = vpack.c.bf16 %v4405, %v4404
      %v4427 = vpack.c.bf16 %v4407, %v4406
      %v4428 = vpack.c.bf16 %v4409, %v4408
      %v4429 = vpack.c.bf16 %v4411, %v4410
      %v4430 = vpack.c.bf16 %v4413, %v4412
      %v4431 = vpack.c.bf16 %v4415, %v4414
      %v4432 = vld [vmem:[%s8 + $0x4] sm:$0x3]
      %v4434 = vsel %vm369, %v4416, 0
      %v4437 = vsel %vm369, %v4417, 0
      %v4440 = vsel %vm369, %v4418, 0
      %v4443 = vsel %vm369, %v4419, 0
      %v4446 = vsel %vm369, %v4420, 0
      %v4449 = vsel %vm369, %v4421, 0
      %v4452 = vsel %vm369, %v4422, 0
      %v4455 = vsel %vm369, %v4423, 0
      %v4458 = vsel %vm369, %v4424, 0
      %v4461 = vsel %vm369, %v4425, 0
      %v4464 = vsel %vm369, %v4426, 0
      %v4467 = vsel %vm369, %v4427, 0
      %v4470 = vsel %vm369, %v4428, 0
      %v4473 = vsel %vm369, %v4429, 0
      %v4476 = vsel %vm369, %v4430, 0
      %v4479 = vsel %vm369, %v4431, 0
      %v4482 = vsel %vm970, %v4432, 0
      %4484 = vmatprep.subr.bf16.mxu0 0
      %4485 = vmatpush1.bf16.msra.mxu0 %v4482
      %4486 = vmatprep.subr.bf16.mxu0 0
      %4487 = vmatpush1.bf16.msra.mxu0 0
      %4488 = vmatprep.subr.bf16.mxu0 0
      %4489 = vmatpush1.bf16.msra.mxu0 0
      %4490 = vmatprep.subr.bf16.mxu0 0
      %4491 = vmatpush1.bf16.msra.mxu0 0
      %4492 = vmatprep.subr.bf16.mxu0 0
      %4493 = vmatpush1.bf16.msra.mxu0 0
      %4494 = vmatprep.subr.bf16.mxu0 0
      %4495 = vmatpush1.bf16.msra.mxu0 0
      %4496 = vmatprep.subr.bf16.mxu0 0
      %4497 = vmatpush1.bf16.msra.mxu0 0
      %4498 = vmatprep.subr.bf16.mxu0 0
      %4499 = vmatpush1.bf16.msra.mxu0 0
      %4500 = vmatprep.subr.bf16.mxu0 0
      %4501 = vmatpush1.bf16.msra.mxu0 0
      %4502 = vmatprep.subr.bf16.mxu0 0
      %4503 = vmatpush1.bf16.msra.mxu0 0
      %4504 = vmatprep.subr.bf16.mxu0 0
      %4505 = vmatpush1.bf16.msra.mxu0 0
      %4506 = vmatprep.subr.bf16.mxu0 0
      %4507 = vmatpush1.bf16.msra.mxu0 0
      %4508 = vmatprep.subr.bf16.mxu0 0
      %4509 = vmatpush1.bf16.msra.mxu0 0
      %4510 = vmatprep.subr.bf16.mxu0 0
      %4511 = vmatpush1.bf16.msra.mxu0 0
      %4512 = vmatprep.subr.bf16.mxu0 0
      %4513 = vmatpush1.bf16.msra.mxu0 0
      %4514 = vmatprep.subr.bf16.mxu0 0
      %4515 = vmatpush1.bf16.msra.mxu0 0
      %4516 = vmatprep.mubr.bf16.mxu0 0
      %4517 = vmatmul.mubr.bf16.gmra.mrb[0].mxu0 %v4434
      %v4518 = vpop.f32.mrb[0].mxu0
      %v4519 = vadd.f32 0.0, %v4518
      %v4520 = vpop.f32.mrb[0].mxu0
      %v4521 = vpop.f32.mrb[0].mxu0
      %v4522 = vadd.f32 0.0, %v4521
      %v4523 = vpop.f32.mrb[0].mxu0
      %4524 = vmatprep.mubr.bf16.mxu0 0
      %4525 = vmatmul.mubr.bf16.gmra.mrb[0].mxu0 %v4437
      %v4526 = vpop.f32.mrb[0].mxu0
      %v4527 = vadd.f32 0.0, %v4526
      %v4528 = vpop.f32.mrb[0].mxu0
      %v4529 = vpop.f32.mrb[0].mxu0
      %v4530 = vadd.f32 0.0, %v4529
      %v4531 = vpop.f32.mrb[0].mxu0
      %4532 = vmatprep.mubr.bf16.mxu0 0
      %4533 = vmatmul.mubr.bf16.gmra.mrb[0].mxu0 %v4440
      %v4534 = vpop.f32.mrb[0].mxu0
      %v4535 = vadd.f32 0.0, %v4534
      %v4536 = vpop.f32.mrb[0].mxu0
      %v4537 = vpop.f32.mrb[0].mxu0
      %v4538 = vadd.f32 0.0, %v4537
      %v4539 = vpop.f32.mrb[0].mxu0
      %4540 = vmatprep.mubr.bf16.mxu0 0
      %4541 = vmatmul.mubr.bf16.gmra.mrb[0].mxu0 %v4443
      %v4542 = vpop.f32.mrb[0].mxu0
      %v4543 = vadd.f32 0.0, %v4542
      %v4544 = vpop.f32.mrb[0].mxu0
      %v4545 = vpop.f32.mrb[0].mxu0
      %v4546 = vadd.f32 0.0, %v4545
      %v4547 = vpop.f32.mrb[0].mxu0
      %4548 = vmatprep.mubr.bf16.mxu0 0
      %4549 = vmatmul.mubr.bf16.gmra.mrb[0].mxu0 %v4446
      %v4550 = vpop.f32.mrb[0].mxu0
      %v4551 = vadd.f32 0.0, %v4550
      %v4552 = vpop.f32.mrb[0].mxu0
      %v4553 = vpop.f32.mrb[0].mxu0
      %v4554 = vadd.f32 0.0, %v4553
      %v4555 = vpop.f32.mrb[0].mxu0
      %4556 = vmatprep.mubr.bf16.mxu0 0
      %4557 = vmatmul.mubr.bf16.gmra.mrb[0].mxu0 %v4449
      %v4558 = vpop.f32.mrb[0].mxu0
      %v4559 = vadd.f32 0.0, %v4558
      %v4560 = vpop.f32.mrb[0].mxu0
      %v4561 = vpop.f32.mrb[0].mxu0
      %v4562 = vadd.f32 0.0, %v4561
      %v4563 = vpop.f32.mrb[0].mxu0
      %4564 = vmatprep.mubr.bf16.mxu0 0
      %4565 = vmatmul.mubr.bf16.gmra.mrb[0].mxu0 %v4452
      %v4566 = vpop.f32.mrb[0].mxu0
      %v4567 = vadd.f32 0.0, %v4566
      %v4568 = vpop.f32.mrb[0].mxu0
      %v4569 = vpop.f32.mrb[0].mxu0
      %v4570 = vadd.f32 0.0, %v4569
      %v4571 = vpop.f32.mrb[0].mxu0
      %4572 = vmatprep.mubr.bf16.mxu0 0
      %4573 = vmatmul.mubr.bf16.gmra.mrb[0].mxu0 %v4455
      %v4574 = vpop.f32.mrb[0].mxu0
      %v4575 = vadd.f32 0.0, %v4574
      %v4576 = vpop.f32.mrb[0].mxu0
      %v4577 = vpop.f32.mrb[0].mxu0
      %v4578 = vadd.f32 0.0, %v4577
      %v4579 = vpop.f32.mrb[0].mxu0
      %4580 = vmatprep.mubr.bf16.mxu0 0
      %4581 = vmatmul.mubr.bf16.gmra.mrb[0].mxu0 %v4458
      %v4582 = vpop.f32.mrb[0].mxu0
      %v4583 = vadd.f32 0.0, %v4582
      %v4584 = vpop.f32.mrb[0].mxu0
      %v4585 = vpop.f32.mrb[0].mxu0
      %v4586 = vadd.f32 0.0, %v4585
      %v4587 = vpop.f32.mrb[0].mxu0
      %4588 = vmatprep.mubr.bf16.mxu0 0
      %4589 = vmatmul.mubr.bf16.gmra.mrb[0].mxu0 %v4461
      %v4590 = vpop.f32.mrb[0].mxu0
      %v4591 = vadd.f32 0.0, %v4590
      %v4592 = vpop.f32.mrb[0].mxu0
      %v4593 = vpop.f32.mrb[0].mxu0
      %v4594 = vadd.f32 0.0, %v4593
      %v4595 = vpop.f32.mrb[0].mxu0
      %4596 = vmatprep.mubr.bf16.mxu0 0
      %4597 = vmatmul.mubr.bf16.gmra.mrb[0].mxu0 %v4464
      %v4598 = vpop.f32.mrb[0].mxu0
      %v4599 = vadd.f32 0.0, %v4598
      %v4600 = vpop.f32.mrb[0].mxu0
      %v4601 = vpop.f32.mrb[0].mxu0
      %v4602 = vadd.f32 0.0, %v4601
      %v4603 = vpop.f32.mrb[0].mxu0
      %4604 = vmatprep.mubr.bf16.mxu0 0
      %4605 = vmatmul.mubr.bf16.gmra.mrb[0].mxu0 %v4467
      %v4606 = vpop.f32.mrb[0].mxu0
      %v4607 = vadd.f32 0.0, %v4606
      %v4608 = vpop.f32.mrb[0].mxu0
      %v4609 = vpop.f32.mrb[0].mxu0
      %v4610 = vadd.f32 0.0, %v4609
      %v4611 = vpop.f32.mrb[0].mxu0
      %4612 = vmatprep.mubr.bf16.mxu0 0
      %4613 = vmatmul.mubr.bf16.gmra.mrb[0].mxu0 %v4470
      %v4614 = vpop.f32.mrb[0].mxu0
      %v4615 = vadd.f32 0.0, %v4614
      %v4616 = vpop.f32.mrb[0].mxu0
      %v4617 = vpop.f32.mrb[0].mxu0
      %v4618 = vadd.f32 0.0, %v4617
      %v4619 = vpop.f32.mrb[0].mxu0
      %4620 = vmatprep.mubr.bf16.mxu0 0
      %4621 = vmatmul.mubr.bf16.gmra.mrb[0].mxu0 %v4473
      %v4622 = vpop.f32.mrb[0].mxu0
      %v4623 = vadd.f32 0.0, %v4622
      %v4624 = vpop.f32.mrb[0].mxu0
      %v4625 = vpop.f32.mrb[0].mxu0
      %v4626 = vadd.f32 0.0, %v4625
      %v4627 = vpop.f32.mrb[0].mxu0
      %4628 = vmatprep.mubr.bf16.mxu0 0
      %4629 = vmatmul.mubr.bf16.gmra.mrb[0].mxu0 %v4476
      %v4630 = vpop.f32.mrb[0].mxu0
      %v4631 = vadd.f32 0.0, %v4630
      %v4632 = vpop.f32.mrb[0].mxu0
      %v4633 = vpop.f32.mrb[0].mxu0
      %v4634 = vadd.f32 0.0, %v4633
      %v4635 = vpop.f32.mrb[0].mxu0
      %4636 = vmatprep.mubr.bf16.mxu0 0
      %4637 = vmatmul.mubr.bf16.gmra.mrb[0].mxu0 %v4479
      %v4638 = vpop.f32.mrb[0].mxu0
      %v4639 = vadd.f32 0.0, %v4638
      %v4640 = vpop.f32.mrb[0].mxu0
      %v4641 = vpop.f32.mrb[0].mxu0
      %v4642 = vadd.f32 0.0, %v4641
      %v4643 = vpop.f32.mrb[0].mxu0
      %4644 = vdwg.mxu0
      %v4645 = vadd.f32 %v4258, %v4519
      %v4646 = vadd.f32 %v4261, %v4522
      %v4647 = vadd.f32 %v4266, %v4527
      %v4648 = vadd.f32 %v4269, %v4530
      %v4649 = vadd.f32 %v4274, %v4535
      %v4650 = vadd.f32 %v4277, %v4538
      %v4651 = vadd.f32 %v4282, %v4543
      %v4652 = vadd.f32 %v4285, %v4546
      %v4653 = vadd.f32 %v4290, %v4551
      %v4654 = vadd.f32 %v4293, %v4554
      %v4655 = vadd.f32 %v4298, %v4559
      %v4656 = vadd.f32 %v4301, %v4562
      %v4657 = vadd.f32 %v4306, %v4567
      %v4658 = vadd.f32 %v4309, %v4570
      %v4659 = vadd.f32 %v4314, %v4575
      %v4660 = vadd.f32 %v4317, %v4578
      %v4661 = vadd.f32 %v4322, %v4583
      %v4662 = vadd.f32 %v4325, %v4586
      %v4663 = vadd.f32 %v4330, %v4591
      %v4664 = vadd.f32 %v4333, %v4594
      %v4665 = vadd.f32 %v4338, %v4599
      %v4666 = vadd.f32 %v4341, %v4602
      %v4667 = vadd.f32 %v4346, %v4607
      %v4668 = vadd.f32 %v4349, %v4610
      %v4669 = vadd.f32 %v4354, %v4615
      %v4670 = vadd.f32 %v4357, %v4618
      %v4671 = vadd.f32 %v4362, %v4623
      %v4672 = vadd.f32 %v4365, %v4626
      %v4673 = vadd.f32 %v4370, %v4631
      %v4674 = vadd.f32 %v4373, %v4634
      %v4675 = vadd.f32 %v4378, %v4639
      %v4676 = vadd.f32 %v4381, %v4642
      %v4677 = vld [vmem:[%s754] sm:$0xff]
      %v4678 = vld [vmem:[%s754 + $0x8] sm:$0xff]
      %v4679 = vld [vmem:[%s754 + $0x18] sm:$0xff]
      %v4680 = vld [vmem:[%s754 + $0x20] sm:$0xff]
      %v4681 = vld [vmem:[%s754 + $0x30] sm:$0xff]
      %v4682 = vld [vmem:[%s754 + $0x38] sm:$0xff]
      %v4683 = vld [vmem:[%s754 + $0x48] sm:$0xff]
      %v4684 = vld [vmem:[%s754 + $0x50] sm:$0xff]
      %v4685 = vld [vmem:[%s754 + $0x60] sm:$0xff]
      %v4686 = vld [vmem:[%s754 + $0x68] sm:$0xff]
      %v4687 = vld [vmem:[%s754 + $0x78] sm:$0xff]
      %v4688 = vld [vmem:[%s754 + $0x80] sm:$0xff]
      %v4689 = vld [vmem:[%s754 + $0x90] sm:$0xff]
      %v4690 = vld [vmem:[%s754 + $0x98] sm:$0xff]
      %v4691 = vld [vmem:[%s754 + $0xa8] sm:$0xff]
      %v4692 = vld [vmem:[%s754 + $0xb0] sm:$0xff]
      %v4693 = vld [vmem:[%s754 + $0xc0] sm:$0xff]
      %v4694 = vld [vmem:[%s754 + $0xc8] sm:$0xff]
      %v4695 = vld [vmem:[%s754 + $0xd8] sm:$0xff]
      %v4696 = vld [vmem:[%s754 + $0xe0] sm:$0xff]
      %v4697 = vld [vmem:[%s754 + $0xf0] sm:$0xff]
      %v4698 = vld [vmem:[%s754 + $0xf8] sm:$0xff]
      %v4699 = vld [vmem:[%s754 + $0x108] sm:$0xff]
      %v4700 = vld [vmem:[%s754 + $0x110] sm:$0xff]
      %v4701 = vld [vmem:[%s754 + $0x120] sm:$0xff]
      %v4702 = vld [vmem:[%s754 + $0x128] sm:$0xff]
      %v4703 = vld [vmem:[%s754 + $0x138] sm:$0xff]
      %v4704 = vld [vmem:[%s754 + $0x140] sm:$0xff]
      %v4705 = vld [vmem:[%s754 + $0x150] sm:$0xff]
      %v4706 = vld [vmem:[%s754 + $0x158] sm:$0xff]
      %v4707 = vld [vmem:[%s754 + $0x168] sm:$0xff]
      %v4708 = vld [vmem:[%s754 + $0x170] sm:$0xff]
      %v4709 = vpack.c.bf16 %v4678, %v4677
      %v4710 = vpack.c.bf16 %v4680, %v4679
      %v4711 = vpack.c.bf16 %v4682, %v4681
      %v4712 = vpack.c.bf16 %v4684, %v4683
      %v4713 = vpack.c.bf16 %v4686, %v4685
      %v4714 = vpack.c.bf16 %v4688, %v4687
      %v4715 = vpack.c.bf16 %v4690, %v4689
      %v4716 = vpack.c.bf16 %v4692, %v4691
      %v4717 = vpack.c.bf16 %v4694, %v4693
      %v4718 = vpack.c.bf16 %v4696, %v4695
      %v4719 = vpack.c.bf16 %v4698, %v4697
      %v4720 = vpack.c.bf16 %v4700, %v4699
      %v4721 = vpack.c.bf16 %v4702, %v4701
      %v4722 = vpack.c.bf16 %v4704, %v4703
      %v4723 = vpack.c.bf16 %v4706, %v4705
      %v4724 = vpack.c.bf16 %v4708, %v4707
      %v4725 = vld [vmem:[%s8 + $0x4] sm:$0xc]
      %v4727 = vunpack.c.l.b16 %v4725
      %v4728 = vpack.c.b16 %v4727, %v4727
      %v4729 = vrot.slane %v4728, 2
      %v4731 = vsel %vm369, %v4709, 0
      %v4734 = vsel %vm369, %v4710, 0
      %v4737 = vsel %vm369, %v4711, 0
      %v4740 = vsel %vm369, %v4712, 0
      %v4743 = vsel %vm369, %v4713, 0
      %v4746 = vsel %vm369, %v4714, 0
      %v4749 = vsel %vm369, %v4715, 0
      %v4752 = vsel %vm369, %v4716, 0
      %v4755 = vsel %vm369, %v4717, 0
      %v4758 = vsel %vm369, %v4718, 0
      %v4761 = vsel %vm369, %v4719, 0
      %v4764 = vsel %vm369, %v4720, 0
      %v4767 = vsel %vm369, %v4721, 0
      %v4770 = vsel %vm369, %v4722, 0
      %v4773 = vsel %vm369, %v4723, 0
      %v4776 = vsel %vm369, %v4724, 0
      %v4779 = vsel %vm970, %v4729, 0
      %4781 = vmatprep.subr.bf16.mxu0 0
      %4782 = vmatpush1.bf16.msra.mxu0 %v4779
      %4783 = vmatprep.subr.bf16.mxu0 0
      %4784 = vmatpush1.bf16.msra.mxu0 0
      %4785 = vmatprep.subr.bf16.mxu0 0
      %4786 = vmatpush1.bf16.msra.mxu0 0
      %4787 = vmatprep.subr.bf16.mxu0 0
      %4788 = vmatpush1.bf16.msra.mxu0 0
      %4789 = vmatprep.subr.bf16.mxu0 0
      %4790 = vmatpush1.bf16.msra.mxu0 0
      %4791 = vmatprep.subr.bf16.mxu0 0
      %4792 = vmatpush1.bf16.msra.mxu0 0
      %4793 = vmatprep.subr.bf16.mxu0 0
      %4794 = vmatpush1.bf16.msra.mxu0 0
      %4795 = vmatprep.subr.bf16.mxu0 0
      %4796 = vmatpush1.bf16.msra.mxu0 0
      %4797 = vmatprep.subr.bf16.mxu0 0
      %4798 = vmatpush1.bf16.msra.mxu0 0
      %4799 = vmatprep.subr.bf16.mxu0 0
      %4800 = vmatpush1.bf16.msra.mxu0 0
      %4801 = vmatprep.subr.bf16.mxu0 0
      %4802 = vmatpush1.bf16.msra.mxu0 0
      %4803 = vmatprep.subr.bf16.mxu0 0
      %4804 = vmatpush1.bf16.msra.mxu0 0
      %4805 = vmatprep.subr.bf16.mxu0 0
      %4806 = vmatpush1.bf16.msra.mxu0 0
      %4807 = vmatprep.subr.bf16.mxu0 0
      %4808 = vmatpush1.bf16.msra.mxu0 0
      %4809 = vmatprep.subr.bf16.mxu0 0
      %4810 = vmatpush1.bf16.msra.mxu0 0
      %4811 = vmatprep.subr.bf16.mxu0 0
      %4812 = vmatpush1.bf16.msra.mxu0 0
      %4813 = vmatprep.mubr.bf16.mxu0 0
      %4814 = vmatmul.mubr.bf16.gmra.mrb[0].mxu0 %v4731
      %v4815 = vpop.f32.mrb[0].mxu0
      %v4816 = vadd.f32 0.0, %v4815
      %v4817 = vpop.f32.mrb[0].mxu0
      %v4818 = vpop.f32.mrb[0].mxu0
      %v4819 = vadd.f32 0.0, %v4818
      %v4820 = vpop.f32.mrb[0].mxu0
      %4821 = vmatprep.mubr.bf16.mxu0 0
      %4822 = vmatmul.mubr.bf16.gmra.mrb[0].mxu0 %v4734
      %v4823 = vpop.f32.mrb[0].mxu0
      %v4824 = vadd.f32 0.0, %v4823
      %v4825 = vpop.f32.mrb[0].mxu0
      %v4826 = vpop.f32.mrb[0].mxu0
      %v4827 = vadd.f32 0.0, %v4826
      %v4828 = vpop.f32.mrb[0].mxu0
      %4829 = vmatprep.mubr.bf16.mxu0 0
      %4830 = vmatmul.mubr.bf16.gmra.mrb[0].mxu0 %v4737
      %v4831 = vpop.f32.mrb[0].mxu0
      %v4832 = vadd.f32 0.0, %v4831
      %v4833 = vpop.f32.mrb[0].mxu0
      %v4834 = vpop.f32.mrb[0].mxu0
      %v4835 = vadd.f32 0.0, %v4834
      %v4836 = vpop.f32.mrb[0].mxu0
      %4837 = vmatprep.mubr.bf16.mxu0 0
      %4838 = vmatmul.mubr.bf16.gmra.mrb[0].mxu0 %v4740
      %v4839 = vpop.f32.mrb[0].mxu0
      %v4840 = vadd.f32 0.0, %v4839
      %v4841 = vpop.f32.mrb[0].mxu0
      %v4842 = vpop.f32.mrb[0].mxu0
      %v4843 = vadd.f32 0.0, %v4842
      %v4844 = vpop.f32.mrb[0].mxu0
      %4845 = vmatprep.mubr.bf16.mxu0 0
      %4846 = vmatmul.mubr.bf16.gmra.mrb[0].mxu0 %v4743
      %v4847 = vpop.f32.mrb[0].mxu0
      %v4848 = vadd.f32 0.0, %v4847
      %v4849 = vpop.f32.mrb[0].mxu0
      %v4850 = vpop.f32.mrb[0].mxu0
      %v4851 = vadd.f32 0.0, %v4850
      %v4852 = vpop.f32.mrb[0].mxu0
      %4853 = vmatprep.mubr.bf16.mxu0 0
      %4854 = vmatmul.mubr.bf16.gmra.mrb[0].mxu0 %v4746
      %v4855 = vpop.f32.mrb[0].mxu0
      %v4856 = vadd.f32 0.0, %v4855
      %v4857 = vpop.f32.mrb[0].mxu0
      %v4858 = vpop.f32.mrb[0].mxu0
      %v4859 = vadd.f32 0.0, %v4858
      %v4860 = vpop.f32.mrb[0].mxu0
      %4861 = vmatprep.mubr.bf16.mxu0 0
      %4862 = vmatmul.mubr.bf16.gmra.mrb[0].mxu0 %v4749
      %v4863 = vpop.f32.mrb[0].mxu0
      %v4864 = vadd.f32 0.0, %v4863
      %v4865 = vpop.f32.mrb[0].mxu0
      %v4866 = vpop.f32.mrb[0].mxu0
      %v4867 = vadd.f32 0.0, %v4866
      %v4868 = vpop.f32.mrb[0].mxu0
      %4869 = vmatprep.mubr.bf16.mxu0 0
      %4870 = vmatmul.mubr.bf16.gmra.mrb[0].mxu0 %v4752
      %v4871 = vpop.f32.mrb[0].mxu0
      %v4872 = vadd.f32 0.0, %v4871
      %v4873 = vpop.f32.mrb[0].mxu0
      %v4874 = vpop.f32.mrb[0].mxu0
      %v4875 = vadd.f32 0.0, %v4874
      %v4876 = vpop.f32.mrb[0].mxu0
      %4877 = vmatprep.mubr.bf16.mxu0 0
      %4878 = vmatmul.mubr.bf16.gmra.mrb[0].mxu0 %v4755
      %v4879 = vpop.f32.mrb[0].mxu0
      %v4880 = vadd.f32 0.0, %v4879
      %v4881 = vpop.f32.mrb[0].mxu0
      %v4882 = vpop.f32.mrb[0].mxu0
      %v4883 = vadd.f32 0.0, %v4882
      %v4884 = vpop.f32.mrb[0].mxu0
      %4885 = vmatprep.mubr.bf16.mxu0 0
      %4886 = vmatmul.mubr.bf16.gmra.mrb[0].mxu0 %v4758
      %v4887 = vpop.f32.mrb[0].mxu0
      %v4888 = vadd.f32 0.0, %v4887
      %v4889 = vpop.f32.mrb[0].mxu0
      %v4890 = vpop.f32.mrb[0].mxu0
      %v4891 = vadd.f32 0.0, %v4890
      %v4892 = vpop.f32.mrb[0].mxu0
      %4893 = vmatprep.mubr.bf16.mxu0 0
      %4894 = vmatmul.mubr.bf16.gmra.mrb[0].mxu0 %v4761
      %v4895 = vpop.f32.mrb[0].mxu0
      %v4896 = vadd.f32 0.0, %v4895
      %v4897 = vpop.f32.mrb[0].mxu0
      %v4898 = vpop.f32.mrb[0].mxu0
      %v4899 = vadd.f32 0.0, %v4898
      %v4900 = vpop.f32.mrb[0].mxu0
      %4901 = vmatprep.mubr.bf16.mxu0 0
      %4902 = vmatmul.mubr.bf16.gmra.mrb[0].mxu0 %v4764
      %v4903 = vpop.f32.mrb[0].mxu0
      %v4904 = vadd.f32 0.0, %v4903
      %v4905 = vpop.f32.mrb[0].mxu0
      %v4906 = vpop.f32.mrb[0].mxu0
      %v4907 = vadd.f32 0.0, %v4906
      %v4908 = vpop.f32.mrb[0].mxu0
      %4909 = vmatprep.mubr.bf16.mxu0 0
      %4910 = vmatmul.mubr.bf16.gmra.mrb[0].mxu0 %v4767
      %v4911 = vpop.f32.mrb[0].mxu0
      %v4912 = vadd.f32 0.0, %v4911
      %v4913 = vpop.f32.mrb[0].mxu0
      %v4914 = vpop.f32.mrb[0].mxu0
      %v4915 = vadd.f32 0.0, %v4914
      %v4916 = vpop.f32.mrb[0].mxu0
      %4917 = vmatprep.mubr.bf16.mxu0 0
      %4918 = vmatmul.mubr.bf16.gmra.mrb[0].mxu0 %v4770
      %v4919 = vpop.f32.mrb[0].mxu0
      %v4920 = vadd.f32 0.0, %v4919
      %v4921 = vpop.f32.mrb[0].mxu0
      %v4922 = vpop.f32.mrb[0].mxu0
      %v4923 = vadd.f32 0.0, %v4922
      %v4924 = vpop.f32.mrb[0].mxu0
      %4925 = vmatprep.mubr.bf16.mxu0 0
      %4926 = vmatmul.mubr.bf16.gmra.mrb[0].mxu0 %v4773
      %v4927 = vpop.f32.mrb[0].mxu0
      %v4928 = vadd.f32 0.0, %v4927
      %v4929 = vpop.f32.mrb[0].mxu0
      %v4930 = vpop.f32.mrb[0].mxu0
      %v4931 = vadd.f32 0.0, %v4930
      %v4932 = vpop.f32.mrb[0].mxu0
      %4933 = vmatprep.mubr.bf16.mxu0 0
      %4934 = vmatmul.mubr.bf16.gmra.mrb[0].mxu0 %v4776
      %v4935 = vpop.f32.mrb[0].mxu0
      %v4936 = vadd.f32 0.0, %v4935
      %v4937 = vpop.f32.mrb[0].mxu0
      %v4938 = vpop.f32.mrb[0].mxu0
      %v4939 = vadd.f32 0.0, %v4938
      %v4940 = vpop.f32.mrb[0].mxu0
      %4941 = vdwg.mxu0
      %v4942 = vadd.f32 %v4645, %v4816
      %v4943 = vadd.f32 %v4646, %v4819
      %v4944 = vadd.f32 %v4647, %v4824
      %v4945 = vadd.f32 %v4648, %v4827
      %v4946 = vadd.f32 %v4649, %v4832
      %v4947 = vadd.f32 %v4650, %v4835
      %v4948 = vadd.f32 %v4651, %v4840
      %v4949 = vadd.f32 %v4652, %v4843
      %v4950 = vadd.f32 %v4653, %v4848
      %v4951 = vadd.f32 %v4654, %v4851
      %v4952 = vadd.f32 %v4655, %v4856
      %v4953 = vadd.f32 %v4656, %v4859
      %v4954 = vadd.f32 %v4657, %v4864
      %v4955 = vadd.f32 %v4658, %v4867
      %v4956 = vadd.f32 %v4659, %v4872
      %v4957 = vadd.f32 %v4660, %v4875
      %v4958 = vadd.f32 %v4661, %v4880
      %v4959 = vadd.f32 %v4662, %v4883
      %v4960 = vadd.f32 %v4663, %v4888
      %v4961 = vadd.f32 %v4664, %v4891
      %v4962 = vadd.f32 %v4665, %v4896
      %v4963 = vadd.f32 %v4666, %v4899
      %v4964 = vadd.f32 %v4667, %v4904
      %v4965 = vadd.f32 %v4668, %v4907
      %v4966 = vadd.f32 %v4669, %v4912
      %v4967 = vadd.f32 %v4670, %v4915
      %v4968 = vadd.f32 %v4671, %v4920
      %v4969 = vadd.f32 %v4672, %v4923
      %v4970 = vadd.f32 %v4673, %v4928
      %v4971 = vadd.f32 %v4674, %v4931
      %v4972 = vadd.f32 %v4675, %v4936
      %v4973 = vadd.f32 %v4676, %v4939
      %v4974 = vld [vmem:[%s754 + $0x1] sm:$0xff]
      %v4975 = vld [vmem:[%s754 + $0x9] sm:$0xff]
      %v4976 = vld [vmem:[%s754 + $0x19] sm:$0xff]
      %v4977 = vld [vmem:[%s754 + $0x21] sm:$0xff]
      %v4978 = vld [vmem:[%s754 + $0x31] sm:$0xff]
      %v4979 = vld [vmem:[%s754 + $0x39] sm:$0xff]
      %v4980 = vld [vmem:[%s754 + $0x49] sm:$0xff]
      %v4981 = vld [vmem:[%s754 + $0x51] sm:$0xff]
      %v4982 = vld [vmem:[%s754 + $0x61] sm:$0xff]
      %v4983 = vld [vmem:[%s754 + $0x69] sm:$0xff]
      %v4984 = vld [vmem:[%s754 + $0x79] sm:$0xff]
      %v4985 = vld [vmem:[%s754 + $0x81] sm:$0xff]
      %v4986 = vld [vmem:[%s754 + $0x91] sm:$0xff]
      %v4987 = vld [vmem:[%s754 + $0x99] sm:$0xff]
      %v4988 = vld [vmem:[%s754 + $0xa9] sm:$0xff]
      %v4989 = vld [vmem:[%s754 + $0xb1] sm:$0xff]
      %v4990 = vld [vmem:[%s754 + $0xc1] sm:$0xff]
      %v4991 = vld [vmem:[%s754 + $0xc9] sm:$0xff]
      %v4992 = vld [vmem:[%s754 + $0xd9] sm:$0xff]
      %v4993 = vld [vmem:[%s754 + $0xe1] sm:$0xff]
      %v4994 = vld [vmem:[%s754 + $0xf1] sm:$0xff]
      %v4995 = vld [vmem:[%s754 + $0xf9] sm:$0xff]
      %v4996 = vld [vmem:[%s754 + $0x109] sm:$0xff]
      %v4997 = vld [vmem:[%s754 + $0x111] sm:$0xff]
      %v4998 = vld [vmem:[%s754 + $0x121] sm:$0xff]
      %v4999 = vld [vmem:[%s754 + $0x129] sm:$0xff]
      %v5000 = vld [vmem:[%s754 + $0x139] sm:$0xff]
      %v5001 = vld [vmem:[%s754 + $0x141] sm:$0xff]
      %v5002 = vld [vmem:[%s754 + $0x151] sm:$0xff]
      %v5003 = vld [vmem:[%s754 + $0x159] sm:$0xff]
      %v5004 = vld [vmem:[%s754 + $0x169] sm:$0xff]
      %v5005 = vld [vmem:[%s754 + $0x171] sm:$0xff]
      %v5006 = vpack.c.bf16 %v4975, %v4974
      %v5007 = vpack.c.bf16 %v4977, %v4976
      %v5008 = vpack.c.bf16 %v4979, %v4978
      %v5009 = vpack.c.bf16 %v4981, %v4980
      %v5010 = vpack.c.bf16 %v4983, %v4982
      %v5011 = vpack.c.bf16 %v4985, %v4984
      %v5012 = vpack.c.bf16 %v4987, %v4986
      %v5013 = vpack.c.bf16 %v4989, %v4988
      %v5014 = vpack.c.bf16 %v4991, %v4990
      %v5015 = vpack.c.bf16 %v4993, %v4992
      %v5016 = vpack.c.bf16 %v4995, %v4994
      %v5017 = vpack.c.bf16 %v4997, %v4996
      %v5018 = vpack.c.bf16 %v4999, %v4998
      %v5019 = vpack.c.bf16 %v5001, %v5000
      %v5020 = vpack.c.bf16 %v5003, %v5002
      %v5021 = vpack.c.bf16 %v5005, %v5004
      %v5022 = vld [vmem:[%s8 + $0x8] sm:$0x3]
      %v5024 = vsel %vm369, %v5006, 0
      %v5027 = vsel %vm369, %v5007, 0
      %v5030 = vsel %vm369, %v5008, 0
      %v5033 = vsel %vm369, %v5009, 0
      %v5036 = vsel %vm369, %v5010, 0
      %v5039 = vsel %vm369, %v5011, 0
      %v5042 = vsel %vm369, %v5012, 0
      %v5045 = vsel %vm369, %v5013, 0
      %v5048 = vsel %vm369, %v5014, 0
      %v5051 = vsel %vm369, %v5015, 0
      %v5054 = vsel %vm369, %v5016, 0
      %v5057 = vsel %vm369, %v5017, 0
      %v5060 = vsel %vm369, %v5018, 0
      %v5063 = vsel %vm369, %v5019, 0
      %v5066 = vsel %vm369, %v5020, 0
      %v5069 = vsel %vm369, %v5021, 0
      %v5072 = vsel %vm970, %v5022, 0
      %5074 = vmatprep.subr.bf16.mxu0 0
      %5075 = vmatpush1.bf16.msra.mxu0 %v5072
      %5076 = vmatprep.subr.bf16.mxu0 0
      %5077 = vmatpush1.bf16.msra.mxu0 0
      %5078 = vmatprep.subr.bf16.mxu0 0
      %5079 = vmatpush1.bf16.msra.mxu0 0
      %5080 = vmatprep.subr.bf16.mxu0 0
      %5081 = vmatpush1.bf16.msra.mxu0 0
      %5082 = vmatprep.subr.bf16.mxu0 0
      %5083 = vmatpush1.bf16.msra.mxu0 0
      %5084 = vmatprep.subr.bf16.mxu0 0
      %5085 = vmatpush1.bf16.msra.mxu0 0
      %5086 = vmatprep.subr.bf16.mxu0 0
      %5087 = vmatpush1.bf16.msra.mxu0 0
      %5088 = vmatprep.subr.bf16.mxu0 0
      %5089 = vmatpush1.bf16.msra.mxu0 0
      %5090 = vmatprep.subr.bf16.mxu0 0
      %5091 = vmatpush1.bf16.msra.mxu0 0
      %5092 = vmatprep.subr.bf16.mxu0 0
      %5093 = vmatpush1.bf16.msra.mxu0 0
      %5094 = vmatprep.subr.bf16.mxu0 0
      %5095 = vmatpush1.bf16.msra.mxu0 0
      %5096 = vmatprep.subr.bf16.mxu0 0
      %5097 = vmatpush1.bf16.msra.mxu0 0
      %5098 = vmatprep.subr.bf16.mxu0 0
      %5099 = vmatpush1.bf16.msra.mxu0 0
      %5100 = vmatprep.subr.bf16.mxu0 0
      %5101 = vmatpush1.bf16.msra.mxu0 0
      %5102 = vmatprep.subr.bf16.mxu0 0
      %5103 = vmatpush1.bf16.msra.mxu0 0
      %5104 = vmatprep.subr.bf16.mxu0 0
      %5105 = vmatpush1.bf16.msra.mxu0 0
      %5106 = vmatprep.mubr.bf16.mxu0 0
      %5107 = vmatmul.mubr.bf16.gmra.mrb[0].mxu0 %v5024
      %v5108 = vpop.f32.mrb[0].mxu0
      %v5109 = vadd.f32 0.0, %v5108
      %v5110 = vpop.f32.mrb[0].mxu0
      %v5111 = vpop.f32.mrb[0].mxu0
      %v5112 = vadd.f32 0.0, %v5111
      %v5113 = vpop.f32.mrb[0].mxu0
      %5114 = vmatprep.mubr.bf16.mxu0 0
      %5115 = vmatmul.mubr.bf16.gmra.mrb[0].mxu0 %v5027
      %v5116 = vpop.f32.mrb[0].mxu0
      %v5117 = vadd.f32 0.0, %v5116
      %v5118 = vpop.f32.mrb[0].mxu0
      %v5119 = vpop.f32.mrb[0].mxu0
      %v5120 = vadd.f32 0.0, %v5119
      %v5121 = vpop.f32.mrb[0].mxu0
      %5122 = vmatprep.mubr.bf16.mxu0 0
      %5123 = vmatmul.mubr.bf16.gmra.mrb[0].mxu0 %v5030
      %v5124 = vpop.f32.mrb[0].mxu0
      %v5125 = vadd.f32 0.0, %v5124
      %v5126 = vpop.f32.mrb[0].mxu0
      %v5127 = vpop.f32.mrb[0].mxu0
      %v5128 = vadd.f32 0.0, %v5127
      %v5129 = vpop.f32.mrb[0].mxu0
      %5130 = vmatprep.mubr.bf16.mxu0 0
      %5131 = vmatmul.mubr.bf16.gmra.mrb[0].mxu0 %v5033
      %v5132 = vpop.f32.mrb[0].mxu0
      %v5133 = vadd.f32 0.0, %v5132
      %v5134 = vpop.f32.mrb[0].mxu0
      %v5135 = vpop.f32.mrb[0].mxu0
      %v5136 = vadd.f32 0.0, %v5135
      %v5137 = vpop.f32.mrb[0].mxu0
      %5138 = vmatprep.mubr.bf16.mxu0 0
      %5139 = vmatmul.mubr.bf16.gmra.mrb[0].mxu0 %v5036
      %v5140 = vpop.f32.mrb[0].mxu0
      %v5141 = vadd.f32 0.0, %v5140
      %v5142 = vpop.f32.mrb[0].mxu0
      %v5143 = vpop.f32.mrb[0].mxu0
      %v5144 = vadd.f32 0.0, %v5143
      %v5145 = vpop.f32.mrb[0].mxu0
      %5146 = vmatprep.mubr.bf16.mxu0 0
      %5147 = vmatmul.mubr.bf16.gmra.mrb[0].mxu0 %v5039
      %v5148 = vpop.f32.mrb[0].mxu0
      %v5149 = vadd.f32 0.0, %v5148
      %v5150 = vpop.f32.mrb[0].mxu0
      %v5151 = vpop.f32.mrb[0].mxu0
      %v5152 = vadd.f32 0.0, %v5151
      %v5153 = vpop.f32.mrb[0].mxu0
      %5154 = vmatprep.mubr.bf16.mxu0 0
      %5155 = vmatmul.mubr.bf16.gmra.mrb[0].mxu0 %v5042
      %v5156 = vpop.f32.mrb[0].mxu0
      %v5157 = vadd.f32 0.0, %v5156
      %v5158 = vpop.f32.mrb[0].mxu0
      %v5159 = vpop.f32.mrb[0].mxu0
      %v5160 = vadd.f32 0.0, %v5159
      %v5161 = vpop.f32.mrb[0].mxu0
      %5162 = vmatprep.mubr.bf16.mxu0 0
      %5163 = vmatmul.mubr.bf16.gmra.mrb[0].mxu0 %v5045
      %v5164 = vpop.f32.mrb[0].mxu0
      %v5165 = vadd.f32 0.0, %v5164
      %v5166 = vpop.f32.mrb[0].mxu0
      %v5167 = vpop.f32.mrb[0].mxu0
      %v5168 = vadd.f32 0.0, %v5167
      %v5169 = vpop.f32.mrb[0].mxu0
      %5170 = vmatprep.mubr.bf16.mxu0 0
      %5171 = vmatmul.mubr.bf16.gmra.mrb[0].mxu0 %v5048
      %v5172 = vpop.f32.mrb[0].mxu0
      %v5173 = vadd.f32 0.0, %v5172
      %v5174 = vpop.f32.mrb[0].mxu0
      %v5175 = vpop.f32.mrb[0].mxu0
      %v5176 = vadd.f32 0.0, %v5175
      %v5177 = vpop.f32.mrb[0].mxu0
      %5178 = vmatprep.mubr.bf16.mxu0 0
      %5179 = vmatmul.mubr.bf16.gmra.mrb[0].mxu0 %v5051
      %v5180 = vpop.f32.mrb[0].mxu0
      %v5181 = vadd.f32 0.0, %v5180
      %v5182 = vpop.f32.mrb[0].mxu0
      %v5183 = vpop.f32.mrb[0].mxu0
      %v5184 = vadd.f32 0.0, %v5183
      %v5185 = vpop.f32.mrb[0].mxu0
      %5186 = vmatprep.mubr.bf16.mxu0 0
      %5187 = vmatmul.mubr.bf16.gmra.mrb[0].mxu0 %v5054
      %v5188 = vpop.f32.mrb[0].mxu0
      %v5189 = vadd.f32 0.0, %v5188
      %v5190 = vpop.f32.mrb[0].mxu0
      %v5191 = vpop.f32.mrb[0].mxu0
      %v5192 = vadd.f32 0.0, %v5191
      %v5193 = vpop.f32.mrb[0].mxu0
      %5194 = vmatprep.mubr.bf16.mxu0 0
      %5195 = vmatmul.mubr.bf16.gmra.mrb[0].mxu0 %v5057
      %v5196 = vpop.f32.mrb[0].mxu0
      %v5197 = vadd.f32 0.0, %v5196
      %v5198 = vpop.f32.mrb[0].mxu0
      %v5199 = vpop.f32.mrb[0].mxu0
      %v5200 = vadd.f32 0.0, %v5199
      %v5201 = vpop.f32.mrb[0].mxu0
      %5202 = vmatprep.mubr.bf16.mxu0 0
      %5203 = vmatmul.mubr.bf16.gmra.mrb[0].mxu0 %v5060
      %v5204 = vpop.f32.mrb[0].mxu0
      %v5205 = vadd.f32 0.0, %v5204
      %v5206 = vpop.f32.mrb[0].mxu0
      %v5207 = vpop.f32.mrb[0].mxu0
      %v5208 = vadd.f32 0.0, %v5207
      %v5209 = vpop.f32.mrb[0].mxu0
      %5210 = vmatprep.mubr.bf16.mxu0 0
      %5211 = vmatmul.mubr.bf16.gmra.mrb[0].mxu0 %v5063
      %v5212 = vpop.f32.mrb[0].mxu0
      %v5213 = vadd.f32 0.0, %v5212
      %v5214 = vpop.f32.mrb[0].mxu0
      %v5215 = vpop.f32.mrb[0].mxu0
      %v5216 = vadd.f32 0.0, %v5215
      %v5217 = vpop.f32.mrb[0].mxu0
      %5218 = vmatprep.mubr.bf16.mxu0 0
      %5219 = vmatmul.mubr.bf16.gmra.mrb[0].mxu0 %v5066
      %v5220 = vpop.f32.mrb[0].mxu0
      %v5221 = vadd.f32 0.0, %v5220
      %v5222 = vpop.f32.mrb[0].mxu0
      %v5223 = vpop.f32.mrb[0].mxu0
      %v5224 = vadd.f32 0.0, %v5223
      %v5225 = vpop.f32.mrb[0].mxu0
      %5226 = vmatprep.mubr.bf16.mxu0 0
      %5227 = vmatmul.mubr.bf16.gmra.mrb[0].mxu0 %v5069
      %v5228 = vpop.f32.mrb[0].mxu0
      %v5229 = vadd.f32 0.0, %v5228
      %v5230 = vpop.f32.mrb[0].mxu0
      %v5231 = vpop.f32.mrb[0].mxu0
      %v5232 = vadd.f32 0.0, %v5231
      %v5233 = vpop.f32.mrb[0].mxu0
      %5234 = vdwg.mxu0
      %v5235 = vadd.f32 %v4942, %v5109
      %v5236 = vadd.f32 %v4943, %v5112
      %v5237 = vadd.f32 %v4944, %v5117
      %v5238 = vadd.f32 %v4945, %v5120
      %v5239 = vadd.f32 %v4946, %v5125
      %v5240 = vadd.f32 %v4947, %v5128
      %v5241 = vadd.f32 %v4948, %v5133
      %v5242 = vadd.f32 %v4949, %v5136
      %v5243 = vadd.f32 %v4950, %v5141
      %v5244 = vadd.f32 %v4951, %v5144
      %v5245 = vadd.f32 %v4952, %v5149
      %v5246 = vadd.f32 %v4953, %v5152
      %v5247 = vadd.f32 %v4954, %v5157
      %v5248 = vadd.f32 %v4955, %v5160
      %v5249 = vadd.f32 %v4956, %v5165
      %v5250 = vadd.f32 %v4957, %v5168
      %v5251 = vadd.f32 %v4958, %v5173
      %v5252 = vadd.f32 %v4959, %v5176
      %v5253 = vadd.f32 %v4960, %v5181
      %v5254 = vadd.f32 %v4961, %v5184
      %v5255 = vadd.f32 %v4962, %v5189
      %v5256 = vadd.f32 %v4963, %v5192
      %v5257 = vadd.f32 %v4964, %v5197
      %v5258 = vadd.f32 %v4965, %v5200
      %v5259 = vadd.f32 %v4966, %v5205
      %v5260 = vadd.f32 %v4967, %v5208
      %v5261 = vadd.f32 %v4968, %v5213
      %v5262 = vadd.f32 %v4969, %v5216
      %v5263 = vadd.f32 %v4970, %v5221
      %v5264 = vadd.f32 %v4971, %v5224
      %v5265 = vadd.f32 %v4972, %v5229
      %v5266 = vadd.f32 %v4973, %v5232
      %v5267 = vld [vmem:[%s754 + $0x2] sm:$0xff]
      %v5268 = vld [vmem:[%s754 + $0xa] sm:$0xff]
      %v5269 = vld [vmem:[%s754 + $0x1a] sm:$0xff]
      %v5270 = vld [vmem:[%s754 + $0x22] sm:$0xff]
      %v5271 = vld [vmem:[%s754 + $0x32] sm:$0xff]
      %v5272 = vld [vmem:[%s754 + $0x3a] sm:$0xff]
      %v5273 = vld [vmem:[%s754 + $0x4a] sm:$0xff]
      %v5274 = vld [vmem:[%s754 + $0x52] sm:$0xff]
      %v5275 = vld [vmem:[%s754 + $0x62] sm:$0xff]
      %v5276 = vld [vmem:[%s754 + $0x6a] sm:$0xff]
      %v5277 = vld [vmem:[%s754 + $0x7a] sm:$0xff]
      %v5278 = vld [vmem:[%s754 + $0x82] sm:$0xff]
      %v5279 = vld [vmem:[%s754 + $0x92] sm:$0xff]
      %v5280 = vld [vmem:[%s754 + $0x9a] sm:$0xff]
      %v5281 = vld [vmem:[%s754 + $0xaa] sm:$0xff]
      %v5282 = vld [vmem:[%s754 + $0xb2] sm:$0xff]
      %v5283 = vld [vmem:[%s754 + $0xc2] sm:$0xff]
      %v5284 = vld [vmem:[%s754 + $0xca] sm:$0xff]
      %v5285 = vld [vmem:[%s754 + $0xda] sm:$0xff]
      %v5286 = vld [vmem:[%s754 + $0xe2] sm:$0xff]
      %v5287 = vld [vmem:[%s754 + $0xf2] sm:$0xff]
      %v5288 = vld [vmem:[%s754 + $0xfa] sm:$0xff]
      %v5289 = vld [vmem:[%s754 + $0x10a] sm:$0xff]
      %v5290 = vld [vmem:[%s754 + $0x112] sm:$0xff]
      %v5291 = vld [vmem:[%s754 + $0x122] sm:$0xff]
      %v5292 = vld [vmem:[%s754 + $0x12a] sm:$0xff]
      %v5293 = vld [vmem:[%s754 + $0x13a] sm:$0xff]
      %v5294 = vld [vmem:[%s754 + $0x142] sm:$0xff]
      %v5295 = vld [vmem:[%s754 + $0x152] sm:$0xff]
      %v5296 = vld [vmem:[%s754 + $0x15a] sm:$0xff]
      %v5297 = vld [vmem:[%s754 + $0x16a] sm:$0xff]
      %v5298 = vld [vmem:[%s754 + $0x172] sm:$0xff]
      %v5299 = vpack.c.bf16 %v5268, %v5267
      %v5300 = vpack.c.bf16 %v5270, %v5269
      %v5301 = vpack.c.bf16 %v5272, %v5271
      %v5302 = vpack.c.bf16 %v5274, %v5273
      %v5303 = vpack.c.bf16 %v5276, %v5275
      %v5304 = vpack.c.bf16 %v5278, %v5277
      %v5305 = vpack.c.bf16 %v5280, %v5279
      %v5306 = vpack.c.bf16 %v5282, %v5281
      %v5307 = vpack.c.bf16 %v5284, %v5283
      %v5308 = vpack.c.bf16 %v5286, %v5285
      %v5309 = vpack.c.bf16 %v5288, %v5287
      %v5310 = vpack.c.bf16 %v5290, %v5289
      %v5311 = vpack.c.bf16 %v5292, %v5291
      %v5312 = vpack.c.bf16 %v5294, %v5293
      %v5313 = vpack.c.bf16 %v5296, %v5295
      %v5314 = vpack.c.bf16 %v5298, %v5297
      %v5315 = vld [vmem:[%s8 + $0x8] sm:$0xc]
      %v5317 = vunpack.c.l.b16 %v5315
      %v5318 = vpack.c.b16 %v5317, %v5317
      %v5319 = vrot.slane %v5318, 2
      %v5321 = vsel %vm369, %v5299, 0
      %v5324 = vsel %vm369, %v5300, 0
      %v5327 = vsel %vm369, %v5301, 0
      %v5330 = vsel %vm369, %v5302, 0
      %v5333 = vsel %vm369, %v5303, 0
      %v5336 = vsel %vm369, %v5304, 0
      %v5339 = vsel %vm369, %v5305, 0
      %v5342 = vsel %vm369, %v5306, 0
      %v5345 = vsel %vm369, %v5307, 0
      %v5348 = vsel %vm369, %v5308, 0
      %v5351 = vsel %vm369, %v5309, 0
      %v5354 = vsel %vm369, %v5310, 0
      %v5357 = vsel %vm369, %v5311, 0
      %v5360 = vsel %vm369, %v5312, 0
      %v5363 = vsel %vm369, %v5313, 0
      %v5366 = vsel %vm369, %v5314, 0
      %v5369 = vsel %vm970, %v5319, 0
      %5371 = vmatprep.subr.bf16.mxu0 0
      %5372 = vmatpush1.bf16.msra.mxu0 %v5369
      %5373 = vmatprep.subr.bf16.mxu0 0
      %5374 = vmatpush1.bf16.msra.mxu0 0
      %5375 = vmatprep.subr.bf16.mxu0 0
      %5376 = vmatpush1.bf16.msra.mxu0 0
      %5377 = vmatprep.subr.bf16.mxu0 0
      %5378 = vmatpush1.bf16.msra.mxu0 0
      %5379 = vmatprep.subr.bf16.mxu0 0
      %5380 = vmatpush1.bf16.msra.mxu0 0
      %5381 = vmatprep.subr.bf16.mxu0 0
      %5382 = vmatpush1.bf16.msra.mxu0 0
      %5383 = vmatprep.subr.bf16.mxu0 0
      %5384 = vmatpush1.bf16.msra.mxu0 0
      %5385 = vmatprep.subr.bf16.mxu0 0
      %5386 = vmatpush1.bf16.msra.mxu0 0
      %5387 = vmatprep.subr.bf16.mxu0 0
      %5388 = vmatpush1.bf16.msra.mxu0 0
      %5389 = vmatprep.subr.bf16.mxu0 0
      %5390 = vmatpush1.bf16.msra.mxu0 0
      %5391 = vmatprep.subr.bf16.mxu0 0
      %5392 = vmatpush1.bf16.msra.mxu0 0
      %5393 = vmatprep.subr.bf16.mxu0 0
      %5394 = vmatpush1.bf16.msra.mxu0 0
      %5395 = vmatprep.subr.bf16.mxu0 0
      %5396 = vmatpush1.bf16.msra.mxu0 0
      %5397 = vmatprep.subr.bf16.mxu0 0
      %5398 = vmatpush1.bf16.msra.mxu0 0
      %5399 = vmatprep.subr.bf16.mxu0 0
      %5400 = vmatpush1.bf16.msra.mxu0 0
      %5401 = vmatprep.subr.bf16.mxu0 0
      %5402 = vmatpush1.bf16.msra.mxu0 0
      %5403 = vmatprep.mubr.bf16.mxu0 0
      %5404 = vmatmul.mubr.bf16.gmra.mrb[0].mxu0 %v5321
      %v5405 = vpop.f32.mrb[0].mxu0
      %v5406 = vadd.f32 0.0, %v5405
      %v5407 = vpop.f32.mrb[0].mxu0
      %v5408 = vpop.f32.mrb[0].mxu0
      %v5409 = vadd.f32 0.0, %v5408
      %v5410 = vpop.f32.mrb[0].mxu0
      %5411 = vmatprep.mubr.bf16.mxu0 0
      %5412 = vmatmul.mubr.bf16.gmra.mrb[0].mxu0 %v5324
      %v5413 = vpop.f32.mrb[0].mxu0
      %v5414 = vadd.f32 0.0, %v5413
      %v5415 = vpop.f32.mrb[0].mxu0
      %v5416 = vpop.f32.mrb[0].mxu0
      %v5417 = vadd.f32 0.0, %v5416
      %v5418 = vpop.f32.mrb[0].mxu0
      %5419 = vmatprep.mubr.bf16.mxu0 0
      %5420 = vmatmul.mubr.bf16.gmra.mrb[0].mxu0 %v5327
      %v5421 = vpop.f32.mrb[0].mxu0
      %v5422 = vadd.f32 0.0, %v5421
      %v5423 = vpop.f32.mrb[0].mxu0
      %v5424 = vpop.f32.mrb[0].mxu0
      %v5425 = vadd.f32 0.0, %v5424
      %v5426 = vpop.f32.mrb[0].mxu0
      %5427 = vmatprep.mubr.bf16.mxu0 0
      %5428 = vmatmul.mubr.bf16.gmra.mrb[0].mxu0 %v5330
      %v5429 = vpop.f32.mrb[0].mxu0
      %v5430 = vadd.f32 0.0, %v5429
      %v5431 = vpop.f32.mrb[0].mxu0
      %v5432 = vpop.f32.mrb[0].mxu0
      %v5433 = vadd.f32 0.0, %v5432
      %v5434 = vpop.f32.mrb[0].mxu0
      %5435 = vmatprep.mubr.bf16.mxu0 0
      %5436 = vmatmul.mubr.bf16.gmra.mrb[0].mxu0 %v5333
      %v5437 = vpop.f32.mrb[0].mxu0
      %v5438 = vadd.f32 0.0, %v5437
      %v5439 = vpop.f32.mrb[0].mxu0
      %v5440 = vpop.f32.mrb[0].mxu0
      %v5441 = vadd.f32 0.0, %v5440
      %v5442 = vpop.f32.mrb[0].mxu0
      %5443 = vmatprep.mubr.bf16.mxu0 0
      %5444 = vmatmul.mubr.bf16.gmra.mrb[0].mxu0 %v5336
      %v5445 = vpop.f32.mrb[0].mxu0
      %v5446 = vadd.f32 0.0, %v5445
      %v5447 = vpop.f32.mrb[0].mxu0
      %v5448 = vpop.f32.mrb[0].mxu0
      %v5449 = vadd.f32 0.0, %v5448
      %v5450 = vpop.f32.mrb[0].mxu0
      %5451 = vmatprep.mubr.bf16.mxu0 0
      %5452 = vmatmul.mubr.bf16.gmra.mrb[0].mxu0 %v5339
      %v5453 = vpop.f32.mrb[0].mxu0
      %v5454 = vadd.f32 0.0, %v5453
      %v5455 = vpop.f32.mrb[0].mxu0
      %v5456 = vpop.f32.mrb[0].mxu0
      %v5457 = vadd.f32 0.0, %v5456
      %v5458 = vpop.f32.mrb[0].mxu0
      %5459 = vmatprep.mubr.bf16.mxu0 0
      %5460 = vmatmul.mubr.bf16.gmra.mrb[0].mxu0 %v5342
      %v5461 = vpop.f32.mrb[0].mxu0
      %v5462 = vadd.f32 0.0, %v5461
      %v5463 = vpop.f32.mrb[0].mxu0
      %v5464 = vpop.f32.mrb[0].mxu0
      %v5465 = vadd.f32 0.0, %v5464
      %v5466 = vpop.f32.mrb[0].mxu0
      %5467 = vmatprep.mubr.bf16.mxu0 0
      %5468 = vmatmul.mubr.bf16.gmra.mrb[0].mxu0 %v5345
      %v5469 = vpop.f32.mrb[0].mxu0
      %v5470 = vadd.f32 0.0, %v5469
      %v5471 = vpop.f32.mrb[0].mxu0
      %v5472 = vpop.f32.mrb[0].mxu0
      %v5473 = vadd.f32 0.0, %v5472
      %v5474 = vpop.f32.mrb[0].mxu0
      %5475 = vmatprep.mubr.bf16.mxu0 0
      %5476 = vmatmul.mubr.bf16.gmra.mrb[0].mxu0 %v5348
      %v5477 = vpop.f32.mrb[0].mxu0
      %v5478 = vadd.f32 0.0, %v5477
      %v5479 = vpop.f32.mrb[0].mxu0
      %v5480 = vpop.f32.mrb[0].mxu0
      %v5481 = vadd.f32 0.0, %v5480
      %v5482 = vpop.f32.mrb[0].mxu0
      %5483 = vmatprep.mubr.bf16.mxu0 0
      %5484 = vmatmul.mubr.bf16.gmra.mrb[0].mxu0 %v5351
      %v5485 = vpop.f32.mrb[0].mxu0
      %v5486 = vadd.f32 0.0, %v5485
      %v5487 = vpop.f32.mrb[0].mxu0
      %v5488 = vpop.f32.mrb[0].mxu0
      %v5489 = vadd.f32 0.0, %v5488
      %v5490 = vpop.f32.mrb[0].mxu0
      %5491 = vmatprep.mubr.bf16.mxu0 0
      %5492 = vmatmul.mubr.bf16.gmra.mrb[0].mxu0 %v5354
      %v5493 = vpop.f32.mrb[0].mxu0
      %v5494 = vadd.f32 0.0, %v5493
      %v5495 = vpop.f32.mrb[0].mxu0
      %v5496 = vpop.f32.mrb[0].mxu0
      %v5497 = vadd.f32 0.0, %v5496
      %v5498 = vpop.f32.mrb[0].mxu0
      %5499 = vmatprep.mubr.bf16.mxu0 0
      %5500 = vmatmul.mubr.bf16.gmra.mrb[0].mxu0 %v5357
      %v5501 = vpop.f32.mrb[0].mxu0
      %v5502 = vadd.f32 0.0, %v5501
      %v5503 = vpop.f32.mrb[0].mxu0
      %v5504 = vpop.f32.mrb[0].mxu0
      %v5505 = vadd.f32 0.0, %v5504
      %v5506 = vpop.f32.mrb[0].mxu0
      %5507 = vmatprep.mubr.bf16.mxu0 0
      %5508 = vmatmul.mubr.bf16.gmra.mrb[0].mxu0 %v5360
      %v5509 = vpop.f32.mrb[0].mxu0
      %v5510 = vadd.f32 0.0, %v5509
      %v5511 = vpop.f32.mrb[0].mxu0
      %v5512 = vpop.f32.mrb[0].mxu0
      %v5513 = vadd.f32 0.0, %v5512
      %v5514 = vpop.f32.mrb[0].mxu0
      %5515 = vmatprep.mubr.bf16.mxu0 0
      %5516 = vmatmul.mubr.bf16.gmra.mrb[0].mxu0 %v5363
      %v5517 = vpop.f32.mrb[0].mxu0
      %v5518 = vadd.f32 0.0, %v5517
      %v5519 = vpop.f32.mrb[0].mxu0
      %v5520 = vpop.f32.mrb[0].mxu0
      %v5521 = vadd.f32 0.0, %v5520
      %v5522 = vpop.f32.mrb[0].mxu0
      %5523 = vmatprep.mubr.bf16.mxu0 0
      %5524 = vmatmul.mubr.bf16.gmra.mrb[0].mxu0 %v5366
      %v5525 = vpop.f32.mrb[0].mxu0
      %v5526 = vadd.f32 0.0, %v5525
      %v5527 = vpop.f32.mrb[0].mxu0
      %v5528 = vpop.f32.mrb[0].mxu0
      %v5529 = vadd.f32 0.0, %v5528
      %v5530 = vpop.f32.mrb[0].mxu0
      %5531 = vdwg.mxu0
      %v5532 = vadd.f32 %v5235, %v5406
      %v5533 = vadd.f32 %v5236, %v5409
      %v5534 = vadd.f32 %v5237, %v5414
      %v5535 = vadd.f32 %v5238, %v5417
      %v5536 = vadd.f32 %v5239, %v5422
      %v5537 = vadd.f32 %v5240, %v5425
      %v5538 = vadd.f32 %v5241, %v5430
      %v5539 = vadd.f32 %v5242, %v5433
      %v5540 = vadd.f32 %v5243, %v5438
      %v5541 = vadd.f32 %v5244, %v5441
      %v5542 = vadd.f32 %v5245, %v5446
      %v5543 = vadd.f32 %v5246, %v5449
      %v5544 = vadd.f32 %v5247, %v5454
      %v5545 = vadd.f32 %v5248, %v5457
      %v5546 = vadd.f32 %v5249, %v5462
      %v5547 = vadd.f32 %v5250, %v5465
      %v5548 = vadd.f32 %v5251, %v5470
      %v5549 = vadd.f32 %v5252, %v5473
      %v5550 = vadd.f32 %v5253, %v5478
      %v5551 = vadd.f32 %v5254, %v5481
      %v5552 = vadd.f32 %v5255, %v5486
      %v5553 = vadd.f32 %v5256, %v5489
      %v5554 = vadd.f32 %v5257, %v5494
      %v5555 = vadd.f32 %v5258, %v5497
      %v5556 = vadd.f32 %v5259, %v5502
      %v5557 = vadd.f32 %v5260, %v5505
      %v5558 = vadd.f32 %v5261, %v5510
      %v5559 = vadd.f32 %v5262, %v5513
      %v5560 = vadd.f32 %v5263, %v5518
      %v5561 = vadd.f32 %v5264, %v5521
      %v5562 = vadd.f32 %v5265, %v5526
      %v5563 = vadd.f32 %v5266, %v5529
      %v5564 = vld [vmem:[%s2527] sm:$0xff]
      %v5565 = vld [vmem:[%s2527 + $0x8] sm:$0xff]
      %v5566 = vld [vmem:[%s2527 + $0x18] sm:$0xff]
      %v5567 = vld [vmem:[%s2527 + $0x20] sm:$0xff]
      %v5568 = vld [vmem:[%s2527 + $0x30] sm:$0xff]
      %v5569 = vld [vmem:[%s2527 + $0x38] sm:$0xff]
      %v5570 = vld [vmem:[%s2527 + $0x48] sm:$0xff]
      %v5571 = vld [vmem:[%s2527 + $0x50] sm:$0xff]
      %v5572 = vld [vmem:[%s2527 + $0x60] sm:$0xff]
      %v5573 = vld [vmem:[%s2527 + $0x68] sm:$0xff]
      %v5574 = vld [vmem:[%s2527 + $0x78] sm:$0xff]
      %v5575 = vld [vmem:[%s2527 + $0x80] sm:$0xff]
      %v5576 = vld [vmem:[%s2527 + $0x90] sm:$0xff]
      %v5577 = vld [vmem:[%s2527 + $0x98] sm:$0xff]
      %v5578 = vld [vmem:[%s2527 + $0xa8] sm:$0xff]
      %v5579 = vld [vmem:[%s2527 + $0xb0] sm:$0xff]
      %v5580 = vld [vmem:[%s2527 + $0xc0] sm:$0xff]
      %v5581 = vld [vmem:[%s2527 + $0xc8] sm:$0xff]
      %v5582 = vld [vmem:[%s2527 + $0xd8] sm:$0xff]
      %v5583 = vld [vmem:[%s2527 + $0xe0] sm:$0xff]
      %v5584 = vld [vmem:[%s2527 + $0xf0] sm:$0xff]
      %v5585 = vld [vmem:[%s2527 + $0xf8] sm:$0xff]
      %v5586 = vld [vmem:[%s2527 + $0x108] sm:$0xff]
      %v5587 = vld [vmem:[%s2527 + $0x110] sm:$0xff]
      %v5588 = vld [vmem:[%s2527 + $0x120] sm:$0xff]
      %v5589 = vld [vmem:[%s2527 + $0x128] sm:$0xff]
      %v5590 = vld [vmem:[%s2527 + $0x138] sm:$0xff]
      %v5591 = vld [vmem:[%s2527 + $0x140] sm:$0xff]
      %v5592 = vld [vmem:[%s2527 + $0x150] sm:$0xff]
      %v5593 = vld [vmem:[%s2527 + $0x158] sm:$0xff]
      %v5594 = vld [vmem:[%s2527 + $0x168] sm:$0xff]
      %v5595 = vld [vmem:[%s2527 + $0x170] sm:$0xff]
      %v5596 = vpack.c.bf16 %v5565, %v5564
      %v5597 = vpack.c.bf16 %v5567, %v5566
      %v5598 = vpack.c.bf16 %v5569, %v5568
      %v5599 = vpack.c.bf16 %v5571, %v5570
      %v5600 = vpack.c.bf16 %v5573, %v5572
      %v5601 = vpack.c.bf16 %v5575, %v5574
      %v5602 = vpack.c.bf16 %v5577, %v5576
      %v5603 = vpack.c.bf16 %v5579, %v5578
      %v5604 = vpack.c.bf16 %v5581, %v5580
      %v5605 = vpack.c.bf16 %v5583, %v5582
      %v5606 = vpack.c.bf16 %v5585, %v5584
      %v5607 = vpack.c.bf16 %v5587, %v5586
      %v5608 = vpack.c.bf16 %v5589, %v5588
      %v5609 = vpack.c.bf16 %v5591, %v5590
      %v5610 = vpack.c.bf16 %v5593, %v5592
      %v5611 = vpack.c.bf16 %v5595, %v5594
      %v5612 = vld [vmem:[%s8 + $0xc] sm:$0x3]
      %v5614 = vsel %vm369, %v5596, 0
      %v5617 = vsel %vm369, %v5597, 0
      %v5620 = vsel %vm369, %v5598, 0
      %v5623 = vsel %vm369, %v5599, 0
      %v5626 = vsel %vm369, %v5600, 0
      %v5629 = vsel %vm369, %v5601, 0
      %v5632 = vsel %vm369, %v5602, 0
      %v5635 = vsel %vm369, %v5603, 0
      %v5638 = vsel %vm369, %v5604, 0
      %v5641 = vsel %vm369, %v5605, 0
      %v5644 = vsel %vm369, %v5606, 0
      %v5647 = vsel %vm369, %v5607, 0
      %v5650 = vsel %vm369, %v5608, 0
      %v5653 = vsel %vm369, %v5609, 0
      %v5656 = vsel %vm369, %v5610, 0
      %v5659 = vsel %vm369, %v5611, 0
      %v5662 = vsel %vm970, %v5612, 0
      %5664 = vmatprep.subr.bf16.mxu0 0
      %5665 = vmatpush1.bf16.msra.mxu0 %v5662
      %5666 = vmatprep.subr.bf16.mxu0 0
      %5667 = vmatpush1.bf16.msra.mxu0 0
      %5668 = vmatprep.subr.bf16.mxu0 0
      %5669 = vmatpush1.bf16.msra.mxu0 0
      %5670 = vmatprep.subr.bf16.mxu0 0
      %5671 = vmatpush1.bf16.msra.mxu0 0
      %5672 = vmatprep.subr.bf16.mxu0 0
      %5673 = vmatpush1.bf16.msra.mxu0 0
      %5674 = vmatprep.subr.bf16.mxu0 0
      %5675 = vmatpush1.bf16.msra.mxu0 0
      %5676 = vmatprep.subr.bf16.mxu0 0
      %5677 = vmatpush1.bf16.msra.mxu0 0
      %5678 = vmatprep.subr.bf16.mxu0 0
      %5679 = vmatpush1.bf16.msra.mxu0 0
      %5680 = vmatprep.subr.bf16.mxu0 0
      %5681 = vmatpush1.bf16.msra.mxu0 0
      %5682 = vmatprep.subr.bf16.mxu0 0
      %5683 = vmatpush1.bf16.msra.mxu0 0
      %5684 = vmatprep.subr.bf16.mxu0 0
      %5685 = vmatpush1.bf16.msra.mxu0 0
      %5686 = vmatprep.subr.bf16.mxu0 0
      %5687 = vmatpush1.bf16.msra.mxu0 0
      %5688 = vmatprep.subr.bf16.mxu0 0
      %5689 = vmatpush1.bf16.msra.mxu0 0
      %5690 = vmatprep.subr.bf16.mxu0 0
      %5691 = vmatpush1.bf16.msra.mxu0 0
      %5692 = vmatprep.subr.bf16.mxu0 0
      %5693 = vmatpush1.bf16.msra.mxu0 0
      %5694 = vmatprep.subr.bf16.mxu0 0
      %5695 = vmatpush1.bf16.msra.mxu0 0
      %5696 = vmatprep.mubr.bf16.mxu0 0
      %5697 = vmatmul.mubr.bf16.gmra.mrb[0].mxu0 %v5614
      %v5698 = vpop.f32.mrb[0].mxu0
      %v5699 = vadd.f32 0.0, %v5698
      %v5700 = vpop.f32.mrb[0].mxu0
      %v5701 = vpop.f32.mrb[0].mxu0
      %v5702 = vadd.f32 0.0, %v5701
      %v5703 = vpop.f32.mrb[0].mxu0
      %5704 = vmatprep.mubr.bf16.mxu0 0
      %5705 = vmatmul.mubr.bf16.gmra.mrb[0].mxu0 %v5617
      %v5706 = vpop.f32.mrb[0].mxu0
      %v5707 = vadd.f32 0.0, %v5706
      %v5708 = vpop.f32.mrb[0].mxu0
      %v5709 = vpop.f32.mrb[0].mxu0
      %v5710 = vadd.f32 0.0, %v5709
      %v5711 = vpop.f32.mrb[0].mxu0
      %5712 = vmatprep.mubr.bf16.mxu0 0
      %5713 = vmatmul.mubr.bf16.gmra.mrb[0].mxu0 %v5620
      %v5714 = vpop.f32.mrb[0].mxu0
      %v5715 = vadd.f32 0.0, %v5714
      %v5716 = vpop.f32.mrb[0].mxu0
      %v5717 = vpop.f32.mrb[0].mxu0
      %v5718 = vadd.f32 0.0, %v5717
      %v5719 = vpop.f32.mrb[0].mxu0
      %5720 = vmatprep.mubr.bf16.mxu0 0
      %5721 = vmatmul.mubr.bf16.gmra.mrb[0].mxu0 %v5623
      %v5722 = vpop.f32.mrb[0].mxu0
      %v5723 = vadd.f32 0.0, %v5722
      %v5724 = vpop.f32.mrb[0].mxu0
      %v5725 = vpop.f32.mrb[0].mxu0
      %v5726 = vadd.f32 0.0, %v5725
      %v5727 = vpop.f32.mrb[0].mxu0
      %5728 = vmatprep.mubr.bf16.mxu0 0
      %5729 = vmatmul.mubr.bf16.gmra.mrb[0].mxu0 %v5626
      %v5730 = vpop.f32.mrb[0].mxu0
      %v5731 = vadd.f32 0.0, %v5730
      %v5732 = vpop.f32.mrb[0].mxu0
      %v5733 = vpop.f32.mrb[0].mxu0
      %v5734 = vadd.f32 0.0, %v5733
      %v5735 = vpop.f32.mrb[0].mxu0
      %5736 = vmatprep.mubr.bf16.mxu0 0
      %5737 = vmatmul.mubr.bf16.gmra.mrb[0].mxu0 %v5629
      %v5738 = vpop.f32.mrb[0].mxu0
      %v5739 = vadd.f32 0.0, %v5738
      %v5740 = vpop.f32.mrb[0].mxu0
      %v5741 = vpop.f32.mrb[0].mxu0
      %v5742 = vadd.f32 0.0, %v5741
      %v5743 = vpop.f32.mrb[0].mxu0
      %5744 = vmatprep.mubr.bf16.mxu0 0
      %5745 = vmatmul.mubr.bf16.gmra.mrb[0].mxu0 %v5632
      %v5746 = vpop.f32.mrb[0].mxu0
      %v5747 = vadd.f32 0.0, %v5746
      %v5748 = vpop.f32.mrb[0].mxu0
      %v5749 = vpop.f32.mrb[0].mxu0
      %v5750 = vadd.f32 0.0, %v5749
      %v5751 = vpop.f32.mrb[0].mxu0
      %5752 = vmatprep.mubr.bf16.mxu0 0
      %5753 = vmatmul.mubr.bf16.gmra.mrb[0].mxu0 %v5635
      %v5754 = vpop.f32.mrb[0].mxu0
      %v5755 = vadd.f32 0.0, %v5754
      %v5756 = vpop.f32.mrb[0].mxu0
      %v5757 = vpop.f32.mrb[0].mxu0
      %v5758 = vadd.f32 0.0, %v5757
      %v5759 = vpop.f32.mrb[0].mxu0
      %5760 = vmatprep.mubr.bf16.mxu0 0
      %5761 = vmatmul.mubr.bf16.gmra.mrb[0].mxu0 %v5638
      %v5762 = vpop.f32.mrb[0].mxu0
      %v5763 = vadd.f32 0.0, %v5762
      %v5764 = vpop.f32.mrb[0].mxu0
      %v5765 = vpop.f32.mrb[0].mxu0
      %v5766 = vadd.f32 0.0, %v5765
      %v5767 = vpop.f32.mrb[0].mxu0
      %5768 = vmatprep.mubr.bf16.mxu0 0
      %5769 = vmatmul.mubr.bf16.gmra.mrb[0].mxu0 %v5641
      %v5770 = vpop.f32.mrb[0].mxu0
      %v5771 = vadd.f32 0.0, %v5770
      %v5772 = vpop.f32.mrb[0].mxu0
      %v5773 = vpop.f32.mrb[0].mxu0
      %v5774 = vadd.f32 0.0, %v5773
      %v5775 = vpop.f32.mrb[0].mxu0
      %5776 = vmatprep.mubr.bf16.mxu0 0
      %5777 = vmatmul.mubr.bf16.gmra.mrb[0].mxu0 %v5644
      %v5778 = vpop.f32.mrb[0].mxu0
      %v5779 = vadd.f32 0.0, %v5778
      %v5780 = vpop.f32.mrb[0].mxu0
      %v5781 = vpop.f32.mrb[0].mxu0
      %v5782 = vadd.f32 0.0, %v5781
      %v5783 = vpop.f32.mrb[0].mxu0
      %5784 = vmatprep.mubr.bf16.mxu0 0
      %5785 = vmatmul.mubr.bf16.gmra.mrb[0].mxu0 %v5647
      %v5786 = vpop.f32.mrb[0].mxu0
      %v5787 = vadd.f32 0.0, %v5786
      %v5788 = vpop.f32.mrb[0].mxu0
      %v5789 = vpop.f32.mrb[0].mxu0
      %v5790 = vadd.f32 0.0, %v5789
      %v5791 = vpop.f32.mrb[0].mxu0
      %5792 = vmatprep.mubr.bf16.mxu0 0
      %5793 = vmatmul.mubr.bf16.gmra.mrb[0].mxu0 %v5650
      %v5794 = vpop.f32.mrb[0].mxu0
      %v5795 = vadd.f32 0.0, %v5794
      %v5796 = vpop.f32.mrb[0].mxu0
      %v5797 = vpop.f32.mrb[0].mxu0
      %v5798 = vadd.f32 0.0, %v5797
      %v5799 = vpop.f32.mrb[0].mxu0
      %5800 = vmatprep.mubr.bf16.mxu0 0
      %5801 = vmatmul.mubr.bf16.gmra.mrb[0].mxu0 %v5653
      %v5802 = vpop.f32.mrb[0].mxu0
      %v5803 = vadd.f32 0.0, %v5802
      %v5804 = vpop.f32.mrb[0].mxu0
      %v5805 = vpop.f32.mrb[0].mxu0
      %v5806 = vadd.f32 0.0, %v5805
      %v5807 = vpop.f32.mrb[0].mxu0
      %5808 = vmatprep.mubr.bf16.mxu0 0
      %5809 = vmatmul.mubr.bf16.gmra.mrb[0].mxu0 %v5656
      %v5810 = vpop.f32.mrb[0].mxu0
      %v5811 = vadd.f32 0.0, %v5810
      %v5812 = vpop.f32.mrb[0].mxu0
      %v5813 = vpop.f32.mrb[0].mxu0
      %v5814 = vadd.f32 0.0, %v5813
      %v5815 = vpop.f32.mrb[0].mxu0
      %5816 = vmatprep.mubr.bf16.mxu0 0
      %5817 = vmatmul.mubr.bf16.gmra.mrb[0].mxu0 %v5659
      %v5818 = vpop.f32.mrb[0].mxu0
      %v5819 = vadd.f32 0.0, %v5818
      %v5820 = vpop.f32.mrb[0].mxu0
      %v5821 = vpop.f32.mrb[0].mxu0
      %v5822 = vadd.f32 0.0, %v5821
      %v5823 = vpop.f32.mrb[0].mxu0
      %5824 = vdwg.mxu0
      %v5825 = vadd.f32 %v5532, %v5699
      %v5826 = vadd.f32 %v5533, %v5702
      %v5827 = vadd.f32 %v5534, %v5707
      %v5828 = vadd.f32 %v5535, %v5710
      %v5829 = vadd.f32 %v5536, %v5715
      %v5830 = vadd.f32 %v5537, %v5718
      %v5831 = vadd.f32 %v5538, %v5723
      %v5832 = vadd.f32 %v5539, %v5726
      %v5833 = vadd.f32 %v5540, %v5731
      %v5834 = vadd.f32 %v5541, %v5734
      %v5835 = vadd.f32 %v5542, %v5739
      %v5836 = vadd.f32 %v5543, %v5742
      %v5837 = vadd.f32 %v5544, %v5747
      %v5838 = vadd.f32 %v5545, %v5750
      %v5839 = vadd.f32 %v5546, %v5755
      %v5840 = vadd.f32 %v5547, %v5758
      %v5841 = vadd.f32 %v5548, %v5763
      %v5842 = vadd.f32 %v5549, %v5766
      %v5843 = vadd.f32 %v5550, %v5771
      %v5844 = vadd.f32 %v5551, %v5774
      %v5845 = vadd.f32 %v5552, %v5779
      %v5846 = vadd.f32 %v5553, %v5782
      %v5847 = vadd.f32 %v5554, %v5787
      %v5848 = vadd.f32 %v5555, %v5790
      %v5849 = vadd.f32 %v5556, %v5795
      %v5850 = vadd.f32 %v5557, %v5798
      %v5851 = vadd.f32 %v5558, %v5803
      %v5852 = vadd.f32 %v5559, %v5806
      %v5853 = vadd.f32 %v5560, %v5811
      %v5854 = vadd.f32 %v5561, %v5814
      %v5855 = vadd.f32 %v5562, %v5819
      %v5856 = vadd.f32 %v5563, %v5822
      %v5857 = vld [vmem:[%s2527 + $0x1] sm:$0xff]
      %v5858 = vld [vmem:[%s2527 + $0x9] sm:$0xff]
      %v5859 = vld [vmem:[%s2527 + $0x19] sm:$0xff]
      %v5860 = vld [vmem:[%s2527 + $0x21] sm:$0xff]
      %v5861 = vld [vmem:[%s2527 + $0x31] sm:$0xff]
      %v5862 = vld [vmem:[%s2527 + $0x39] sm:$0xff]
      %v5863 = vld [vmem:[%s2527 + $0x49] sm:$0xff]
      %v5864 = vld [vmem:[%s2527 + $0x51] sm:$0xff]
      %v5865 = vld [vmem:[%s2527 + $0x61] sm:$0xff]
      %v5866 = vld [vmem:[%s2527 + $0x69] sm:$0xff]
      %v5867 = vld [vmem:[%s2527 + $0x79] sm:$0xff]
      %v5868 = vld [vmem:[%s2527 + $0x81] sm:$0xff]
      %v5869 = vld [vmem:[%s2527 + $0x91] sm:$0xff]
      %v5870 = vld [vmem:[%s2527 + $0x99] sm:$0xff]
      %v5871 = vld [vmem:[%s2527 + $0xa9] sm:$0xff]
      %v5872 = vld [vmem:[%s2527 + $0xb1] sm:$0xff]
      %v5873 = vld [vmem:[%s2527 + $0xc1] sm:$0xff]
      %v5874 = vld [vmem:[%s2527 + $0xc9] sm:$0xff]
      %v5875 = vld [vmem:[%s2527 + $0xd9] sm:$0xff]
      %v5876 = vld [vmem:[%s2527 + $0xe1] sm:$0xff]
      %v5877 = vld [vmem:[%s2527 + $0xf1] sm:$0xff]
      %v5878 = vld [vmem:[%s2527 + $0xf9] sm:$0xff]
      %v5879 = vld [vmem:[%s2527 + $0x109] sm:$0xff]
      %v5880 = vld [vmem:[%s2527 + $0x111] sm:$0xff]
      %v5881 = vld [vmem:[%s2527 + $0x121] sm:$0xff]
      %v5882 = vld [vmem:[%s2527 + $0x129] sm:$0xff]
      %v5883 = vld [vmem:[%s2527 + $0x139] sm:$0xff]
      %v5884 = vld [vmem:[%s2527 + $0x141] sm:$0xff]
      %v5885 = vld [vmem:[%s2527 + $0x151] sm:$0xff]
      %v5886 = vld [vmem:[%s2527 + $0x159] sm:$0xff]
      %v5887 = vld [vmem:[%s2527 + $0x169] sm:$0xff]
      %v5888 = vld [vmem:[%s2527 + $0x171] sm:$0xff]
      %v5889 = vpack.c.bf16 %v5858, %v5857
      %v5890 = vpack.c.bf16 %v5860, %v5859
      %v5891 = vpack.c.bf16 %v5862, %v5861
      %v5892 = vpack.c.bf16 %v5864, %v5863
      %v5893 = vpack.c.bf16 %v5866, %v5865
      %v5894 = vpack.c.bf16 %v5868, %v5867
      %v5895 = vpack.c.bf16 %v5870, %v5869
      %v5896 = vpack.c.bf16 %v5872, %v5871
      %v5897 = vpack.c.bf16 %v5874, %v5873
      %v5898 = vpack.c.bf16 %v5876, %v5875
      %v5899 = vpack.c.bf16 %v5878, %v5877
      %v5900 = vpack.c.bf16 %v5880, %v5879
      %v5901 = vpack.c.bf16 %v5882, %v5881
      %v5902 = vpack.c.bf16 %v5884, %v5883
      %v5903 = vpack.c.bf16 %v5886, %v5885
      %v5904 = vpack.c.bf16 %v5888, %v5887
      %v5905 = vld [vmem:[%s8 + $0xc] sm:$0xc]
      %v5907 = vunpack.c.l.b16 %v5905
      %v5908 = vpack.c.b16 %v5907, %v5907
      %v5909 = vrot.slane %v5908, 2
      %v5911 = vsel %vm369, %v5889, 0
      %v5914 = vsel %vm369, %v5890, 0
      %v5917 = vsel %vm369, %v5891, 0
      %v5920 = vsel %vm369, %v5892, 0
      %v5923 = vsel %vm369, %v5893, 0
      %v5926 = vsel %vm369, %v5894, 0
      %v5929 = vsel %vm369, %v5895, 0
      %v5932 = vsel %vm369, %v5896, 0
      %v5935 = vsel %vm369, %v5897, 0
      %v5938 = vsel %vm369, %v5898, 0
      %v5941 = vsel %vm369, %v5899, 0
      %v5944 = vsel %vm369, %v5900, 0
      %v5947 = vsel %vm369, %v5901, 0
      %v5950 = vsel %vm369, %v5902, 0
      %v5953 = vsel %vm369, %v5903, 0
      %v5956 = vsel %vm369, %v5904, 0
      %v5959 = vsel %vm970, %v5909, 0
      %5961 = vmatprep.subr.bf16.mxu0 0
      %5962 = vmatpush1.bf16.msra.mxu0 %v5959
      %5963 = vmatprep.subr.bf16.mxu0 0
      %5964 = vmatpush1.bf16.msra.mxu0 0
      %5965 = vmatprep.subr.bf16.mxu0 0
      %5966 = vmatpush1.bf16.msra.mxu0 0
      %5967 = vmatprep.subr.bf16.mxu0 0
      %5968 = vmatpush1.bf16.msra.mxu0 0
      %5969 = vmatprep.subr.bf16.mxu0 0
      %5970 = vmatpush1.bf16.msra.mxu0 0
      %5971 = vmatprep.subr.bf16.mxu0 0
      %5972 = vmatpush1.bf16.msra.mxu0 0
      %5973 = vmatprep.subr.bf16.mxu0 0
      %5974 = vmatpush1.bf16.msra.mxu0 0
      %5975 = vmatprep.subr.bf16.mxu0 0
      %5976 = vmatpush1.bf16.msra.mxu0 0
      %5977 = vmatprep.subr.bf16.mxu0 0
      %5978 = vmatpush1.bf16.msra.mxu0 0
      %5979 = vmatprep.subr.bf16.mxu0 0
      %5980 = vmatpush1.bf16.msra.mxu0 0
      %5981 = vmatprep.subr.bf16.mxu0 0
      %5982 = vmatpush1.bf16.msra.mxu0 0
      %5983 = vmatprep.subr.bf16.mxu0 0
      %5984 = vmatpush1.bf16.msra.mxu0 0
      %5985 = vmatprep.subr.bf16.mxu0 0
      %5986 = vmatpush1.bf16.msra.mxu0 0
      %5987 = vmatprep.subr.bf16.mxu0 0
      %5988 = vmatpush1.bf16.msra.mxu0 0
      %5989 = vmatprep.subr.bf16.mxu0 0
      %5990 = vmatpush1.bf16.msra.mxu0 0
      %5991 = vmatprep.subr.bf16.mxu0 0
      %5992 = vmatpush1.bf16.msra.mxu0 0
      %5993 = vmatprep.mubr.bf16.mxu0 0
      %5994 = vmatmul.mubr.bf16.gmra.mrb[0].mxu0 %v5911
      %v5995 = vpop.f32.mrb[0].mxu0
      %v5996 = vadd.f32 0.0, %v5995
      %v5997 = vpop.f32.mrb[0].mxu0
      %v5998 = vpop.f32.mrb[0].mxu0
      %v5999 = vadd.f32 0.0, %v5998
      %v6000 = vpop.f32.mrb[0].mxu0
      %6001 = vmatprep.mubr.bf16.mxu0 0
      %6002 = vmatmul.mubr.bf16.gmra.mrb[0].mxu0 %v5914
      %v6003 = vpop.f32.mrb[0].mxu0
      %v6004 = vadd.f32 0.0, %v6003
      %v6005 = vpop.f32.mrb[0].mxu0
      %v6006 = vpop.f32.mrb[0].mxu0
      %v6007 = vadd.f32 0.0, %v6006
      %v6008 = vpop.f32.mrb[0].mxu0
      %6009 = vmatprep.mubr.bf16.mxu0 0
      %6010 = vmatmul.mubr.bf16.gmra.mrb[0].mxu0 %v5917
      %v6011 = vpop.f32.mrb[0].mxu0
      %v6012 = vadd.f32 0.0, %v6011
      %v6013 = vpop.f32.mrb[0].mxu0
      %v6014 = vpop.f32.mrb[0].mxu0
      %v6015 = vadd.f32 0.0, %v6014
      %v6016 = vpop.f32.mrb[0].mxu0
      %6017 = vmatprep.mubr.bf16.mxu0 0
      %6018 = vmatmul.mubr.bf16.gmra.mrb[0].mxu0 %v5920
      %v6019 = vpop.f32.mrb[0].mxu0
      %v6020 = vadd.f32 0.0, %v6019
      %v6021 = vpop.f32.mrb[0].mxu0
      %v6022 = vpop.f32.mrb[0].mxu0
      %v6023 = vadd.f32 0.0, %v6022
      %v6024 = vpop.f32.mrb[0].mxu0
      %6025 = vmatprep.mubr.bf16.mxu0 0
      %6026 = vmatmul.mubr.bf16.gmra.mrb[0].mxu0 %v5923
      %v6027 = vpop.f32.mrb[0].mxu0
      %v6028 = vadd.f32 0.0, %v6027
      %v6029 = vpop.f32.mrb[0].mxu0
      %v6030 = vpop.f32.mrb[0].mxu0
      %v6031 = vadd.f32 0.0, %v6030
      %v6032 = vpop.f32.mrb[0].mxu0
      %6033 = vmatprep.mubr.bf16.mxu0 0
      %6034 = vmatmul.mubr.bf16.gmra.mrb[0].mxu0 %v5926
      %v6035 = vpop.f32.mrb[0].mxu0
      %v6036 = vadd.f32 0.0, %v6035
      %v6037 = vpop.f32.mrb[0].mxu0
      %v6038 = vpop.f32.mrb[0].mxu0
      %v6039 = vadd.f32 0.0, %v6038
      %v6040 = vpop.f32.mrb[0].mxu0
      %6041 = vmatprep.mubr.bf16.mxu0 0
      %6042 = vmatmul.mubr.bf16.gmra.mrb[0].mxu0 %v5929
      %v6043 = vpop.f32.mrb[0].mxu0
      %v6044 = vadd.f32 0.0, %v6043
      %v6045 = vpop.f32.mrb[0].mxu0
      %v6046 = vpop.f32.mrb[0].mxu0
      %v6047 = vadd.f32 0.0, %v6046
      %v6048 = vpop.f32.mrb[0].mxu0
      %6049 = vmatprep.mubr.bf16.mxu0 0
      %6050 = vmatmul.mubr.bf16.gmra.mrb[0].mxu0 %v5932
      %v6051 = vpop.f32.mrb[0].mxu0
      %v6052 = vadd.f32 0.0, %v6051
      %v6053 = vpop.f32.mrb[0].mxu0
      %v6054 = vpop.f32.mrb[0].mxu0
      %v6055 = vadd.f32 0.0, %v6054
      %v6056 = vpop.f32.mrb[0].mxu0
      %6057 = vmatprep.mubr.bf16.mxu0 0
      %6058 = vmatmul.mubr.bf16.gmra.mrb[0].mxu0 %v5935
      %v6059 = vpop.f32.mrb[0].mxu0
      %v6060 = vadd.f32 0.0, %v6059
      %v6061 = vpop.f32.mrb[0].mxu0
      %v6062 = vpop.f32.mrb[0].mxu0
      %v6063 = vadd.f32 0.0, %v6062
      %v6064 = vpop.f32.mrb[0].mxu0
      %6065 = vmatprep.mubr.bf16.mxu0 0
      %6066 = vmatmul.mubr.bf16.gmra.mrb[0].mxu0 %v5938
      %v6067 = vpop.f32.mrb[0].mxu0
      %v6068 = vadd.f32 0.0, %v6067
      %v6069 = vpop.f32.mrb[0].mxu0
      %v6070 = vpop.f32.mrb[0].mxu0
      %v6071 = vadd.f32 0.0, %v6070
      %v6072 = vpop.f32.mrb[0].mxu0
      %6073 = vmatprep.mubr.bf16.mxu0 0
      %6074 = vmatmul.mubr.bf16.gmra.mrb[0].mxu0 %v5941
      %v6075 = vpop.f32.mrb[0].mxu0
      %v6076 = vadd.f32 0.0, %v6075
      %v6077 = vpop.f32.mrb[0].mxu0
      %v6078 = vpop.f32.mrb[0].mxu0
      %v6079 = vadd.f32 0.0, %v6078
      %v6080 = vpop.f32.mrb[0].mxu0
      %6081 = vmatprep.mubr.bf16.mxu0 0
      %6082 = vmatmul.mubr.bf16.gmra.mrb[0].mxu0 %v5944
      %v6083 = vpop.f32.mrb[0].mxu0
      %v6084 = vadd.f32 0.0, %v6083
      %v6085 = vpop.f32.mrb[0].mxu0
      %v6086 = vpop.f32.mrb[0].mxu0
      %v6087 = vadd.f32 0.0, %v6086
      %v6088 = vpop.f32.mrb[0].mxu0
      %6089 = vmatprep.mubr.bf16.mxu0 0
      %6090 = vmatmul.mubr.bf16.gmra.mrb[0].mxu0 %v5947
      %v6091 = vpop.f32.mrb[0].mxu0
      %v6092 = vadd.f32 0.0, %v6091
      %v6093 = vpop.f32.mrb[0].mxu0
      %v6094 = vpop.f32.mrb[0].mxu0
      %v6095 = vadd.f32 0.0, %v6094
      %v6096 = vpop.f32.mrb[0].mxu0
      %6097 = vmatprep.mubr.bf16.mxu0 0
      %6098 = vmatmul.mubr.bf16.gmra.mrb[0].mxu0 %v5950
      %v6099 = vpop.f32.mrb[0].mxu0
      %v6100 = vadd.f32 0.0, %v6099
      %v6101 = vpop.f32.mrb[0].mxu0
      %v6102 = vpop.f32.mrb[0].mxu0
      %v6103 = vadd.f32 0.0, %v6102
      %v6104 = vpop.f32.mrb[0].mxu0
      %6105 = vmatprep.mubr.bf16.mxu0 0
      %6106 = vmatmul.mubr.bf16.gmra.mrb[0].mxu0 %v5953
      %v6107 = vpop.f32.mrb[0].mxu0
      %v6108 = vadd.f32 0.0, %v6107
      %v6109 = vpop.f32.mrb[0].mxu0
      %v6110 = vpop.f32.mrb[0].mxu0
      %v6111 = vadd.f32 0.0, %v6110
      %v6112 = vpop.f32.mrb[0].mxu0
      %6113 = vmatprep.mubr.bf16.mxu0 0
      %6114 = vmatmul.mubr.bf16.gmra.mrb[0].mxu0 %v5956
      %v6115 = vpop.f32.mrb[0].mxu0
      %v6116 = vadd.f32 0.0, %v6115
      %v6117 = vpop.f32.mrb[0].mxu0
      %v6118 = vpop.f32.mrb[0].mxu0
      %v6119 = vadd.f32 0.0, %v6118
      %v6120 = vpop.f32.mrb[0].mxu0
      %6121 = vdwg.mxu0
      %v6122 = vadd.f32 %v5825, %v5996
      %v6123 = vadd.f32 %v5826, %v5999
      %v6124 = vadd.f32 %v5827, %v6004
      %v6125 = vadd.f32 %v5828, %v6007
      %v6126 = vadd.f32 %v5829, %v6012
      %v6127 = vadd.f32 %v5830, %v6015
      %v6128 = vadd.f32 %v5831, %v6020
      %v6129 = vadd.f32 %v5832, %v6023
      %v6130 = vadd.f32 %v5833, %v6028
      %v6131 = vadd.f32 %v5834, %v6031
      %v6132 = vadd.f32 %v5835, %v6036
      %v6133 = vadd.f32 %v5836, %v6039
      %v6134 = vadd.f32 %v5837, %v6044
      %v6135 = vadd.f32 %v5838, %v6047
      %v6136 = vadd.f32 %v5839, %v6052
      %v6137 = vadd.f32 %v5840, %v6055
      %v6138 = vadd.f32 %v5841, %v6060
      %v6139 = vadd.f32 %v5842, %v6063
      %v6140 = vadd.f32 %v5843, %v6068
      %v6141 = vadd.f32 %v5844, %v6071
      %v6142 = vadd.f32 %v5845, %v6076
      %v6143 = vadd.f32 %v5846, %v6079
      %v6144 = vadd.f32 %v5847, %v6084
      %v6145 = vadd.f32 %v5848, %v6087
      %v6146 = vadd.f32 %v5849, %v6092
      %v6147 = vadd.f32 %v5850, %v6095
      %v6148 = vadd.f32 %v5851, %v6100
      %v6149 = vadd.f32 %v5852, %v6103
      %v6150 = vadd.f32 %v5853, %v6108
      %v6151 = vadd.f32 %v5854, %v6111
      %v6152 = vadd.f32 %v5855, %v6116
      %v6153 = vadd.f32 %v5856, %v6119
      %v6154 = vld [vmem:[%s2527 + $0x2] sm:$0xff]
      %v6155 = vld [vmem:[%s2527 + $0xa] sm:$0xff]
      %v6156 = vld [vmem:[%s2527 + $0x1a] sm:$0xff]
      %v6157 = vld [vmem:[%s2527 + $0x22] sm:$0xff]
      %v6158 = vld [vmem:[%s2527 + $0x32] sm:$0xff]
      %v6159 = vld [vmem:[%s2527 + $0x3a] sm:$0xff]
      %v6160 = vld [vmem:[%s2527 + $0x4a] sm:$0xff]
      %v6161 = vld [vmem:[%s2527 + $0x52] sm:$0xff]
      %v6162 = vld [vmem:[%s2527 + $0x62] sm:$0xff]
      %v6163 = vld [vmem:[%s2527 + $0x6a] sm:$0xff]
      %v6164 = vld [vmem:[%s2527 + $0x7a] sm:$0xff]
      %v6165 = vld [vmem:[%s2527 + $0x82] sm:$0xff]
      %v6166 = vld [vmem:[%s2527 + $0x92] sm:$0xff]
      %v6167 = vld [vmem:[%s2527 + $0x9a] sm:$0xff]
      %v6168 = vld [vmem:[%s2527 + $0xaa] sm:$0xff]
      %v6169 = vld [vmem:[%s2527 + $0xb2] sm:$0xff]
      %v6170 = vld [vmem:[%s2527 + $0xc2] sm:$0xff]
      %v6171 = vld [vmem:[%s2527 + $0xca] sm:$0xff]
      %v6172 = vld [vmem:[%s2527 + $0xda] sm:$0xff]
      %v6173 = vld [vmem:[%s2527 + $0xe2] sm:$0xff]
      %v6174 = vld [vmem:[%s2527 + $0xf2] sm:$0xff]
      %v6175 = vld [vmem:[%s2527 + $0xfa] sm:$0xff]
      %v6176 = vld [vmem:[%s2527 + $0x10a] sm:$0xff]
      %v6177 = vld [vmem:[%s2527 + $0x112] sm:$0xff]
      %v6178 = vld [vmem:[%s2527 + $0x122] sm:$0xff]
      %v6179 = vld [vmem:[%s2527 + $0x12a] sm:$0xff]
      %v6180 = vld [vmem:[%s2527 + $0x13a] sm:$0xff]
      %v6181 = vld [vmem:[%s2527 + $0x142] sm:$0xff]
      %v6182 = vld [vmem:[%s2527 + $0x152] sm:$0xff]
      %v6183 = vld [vmem:[%s2527 + $0x15a] sm:$0xff]
      %v6184 = vld [vmem:[%s2527 + $0x16a] sm:$0xff]
      %v6185 = vld [vmem:[%s2527 + $0x172] sm:$0xff]
      %v6186 = vpack.c.bf16 %v6155, %v6154
      %v6187 = vpack.c.bf16 %v6157, %v6156
      %v6188 = vpack.c.bf16 %v6159, %v6158
      %v6189 = vpack.c.bf16 %v6161, %v6160
      %v6190 = vpack.c.bf16 %v6163, %v6162
      %v6191 = vpack.c.bf16 %v6165, %v6164
      %v6192 = vpack.c.bf16 %v6167, %v6166
      %v6193 = vpack.c.bf16 %v6169, %v6168
      %v6194 = vpack.c.bf16 %v6171, %v6170
      %v6195 = vpack.c.bf16 %v6173, %v6172
      %v6196 = vpack.c.bf16 %v6175, %v6174
      %v6197 = vpack.c.bf16 %v6177, %v6176
      %v6198 = vpack.c.bf16 %v6179, %v6178
      %v6199 = vpack.c.bf16 %v6181, %v6180
      %v6200 = vpack.c.bf16 %v6183, %v6182
      %v6201 = vpack.c.bf16 %v6185, %v6184
      %v6202 = vld [vmem:[%s8 + $0x10] sm:$0x3]
      %v6204 = vsel %vm369, %v6186, 0
      %v6207 = vsel %vm369, %v6187, 0
      %v6210 = vsel %vm369, %v6188, 0
      %v6213 = vsel %vm369, %v6189, 0
      %v6216 = vsel %vm369, %v6190, 0
      %v6219 = vsel %vm369, %v6191, 0
      %v6222 = vsel %vm369, %v6192, 0
      %v6225 = vsel %vm369, %v6193, 0
      %v6228 = vsel %vm369, %v6194, 0
      %v6231 = vsel %vm369, %v6195, 0
      %v6234 = vsel %vm369, %v6196, 0
      %v6237 = vsel %vm369, %v6197, 0
      %v6240 = vsel %vm369, %v6198, 0
      %v6243 = vsel %vm369, %v6199, 0
      %v6246 = vsel %vm369, %v6200, 0
      %v6249 = vsel %vm369, %v6201, 0
      %v6252 = vsel %vm970, %v6202, 0
      %6254 = vmatprep.subr.bf16.mxu0 0
      %6255 = vmatpush1.bf16.msra.mxu0 %v6252
      %6256 = vmatprep.subr.bf16.mxu0 0
      %6257 = vmatpush1.bf16.msra.mxu0 0
      %6258 = vmatprep.subr.bf16.mxu0 0
      %6259 = vmatpush1.bf16.msra.mxu0 0
      %6260 = vmatprep.subr.bf16.mxu0 0
      %6261 = vmatpush1.bf16.msra.mxu0 0
      %6262 = vmatprep.subr.bf16.mxu0 0
      %6263 = vmatpush1.bf16.msra.mxu0 0
      %6264 = vmatprep.subr.bf16.mxu0 0
      %6265 = vmatpush1.bf16.msra.mxu0 0
      %6266 = vmatprep.subr.bf16.mxu0 0
      %6267 = vmatpush1.bf16.msra.mxu0 0
      %6268 = vmatprep.subr.bf16.mxu0 0
      %6269 = vmatpush1.bf16.msra.mxu0 0
      %6270 = vmatprep.subr.bf16.mxu0 0
      %6271 = vmatpush1.bf16.msra.mxu0 0
      %6272 = vmatprep.subr.bf16.mxu0 0
      %6273 = vmatpush1.bf16.msra.mxu0 0
      %6274 = vmatprep.subr.bf16.mxu0 0
      %6275 = vmatpush1.bf16.msra.mxu0 0
      %6276 = vmatprep.subr.bf16.mxu0 0
      %6277 = vmatpush1.bf16.msra.mxu0 0
      %6278 = vmatprep.subr.bf16.mxu0 0
      %6279 = vmatpush1.bf16.msra.mxu0 0
      %6280 = vmatprep.subr.bf16.mxu0 0
      %6281 = vmatpush1.bf16.msra.mxu0 0
      %6282 = vmatprep.subr.bf16.mxu0 0
      %6283 = vmatpush1.bf16.msra.mxu0 0
      %6284 = vmatprep.subr.bf16.mxu0 0
      %6285 = vmatpush1.bf16.msra.mxu0 0
      %6286 = vmatprep.mubr.bf16.mxu0 0
      %6287 = vmatmul.mubr.bf16.gmra.mrb[0].mxu0 %v6204
      %v6288 = vpop.f32.mrb[0].mxu0
      %v6289 = vadd.f32 0.0, %v6288
      %v6290 = vpop.f32.mrb[0].mxu0
      %v6291 = vpop.f32.mrb[0].mxu0
      %v6292 = vadd.f32 0.0, %v6291
      %v6293 = vpop.f32.mrb[0].mxu0
      %6294 = vmatprep.mubr.bf16.mxu0 0
      %6295 = vmatmul.mubr.bf16.gmra.mrb[0].mxu0 %v6207
      %v6296 = vpop.f32.mrb[0].mxu0
      %v6297 = vadd.f32 0.0, %v6296
      %v6298 = vpop.f32.mrb[0].mxu0
      %v6299 = vpop.f32.mrb[0].mxu0
      %v6300 = vadd.f32 0.0, %v6299
      %v6301 = vpop.f32.mrb[0].mxu0
      %6302 = vmatprep.mubr.bf16.mxu0 0
      %6303 = vmatmul.mubr.bf16.gmra.mrb[0].mxu0 %v6210
      %v6304 = vpop.f32.mrb[0].mxu0
      %v6305 = vadd.f32 0.0, %v6304
      %v6306 = vpop.f32.mrb[0].mxu0
      %v6307 = vpop.f32.mrb[0].mxu0
      %v6308 = vadd.f32 0.0, %v6307
      %v6309 = vpop.f32.mrb[0].mxu0
      %6310 = vmatprep.mubr.bf16.mxu0 0
      %6311 = vmatmul.mubr.bf16.gmra.mrb[0].mxu0 %v6213
      %v6312 = vpop.f32.mrb[0].mxu0
      %v6313 = vadd.f32 0.0, %v6312
      %v6314 = vpop.f32.mrb[0].mxu0
      %v6315 = vpop.f32.mrb[0].mxu0
      %v6316 = vadd.f32 0.0, %v6315
      %v6317 = vpop.f32.mrb[0].mxu0
      %6318 = vmatprep.mubr.bf16.mxu0 0
      %6319 = vmatmul.mubr.bf16.gmra.mrb[0].mxu0 %v6216
      %v6320 = vpop.f32.mrb[0].mxu0
      %v6321 = vadd.f32 0.0, %v6320
      %v6322 = vpop.f32.mrb[0].mxu0
      %v6323 = vpop.f32.mrb[0].mxu0
      %v6324 = vadd.f32 0.0, %v6323
      %v6325 = vpop.f32.mrb[0].mxu0
      %6326 = vmatprep.mubr.bf16.mxu0 0
      %6327 = vmatmul.mubr.bf16.gmra.mrb[0].mxu0 %v6219
      %v6328 = vpop.f32.mrb[0].mxu0
      %v6329 = vadd.f32 0.0, %v6328
      %v6330 = vpop.f32.mrb[0].mxu0
      %v6331 = vpop.f32.mrb[0].mxu0
      %v6332 = vadd.f32 0.0, %v6331
      %v6333 = vpop.f32.mrb[0].mxu0
      %6334 = vmatprep.mubr.bf16.mxu0 0
      %6335 = vmatmul.mubr.bf16.gmra.mrb[0].mxu0 %v6222
      %v6336 = vpop.f32.mrb[0].mxu0
      %v6337 = vadd.f32 0.0, %v6336
      %v6338 = vpop.f32.mrb[0].mxu0
      %v6339 = vpop.f32.mrb[0].mxu0
      %v6340 = vadd.f32 0.0, %v6339
      %v6341 = vpop.f32.mrb[0].mxu0
      %6342 = vmatprep.mubr.bf16.mxu0 0
      %6343 = vmatmul.mubr.bf16.gmra.mrb[0].mxu0 %v6225
      %v6344 = vpop.f32.mrb[0].mxu0
      %v6345 = vadd.f32 0.0, %v6344
      %v6346 = vpop.f32.mrb[0].mxu0
      %v6347 = vpop.f32.mrb[0].mxu0
      %v6348 = vadd.f32 0.0, %v6347
      %v6349 = vpop.f32.mrb[0].mxu0
      %6350 = vmatprep.mubr.bf16.mxu0 0
      %6351 = vmatmul.mubr.bf16.gmra.mrb[0].mxu0 %v6228
      %v6352 = vpop.f32.mrb[0].mxu0
      %v6353 = vadd.f32 0.0, %v6352
      %v6354 = vpop.f32.mrb[0].mxu0
      %v6355 = vpop.f32.mrb[0].mxu0
      %v6356 = vadd.f32 0.0, %v6355
      %v6357 = vpop.f32.mrb[0].mxu0
      %6358 = vmatprep.mubr.bf16.mxu0 0
      %6359 = vmatmul.mubr.bf16.gmra.mrb[0].mxu0 %v6231
      %v6360 = vpop.f32.mrb[0].mxu0
      %v6361 = vadd.f32 0.0, %v6360
      %v6362 = vpop.f32.mrb[0].mxu0
      %v6363 = vpop.f32.mrb[0].mxu0
      %v6364 = vadd.f32 0.0, %v6363
      %v6365 = vpop.f32.mrb[0].mxu0
      %6366 = vmatprep.mubr.bf16.mxu0 0
      %6367 = vmatmul.mubr.bf16.gmra.mrb[0].mxu0 %v6234
      %v6368 = vpop.f32.mrb[0].mxu0
      %v6369 = vadd.f32 0.0, %v6368
      %v6370 = vpop.f32.mrb[0].mxu0
      %v6371 = vpop.f32.mrb[0].mxu0
      %v6372 = vadd.f32 0.0, %v6371
      %v6373 = vpop.f32.mrb[0].mxu0
      %6374 = vmatprep.mubr.bf16.mxu0 0
      %6375 = vmatmul.mubr.bf16.gmra.mrb[0].mxu0 %v6237
      %v6376 = vpop.f32.mrb[0].mxu0
      %v6377 = vadd.f32 0.0, %v6376
      %v6378 = vpop.f32.mrb[0].mxu0
      %v6379 = vpop.f32.mrb[0].mxu0
      %v6380 = vadd.f32 0.0, %v6379
      %v6381 = vpop.f32.mrb[0].mxu0
      %6382 = vmatprep.mubr.bf16.mxu0 0
      %6383 = vmatmul.mubr.bf16.gmra.mrb[0].mxu0 %v6240
      %v6384 = vpop.f32.mrb[0].mxu0
      %v6385 = vadd.f32 0.0, %v6384
      %v6386 = vpop.f32.mrb[0].mxu0
      %v6387 = vpop.f32.mrb[0].mxu0
      %v6388 = vadd.f32 0.0, %v6387
      %v6389 = vpop.f32.mrb[0].mxu0
      %6390 = vmatprep.mubr.bf16.mxu0 0
      %6391 = vmatmul.mubr.bf16.gmra.mrb[0].mxu0 %v6243
      %v6392 = vpop.f32.mrb[0].mxu0
      %v6393 = vadd.f32 0.0, %v6392
      %v6394 = vpop.f32.mrb[0].mxu0
      %v6395 = vpop.f32.mrb[0].mxu0
      %v6396 = vadd.f32 0.0, %v6395
      %v6397 = vpop.f32.mrb[0].mxu0
      %6398 = vmatprep.mubr.bf16.mxu0 0
      %6399 = vmatmul.mubr.bf16.gmra.mrb[0].mxu0 %v6246
      %v6400 = vpop.f32.mrb[0].mxu0
      %v6401 = vadd.f32 0.0, %v6400
      %v6402 = vpop.f32.mrb[0].mxu0
      %v6403 = vpop.f32.mrb[0].mxu0
      %v6404 = vadd.f32 0.0, %v6403
      %v6405 = vpop.f32.mrb[0].mxu0
      %6406 = vmatprep.mubr.bf16.mxu0 0
      %6407 = vmatmul.mubr.bf16.gmra.mrb[0].mxu0 %v6249
      %v6408 = vpop.f32.mrb[0].mxu0
      %v6409 = vadd.f32 0.0, %v6408
      %v6410 = vpop.f32.mrb[0].mxu0
      %v6411 = vpop.f32.mrb[0].mxu0
      %v6412 = vadd.f32 0.0, %v6411
      %v6413 = vpop.f32.mrb[0].mxu0
      %6414 = vdwg.mxu0
      %v6415 = vadd.f32 %v6122, %v6289
      %v6416 = vadd.f32 %v6123, %v6292
      %v6417 = vadd.f32 %v6124, %v6297
      %v6418 = vadd.f32 %v6125, %v6300
      %v6419 = vadd.f32 %v6126, %v6305
      %v6420 = vadd.f32 %v6127, %v6308
      %v6421 = vadd.f32 %v6128, %v6313
      %v6422 = vadd.f32 %v6129, %v6316
      %v6423 = vadd.f32 %v6130, %v6321
      %v6424 = vadd.f32 %v6131, %v6324
      %v6425 = vadd.f32 %v6132, %v6329
      %v6426 = vadd.f32 %v6133, %v6332
      %v6427 = vadd.f32 %v6134, %v6337
      %v6428 = vadd.f32 %v6135, %v6340
      %v6429 = vadd.f32 %v6136, %v6345
      %v6430 = vadd.f32 %v6137, %v6348
      %v6431 = vadd.f32 %v6138, %v6353
      %v6432 = vadd.f32 %v6139, %v6356
      %v6433 = vadd.f32 %v6140, %v6361
      %v6434 = vadd.f32 %v6141, %v6364
      %v6435 = vadd.f32 %v6142, %v6369
      %v6436 = vadd.f32 %v6143, %v6372
      %v6437 = vadd.f32 %v6144, %v6377
      %v6438 = vadd.f32 %v6145, %v6380
      %v6439 = vadd.f32 %v6146, %v6385
      %v6440 = vadd.f32 %v6147, %v6388
      %v6441 = vadd.f32 %v6148, %v6393
      %v6442 = vadd.f32 %v6149, %v6396
      %v6443 = vadd.f32 %v6150, %v6401
      %v6444 = vadd.f32 %v6151, %v6404
      %v6445 = vadd.f32 %v6152, %v6409
      %v6446 = vadd.f32 %v6153, %v6412
      %v6447 = vld [vmem:[%s327] sm:$0xff]
      %v6448 = vld [vmem:[%s327 + $0x8] sm:$0xff]
      %v6449 = vld [vmem:[%s327 + $0x10] sm:$0xff]
      %v6450 = vld [vmem:[%s327 + $0x18] sm:$0xff]
      %v6451 = vld [vmem:[%s327 + $0x20] sm:$0xff]
      %v6452 = vld [vmem:[%s327 + $0x28] sm:$0xff]
      %v6453 = vld [vmem:[%s327 + $0x30] sm:$0xff]
      %v6454 = vld [vmem:[%s327 + $0x38] sm:$0xff]
      %v6455 = vld [vmem:[%s327 + $0x40] sm:$0xff]
      %v6456 = vld [vmem:[%s327 + $0x48] sm:$0xff]
      %v6457 = vld [vmem:[%s327 + $0x50] sm:$0xff]
      %v6458 = vld [vmem:[%s327 + $0x58] sm:$0xff]
      %v6459 = vld [vmem:[%s327 + $0x60] sm:$0xff]
      %v6460 = vld [vmem:[%s327 + $0x68] sm:$0xff]
      %v6461 = vld [vmem:[%s327 + $0x70] sm:$0xff]
      %v6462 = vld [vmem:[%s327 + $0x78] sm:$0xff]
      %v6463 = vld [vmem:[%s327 + $0x80] sm:$0xff]
      %v6464 = vld [vmem:[%s327 + $0x88] sm:$0xff]
      %v6465 = vld [vmem:[%s327 + $0x90] sm:$0xff]
      %v6466 = vld [vmem:[%s327 + $0x98] sm:$0xff]
      %v6467 = vld [vmem:[%s327 + $0xa0] sm:$0xff]
      %v6468 = vld [vmem:[%s327 + $0xa8] sm:$0xff]
      %v6469 = vld [vmem:[%s327 + $0xb0] sm:$0xff]
      %v6470 = vld [vmem:[%s327 + $0xb8] sm:$0xff]
      %v6471 = vld [vmem:[%s327 + $0xc0] sm:$0xff]
      %v6472 = vld [vmem:[%s327 + $0xc8] sm:$0xff]
      %v6473 = vld [vmem:[%s327 + $0xd0] sm:$0xff]
      %v6474 = vld [vmem:[%s327 + $0xd8] sm:$0xff]
      %v6475 = vld [vmem:[%s327 + $0xe0] sm:$0xff]
      %v6476 = vld [vmem:[%s327 + $0xe8] sm:$0xff]
      %v6477 = vld [vmem:[%s327 + $0xf0] sm:$0xff]
      %v6478 = vld [vmem:[%s327 + $0xf8] sm:$0xff]
      %v6479 = vadd.f32 %v6415, %v6447
      %v6480 = vadd.f32 %v6416, %v6448
      %v6481 = vadd.f32 %v6417, %v6449
      %v6482 = vadd.f32 %v6418, %v6450
      %v6483 = vadd.f32 %v6419, %v6451
      %v6484 = vadd.f32 %v6420, %v6452
      %v6485 = vadd.f32 %v6421, %v6453
      %v6486 = vadd.f32 %v6422, %v6454
      %v6487 = vadd.f32 %v6423, %v6455
      %v6488 = vadd.f32 %v6424, %v6456
      %v6489 = vadd.f32 %v6425, %v6457
      %v6490 = vadd.f32 %v6426, %v6458
      %v6491 = vadd.f32 %v6427, %v6459
      %v6492 = vadd.f32 %v6428, %v6460
      %v6493 = vadd.f32 %v6429, %v6461
      %v6494 = vadd.f32 %v6430, %v6462
      %v6495 = vadd.f32 %v6431, %v6463
      %v6496 = vadd.f32 %v6432, %v6464
      %v6497 = vadd.f32 %v6433, %v6465
      %v6498 = vadd.f32 %v6434, %v6466
      %v6499 = vadd.f32 %v6435, %v6467
      %v6500 = vadd.f32 %v6436, %v6468
      %v6501 = vadd.f32 %v6437, %v6469
      %v6502 = vadd.f32 %v6438, %v6470
      %v6503 = vadd.f32 %v6439, %v6471
      %v6504 = vadd.f32 %v6440, %v6472
      %v6505 = vadd.f32 %v6441, %v6473
      %v6506 = vadd.f32 %v6442, %v6474
      %v6507 = vadd.f32 %v6443, %v6475
      %v6508 = vadd.f32 %v6444, %v6476
      %v6509 = vadd.f32 %v6445, %v6477
      %v6510 = vadd.f32 %v6446, %v6478
      %6511 = vst.msk [vmem:[%s332] sm:$0xff] %vm369, %v6479
      %6512 = vst.msk [vmem:[%s332 + $0x8] sm:$0xff] %vm369, %v6480
      %6513 = vst.msk [vmem:[%s332 + $0x10] sm:$0xff] %vm369, %v6481
      %6514 = vst.msk [vmem:[%s332 + $0x18] sm:$0xff] %vm369, %v6482
      %6515 = vst.msk [vmem:[%s332 + $0x20] sm:$0xff] %vm369, %v6483
      %6516 = vst.msk [vmem:[%s332 + $0x28] sm:$0xff] %vm369, %v6484
      %6517 = vst.msk [vmem:[%s332 + $0x30] sm:$0xff] %vm369, %v6485
      %6518 = vst.msk [vmem:[%s332 + $0x38] sm:$0xff] %vm369, %v6486
      %6519 = vst.msk [vmem:[%s332 + $0x40] sm:$0xff] %vm369, %v6487
      %6520 = vst.msk [vmem:[%s332 + $0x48] sm:$0xff] %vm369, %v6488
      %6521 = vst.msk [vmem:[%s332 + $0x50] sm:$0xff] %vm369, %v6489
      %6522 = vst.msk [vmem:[%s332 + $0x58] sm:$0xff] %vm369, %v6490
      %6523 = vst.msk [vmem:[%s332 + $0x60] sm:$0xff] %vm369, %v6491
      %6524 = vst.msk [vmem:[%s332 + $0x68] sm:$0xff] %vm369, %v6492
      %6525 = vst.msk [vmem:[%s332 + $0x70] sm:$0xff] %vm369, %v6493
      %6526 = vst.msk [vmem:[%s332 + $0x78] sm:$0xff] %vm369, %v6494
      %6527 = vst.msk [vmem:[%s332 + $0x80] sm:$0xff] %vm369, %v6495
      %6528 = vst.msk [vmem:[%s332 + $0x88] sm:$0xff] %vm369, %v6496
      %6529 = vst.msk [vmem:[%s332 + $0x90] sm:$0xff] %vm369, %v6497
      %6530 = vst.msk [vmem:[%s332 + $0x98] sm:$0xff] %vm369, %v6498
      %6531 = vst.msk [vmem:[%s332 + $0xa0] sm:$0xff] %vm369, %v6499
      %6532 = vst.msk [vmem:[%s332 + $0xa8] sm:$0xff] %vm369, %v6500
      %6533 = vst.msk [vmem:[%s332 + $0xb0] sm:$0xff] %vm369, %v6501
      %6534 = vst.msk [vmem:[%s332 + $0xb8] sm:$0xff] %vm369, %v6502
      %6535 = vst.msk [vmem:[%s332 + $0xc0] sm:$0xff] %vm369, %v6503
      %6536 = vst.msk [vmem:[%s332 + $0xc8] sm:$0xff] %vm369, %v6504
      %6537 = vst.msk [vmem:[%s332 + $0xd0] sm:$0xff] %vm369, %v6505
      %6538 = vst.msk [vmem:[%s332 + $0xd8] sm:$0xff] %vm369, %v6506
      %6539 = vst.msk [vmem:[%s332 + $0xe0] sm:$0xff] %vm369, %v6507
      %6540 = vst.msk [vmem:[%s332 + $0xe8] sm:$0xff] %vm369, %v6508
      %6541 = vst.msk [vmem:[%s332 + $0xf0] sm:$0xff] %vm369, %v6509
      %6542 = vst.msk [vmem:[%s332 + $0xf8] sm:$0xff] %vm369, %v6510
      %p6543 = scmp.lt.s32.totalorder %s20, 1
      %s6544 = scalar_select %p6543, %s20, 1
      %s6545 = smul.addr %s6544, 32
      %s6546 = smul.addr %s6545, 8
      %s6547 = scalar_lea.vmem %s9, %s6546
      // Predicated region
      $region57: #{tpu_custom_call.1} parent=55 // pred_check
        %p6548 = pneg %p232
      $region58: #{tpu_custom_call.1} parent=55 // pred_check_branch
        %6550 = sbr.rel (%p6548) target = $region60
      $region59: #{tpu_custom_call.1} parent=55 // pred_region
        _
      $region60: #{tpu_custom_call.1} parent=55 // pred_fallthru
        _
    $region56: #{tpu_custom_call.1} parent=5 // pred_fallthru
      _
    %p6551 = scmp.le.s32.totalorder 2, %s15
    // Predicated region
    $region61: #{tpu_custom_call.1} parent=5 // pred_check
      %p6552 = pneg %p6551
    $region62: #{tpu_custom_call.1} parent=5 // pred_check_branch
      %6554 = sbr.rel (%p6552) target = $region64
    $region63: #{tpu_custom_call.1} parent=5 // pred_region
      %s6555 = ssub.s32 %s15, 2
      // Predicated region
      $region65: #{tpu_custom_call.1} parent=63 // pred_check
        %p6556 = pneg %p238
      $region66: #{tpu_custom_call.1} parent=63 // pred_check_branch
        %6558 = sbr.rel (%p6556) target = $region68
      $region67: #{tpu_custom_call.1} parent=63 // pred_region
        %p6559 = scmp.lt.s32.totalorder %s21, 1
        %s6560 = scalar_select %p6559, %s21, 1
        %s6561 = smul.addr %s6560, 32
        %s6562 = smul.addr %s6561, 8
        %s6563 = scalar_lea.vmem %s9, %s6562
      $region68: #{tpu_custom_call.1} parent=63 // pred_fallthru
        _
    $region64: #{tpu_custom_call.1} parent=5 // pred_fallthru
      _
  $region6: #{tpu_custom_call.1} parent=0 // loop_footer
    %s19 = sadd.s32 1, %s15
  $region7: #{tpu_custom_call.1} parent=0 // loop_footer_branch
    %14 = sbr.rel target = $region3
  $region8: #{tpu_custom_call.1} parent=0 // loop_exit
    _

</llo_original>
